<compile_context>
chip_gen: v7x
topology: tpu7x:2x2x1
jax: 0.10.0
libtpu: 0.0.40
codegen_flags: <defaults>
</compile_context>

<pallas_src>
import math

import numpy as np
import jax
import jax.numpy as jnp
from jax import lax
from jax.experimental import pallas as pl
from jax.experimental.pallas import tpu as pltpu

# ----------------------- config (small Swin-V2: same ops, small dims) --------
NUM_CLASSES = 3
IMG_SIZE = 16
IN_CHANS = 3
PATCH = 4
EMBED = 32
DEPTHS = (2, 2)
HEADS = (2, 4)
WINDOW = 2
MLP_RATIO = 4
CPB_HIDDEN = 512        # torchvision Swin-V2 continuous-position-bias MLP hidden
LN_EPS = 1e-5
PAD = 128               # lane padding for all channel dims
NEG = -1e9              # structural (cross-window) mask; reference shift mask stays -100


# ====================== static packing layout (arch only) =====================
def _arch_layout():
    """Slab indices for packed weights/vectors; depends only on constants."""
    cnt = {"w": 0, "v": 0}

    def w():
        cnt["w"] += 1
        return cnt["w"] - 1

    def v():
        cnt["v"] += 1
        return cnt["v"] - 1

    L = {"pe_w": w(), "pe_b": v(), "pe_g": v(), "pe_bt": v(), "blocks": []}
    so = 0
    for si, (depth, heads) in enumerate(zip(DEPTHS, HEADS)):
        C = EMBED * (2 ** si)
        hid = MLP_RATIO * C
        assert C <= PAD and hid % PAD == 0
        nh = hid // PAD
        for _ in range(depth):
            L["blocks"].append(dict(
                C=C, heads=heads, so=so,
                wq=w(), wk=w(), wv=w(), vq=v(), vk=v(), vv=v(),
                wp=w(), vp=v(), n1g=v(), n1b=v(),
                wm1=[w() for _ in range(nh)], m1b=[v() for _ in range(nh)],
                wm2=[w() for _ in range(nh)], m2b=v(), n2g=v(), n2b=v()))
            so += heads
    L["mg_w"] = [w() for _ in range(4)]
    L["mg_g"] = v()
    L["mg_b"] = v()
    L["fn_g"] = v()
    L["fn_b"] = v()
    L["head_w"] = w()
    L["head_b"] = v()
    L["n_w"], L["n_v"], L["n_s"] = cnt["w"], cnt["v"], so
    return L


_LAYOUT = _arch_layout()


# ============================ static (numpy) tables ============================
def relative_position_index_np(ws):
    coords = np.stack(np.meshgrid(np.arange(ws), np.arange(ws), indexing="ij"))
    flat = coords.reshape(2, -1)
    rel = (flat[:, :, None] - flat[:, None, :]).transpose(1, 2, 0).astype(np.int64)
    rel[..., 0] += ws - 1
    rel[..., 1] += ws - 1
    rel[..., 0] *= 2 * ws - 1
    return rel.sum(-1).reshape(-1)                                  # (N*N,)


def relative_coords_table_np(ws):
    r = np.arange(-(ws - 1), ws, dtype=np.float32)
    table = np.stack(np.meshgrid(r, r, indexing="ij")).transpose(1, 2, 0).copy()
    table[..., 0] /= max(ws - 1, 1)
    table[..., 1] /= max(ws - 1, 1)
    table *= 8.0
    table = np.sign(table) * np.log2(np.abs(table) + 1.0) / 3.0
    return table.reshape(-1, 2).astype(np.float32)                  # ((2ws-1)^2, 2)


def attn_mask_np(H, W, ws, sh, sw):
    img = np.zeros((H, W), np.float32)
    h_slices = ((0, H - ws), (H - ws, H - sh), (H - sh, H))
    w_slices = ((0, W - ws), (W - ws, W - sw), (W - sw, W))
    cnt = 0
    for hs in h_slices:
        for wsl in w_slices:
            img[hs[0]:hs[1], wsl[0]:wsl[1]] = cnt
            cnt += 1
    nH, nW = H // ws, W // ws
    win = img.reshape(nH, ws, nW, ws).transpose(0, 2, 1, 3).reshape(nH * nW, ws * ws)
    diff = win[:, None, :] - win[:, :, None]
    return np.where(diff != 0, -100.0, 0.0).astype(np.float32)      # (nW, N, N)


def _dense_bias(rel, H, W, ws, s):
    """Fold shift-roll + window partition into a dense (heads, H*W, H*W) bias."""
    hh, ww = np.meshgrid(np.arange(H), np.arange(W), indexing="ij")
    hr = (hh - s) % H                       # rolled coordinates (as used by reference)
    wr = (ww - s) % W
    win = ((hr // ws) * (W // ws) + (wr // ws)).reshape(-1)
    loc = ((hr % ws) * ws + (wr % ws)).reshape(-1)
    nW = (H // ws) * (W // ws)
    if s > 0:
        sm = attn_mask_np(H, W, ws, s, s)
    else:
        sm = np.zeros((nW, ws * ws, ws * ws), np.float32)
    same = (win[:, None] == win[None, :])
    rel_d = rel[:, loc[:, None], loc[None, :]]                          # (heads, M, M)
    sm_d = jnp.asarray(sm[win[:, None], loc[:, None], loc[None, :]])    # (M, M)
    return jnp.where(jnp.asarray(same)[None], rel_d + sm_d[None], NEG).astype(jnp.float32)


# =============================== the fused kernel ==============================
def _fused_forward_kernel(scale_ref, x_ref, w_ref, v_ref,
                          b0_ref, b1_ref, b2_ref, b3_ref, sel_ref, o_ref):
    L = _LAYOUT
    lane = lax.broadcasted_iota(jnp.int32, (1, PAD), 1)
    masks = {c: (lane < c).astype(jnp.float32)
             for c in sorted({EMBED * (2 ** s) for s in range(len(DEPTHS))})}

    def vrow(i):                                   # (1, 128) f32 parameter row
        return v_ref[i:i + 1, :]

    def mm(a, wi):                                 # bf16 MXU operands, f32 accumulate
        return jnp.dot(a.astype(jnp.bfloat16), w_ref[wi],
                       preferred_element_type=jnp.float32)

    def ln(xv, gi, bi, c):                         # LayerNorm over the true C lanes
        m = masks[c]
        inv = 1.0 / c
        mu = jnp.sum(xv, axis=-1, keepdims=True) * inv     # padded lanes are zero
        xc = (xv - mu) * m
        var = jnp.sum(xc * xc, axis=-1, keepdims=True) * inv
        return xc * lax.rsqrt(var + LN_EPS) * vrow(gi) + vrow(bi)

    def run_block(xv, b_ref, p):
        C, heads = p["C"], p["heads"]
        Dh = C // heads
        rows = xv.shape[0]
        q = mm(xv, p["wq"]) + vrow(p["vq"])
        k = mm(xv, p["wk"]) + vrow(p["vk"])
        v = mm(xv, p["wv"]) + vrow(p["vv"])
        outs = []
        for h in range(heads):                     # dense masked attention per head
            sl = slice(h * Dh, (h + 1) * Dh)
            qh, kh, vh = q[:, sl], k[:, sl], v[:, sl]
            qn = qh * lax.rsqrt(jnp.maximum(jnp.sum(qh * qh, -1, keepdims=True), 1e-24))
            kn = kh * lax.rsqrt(jnp.maximum(jnp.sum(kh * kh, -1, keepdims=True), 1e-24))
            s = lax.dot_general(qn.astype(jnp.bfloat16), kn.astype(jnp.bfloat16),
                                (((1,), (1,)), ((), ())),
                                preferred_element_type=jnp.float32)
            s = s * scale_ref[p["so"] + h] + b_ref[h]
            s = s - jnp.max(s, axis=-1, keepdims=True)
            pr = jnp.exp(s)
            pr = pr / jnp.sum(pr, axis=-1, keepdims=True)
            outs.append(jnp.dot(pr.astype(jnp.bfloat16), vh.astype(jnp.bfloat16),
                                preferred_element_type=jnp.float32))
        att = jnp.concatenate(outs + [jnp.zeros((rows, PAD - C), jnp.float32)], axis=-1)
        a = mm(att, p["wp"]) + vrow(p["vp"])
        xv = xv + ln(a, p["n1g"], p["n1b"], C)               # Swin-V2 post-norm
        hs = []
        for j, wi in enumerate(p["wm1"]):
            hj = mm(xv, wi) + vrow(p["m1b"][j])
            # TODO(synk): PyTorch nn.GELU default is exact erf; tanh approximation
            # used here for guaranteed Mosaic lowering.
            hs.append(jax.nn.gelu(hj, approximate=True))
        m = vrow(p["m2b"])
        for j, wi in enumerate(p["wm2"]):
            m = m + jnp.dot(hs[j].astype(jnp.bfloat16), w_ref[wi],
                            preferred_element_type=jnp.float32)
        xv = xv + ln(m, p["n2g"], p["n2b"], C)
        return xv

    # ---- patch embed (conv-as-matmul + LN); tokens kept in (h, w) image order ----
    x = x_ref[0]                                              # (H0*W0, 128) f32
    x = ln(mm(x, L["pe_w"]) + vrow(L["pe_b"]), L["pe_g"], L["pe_bt"], EMBED)

    bias_refs = (b0_ref, b1_ref, b2_ref, b3_ref)
    # ---- stage 0 blocks ----
    for i in range(DEPTHS[0]):
        x = run_block(x, bias_refs[i], L["blocks"][i])

    # ---- patch merging: 0/1 row-selection matmuls + Linear(4C->2C) + LN ----
    xb = x.astype(jnp.bfloat16)
    y = None
    for kk in range(4):
        xk = jnp.dot(sel_ref[kk].astype(jnp.bfloat16), xb,
                     preferred_element_type=jnp.float32)
        t = jnp.dot(xk.astype(jnp.bfloat16), w_ref[L["mg_w"][kk]],
                    preferred_element_type=jnp.float32)
        y = t if y is None else y + t
    C1 = 2 * EMBED
    x = ln(y, L["mg_g"], L["mg_b"], C1)

    # ---- stage 1 blocks ----
    for i in range(DEPTHS[0], DEPTHS[0] + DEPTHS[1]):
        x = run_block(x, bias_refs[i], L["blocks"][i])

    # ---- final LN + global average pool + classifier head ----
    y = ln(x, L["fn_g"], L["fn_b"], C1)
    pooled = jnp.mean(y, axis=0, keepdims=True)               # (1, 128)
    logits = jnp.dot(pooled.astype(jnp.bfloat16), w_ref[L["head_w"]],
                     preferred_element_type=jnp.float32) + vrow(L["head_b"])
    o_ref[...] = logits.reshape(1, 1, PAD)


# =============================== forward (wrapper) =============================
def swin_forward(x, rp):
    B, Cin, Hi, Wi = x.shape
    H0, W0 = Hi // PATCH, Wi // PATCH
    feat = Cin * PATCH * PATCH
    # Conv2d(k=4, s=4) as patch unfold (the single remaining XLA glue op).
    patches = x.reshape(B, Cin, H0, PATCH, W0, PATCH)
    patches = patches.transpose(0, 2, 4, 1, 3, 5).reshape(B, H0 * W0, feat)
    patches = jnp.pad(patches, ((0, 0), (0, 0), (0, PAD - feat)))
    out = pl.pallas_call(
        _fused_forward_kernel,
        out_shape=jax.ShapeDtypeStruct((B, 1, PAD), jnp.float32),
        grid=(B,),
        in_specs=[
            pl.BlockSpec(memory_space=pltpu.MemorySpace.SMEM),            # logit scales
            pl.BlockSpec((1, H0 * W0, PAD), lambda b: (b, 0, 0)),          # per-batch tokens
            pl.BlockSpec(rp["W"].shape, lambda b: (0, 0, 0)),              # packed weights (bf16)
            pl.BlockSpec(rp["V"].shape, lambda b: (0, 0)),                 # packed vectors (f32)
            pl.BlockSpec(rp["bias0"].shape, lambda b: (0, 0, 0)),          # dense attn biases
            pl.BlockSpec(rp["bias1"].shape, lambda b: (0, 0, 0)),
            pl.BlockSpec(rp["bias2"].shape, lambda b: (0, 0, 0)),
            pl.BlockSpec(rp["bias3"].shape, lambda b: (0, 0, 0)),
            pl.BlockSpec(rp["sel"].shape, lambda b: (0, 0, 0)),            # merge selectors
        ],
        out_specs=pl.BlockSpec((1, 1, PAD), lambda b: (b, 0, 0)),
        compiler_params=pltpu.CompilerParams(dimension_semantics=("parallel",)),
    )(rp["scales"], patches, rp["W"], rp["V"],
      rp["bias0"], rp["bias1"], rp["bias2"], rp["bias3"], rp["sel"])
    return out.reshape(B, PAD)[:, :NUM_CLASSES]


# ====================== one-time parameter preprocessing ======================
def _padw(m):
    m = jnp.asarray(m, jnp.float32)
    return jnp.zeros((PAD, PAD), jnp.float32).at[:m.shape[0], :m.shape[1]].set(m)


def _padv(v):
    v = jnp.asarray(v, jnp.float32).reshape(-1)
    return jnp.zeros((PAD,), jnp.float32).at[:v.shape[0]].set(v)


def prepare_forward_params(params):
    """Hoisted, input-independent preprocessing (runs once, plain JAX):
    pack all weights into one bf16 (n, 128, 128) slab + one f32 (n, 128) vector
    slab, fold logit-scale clamp/exp into SMEM scalars, and precompute the dense
    per-batch attention bias (CPB rel-pos bias + shift mask + window mask)."""
    L = _LAYOUT
    wblocks = [None] * L["n_w"]
    vrows = [None] * L["n_v"]
    scales = []
    biases = []

    pe = params["patch"]
    wblocks[L["pe_w"]] = _padw(pe["proj_w"])
    vrows[L["pe_b"]] = _padv(pe["proj_b"])
    vrows[L["pe_g"]] = _padv(pe["norm_g"])
    vrows[L["pe_bt"]] = _padv(pe["norm_b"])

    ws = WINDOW
    N = ws * ws
    rel_idx = relative_position_index_np(ws)
    coords = jnp.asarray(relative_coords_table_np(ws))
    H = IMG_SIZE // PATCH
    bidx = 0
    for si, stage in enumerate(params["stages"]):
        heads = HEADS[si]
        for bi, blk in enumerate(stage["blocks"]):
            p = L["blocks"][bidx]; bidx += 1
            C = p["C"]
            a = blk["attn"]
            wblocks[p["wq"]] = _padw(a["qkv_w"][:, :C])
            wblocks[p["wk"]] = _padw(a["qkv_w"][:, C:2 * C])
            wblocks[p["wv"]] = _padw(a["qkv_w"][:, 2 * C:])
            vrows[p["vq"]] = _padv(a["qkv_b"][:C])
            vrows[p["vk"]] = _padv(a["qkv_b"][C:2 * C])
            vrows[p["vv"]] = _padv(a["qkv_b"][2 * C:])
            wblocks[p["wp"]] = _padw(a["proj_w"])
            vrows[p["vp"]] = _padv(a["proj_b"])
            vrows[p["n1g"]] = _padv(blk["norm1_g"])
            vrows[p["n1b"]] = _padv(blk["norm1_b"])
            for j, wi in enumerate(p["wm1"]):
                wblocks[wi] = _padw(blk["mlp_w1"][:, j * PAD:(j + 1) * PAD])
                vrows[p["m1b"][j]] = _padv(blk["mlp_b1"][j * PAD:(j + 1) * PAD])
            for j, wi in enumerate(p["wm2"]):
                wblocks[wi] = _padw(blk["mlp_w2"][j * PAD:(j + 1) * PAD, :])
            vrows[p["m2b"]] = _padv(blk["mlp_b2"])
            vrows[p["n2g"]] = _padv(blk["norm2_g"])
            vrows[p["n2b"]] = _padv(blk["norm2_b"])
            scales.append(jnp.exp(jnp.minimum(a["logit_scale"], math.log(100.0))))
            # Continuous position bias MLP (Linear-ReLU-Linear, no 2nd bias).
            hid = jnp.maximum(coords @ a["cpb_w1"] + a["cpb_b1"], 0.0)
            tbl = hid @ a["cpb_w2"]
            rel = 16.0 * jax.nn.sigmoid(tbl[rel_idx].reshape(N, N, heads).transpose(2, 0, 1))
            shift = 0 if bi % 2 == 0 else ws // 2
            s = shift if ws < H else 0          # torchvision: no shift if window covers map
            biases.append(_dense_bias(rel, H, H, ws, s))
        if "merge" in stage:
            mg = stage["merge"]
            Cin = EMBED * (2 ** si)
            for kk, wi in enumerate(L["mg_w"]):
                wblocks[wi] = _padw(mg["red_w"][kk * Cin:(kk + 1) * Cin, :])
            vrows[L["mg_g"]] = _padv(mg["norm_g"])
            vrows[L["mg_b"]] = _padv(mg["norm_b"])
            H //= 2
    vrows[L["fn_g"]] = _padv(params["norm_g"])
    vrows[L["fn_b"]] = _padv(params["norm_b"])
    wblocks[L["head_w"]] = _padw(params["head_w"])
    vrows[L["head_b"]] = _padv(params["head_b"])
    assert all(b is not None for b in wblocks) and all(v is not None for v in vrows)

    # Patch-merge row-selection matrices (per batch element, image token order).
    H0 = IMG_SIZE // PATCH
    Ho = H0 // 2
    sel = np.zeros((4, Ho * Ho, H0 * H0), np.float32)
    for i in range(Ho):
        for j in range(Ho):
            r = i * Ho + j
            sel[0, r, (2 * i) * H0 + 2 * j] = 1.0
            sel[1, r, (2 * i + 1) * H0 + 2 * j] = 1.0
            sel[2, r, (2 * i) * H0 + 2 * j + 1] = 1.0
            sel[3, r, (2 * i + 1) * H0 + 2 * j + 1] = 1.0

    sc = jnp.concatenate(scales).astype(jnp.float32)
    assert sc.shape[0] == L["n_s"]
    return {"scales": sc,
            "W": jnp.stack(wblocks).astype(jnp.bfloat16),
            "V": jnp.stack(vrows).astype(jnp.float32),
            "bias0": biases[0], "bias1": biases[1],
            "bias2": biases[2], "bias3": biases[3],
            "sel": jnp.asarray(sel)}


# ============================ deterministic params =============================
def init_params(key):
    # TODO(synk): torchvision's pretrained swin_v2 weights are not loadable here;
    # parameters are synthetic (deterministic) with the right shapes/structure.
    kit = iter(jax.random.split(key, 512))

    def w(shape, scale=0.02):
        return (scale * jax.random.normal(next(kit), shape)).astype(jnp.float32)

    P = {"patch": dict(proj_w=w((IN_CHANS * PATCH * PATCH, EMBED)),   # conv weight reshaped+T
                       proj_b=w((EMBED,)),
                       norm_g=jnp.ones((EMBED,), jnp.float32),
                       norm_b=jnp.zeros((EMBED,), jnp.float32)),
         "stages": []}
    dim = EMBED
    for si, (depth, heads) in enumerate(zip(DEPTHS, HEADS)):
        blocks = []
        for _ in range(depth):
            C = dim
            qkv_b = w((3 * C,))
            qkv_b = qkv_b.at[C:2 * C].set(0.0)                        # Swin-V2: k bias is zero
            attn = dict(qkv_w=w((C, 3 * C)), qkv_b=qkv_b,
                        proj_w=w((C, C)), proj_b=w((C,)),
                        logit_scale=jnp.full((heads,), math.log(10.0), jnp.float32),
                        cpb_w1=w((2, CPB_HIDDEN)), cpb_b1=w((CPB_HIDDEN,)),
                        cpb_w2=w((CPB_HIDDEN, heads)))
            blocks.append(dict(attn=attn,
                               norm1_g=jnp.ones((C,), jnp.float32),
                               norm1_b=jnp.zeros((C,), jnp.float32),
                               mlp_w1=w((C, MLP_RATIO * C)), mlp_b1=w((MLP_RATIO * C,)),
                               mlp_w2=w((MLP_RATIO * C, C)), mlp_b2=w((C,)),
                               norm2_g=jnp.ones((C,), jnp.float32),
                               norm2_b=jnp.zeros((C,), jnp.float32)))
        stage = dict(blocks=blocks)
        if si < len(DEPTHS) - 1:
            stage["merge"] = dict(red_w=w((4 * dim, 2 * dim)),
                                  norm_g=jnp.ones((2 * dim,), jnp.float32),
                                  norm_b=jnp.zeros((2 * dim,), jnp.float32))
            dim *= 2
        P["stages"].append(stage)
    P["norm_g"] = jnp.ones((dim,), jnp.float32)
    P["norm_b"] = jnp.zeros((dim,), jnp.float32)
    P["head_w"] = w((dim, NUM_CLASSES))
    P["head_b"] = jnp.zeros((NUM_CLASSES,), jnp.float32)
    return P


# ==================================== main =====================================
if __name__ == "__main__":
    root = jax.random.PRNGKey(0)
    pkey, xkey = jax.random.split(root)
    params = init_params(pkey)
    run_params = prepare_forward_params(params)       # one-time, hoisted out of forward
    x = jax.random.normal(xkey, (2, IN_CHANS, IMG_SIZE, IMG_SIZE), dtype=jnp.float32)

    fwd = jax.jit(swin_forward)
    logits = jax.block_until_ready(fwd(x, run_params))
    assert logits.shape == (2, NUM_CLASSES)
    assert bool(jnp.all(jnp.isfinite(logits)))
    print("KERNEL_OK")
</pallas_src>

<mosaic_0001>
module attributes {stable_mosaic.version = 11 : i64} {
  func.func @_fused_forward_kernel(%arg0: i32, %arg1: memref<12xf32, #tpu.memory_space<smem>>, %arg2: memref<1x16x128xf32, #tpu.memory_space<vmem>>, %arg3: memref<34x128x128xbf16, #tpu.memory_space<vmem>>, %arg4: memref<50x128xf32, #tpu.memory_space<vmem>>, %arg5: memref<2x16x16xf32, #tpu.memory_space<vmem>>, %arg6: memref<2x16x16xf32, #tpu.memory_space<vmem>>, %arg7: memref<4x4x4xf32, #tpu.memory_space<vmem>>, %arg8: memref<4x4x4xf32, #tpu.memory_space<vmem>>, %arg9: memref<4x4x16xf32, #tpu.memory_space<vmem>>, %arg10: memref<1x1x128xf32, #tpu.memory_space<vmem>>) attributes {dimension_semantics = [#tpu.dimension_semantics<parallel>], iteration_bounds = array<i64: 2>, scalar_prefetch = 0 : i64, scratch_operands = 0 : i64, tpu.core_type = #tpu.core_type<tc>, window_params = [{transform_indices = @transform_0, window_bounds = array<i64: 12>}, {transform_indices = @transform_1, window_bounds = array<i64: 1, 16, 128>}, {pipeline_mode = #tpu.pipeline_mode<synchronous>, transform_indices = @transform_2, window_bounds = array<i64: 34, 128, 128>}, {pipeline_mode = #tpu.pipeline_mode<synchronous>, transform_indices = @transform_3, window_bounds = array<i64: 50, 128>}, {pipeline_mode = #tpu.pipeline_mode<synchronous>, transform_indices = @transform_4, window_bounds = array<i64: 2, 16, 16>}, {pipeline_mode = #tpu.pipeline_mode<synchronous>, transform_indices = @transform_5, window_bounds = array<i64: 2, 16, 16>}, {pipeline_mode = #tpu.pipeline_mode<synchronous>, transform_indices = @transform_6, window_bounds = array<i64: 4, 4, 4>}, {pipeline_mode = #tpu.pipeline_mode<synchronous>, transform_indices = @transform_7, window_bounds = array<i64: 4, 4, 4>}, {pipeline_mode = #tpu.pipeline_mode<synchronous>, transform_indices = @transform_8, window_bounds = array<i64: 4, 4, 16>}, {transform_indices = @transform_9, window_bounds = array<i64: 1, 1, 128>}]} {
    %0 = tpu.iota {dimensions = array<i32: 1>} : vector<1x128xi32>
    %c32_i32 = arith.constant 32 : i32
    %1 = vector.broadcast %c32_i32 : i32 to vector<1x128xi32>
    %2 = arith.cmpi slt, %0, %1 : vector<1x128xi32>
    %3 = arith.extui %2 : vector<1x128xi1> to vector<1x128xi32>
    %4 = arith.sitofp %3 : vector<1x128xi32> to vector<1x128xf32>
    %c64_i32 = arith.constant 64 : i32
    %5 = vector.broadcast %c64_i32 : i32 to vector<1x128xi32>
    %6 = arith.cmpi slt, %0, %5 : vector<1x128xi32>
    %7 = arith.extui %6 : vector<1x128xi1> to vector<1x128xi32>
    %8 = arith.sitofp %7 : vector<1x128xi32> to vector<1x128xf32>
    %c0 = arith.constant 0 : index
    %c0_0 = arith.constant 0 : index
    %c0_1 = arith.constant 0 : index
    %9 = vector.load %arg2[%c0, %c0_0, %c0_1] : memref<1x16x128xf32, #tpu.memory_space<vmem>>, vector<1x16x128xf32>
    %10 = vector.shape_cast %9 : vector<1x16x128xf32> to vector<16x128xf32>
    %11 = arith.truncf %10 : vector<16x128xf32> to vector<16x128xbf16>
    %c0_2 = arith.constant 0 : index
    %c0_3 = arith.constant 0 : index
    %c0_4 = arith.constant 0 : index
    %12 = vector.load %arg3[%c0_2, %c0_3, %c0_4] : memref<34x128x128xbf16, #tpu.memory_space<vmem>>, vector<1x128x128xbf16>
    %13 = vector.shape_cast %12 : vector<1x128x128xbf16> to vector<128x128xbf16>
    %cst = arith.constant dense<0.000000e+00> : vector<16x128xf32>
    %14 = tpu.matmul %11, %13, %cst {dimension_numbers = #tpu.dot_dimension_numbers<[1], [0], [0], [1], [0, 0, 1, 1], [], []>} : vector<16x128xbf16>, vector<128x128xbf16>, vector<16x128xf32> -> vector<16x128xf32>
    %c0_5 = arith.constant 0 : index
    %c0_6 = arith.constant 0 : index
    %15 = vector.load %arg4[%c0_5, %c0_6] : memref<50x128xf32, #tpu.memory_space<vmem>>, vector<1x128xf32>
    %16 = vector.broadcast %15 : vector<1x128xf32> to vector<16x128xf32>
    %17 = arith.addf %14, %16 : vector<16x128xf32>
    %cst_7 = arith.constant dense<0.000000e+00> : vector<16xf32>
    %18 = vector.multi_reduction <add>, %17, %cst_7 [1] : vector<16x128xf32> to vector<16xf32>
    %19 = vector.shape_cast %18 : vector<16xf32> to vector<16x1xf32>
    %cst_8 = arith.constant 3.125000e-02 : f32
    %20 = vector.broadcast %cst_8 : f32 to vector<16x1xf32>
    %21 = arith.mulf %19, %20 : vector<16x1xf32>
    %22 = vector.broadcast %21 : vector<16x1xf32> to vector<16x128xf32>
    %23 = arith.subf %17, %22 : vector<16x128xf32>
    %24 = vector.broadcast %4 : vector<1x128xf32> to vector<16x128xf32>
    %25 = arith.mulf %23, %24 : vector<16x128xf32>
    %26 = arith.mulf %25, %25 : vector<16x128xf32>
    %cst_9 = arith.constant dense<0.000000e+00> : vector<16xf32>
    %27 = vector.multi_reduction <add>, %26, %cst_9 [1] : vector<16x128xf32> to vector<16xf32>
    %28 = vector.shape_cast %27 : vector<16xf32> to vector<16x1xf32>
    %cst_10 = arith.constant 3.125000e-02 : f32
    %29 = vector.broadcast %cst_10 : f32 to vector<16x1xf32>
    %30 = arith.mulf %28, %29 : vector<16x1xf32>
    %cst_11 = arith.constant 9.99999974E-6 : f32
    %31 = vector.broadcast %cst_11 : f32 to vector<16x1xf32>
    %32 = arith.addf %30, %31 : vector<16x1xf32>
    %33 = math.rsqrt %32 : vector<16x1xf32>
    %34 = vector.broadcast %33 : vector<16x1xf32> to vector<16x128xf32>
    %35 = arith.mulf %25, %34 : vector<16x128xf32>
    %c1 = arith.constant 1 : index
    %c0_12 = arith.constant 0 : index
    %36 = vector.load %arg4[%c1, %c0_12] : memref<50x128xf32, #tpu.memory_space<vmem>>, vector<1x128xf32>
    %37 = vector.broadcast %36 : vector<1x128xf32> to vector<16x128xf32>
    %38 = arith.mulf %35, %37 : vector<16x128xf32>
    %c2 = arith.constant 2 : index
    %c0_13 = arith.constant 0 : index
    %39 = vector.load %arg4[%c2, %c0_13] : memref<50x128xf32, #tpu.memory_space<vmem>>, vector<1x128xf32>
    %40 = vector.broadcast %39 : vector<1x128xf32> to vector<16x128xf32>
    %41 = arith.addf %38, %40 : vector<16x128xf32>
    %42 = arith.truncf %41 : vector<16x128xf32> to vector<16x128xbf16>
    %c1_14 = arith.constant 1 : index
    %c0_15 = arith.constant 0 : index
    %c0_16 = arith.constant 0 : index
    %43 = vector.load %arg3[%c1_14, %c0_15, %c0_16] : memref<34x128x128xbf16, #tpu.memory_space<vmem>>, vector<1x128x128xbf16>
    %44 = vector.shape_cast %43 : vector<1x128x128xbf16> to vector<128x128xbf16>
    %cst_17 = arith.constant dense<0.000000e+00> : vector<16x128xf32>
    %45 = tpu.matmul %42, %44, %cst_17 {dimension_numbers = #tpu.dot_dimension_numbers<[1], [0], [0], [1], [0, 0, 1, 1], [], []>} : vector<16x128xbf16>, vector<128x128xbf16>, vector<16x128xf32> -> vector<16x128xf32>
    %c3 = arith.constant 3 : index
    %c0_18 = arith.constant 0 : index
    %46 = vector.load %arg4[%c3, %c0_18] : memref<50x128xf32, #tpu.memory_space<vmem>>, vector<1x128xf32>
    %47 = vector.broadcast %46 : vector<1x128xf32> to vector<16x128xf32>
    %48 = arith.addf %45, %47 : vector<16x128xf32>
    %49 = arith.truncf %41 : vector<16x128xf32> to vector<16x128xbf16>
    %c2_19 = arith.constant 2 : index
    %c0_20 = arith.constant 0 : index
    %c0_21 = arith.constant 0 : index
    %50 = vector.load %arg3[%c2_19, %c0_20, %c0_21] : memref<34x128x128xbf16, #tpu.memory_space<vmem>>, vector<1x128x128xbf16>
    %51 = vector.shape_cast %50 : vector<1x128x128xbf16> to vector<128x128xbf16>
    %cst_22 = arith.constant dense<0.000000e+00> : vector<16x128xf32>
    %52 = tpu.matmul %49, %51, %cst_22 {dimension_numbers = #tpu.dot_dimension_numbers<[1], [0], [0], [1], [0, 0, 1, 1], [], []>} : vector<16x128xbf16>, vector<128x128xbf16>, vector<16x128xf32> -> vector<16x128xf32>
    %c4 = arith.constant 4 : index
    %c0_23 = arith.constant 0 : index
    %53 = vector.load %arg4[%c4, %c0_23] : memref<50x128xf32, #tpu.memory_space<vmem>>, vector<1x128xf32>
    %54 = vector.broadcast %53 : vector<1x128xf32> to vector<16x128xf32>
    %55 = arith.addf %52, %54 : vector<16x128xf32>
    %56 = arith.truncf %41 : vector<16x128xf32> to vector<16x128xbf16>
    %c3_24 = arith.constant 3 : index
    %c0_25 = arith.constant 0 : index
    %c0_26 = arith.constant 0 : index
    %57 = vector.load %arg3[%c3_24, %c0_25, %c0_26] : memref<34x128x128xbf16, #tpu.memory_space<vmem>>, vector<1x128x128xbf16>
    %58 = vector.shape_cast %57 : vector<1x128x128xbf16> to vector<128x128xbf16>
    %cst_27 = arith.constant dense<0.000000e+00> : vector<16x128xf32>
    %59 = tpu.matmul %56, %58, %cst_27 {dimension_numbers = #tpu.dot_dimension_numbers<[1], [0], [0], [1], [0, 0, 1, 1], [], []>} : vector<16x128xbf16>, vector<128x128xbf16>, vector<16x128xf32> -> vector<16x128xf32>
    %c5 = arith.constant 5 : index
    %c0_28 = arith.constant 0 : index
    %60 = vector.load %arg4[%c5, %c0_28] : memref<50x128xf32, #tpu.memory_space<vmem>>, vector<1x128xf32>
    %61 = vector.broadcast %60 : vector<1x128xf32> to vector<16x128xf32>
    %62 = arith.addf %59, %61 : vector<16x128xf32>
    %63 = vector.extract_strided_slice %48 {offsets = [0, 0], sizes = [16, 16], strides = [1, 1]} : vector<16x128xf32> to vector<16x16xf32>
    %64 = vector.extract_strided_slice %55 {offsets = [0, 0], sizes = [16, 16], strides = [1, 1]} : vector<16x128xf32> to vector<16x16xf32>
    %65 = vector.extract_strided_slice %62 {offsets = [0, 0], sizes = [16, 16], strides = [1, 1]} : vector<16x128xf32> to vector<16x16xf32>
    %66 = arith.mulf %63, %63 : vector<16x16xf32>
    %cst_29 = arith.constant dense<0.000000e+00> : vector<16xf32>
    %67 = vector.multi_reduction <add>, %66, %cst_29 [1] : vector<16x16xf32> to vector<16xf32>
    %68 = vector.shape_cast %67 : vector<16xf32> to vector<16x1xf32>
    %cst_30 = arith.constant 1.000000e-24 : f32
    %69 = vector.broadcast %cst_30 : f32 to vector<16x1xf32>
    %70 = arith.maximumf %68, %69 : vector<16x1xf32>
    %71 = math.rsqrt %70 : vector<16x1xf32>
    %72 = vector.broadcast %71 : vector<16x1xf32> to vector<16x16xf32>
    %73 = arith.mulf %63, %72 : vector<16x16xf32>
    %74 = arith.mulf %64, %64 : vector<16x16xf32>
    %cst_31 = arith.constant dense<0.000000e+00> : vector<16xf32>
    %75 = vector.multi_reduction <add>, %74, %cst_31 [1] : vector<16x16xf32> to vector<16xf32>
    %76 = vector.shape_cast %75 : vector<16xf32> to vector<16x1xf32>
    %cst_32 = arith.constant 1.000000e-24 : f32
    %77 = vector.broadcast %cst_32 : f32 to vector<16x1xf32>
    %78 = arith.maximumf %76, %77 : vector<16x1xf32>
    %79 = math.rsqrt %78 : vector<16x1xf32>
    %80 = vector.broadcast %79 : vector<16x1xf32> to vector<16x16xf32>
    %81 = arith.mulf %64, %80 : vector<16x16xf32>
    %82 = arith.truncf %73 : vector<16x16xf32> to vector<16x16xbf16>
    %83 = arith.truncf %81 : vector<16x16xf32> to vector<16x16xbf16>
    %cst_33 = arith.constant dense<0.000000e+00> : vector<16x16xf32>
    %84 = tpu.matmul %82, %83, %cst_33 {dimension_numbers = #tpu.dot_dimension_numbers<[1], [1], [0], [0], [0, 0, 1, 0], [], []>} : vector<16x16xbf16>, vector<16x16xbf16>, vector<16x16xf32> -> vector<16x16xf32>
    %c0_34 = arith.constant 0 : index
    %85 = memref.load %arg1[%c0_34] : memref<12xf32, #tpu.memory_space<smem>>
    %86 = vector.broadcast %85 : f32 to vector<16x16xf32>
    %87 = arith.mulf %84, %86 : vector<16x16xf32>
    %c0_35 = arith.constant 0 : index
    %c0_36 = arith.constant 0 : index
    %c0_37 = arith.constant 0 : index
    %88 = vector.load %arg5[%c0_35, %c0_36, %c0_37] : memref<2x16x16xf32, #tpu.memory_space<vmem>>, vector<1x16x16xf32>
    %89 = vector.shape_cast %88 : vector<1x16x16xf32> to vector<16x16xf32>
    %90 = arith.addf %87, %89 : vector<16x16xf32>
    %cst_38 = arith.constant dense<0xFF800000> : vector<16xf32>
    %91 = vector.multi_reduction <maximumf>, %90, %cst_38 [1] : vector<16x16xf32> to vector<16xf32>
    %92 = vector.shape_cast %91 : vector<16xf32> to vector<16x1xf32>
    %93 = vector.broadcast %92 : vector<16x1xf32> to vector<16x16xf32>
    %94 = arith.subf %90, %93 : vector<16x16xf32>
    %95 = math.exp %94 : vector<16x16xf32>
    %cst_39 = arith.constant dense<0.000000e+00> : vector<16xf32>
    %96 = vector.multi_reduction <add>, %95, %cst_39 [1] : vector<16x16xf32> to vector<16xf32>
    %97 = vector.shape_cast %96 : vector<16xf32> to vector<16x1xf32>
    %98 = vector.broadcast %97 : vector<16x1xf32> to vector<16x16xf32>
    %99 = arith.divf %95, %98 : vector<16x16xf32>
    %100 = arith.truncf %99 : vector<16x16xf32> to vector<16x16xbf16>
    %101 = arith.truncf %65 : vector<16x16xf32> to vector<16x16xbf16>
    %cst_40 = arith.constant dense<0.000000e+00> : vector<16x16xf32>
    %102 = tpu.matmul %100, %101, %cst_40 {dimension_numbers = #tpu.dot_dimension_numbers<[1], [0], [0], [1], [0, 0, 1, 1], [], []>} : vector<16x16xbf16>, vector<16x16xbf16>, vector<16x16xf32> -> vector<16x16xf32>
    %103 = vector.extract_strided_slice %48 {offsets = [0, 16], sizes = [16, 16], strides = [1, 1]} : vector<16x128xf32> to vector<16x16xf32>
    %104 = vector.extract_strided_slice %55 {offsets = [0, 16], sizes = [16, 16], strides = [1, 1]} : vector<16x128xf32> to vector<16x16xf32>
    %105 = vector.extract_strided_slice %62 {offsets = [0, 16], sizes = [16, 16], strides = [1, 1]} : vector<16x128xf32> to vector<16x16xf32>
    %106 = arith.mulf %103, %103 : vector<16x16xf32>
    %cst_41 = arith.constant dense<0.000000e+00> : vector<16xf32>
    %107 = vector.multi_reduction <add>, %106, %cst_41 [1] : vector<16x16xf32> to vector<16xf32>
    %108 = vector.shape_cast %107 : vector<16xf32> to vector<16x1xf32>
    %cst_42 = arith.constant 1.000000e-24 : f32
    %109 = vector.broadcast %cst_42 : f32 to vector<16x1xf32>
    %110 = arith.maximumf %108, %109 : vector<16x1xf32>
    %111 = math.rsqrt %110 : vector<16x1xf32>
    %112 = vector.broadcast %111 : vector<16x1xf32> to vector<16x16xf32>
    %113 = arith.mulf %103, %112 : vector<16x16xf32>
    %114 = arith.mulf %104, %104 : vector<16x16xf32>
    %cst_43 = arith.constant dense<0.000000e+00> : vector<16xf32>
    %115 = vector.multi_reduction <add>, %114, %cst_43 [1] : vector<16x16xf32> to vector<16xf32>
    %116 = vector.shape_cast %115 : vector<16xf32> to vector<16x1xf32>
    %cst_44 = arith.constant 1.000000e-24 : f32
    %117 = vector.broadcast %cst_44 : f32 to vector<16x1xf32>
    %118 = arith.maximumf %116, %117 : vector<16x1xf32>
    %119 = math.rsqrt %118 : vector<16x1xf32>
    %120 = vector.broadcast %119 : vector<16x1xf32> to vector<16x16xf32>
    %121 = arith.mulf %104, %120 : vector<16x16xf32>
    %122 = arith.truncf %113 : vector<16x16xf32> to vector<16x16xbf16>
    %123 = arith.truncf %121 : vector<16x16xf32> to vector<16x16xbf16>
    %cst_45 = arith.constant dense<0.000000e+00> : vector<16x16xf32>
    %124 = tpu.matmul %122, %123, %cst_45 {dimension_numbers = #tpu.dot_dimension_numbers<[1], [1], [0], [0], [0, 0, 1, 0], [], []>} : vector<16x16xbf16>, vector<16x16xbf16>, vector<16x16xf32> -> vector<16x16xf32>
    %c1_46 = arith.constant 1 : index
    %125 = memref.load %arg1[%c1_46] : memref<12xf32, #tpu.memory_space<smem>>
    %126 = vector.broadcast %125 : f32 to vector<16x16xf32>
    %127 = arith.mulf %124, %126 : vector<16x16xf32>
    %c1_47 = arith.constant 1 : index
    %c0_48 = arith.constant 0 : index
    %c0_49 = arith.constant 0 : index
    %128 = vector.load %arg5[%c1_47, %c0_48, %c0_49] : memref<2x16x16xf32, #tpu.memory_space<vmem>>, vector<1x16x16xf32>
    %129 = vector.shape_cast %128 : vector<1x16x16xf32> to vector<16x16xf32>
    %130 = arith.addf %127, %129 : vector<16x16xf32>
    %cst_50 = arith.constant dense<0xFF800000> : vector<16xf32>
    %131 = vector.multi_reduction <maximumf>, %130, %cst_50 [1] : vector<16x16xf32> to vector<16xf32>
    %132 = vector.shape_cast %131 : vector<16xf32> to vector<16x1xf32>
    %133 = vector.broadcast %132 : vector<16x1xf32> to vector<16x16xf32>
    %134 = arith.subf %130, %133 : vector<16x16xf32>
    %135 = math.exp %134 : vector<16x16xf32>
    %cst_51 = arith.constant dense<0.000000e+00> : vector<16xf32>
    %136 = vector.multi_reduction <add>, %135, %cst_51 [1] : vector<16x16xf32> to vector<16xf32>
    %137 = vector.shape_cast %136 : vector<16xf32> to vector<16x1xf32>
    %138 = vector.broadcast %137 : vector<16x1xf32> to vector<16x16xf32>
    %139 = arith.divf %135, %138 : vector<16x16xf32>
    %140 = arith.truncf %139 : vector<16x16xf32> to vector<16x16xbf16>
    %141 = arith.truncf %105 : vector<16x16xf32> to vector<16x16xbf16>
    %cst_52 = arith.constant dense<0.000000e+00> : vector<16x16xf32>
    %142 = tpu.matmul %140, %141, %cst_52 {dimension_numbers = #tpu.dot_dimension_numbers<[1], [0], [0], [1], [0, 0, 1, 1], [], []>} : vector<16x16xbf16>, vector<16x16xbf16>, vector<16x16xf32> -> vector<16x16xf32>
    %cst_53 = arith.constant 0.000000e+00 : f32
    %143 = vector.broadcast %cst_53 : f32 to vector<16x96xf32>
    %144 = tpu.concatenate %102, %142, %143 in 1 : vector<16x16xf32>, vector<16x16xf32>, vector<16x96xf32> -> vector<16x128xf32>
    %145 = arith.truncf %144 : vector<16x128xf32> to vector<16x128xbf16>
    %c4_54 = arith.constant 4 : index
    %c0_55 = arith.constant 0 : index
    %c0_56 = arith.constant 0 : index
    %146 = vector.load %arg3[%c4_54, %c0_55, %c0_56] : memref<34x128x128xbf16, #tpu.memory_space<vmem>>, vector<1x128x128xbf16>
    %147 = vector.shape_cast %146 : vector<1x128x128xbf16> to vector<128x128xbf16>
    %cst_57 = arith.constant dense<0.000000e+00> : vector<16x128xf32>
    %148 = tpu.matmul %145, %147, %cst_57 {dimension_numbers = #tpu.dot_dimension_numbers<[1], [0], [0], [1], [0, 0, 1, 1], [], []>} : vector<16x128xbf16>, vector<128x128xbf16>, vector<16x128xf32> -> vector<16x128xf32>
    %c6 = arith.constant 6 : index
    %c0_58 = arith.constant 0 : index
    %149 = vector.load %arg4[%c6, %c0_58] : memref<50x128xf32, #tpu.memory_space<vmem>>, vector<1x128xf32>
    %150 = vector.broadcast %149 : vector<1x128xf32> to vector<16x128xf32>
    %151 = arith.addf %148, %150 : vector<16x128xf32>
    %cst_59 = arith.constant dense<0.000000e+00> : vector<16xf32>
    %152 = vector.multi_reduction <add>, %151, %cst_59 [1] : vector<16x128xf32> to vector<16xf32>
    %153 = vector.shape_cast %152 : vector<16xf32> to vector<16x1xf32>
    %cst_60 = arith.constant 3.125000e-02 : f32
    %154 = vector.broadcast %cst_60 : f32 to vector<16x1xf32>
    %155 = arith.mulf %153, %154 : vector<16x1xf32>
    %156 = vector.broadcast %155 : vector<16x1xf32> to vector<16x128xf32>
    %157 = arith.subf %151, %156 : vector<16x128xf32>
    %158 = vector.broadcast %4 : vector<1x128xf32> to vector<16x128xf32>
    %159 = arith.mulf %157, %158 : vector<16x128xf32>
    %160 = arith.mulf %159, %159 : vector<16x128xf32>
    %cst_61 = arith.constant dense<0.000000e+00> : vector<16xf32>
    %161 = vector.multi_reduction <add>, %160, %cst_61 [1] : vector<16x128xf32> to vector<16xf32>
    %162 = vector.shape_cast %161 : vector<16xf32> to vector<16x1xf32>
    %cst_62 = arith.constant 3.125000e-02 : f32
    %163 = vector.broadcast %cst_62 : f32 to vector<16x1xf32>
    %164 = arith.mulf %162, %163 : vector<16x1xf32>
    %cst_63 = arith.constant 9.99999974E-6 : f32
    %165 = vector.broadcast %cst_63 : f32 to vector<16x1xf32>
    %166 = arith.addf %164, %165 : vector<16x1xf32>
    %167 = math.rsqrt %166 : vector<16x1xf32>
    %168 = vector.broadcast %167 : vector<16x1xf32> to vector<16x128xf32>
    %169 = arith.mulf %159, %168 : vector<16x128xf32>
    %c7 = arith.constant 7 : index
    %c0_64 = arith.constant 0 : index
    %170 = vector.load %arg4[%c7, %c0_64] : memref<50x128xf32, #tpu.memory_space<vmem>>, vector<1x128xf32>
    %171 = vector.broadcast %170 : vector<1x128xf32> to vector<16x128xf32>
    %172 = arith.mulf %169, %171 : vector<16x128xf32>
    %c8 = arith.constant 8 : index
    %c0_65 = arith.constant 0 : index
    %173 = vector.load %arg4[%c8, %c0_65] : memref<50x128xf32, #tpu.memory_space<vmem>>, vector<1x128xf32>
    %174 = vector.broadcast %173 : vector<1x128xf32> to vector<16x128xf32>
    %175 = arith.addf %172, %174 : vector<16x128xf32>
    %176 = arith.addf %41, %175 : vector<16x128xf32>
    %177 = arith.truncf %176 : vector<16x128xf32> to vector<16x128xbf16>
    %c5_66 = arith.constant 5 : index
    %c0_67 = arith.constant 0 : index
    %c0_68 = arith.constant 0 : index
    %178 = vector.load %arg3[%c5_66, %c0_67, %c0_68] : memref<34x128x128xbf16, #tpu.memory_space<vmem>>, vector<1x128x128xbf16>
    %179 = vector.shape_cast %178 : vector<1x128x128xbf16> to vector<128x128xbf16>
    %cst_69 = arith.constant dense<0.000000e+00> : vector<16x128xf32>
    %180 = tpu.matmul %177, %179, %cst_69 {dimension_numbers = #tpu.dot_dimension_numbers<[1], [0], [0], [1], [0, 0, 1, 1], [], []>} : vector<16x128xbf16>, vector<128x128xbf16>, vector<16x128xf32> -> vector<16x128xf32>
    %c9 = arith.constant 9 : index
    %c0_70 = arith.constant 0 : index
    %181 = vector.load %arg4[%c9, %c0_70] : memref<50x128xf32, #tpu.memory_space<vmem>>, vector<1x128xf32>
    %182 = vector.broadcast %181 : vector<1x128xf32> to vector<16x128xf32>
    %183 = arith.addf %180, %182 : vector<16x128xf32>
    %184 = arith.mulf %183, %183 : vector<16x128xf32>
    %185 = arith.mulf %183, %184 : vector<16x128xf32>
    %cst_71 = arith.constant 4.471500e-02 : f32
    %186 = vector.broadcast %cst_71 : f32 to vector<16x128xf32>
    %187 = arith.mulf %186, %185 : vector<16x128xf32>
    %188 = arith.addf %183, %187 : vector<16x128xf32>
    %cst_72 = arith.constant 0.797884583 : f32
    %189 = vector.broadcast %cst_72 : f32 to vector<16x128xf32>
    %190 = arith.mulf %189, %188 : vector<16x128xf32>
    %191 = math.tanh %190 : vector<16x128xf32>
    %cst_73 = arith.constant 1.000000e+00 : f32
    %192 = vector.broadcast %cst_73 : f32 to vector<16x128xf32>
    %193 = arith.addf %192, %191 : vector<16x128xf32>
    %cst_74 = arith.constant 5.000000e-01 : f32
    %194 = vector.broadcast %cst_74 : f32 to vector<16x128xf32>
    %195 = arith.mulf %194, %193 : vector<16x128xf32>
    %196 = arith.mulf %183, %195 : vector<16x128xf32>
    %c10 = arith.constant 10 : index
    %c0_75 = arith.constant 0 : index
    %197 = vector.load %arg4[%c10, %c0_75] : memref<50x128xf32, #tpu.memory_space<vmem>>, vector<1x128xf32>
    %198 = arith.truncf %196 : vector<16x128xf32> to vector<16x128xbf16>
    %c6_76 = arith.constant 6 : index
    %c0_77 = arith.constant 0 : index
    %c0_78 = arith.constant 0 : index
    %199 = vector.load %arg3[%c6_76, %c0_77, %c0_78] : memref<34x128x128xbf16, #tpu.memory_space<vmem>>, vector<1x128x128xbf16>
    %200 = vector.shape_cast %199 : vector<1x128x128xbf16> to vector<128x128xbf16>
    %cst_79 = arith.constant dense<0.000000e+00> : vector<16x128xf32>
    %201 = tpu.matmul %198, %200, %cst_79 {dimension_numbers = #tpu.dot_dimension_numbers<[1], [0], [0], [1], [0, 0, 1, 1], [], []>} : vector<16x128xbf16>, vector<128x128xbf16>, vector<16x128xf32> -> vector<16x128xf32>
    %202 = vector.broadcast %197 : vector<1x128xf32> to vector<16x128xf32>
    %203 = arith.addf %202, %201 : vector<16x128xf32>
    %cst_80 = arith.constant dense<0.000000e+00> : vector<16xf32>
    %204 = vector.multi_reduction <add>, %203, %cst_80 [1] : vector<16x128xf32> to vector<16xf32>
    %205 = vector.shape_cast %204 : vector<16xf32> to vector<16x1xf32>
    %cst_81 = arith.constant 3.125000e-02 : f32
    %206 = vector.broadcast %cst_81 : f32 to vector<16x1xf32>
    %207 = arith.mulf %205, %206 : vector<16x1xf32>
    %208 = vector.broadcast %207 : vector<16x1xf32> to vector<16x128xf32>
    %209 = arith.subf %203, %208 : vector<16x128xf32>
    %210 = vector.broadcast %4 : vector<1x128xf32> to vector<16x128xf32>
    %211 = arith.mulf %209, %210 : vector<16x128xf32>
    %212 = arith.mulf %211, %211 : vector<16x128xf32>
    %cst_82 = arith.constant dense<0.000000e+00> : vector<16xf32>
    %213 = vector.multi_reduction <add>, %212, %cst_82 [1] : vector<16x128xf32> to vector<16xf32>
    %214 = vector.shape_cast %213 : vector<16xf32> to vector<16x1xf32>
    %cst_83 = arith.constant 3.125000e-02 : f32
    %215 = vector.broadcast %cst_83 : f32 to vector<16x1xf32>
    %216 = arith.mulf %214, %215 : vector<16x1xf32>
    %cst_84 = arith.constant 9.99999974E-6 : f32
    %217 = vector.broadcast %cst_84 : f32 to vector<16x1xf32>
    %218 = arith.addf %216, %217 : vector<16x1xf32>
    %219 = math.rsqrt %218 : vector<16x1xf32>
    %220 = vector.broadcast %219 : vector<16x1xf32> to vector<16x128xf32>
    %221 = arith.mulf %211, %220 : vector<16x128xf32>
    %c11 = arith.constant 11 : index
    %c0_85 = arith.constant 0 : index
    %222 = vector.load %arg4[%c11, %c0_85] : memref<50x128xf32, #tpu.memory_space<vmem>>, vector<1x128xf32>
    %223 = vector.broadcast %222 : vector<1x128xf32> to vector<16x128xf32>
    %224 = arith.mulf %221, %223 : vector<16x128xf32>
    %c12 = arith.constant 12 : index
    %c0_86 = arith.constant 0 : index
    %225 = vector.load %arg4[%c12, %c0_86] : memref<50x128xf32, #tpu.memory_space<vmem>>, vector<1x128xf32>
    %226 = vector.broadcast %225 : vector<1x128xf32> to vector<16x128xf32>
    %227 = arith.addf %224, %226 : vector<16x128xf32>
    %228 = arith.addf %176, %227 : vector<16x128xf32>
    %229 = arith.truncf %228 : vector<16x128xf32> to vector<16x128xbf16>
    %c7_87 = arith.constant 7 : index
    %c0_88 = arith.constant 0 : index
    %c0_89 = arith.constant 0 : index
    %230 = vector.load %arg3[%c7_87, %c0_88, %c0_89] : memref<34x128x128xbf16, #tpu.memory_space<vmem>>, vector<1x128x128xbf16>
    %231 = vector.shape_cast %230 : vector<1x128x128xbf16> to vector<128x128xbf16>
    %cst_90 = arith.constant dense<0.000000e+00> : vector<16x128xf32>
    %232 = tpu.matmul %229, %231, %cst_90 {dimension_numbers = #tpu.dot_dimension_numbers<[1], [0], [0], [1], [0, 0, 1, 1], [], []>} : vector<16x128xbf16>, vector<128x128xbf16>, vector<16x128xf32> -> vector<16x128xf32>
    %c13 = arith.constant 13 : index
    %c0_91 = arith.constant 0 : index
    %233 = vector.load %arg4[%c13, %c0_91] : memref<50x128xf32, #tpu.memory_space<vmem>>, vector<1x128xf32>
    %234 = vector.broadcast %233 : vector<1x128xf32> to vector<16x128xf32>
    %235 = arith.addf %232, %234 : vector<16x128xf32>
    %236 = arith.truncf %228 : vector<16x128xf32> to vector<16x128xbf16>
    %c8_92 = arith.constant 8 : index
    %c0_93 = arith.constant 0 : index
    %c0_94 = arith.constant 0 : index
    %237 = vector.load %arg3[%c8_92, %c0_93, %c0_94] : memref<34x128x128xbf16, #tpu.memory_space<vmem>>, vector<1x128x128xbf16>
    %238 = vector.shape_cast %237 : vector<1x128x128xbf16> to vector<128x128xbf16>
    %cst_95 = arith.constant dense<0.000000e+00> : vector<16x128xf32>
    %239 = tpu.matmul %236, %238, %cst_95 {dimension_numbers = #tpu.dot_dimension_numbers<[1], [0], [0], [1], [0, 0, 1, 1], [], []>} : vector<16x128xbf16>, vector<128x128xbf16>, vector<16x128xf32> -> vector<16x128xf32>
    %c14 = arith.constant 14 : index
    %c0_96 = arith.constant 0 : index
    %240 = vector.load %arg4[%c14, %c0_96] : memref<50x128xf32, #tpu.memory_space<vmem>>, vector<1x128xf32>
    %241 = vector.broadcast %240 : vector<1x128xf32> to vector<16x128xf32>
    %242 = arith.addf %239, %241 : vector<16x128xf32>
    %243 = arith.truncf %228 : vector<16x128xf32> to vector<16x128xbf16>
    %c9_97 = arith.constant 9 : index
    %c0_98 = arith.constant 0 : index
    %c0_99 = arith.constant 0 : index
    %244 = vector.load %arg3[%c9_97, %c0_98, %c0_99] : memref<34x128x128xbf16, #tpu.memory_space<vmem>>, vector<1x128x128xbf16>
    %245 = vector.shape_cast %244 : vector<1x128x128xbf16> to vector<128x128xbf16>
    %cst_100 = arith.constant dense<0.000000e+00> : vector<16x128xf32>
    %246 = tpu.matmul %243, %245, %cst_100 {dimension_numbers = #tpu.dot_dimension_numbers<[1], [0], [0], [1], [0, 0, 1, 1], [], []>} : vector<16x128xbf16>, vector<128x128xbf16>, vector<16x128xf32> -> vector<16x128xf32>
    %c15 = arith.constant 15 : index
    %c0_101 = arith.constant 0 : index
    %247 = vector.load %arg4[%c15, %c0_101] : memref<50x128xf32, #tpu.memory_space<vmem>>, vector<1x128xf32>
    %248 = vector.broadcast %247 : vector<1x128xf32> to vector<16x128xf32>
    %249 = arith.addf %246, %248 : vector<16x128xf32>
    %250 = vector.extract_strided_slice %235 {offsets = [0, 0], sizes = [16, 16], strides = [1, 1]} : vector<16x128xf32> to vector<16x16xf32>
    %251 = vector.extract_strided_slice %242 {offsets = [0, 0], sizes = [16, 16], strides = [1, 1]} : vector<16x128xf32> to vector<16x16xf32>
    %252 = vector.extract_strided_slice %249 {offsets = [0, 0], sizes = [16, 16], strides = [1, 1]} : vector<16x128xf32> to vector<16x16xf32>
    %253 = arith.mulf %250, %250 : vector<16x16xf32>
    %cst_102 = arith.constant dense<0.000000e+00> : vector<16xf32>
    %254 = vector.multi_reduction <add>, %253, %cst_102 [1] : vector<16x16xf32> to vector<16xf32>
    %255 = vector.shape_cast %254 : vector<16xf32> to vector<16x1xf32>
    %cst_103 = arith.constant 1.000000e-24 : f32
    %256 = vector.broadcast %cst_103 : f32 to vector<16x1xf32>
    %257 = arith.maximumf %255, %256 : vector<16x1xf32>
    %258 = math.rsqrt %257 : vector<16x1xf32>
    %259 = vector.broadcast %258 : vector<16x1xf32> to vector<16x16xf32>
    %260 = arith.mulf %250, %259 : vector<16x16xf32>
    %261 = arith.mulf %251, %251 : vector<16x16xf32>
    %cst_104 = arith.constant dense<0.000000e+00> : vector<16xf32>
    %262 = vector.multi_reduction <add>, %261, %cst_104 [1] : vector<16x16xf32> to vector<16xf32>
    %263 = vector.shape_cast %262 : vector<16xf32> to vector<16x1xf32>
    %cst_105 = arith.constant 1.000000e-24 : f32
    %264 = vector.broadcast %cst_105 : f32 to vector<16x1xf32>
    %265 = arith.maximumf %263, %264 : vector<16x1xf32>
    %266 = math.rsqrt %265 : vector<16x1xf32>
    %267 = vector.broadcast %266 : vector<16x1xf32> to vector<16x16xf32>
    %268 = arith.mulf %251, %267 : vector<16x16xf32>
    %269 = arith.truncf %260 : vector<16x16xf32> to vector<16x16xbf16>
    %270 = arith.truncf %268 : vector<16x16xf32> to vector<16x16xbf16>
    %cst_106 = arith.constant dense<0.000000e+00> : vector<16x16xf32>
    %271 = tpu.matmul %269, %270, %cst_106 {dimension_numbers = #tpu.dot_dimension_numbers<[1], [1], [0], [0], [0, 0, 1, 0], [], []>} : vector<16x16xbf16>, vector<16x16xbf16>, vector<16x16xf32> -> vector<16x16xf32>
    %c2_107 = arith.constant 2 : index
    %272 = memref.load %arg1[%c2_107] : memref<12xf32, #tpu.memory_space<smem>>
    %273 = vector.broadcast %272 : f32 to vector<16x16xf32>
    %274 = arith.mulf %271, %273 : vector<16x16xf32>
    %c0_108 = arith.constant 0 : index
    %c0_109 = arith.constant 0 : index
    %c0_110 = arith.constant 0 : index
    %275 = vector.load %arg6[%c0_108, %c0_109, %c0_110] : memref<2x16x16xf32, #tpu.memory_space<vmem>>, vector<1x16x16xf32>
    %276 = vector.shape_cast %275 : vector<1x16x16xf32> to vector<16x16xf32>
    %277 = arith.addf %274, %276 : vector<16x16xf32>
    %cst_111 = arith.constant dense<0xFF800000> : vector<16xf32>
    %278 = vector.multi_reduction <maximumf>, %277, %cst_111 [1] : vector<16x16xf32> to vector<16xf32>
    %279 = vector.shape_cast %278 : vector<16xf32> to vector<16x1xf32>
    %280 = vector.broadcast %279 : vector<16x1xf32> to vector<16x16xf32>
    %281 = arith.subf %277, %280 : vector<16x16xf32>
    %282 = math.exp %281 : vector<16x16xf32>
    %cst_112 = arith.constant dense<0.000000e+00> : vector<16xf32>
    %283 = vector.multi_reduction <add>, %282, %cst_112 [1] : vector<16x16xf32> to vector<16xf32>
    %284 = vector.shape_cast %283 : vector<16xf32> to vector<16x1xf32>
    %285 = vector.broadcast %284 : vector<16x1xf32> to vector<16x16xf32>
    %286 = arith.divf %282, %285 : vector<16x16xf32>
    %287 = arith.truncf %286 : vector<16x16xf32> to vector<16x16xbf16>
    %288 = arith.truncf %252 : vector<16x16xf32> to vector<16x16xbf16>
    %cst_113 = arith.constant dense<0.000000e+00> : vector<16x16xf32>
    %289 = tpu.matmul %287, %288, %cst_113 {dimension_numbers = #tpu.dot_dimension_numbers<[1], [0], [0], [1], [0, 0, 1, 1], [], []>} : vector<16x16xbf16>, vector<16x16xbf16>, vector<16x16xf32> -> vector<16x16xf32>
    %290 = vector.extract_strided_slice %235 {offsets = [0, 16], sizes = [16, 16], strides = [1, 1]} : vector<16x128xf32> to vector<16x16xf32>
    %291 = vector.extract_strided_slice %242 {offsets = [0, 16], sizes = [16, 16], strides = [1, 1]} : vector<16x128xf32> to vector<16x16xf32>
    %292 = vector.extract_strided_slice %249 {offsets = [0, 16], sizes = [16, 16], strides = [1, 1]} : vector<16x128xf32> to vector<16x16xf32>
    %293 = arith.mulf %290, %290 : vector<16x16xf32>
    %cst_114 = arith.constant dense<0.000000e+00> : vector<16xf32>
    %294 = vector.multi_reduction <add>, %293, %cst_114 [1] : vector<16x16xf32> to vector<16xf32>
    %295 = vector.shape_cast %294 : vector<16xf32> to vector<16x1xf32>
    %cst_115 = arith.constant 1.000000e-24 : f32
    %296 = vector.broadcast %cst_115 : f32 to vector<16x1xf32>
    %297 = arith.maximumf %295, %296 : vector<16x1xf32>
    %298 = math.rsqrt %297 : vector<16x1xf32>
    %299 = vector.broadcast %298 : vector<16x1xf32> to vector<16x16xf32>
    %300 = arith.mulf %290, %299 : vector<16x16xf32>
    %301 = arith.mulf %291, %291 : vector<16x16xf32>
    %cst_116 = arith.constant dense<0.000000e+00> : vector<16xf32>
    %302 = vector.multi_reduction <add>, %301, %cst_116 [1] : vector<16x16xf32> to vector<16xf32>
    %303 = vector.shape_cast %302 : vector<16xf32> to vector<16x1xf32>
    %cst_117 = arith.constant 1.000000e-24 : f32
    %304 = vector.broadcast %cst_117 : f32 to vector<16x1xf32>
    %305 = arith.maximumf %303, %304 : vector<16x1xf32>
    %306 = math.rsqrt %305 : vector<16x1xf32>
    %307 = vector.broadcast %306 : vector<16x1xf32> to vector<16x16xf32>
    %308 = arith.mulf %291, %307 : vector<16x16xf32>
    %309 = arith.truncf %300 : vector<16x16xf32> to vector<16x16xbf16>
    %310 = arith.truncf %308 : vector<16x16xf32> to vector<16x16xbf16>
    %cst_118 = arith.constant dense<0.000000e+00> : vector<16x16xf32>
    %311 = tpu.matmul %309, %310, %cst_118 {dimension_numbers = #tpu.dot_dimension_numbers<[1], [1], [0], [0], [0, 0, 1, 0], [], []>} : vector<16x16xbf16>, vector<16x16xbf16>, vector<16x16xf32> -> vector<16x16xf32>
    %c3_119 = arith.constant 3 : index
    %312 = memref.load %arg1[%c3_119] : memref<12xf32, #tpu.memory_space<smem>>
    %313 = vector.broadcast %312 : f32 to vector<16x16xf32>
    %314 = arith.mulf %311, %313 : vector<16x16xf32>
    %c1_120 = arith.constant 1 : index
    %c0_121 = arith.constant 0 : index
    %c0_122 = arith.constant 0 : index
    %315 = vector.load %arg6[%c1_120, %c0_121, %c0_122] : memref<2x16x16xf32, #tpu.memory_space<vmem>>, vector<1x16x16xf32>
    %316 = vector.shape_cast %315 : vector<1x16x16xf32> to vector<16x16xf32>
    %317 = arith.addf %314, %316 : vector<16x16xf32>
    %cst_123 = arith.constant dense<0xFF800000> : vector<16xf32>
    %318 = vector.multi_reduction <maximumf>, %317, %cst_123 [1] : vector<16x16xf32> to vector<16xf32>
    %319 = vector.shape_cast %318 : vector<16xf32> to vector<16x1xf32>
    %320 = vector.broadcast %319 : vector<16x1xf32> to vector<16x16xf32>
    %321 = arith.subf %317, %320 : vector<16x16xf32>
    %322 = math.exp %321 : vector<16x16xf32>
    %cst_124 = arith.constant dense<0.000000e+00> : vector<16xf32>
    %323 = vector.multi_reduction <add>, %322, %cst_124 [1] : vector<16x16xf32> to vector<16xf32>
    %324 = vector.shape_cast %323 : vector<16xf32> to vector<16x1xf32>
    %325 = vector.broadcast %324 : vector<16x1xf32> to vector<16x16xf32>
    %326 = arith.divf %322, %325 : vector<16x16xf32>
    %327 = arith.truncf %326 : vector<16x16xf32> to vector<16x16xbf16>
    %328 = arith.truncf %292 : vector<16x16xf32> to vector<16x16xbf16>
    %cst_125 = arith.constant dense<0.000000e+00> : vector<16x16xf32>
    %329 = tpu.matmul %327, %328, %cst_125 {dimension_numbers = #tpu.dot_dimension_numbers<[1], [0], [0], [1], [0, 0, 1, 1], [], []>} : vector<16x16xbf16>, vector<16x16xbf16>, vector<16x16xf32> -> vector<16x16xf32>
    %cst_126 = arith.constant 0.000000e+00 : f32
    %330 = vector.broadcast %cst_126 : f32 to vector<16x96xf32>
    %331 = tpu.concatenate %289, %329, %330 in 1 : vector<16x16xf32>, vector<16x16xf32>, vector<16x96xf32> -> vector<16x128xf32>
    %332 = arith.truncf %331 : vector<16x128xf32> to vector<16x128xbf16>
    %c10_127 = arith.constant 10 : index
    %c0_128 = arith.constant 0 : index
    %c0_129 = arith.constant 0 : index
    %333 = vector.load %arg3[%c10_127, %c0_128, %c0_129] : memref<34x128x128xbf16, #tpu.memory_space<vmem>>, vector<1x128x128xbf16>
    %334 = vector.shape_cast %333 : vector<1x128x128xbf16> to vector<128x128xbf16>
    %cst_130 = arith.constant dense<0.000000e+00> : vector<16x128xf32>
    %335 = tpu.matmul %332, %334, %cst_130 {dimension_numbers = #tpu.dot_dimension_numbers<[1], [0], [0], [1], [0, 0, 1, 1], [], []>} : vector<16x128xbf16>, vector<128x128xbf16>, vector<16x128xf32> -> vector<16x128xf32>
    %c16 = arith.constant 16 : index
    %c0_131 = arith.constant 0 : index
    %336 = vector.load %arg4[%c16, %c0_131] : memref<50x128xf32, #tpu.memory_space<vmem>>, vector<1x128xf32>
    %337 = vector.broadcast %336 : vector<1x128xf32> to vector<16x128xf32>
    %338 = arith.addf %335, %337 : vector<16x128xf32>
    %cst_132 = arith.constant dense<0.000000e+00> : vector<16xf32>
    %339 = vector.multi_reduction <add>, %338, %cst_132 [1] : vector<16x128xf32> to vector<16xf32>
    %340 = vector.shape_cast %339 : vector<16xf32> to vector<16x1xf32>
    %cst_133 = arith.constant 3.125000e-02 : f32
    %341 = vector.broadcast %cst_133 : f32 to vector<16x1xf32>
    %342 = arith.mulf %340, %341 : vector<16x1xf32>
    %343 = vector.broadcast %342 : vector<16x1xf32> to vector<16x128xf32>
    %344 = arith.subf %338, %343 : vector<16x128xf32>
    %345 = vector.broadcast %4 : vector<1x128xf32> to vector<16x128xf32>
    %346 = arith.mulf %344, %345 : vector<16x128xf32>
    %347 = arith.mulf %346, %346 : vector<16x128xf32>
    %cst_134 = arith.constant dense<0.000000e+00> : vector<16xf32>
    %348 = vector.multi_reduction <add>, %347, %cst_134 [1] : vector<16x128xf32> to vector<16xf32>
    %349 = vector.shape_cast %348 : vector<16xf32> to vector<16x1xf32>
    %cst_135 = arith.constant 3.125000e-02 : f32
    %350 = vector.broadcast %cst_135 : f32 to vector<16x1xf32>
    %351 = arith.mulf %349, %350 : vector<16x1xf32>
    %cst_136 = arith.constant 9.99999974E-6 : f32
    %352 = vector.broadcast %cst_136 : f32 to vector<16x1xf32>
    %353 = arith.addf %351, %352 : vector<16x1xf32>
    %354 = math.rsqrt %353 : vector<16x1xf32>
    %355 = vector.broadcast %354 : vector<16x1xf32> to vector<16x128xf32>
    %356 = arith.mulf %346, %355 : vector<16x128xf32>
    %c17 = arith.constant 17 : index
    %c0_137 = arith.constant 0 : index
    %357 = vector.load %arg4[%c17, %c0_137] : memref<50x128xf32, #tpu.memory_space<vmem>>, vector<1x128xf32>
    %358 = vector.broadcast %357 : vector<1x128xf32> to vector<16x128xf32>
    %359 = arith.mulf %356, %358 : vector<16x128xf32>
    %c18 = arith.constant 18 : index
    %c0_138 = arith.constant 0 : index
    %360 = vector.load %arg4[%c18, %c0_138] : memref<50x128xf32, #tpu.memory_space<vmem>>, vector<1x128xf32>
    %361 = vector.broadcast %360 : vector<1x128xf32> to vector<16x128xf32>
    %362 = arith.addf %359, %361 : vector<16x128xf32>
    %363 = arith.addf %228, %362 : vector<16x128xf32>
    %364 = arith.truncf %363 : vector<16x128xf32> to vector<16x128xbf16>
    %c11_139 = arith.constant 11 : index
    %c0_140 = arith.constant 0 : index
    %c0_141 = arith.constant 0 : index
    %365 = vector.load %arg3[%c11_139, %c0_140, %c0_141] : memref<34x128x128xbf16, #tpu.memory_space<vmem>>, vector<1x128x128xbf16>
    %366 = vector.shape_cast %365 : vector<1x128x128xbf16> to vector<128x128xbf16>
    %cst_142 = arith.constant dense<0.000000e+00> : vector<16x128xf32>
    %367 = tpu.matmul %364, %366, %cst_142 {dimension_numbers = #tpu.dot_dimension_numbers<[1], [0], [0], [1], [0, 0, 1, 1], [], []>} : vector<16x128xbf16>, vector<128x128xbf16>, vector<16x128xf32> -> vector<16x128xf32>
    %c19 = arith.constant 19 : index
    %c0_143 = arith.constant 0 : index
    %368 = vector.load %arg4[%c19, %c0_143] : memref<50x128xf32, #tpu.memory_space<vmem>>, vector<1x128xf32>
    %369 = vector.broadcast %368 : vector<1x128xf32> to vector<16x128xf32>
    %370 = arith.addf %367, %369 : vector<16x128xf32>
    %371 = arith.mulf %370, %370 : vector<16x128xf32>
    %372 = arith.mulf %370, %371 : vector<16x128xf32>
    %cst_144 = arith.constant 4.471500e-02 : f32
    %373 = vector.broadcast %cst_144 : f32 to vector<16x128xf32>
    %374 = arith.mulf %373, %372 : vector<16x128xf32>
    %375 = arith.addf %370, %374 : vector<16x128xf32>
    %cst_145 = arith.constant 0.797884583 : f32
    %376 = vector.broadcast %cst_145 : f32 to vector<16x128xf32>
    %377 = arith.mulf %376, %375 : vector<16x128xf32>
    %378 = math.tanh %377 : vector<16x128xf32>
    %cst_146 = arith.constant 1.000000e+00 : f32
    %379 = vector.broadcast %cst_146 : f32 to vector<16x128xf32>
    %380 = arith.addf %379, %378 : vector<16x128xf32>
    %cst_147 = arith.constant 5.000000e-01 : f32
    %381 = vector.broadcast %cst_147 : f32 to vector<16x128xf32>
    %382 = arith.mulf %381, %380 : vector<16x128xf32>
    %383 = arith.mulf %370, %382 : vector<16x128xf32>
    %c20 = arith.constant 20 : index
    %c0_148 = arith.constant 0 : index
    %384 = vector.load %arg4[%c20, %c0_148] : memref<50x128xf32, #tpu.memory_space<vmem>>, vector<1x128xf32>
    %385 = arith.truncf %383 : vector<16x128xf32> to vector<16x128xbf16>
    %c12_149 = arith.constant 12 : index
    %c0_150 = arith.constant 0 : index
    %c0_151 = arith.constant 0 : index
    %386 = vector.load %arg3[%c12_149, %c0_150, %c0_151] : memref<34x128x128xbf16, #tpu.memory_space<vmem>>, vector<1x128x128xbf16>
    %387 = vector.shape_cast %386 : vector<1x128x128xbf16> to vector<128x128xbf16>
    %cst_152 = arith.constant dense<0.000000e+00> : vector<16x128xf32>
    %388 = tpu.matmul %385, %387, %cst_152 {dimension_numbers = #tpu.dot_dimension_numbers<[1], [0], [0], [1], [0, 0, 1, 1], [], []>} : vector<16x128xbf16>, vector<128x128xbf16>, vector<16x128xf32> -> vector<16x128xf32>
    %389 = vector.broadcast %384 : vector<1x128xf32> to vector<16x128xf32>
    %390 = arith.addf %389, %388 : vector<16x128xf32>
    %cst_153 = arith.constant dense<0.000000e+00> : vector<16xf32>
    %391 = vector.multi_reduction <add>, %390, %cst_153 [1] : vector<16x128xf32> to vector<16xf32>
    %392 = vector.shape_cast %391 : vector<16xf32> to vector<16x1xf32>
    %cst_154 = arith.constant 3.125000e-02 : f32
    %393 = vector.broadcast %cst_154 : f32 to vector<16x1xf32>
    %394 = arith.mulf %392, %393 : vector<16x1xf32>
    %395 = vector.broadcast %394 : vector<16x1xf32> to vector<16x128xf32>
    %396 = arith.subf %390, %395 : vector<16x128xf32>
    %397 = vector.broadcast %4 : vector<1x128xf32> to vector<16x128xf32>
    %398 = arith.mulf %396, %397 : vector<16x128xf32>
    %399 = arith.mulf %398, %398 : vector<16x128xf32>
    %cst_155 = arith.constant dense<0.000000e+00> : vector<16xf32>
    %400 = vector.multi_reduction <add>, %399, %cst_155 [1] : vector<16x128xf32> to vector<16xf32>
    %401 = vector.shape_cast %400 : vector<16xf32> to vector<16x1xf32>
    %cst_156 = arith.constant 3.125000e-02 : f32
    %402 = vector.broadcast %cst_156 : f32 to vector<16x1xf32>
    %403 = arith.mulf %401, %402 : vector<16x1xf32>
    %cst_157 = arith.constant 9.99999974E-6 : f32
    %404 = vector.broadcast %cst_157 : f32 to vector<16x1xf32>
    %405 = arith.addf %403, %404 : vector<16x1xf32>
    %406 = math.rsqrt %405 : vector<16x1xf32>
    %407 = vector.broadcast %406 : vector<16x1xf32> to vector<16x128xf32>
    %408 = arith.mulf %398, %407 : vector<16x128xf32>
    %c21 = arith.constant 21 : index
    %c0_158 = arith.constant 0 : index
    %409 = vector.load %arg4[%c21, %c0_158] : memref<50x128xf32, #tpu.memory_space<vmem>>, vector<1x128xf32>
    %410 = vector.broadcast %409 : vector<1x128xf32> to vector<16x128xf32>
    %411 = arith.mulf %408, %410 : vector<16x128xf32>
    %c22 = arith.constant 22 : index
    %c0_159 = arith.constant 0 : index
    %412 = vector.load %arg4[%c22, %c0_159] : memref<50x128xf32, #tpu.memory_space<vmem>>, vector<1x128xf32>
    %413 = vector.broadcast %412 : vector<1x128xf32> to vector<16x128xf32>
    %414 = arith.addf %411, %413 : vector<16x128xf32>
    %415 = arith.addf %363, %414 : vector<16x128xf32>
    %416 = arith.truncf %415 : vector<16x128xf32> to vector<16x128xbf16>
    %c0_160 = arith.constant 0 : index
    %c0_161 = arith.constant 0 : index
    %c0_162 = arith.constant 0 : index
    %417 = vector.load %arg9[%c0_160, %c0_161, %c0_162] : memref<4x4x16xf32, #tpu.memory_space<vmem>>, vector<1x4x16xf32>
    %418 = vector.shape_cast %417 : vector<1x4x16xf32> to vector<4x16xf32>
    %419 = arith.truncf %418 : vector<4x16xf32> to vector<4x16xbf16>
    %cst_163 = arith.constant dense<0.000000e+00> : vector<4x128xf32>
    %420 = tpu.matmul %419, %416, %cst_163 {dimension_numbers = #tpu.dot_dimension_numbers<[1], [0], [0], [1], [0, 0, 1, 1], [], []>} : vector<4x16xbf16>, vector<16x128xbf16>, vector<4x128xf32> -> vector<4x128xf32>
    %421 = arith.truncf %420 : vector<4x128xf32> to vector<4x128xbf16>
    %c29 = arith.constant 29 : index
    %c0_164 = arith.constant 0 : index
    %c0_165 = arith.constant 0 : index
    %422 = vector.load %arg3[%c29, %c0_164, %c0_165] : memref<34x128x128xbf16, #tpu.memory_space<vmem>>, vector<1x128x128xbf16>
    %423 = vector.shape_cast %422 : vector<1x128x128xbf16> to vector<128x128xbf16>
    %cst_166 = arith.constant dense<0.000000e+00> : vector<4x128xf32>
    %424 = tpu.matmul %421, %423, %cst_166 {dimension_numbers = #tpu.dot_dimension_numbers<[1], [0], [0], [1], [0, 0, 1, 1], [], []>} : vector<4x128xbf16>, vector<128x128xbf16>, vector<4x128xf32> -> vector<4x128xf32>
    %c1_167 = arith.constant 1 : index
    %c0_168 = arith.constant 0 : index
    %c0_169 = arith.constant 0 : index
    %425 = vector.load %arg9[%c1_167, %c0_168, %c0_169] : memref<4x4x16xf32, #tpu.memory_space<vmem>>, vector<1x4x16xf32>
    %426 = vector.shape_cast %425 : vector<1x4x16xf32> to vector<4x16xf32>
    %427 = arith.truncf %426 : vector<4x16xf32> to vector<4x16xbf16>
    %cst_170 = arith.constant dense<0.000000e+00> : vector<4x128xf32>
    %428 = tpu.matmul %427, %416, %cst_170 {dimension_numbers = #tpu.dot_dimension_numbers<[1], [0], [0], [1], [0, 0, 1, 1], [], []>} : vector<4x16xbf16>, vector<16x128xbf16>, vector<4x128xf32> -> vector<4x128xf32>
    %429 = arith.truncf %428 : vector<4x128xf32> to vector<4x128xbf16>
    %c30 = arith.constant 30 : index
    %c0_171 = arith.constant 0 : index
    %c0_172 = arith.constant 0 : index
    %430 = vector.load %arg3[%c30, %c0_171, %c0_172] : memref<34x128x128xbf16, #tpu.memory_space<vmem>>, vector<1x128x128xbf16>
    %431 = vector.shape_cast %430 : vector<1x128x128xbf16> to vector<128x128xbf16>
    %cst_173 = arith.constant dense<0.000000e+00> : vector<4x128xf32>
    %432 = tpu.matmul %429, %431, %cst_173 {dimension_numbers = #tpu.dot_dimension_numbers<[1], [0], [0], [1], [0, 0, 1, 1], [], []>} : vector<4x128xbf16>, vector<128x128xbf16>, vector<4x128xf32> -> vector<4x128xf32>
    %433 = arith.addf %424, %432 : vector<4x128xf32>
    %c2_174 = arith.constant 2 : index
    %c0_175 = arith.constant 0 : index
    %c0_176 = arith.constant 0 : index
    %434 = vector.load %arg9[%c2_174, %c0_175, %c0_176] : memref<4x4x16xf32, #tpu.memory_space<vmem>>, vector<1x4x16xf32>
    %435 = vector.shape_cast %434 : vector<1x4x16xf32> to vector<4x16xf32>
    %436 = arith.truncf %435 : vector<4x16xf32> to vector<4x16xbf16>
    %cst_177 = arith.constant dense<0.000000e+00> : vector<4x128xf32>
    %437 = tpu.matmul %436, %416, %cst_177 {dimension_numbers = #tpu.dot_dimension_numbers<[1], [0], [0], [1], [0, 0, 1, 1], [], []>} : vector<4x16xbf16>, vector<16x128xbf16>, vector<4x128xf32> -> vector<4x128xf32>
    %438 = arith.truncf %437 : vector<4x128xf32> to vector<4x128xbf16>
    %c31 = arith.constant 31 : index
    %c0_178 = arith.constant 0 : index
    %c0_179 = arith.constant 0 : index
    %439 = vector.load %arg3[%c31, %c0_178, %c0_179] : memref<34x128x128xbf16, #tpu.memory_space<vmem>>, vector<1x128x128xbf16>
    %440 = vector.shape_cast %439 : vector<1x128x128xbf16> to vector<128x128xbf16>
    %cst_180 = arith.constant dense<0.000000e+00> : vector<4x128xf32>
    %441 = tpu.matmul %438, %440, %cst_180 {dimension_numbers = #tpu.dot_dimension_numbers<[1], [0], [0], [1], [0, 0, 1, 1], [], []>} : vector<4x128xbf16>, vector<128x128xbf16>, vector<4x128xf32> -> vector<4x128xf32>
    %442 = arith.addf %433, %441 : vector<4x128xf32>
    %c3_181 = arith.constant 3 : index
    %c0_182 = arith.constant 0 : index
    %c0_183 = arith.constant 0 : index
    %443 = vector.load %arg9[%c3_181, %c0_182, %c0_183] : memref<4x4x16xf32, #tpu.memory_space<vmem>>, vector<1x4x16xf32>
    %444 = vector.shape_cast %443 : vector<1x4x16xf32> to vector<4x16xf32>
    %445 = arith.truncf %444 : vector<4x16xf32> to vector<4x16xbf16>
    %cst_184 = arith.constant dense<0.000000e+00> : vector<4x128xf32>
    %446 = tpu.matmul %445, %416, %cst_184 {dimension_numbers = #tpu.dot_dimension_numbers<[1], [0], [0], [1], [0, 0, 1, 1], [], []>} : vector<4x16xbf16>, vector<16x128xbf16>, vector<4x128xf32> -> vector<4x128xf32>
    %447 = arith.truncf %446 : vector<4x128xf32> to vector<4x128xbf16>
    %c32 = arith.constant 32 : index
    %c0_185 = arith.constant 0 : index
    %c0_186 = arith.constant 0 : index
    %448 = vector.load %arg3[%c32, %c0_185, %c0_186] : memref<34x128x128xbf16, #tpu.memory_space<vmem>>, vector<1x128x128xbf16>
    %449 = vector.shape_cast %448 : vector<1x128x128xbf16> to vector<128x128xbf16>
    %cst_187 = arith.constant dense<0.000000e+00> : vector<4x128xf32>
    %450 = tpu.matmul %447, %449, %cst_187 {dimension_numbers = #tpu.dot_dimension_numbers<[1], [0], [0], [1], [0, 0, 1, 1], [], []>} : vector<4x128xbf16>, vector<128x128xbf16>, vector<4x128xf32> -> vector<4x128xf32>
    %451 = arith.addf %442, %450 : vector<4x128xf32>
    %cst_188 = arith.constant dense<0.000000e+00> : vector<4xf32>
    %452 = vector.multi_reduction <add>, %451, %cst_188 [1] : vector<4x128xf32> to vector<4xf32>
    %453 = vector.shape_cast %452 : vector<4xf32> to vector<4x1xf32>
    %cst_189 = arith.constant 1.562500e-02 : f32
    %454 = vector.broadcast %cst_189 : f32 to vector<4x1xf32>
    %455 = arith.mulf %453, %454 : vector<4x1xf32>
    %456 = vector.broadcast %455 : vector<4x1xf32> to vector<4x128xf32>
    %457 = arith.subf %451, %456 : vector<4x128xf32>
    %458 = vector.broadcast %8 : vector<1x128xf32> to vector<4x128xf32>
    %459 = arith.mulf %457, %458 : vector<4x128xf32>
    %460 = arith.mulf %459, %459 : vector<4x128xf32>
    %cst_190 = arith.constant dense<0.000000e+00> : vector<4xf32>
    %461 = vector.multi_reduction <add>, %460, %cst_190 [1] : vector<4x128xf32> to vector<4xf32>
    %462 = vector.shape_cast %461 : vector<4xf32> to vector<4x1xf32>
    %cst_191 = arith.constant 1.562500e-02 : f32
    %463 = vector.broadcast %cst_191 : f32 to vector<4x1xf32>
    %464 = arith.mulf %462, %463 : vector<4x1xf32>
    %cst_192 = arith.constant 9.99999974E-6 : f32
    %465 = vector.broadcast %cst_192 : f32 to vector<4x1xf32>
    %466 = arith.addf %464, %465 : vector<4x1xf32>
    %467 = math.rsqrt %466 : vector<4x1xf32>
    %468 = vector.broadcast %467 : vector<4x1xf32> to vector<4x128xf32>
    %469 = arith.mulf %459, %468 : vector<4x128xf32>
    %c45 = arith.constant 45 : index
    %c0_193 = arith.constant 0 : index
    %470 = vector.load %arg4[%c45, %c0_193] : memref<50x128xf32, #tpu.memory_space<vmem>>, vector<1x128xf32>
    %471 = vector.broadcast %470 : vector<1x128xf32> to vector<4x128xf32>
    %472 = arith.mulf %469, %471 : vector<4x128xf32>
    %c46 = arith.constant 46 : index
    %c0_194 = arith.constant 0 : index
    %473 = vector.load %arg4[%c46, %c0_194] : memref<50x128xf32, #tpu.memory_space<vmem>>, vector<1x128xf32>
    %474 = vector.broadcast %473 : vector<1x128xf32> to vector<4x128xf32>
    %475 = arith.addf %472, %474 : vector<4x128xf32>
    %476 = arith.truncf %475 : vector<4x128xf32> to vector<4x128xbf16>
    %c13_195 = arith.constant 13 : index
    %c0_196 = arith.constant 0 : index
    %c0_197 = arith.constant 0 : index
    %477 = vector.load %arg3[%c13_195, %c0_196, %c0_197] : memref<34x128x128xbf16, #tpu.memory_space<vmem>>, vector<1x128x128xbf16>
    %478 = vector.shape_cast %477 : vector<1x128x128xbf16> to vector<128x128xbf16>
    %cst_198 = arith.constant dense<0.000000e+00> : vector<4x128xf32>
    %479 = tpu.matmul %476, %478, %cst_198 {dimension_numbers = #tpu.dot_dimension_numbers<[1], [0], [0], [1], [0, 0, 1, 1], [], []>} : vector<4x128xbf16>, vector<128x128xbf16>, vector<4x128xf32> -> vector<4x128xf32>
    %c23 = arith.constant 23 : index
    %c0_199 = arith.constant 0 : index
    %480 = vector.load %arg4[%c23, %c0_199] : memref<50x128xf32, #tpu.memory_space<vmem>>, vector<1x128xf32>
    %481 = vector.broadcast %480 : vector<1x128xf32> to vector<4x128xf32>
    %482 = arith.addf %479, %481 : vector<4x128xf32>
    %483 = arith.truncf %475 : vector<4x128xf32> to vector<4x128xbf16>
    %c14_200 = arith.constant 14 : index
    %c0_201 = arith.constant 0 : index
    %c0_202 = arith.constant 0 : index
    %484 = vector.load %arg3[%c14_200, %c0_201, %c0_202] : memref<34x128x128xbf16, #tpu.memory_space<vmem>>, vector<1x128x128xbf16>
    %485 = vector.shape_cast %484 : vector<1x128x128xbf16> to vector<128x128xbf16>
    %cst_203 = arith.constant dense<0.000000e+00> : vector<4x128xf32>
    %486 = tpu.matmul %483, %485, %cst_203 {dimension_numbers = #tpu.dot_dimension_numbers<[1], [0], [0], [1], [0, 0, 1, 1], [], []>} : vector<4x128xbf16>, vector<128x128xbf16>, vector<4x128xf32> -> vector<4x128xf32>
    %c24 = arith.constant 24 : index
    %c0_204 = arith.constant 0 : index
    %487 = vector.load %arg4[%c24, %c0_204] : memref<50x128xf32, #tpu.memory_space<vmem>>, vector<1x128xf32>
    %488 = vector.broadcast %487 : vector<1x128xf32> to vector<4x128xf32>
    %489 = arith.addf %486, %488 : vector<4x128xf32>
    %490 = arith.truncf %475 : vector<4x128xf32> to vector<4x128xbf16>
    %c15_205 = arith.constant 15 : index
    %c0_206 = arith.constant 0 : index
    %c0_207 = arith.constant 0 : index
    %491 = vector.load %arg3[%c15_205, %c0_206, %c0_207] : memref<34x128x128xbf16, #tpu.memory_space<vmem>>, vector<1x128x128xbf16>
    %492 = vector.shape_cast %491 : vector<1x128x128xbf16> to vector<128x128xbf16>
    %cst_208 = arith.constant dense<0.000000e+00> : vector<4x128xf32>
    %493 = tpu.matmul %490, %492, %cst_208 {dimension_numbers = #tpu.dot_dimension_numbers<[1], [0], [0], [1], [0, 0, 1, 1], [], []>} : vector<4x128xbf16>, vector<128x128xbf16>, vector<4x128xf32> -> vector<4x128xf32>
    %c25 = arith.constant 25 : index
    %c0_209 = arith.constant 0 : index
    %494 = vector.load %arg4[%c25, %c0_209] : memref<50x128xf32, #tpu.memory_space<vmem>>, vector<1x128xf32>
    %495 = vector.broadcast %494 : vector<1x128xf32> to vector<4x128xf32>
    %496 = arith.addf %493, %495 : vector<4x128xf32>
    %497 = vector.extract_strided_slice %482 {offsets = [0, 0], sizes = [4, 16], strides = [1, 1]} : vector<4x128xf32> to vector<4x16xf32>
    %498 = vector.extract_strided_slice %489 {offsets = [0, 0], sizes = [4, 16], strides = [1, 1]} : vector<4x128xf32> to vector<4x16xf32>
    %499 = vector.extract_strided_slice %496 {offsets = [0, 0], sizes = [4, 16], strides = [1, 1]} : vector<4x128xf32> to vector<4x16xf32>
    %500 = arith.mulf %497, %497 : vector<4x16xf32>
    %cst_210 = arith.constant dense<0.000000e+00> : vector<4xf32>
    %501 = vector.multi_reduction <add>, %500, %cst_210 [1] : vector<4x16xf32> to vector<4xf32>
    %502 = vector.shape_cast %501 : vector<4xf32> to vector<4x1xf32>
    %cst_211 = arith.constant 1.000000e-24 : f32
    %503 = vector.broadcast %cst_211 : f32 to vector<4x1xf32>
    %504 = arith.maximumf %502, %503 : vector<4x1xf32>
    %505 = math.rsqrt %504 : vector<4x1xf32>
    %506 = vector.broadcast %505 : vector<4x1xf32> to vector<4x16xf32>
    %507 = arith.mulf %497, %506 : vector<4x16xf32>
    %508 = arith.mulf %498, %498 : vector<4x16xf32>
    %cst_212 = arith.constant dense<0.000000e+00> : vector<4xf32>
    %509 = vector.multi_reduction <add>, %508, %cst_212 [1] : vector<4x16xf32> to vector<4xf32>
    %510 = vector.shape_cast %509 : vector<4xf32> to vector<4x1xf32>
    %cst_213 = arith.constant 1.000000e-24 : f32
    %511 = vector.broadcast %cst_213 : f32 to vector<4x1xf32>
    %512 = arith.maximumf %510, %511 : vector<4x1xf32>
    %513 = math.rsqrt %512 : vector<4x1xf32>
    %514 = vector.broadcast %513 : vector<4x1xf32> to vector<4x16xf32>
    %515 = arith.mulf %498, %514 : vector<4x16xf32>
    %516 = arith.truncf %507 : vector<4x16xf32> to vector<4x16xbf16>
    %517 = arith.truncf %515 : vector<4x16xf32> to vector<4x16xbf16>
    %cst_214 = arith.constant dense<0.000000e+00> : vector<4x4xf32>
    %518 = tpu.matmul %516, %517, %cst_214 {dimension_numbers = #tpu.dot_dimension_numbers<[1], [1], [0], [0], [0, 0, 1, 0], [], []>} : vector<4x16xbf16>, vector<4x16xbf16>, vector<4x4xf32> -> vector<4x4xf32>
    %c4_215 = arith.constant 4 : index
    %519 = memref.load %arg1[%c4_215] : memref<12xf32, #tpu.memory_space<smem>>
    %520 = vector.broadcast %519 : f32 to vector<4x4xf32>
    %521 = arith.mulf %518, %520 : vector<4x4xf32>
    %c0_216 = arith.constant 0 : index
    %c0_217 = arith.constant 0 : index
    %c0_218 = arith.constant 0 : index
    %522 = vector.load %arg7[%c0_216, %c0_217, %c0_218] : memref<4x4x4xf32, #tpu.memory_space<vmem>>, vector<1x4x4xf32>
    %523 = vector.shape_cast %522 : vector<1x4x4xf32> to vector<4x4xf32>
    %524 = arith.addf %521, %523 : vector<4x4xf32>
    %cst_219 = arith.constant dense<0xFF800000> : vector<4xf32>
    %525 = vector.multi_reduction <maximumf>, %524, %cst_219 [1] : vector<4x4xf32> to vector<4xf32>
    %526 = vector.shape_cast %525 : vector<4xf32> to vector<4x1xf32>
    %527 = vector.broadcast %526 : vector<4x1xf32> to vector<4x4xf32>
    %528 = arith.subf %524, %527 : vector<4x4xf32>
    %529 = math.exp %528 : vector<4x4xf32>
    %cst_220 = arith.constant dense<0.000000e+00> : vector<4xf32>
    %530 = vector.multi_reduction <add>, %529, %cst_220 [1] : vector<4x4xf32> to vector<4xf32>
    %531 = vector.shape_cast %530 : vector<4xf32> to vector<4x1xf32>
    %532 = vector.broadcast %531 : vector<4x1xf32> to vector<4x4xf32>
    %533 = arith.divf %529, %532 : vector<4x4xf32>
    %534 = arith.truncf %533 : vector<4x4xf32> to vector<4x4xbf16>
    %535 = arith.truncf %499 : vector<4x16xf32> to vector<4x16xbf16>
    %cst_221 = arith.constant dense<0.000000e+00> : vector<4x16xf32>
    %536 = tpu.matmul %534, %535, %cst_221 {dimension_numbers = #tpu.dot_dimension_numbers<[1], [0], [0], [1], [0, 0, 1, 1], [], []>} : vector<4x4xbf16>, vector<4x16xbf16>, vector<4x16xf32> -> vector<4x16xf32>
    %537 = vector.extract_strided_slice %482 {offsets = [0, 16], sizes = [4, 16], strides = [1, 1]} : vector<4x128xf32> to vector<4x16xf32>
    %538 = vector.extract_strided_slice %489 {offsets = [0, 16], sizes = [4, 16], strides = [1, 1]} : vector<4x128xf32> to vector<4x16xf32>
    %539 = vector.extract_strided_slice %496 {offsets = [0, 16], sizes = [4, 16], strides = [1, 1]} : vector<4x128xf32> to vector<4x16xf32>
    %540 = arith.mulf %537, %537 : vector<4x16xf32>
    %cst_222 = arith.constant dense<0.000000e+00> : vector<4xf32>
    %541 = vector.multi_reduction <add>, %540, %cst_222 [1] : vector<4x16xf32> to vector<4xf32>
    %542 = vector.shape_cast %541 : vector<4xf32> to vector<4x1xf32>
    %cst_223 = arith.constant 1.000000e-24 : f32
    %543 = vector.broadcast %cst_223 : f32 to vector<4x1xf32>
    %544 = arith.maximumf %542, %543 : vector<4x1xf32>
    %545 = math.rsqrt %544 : vector<4x1xf32>
    %546 = vector.broadcast %545 : vector<4x1xf32> to vector<4x16xf32>
    %547 = arith.mulf %537, %546 : vector<4x16xf32>
    %548 = arith.mulf %538, %538 : vector<4x16xf32>
    %cst_224 = arith.constant dense<0.000000e+00> : vector<4xf32>
    %549 = vector.multi_reduction <add>, %548, %cst_224 [1] : vector<4x16xf32> to vector<4xf32>
    %550 = vector.shape_cast %549 : vector<4xf32> to vector<4x1xf32>
    %cst_225 = arith.constant 1.000000e-24 : f32
    %551 = vector.broadcast %cst_225 : f32 to vector<4x1xf32>
    %552 = arith.maximumf %550, %551 : vector<4x1xf32>
    %553 = math.rsqrt %552 : vector<4x1xf32>
    %554 = vector.broadcast %553 : vector<4x1xf32> to vector<4x16xf32>
    %555 = arith.mulf %538, %554 : vector<4x16xf32>
    %556 = arith.truncf %547 : vector<4x16xf32> to vector<4x16xbf16>
    %557 = arith.truncf %555 : vector<4x16xf32> to vector<4x16xbf16>
    %cst_226 = arith.constant dense<0.000000e+00> : vector<4x4xf32>
    %558 = tpu.matmul %556, %557, %cst_226 {dimension_numbers = #tpu.dot_dimension_numbers<[1], [1], [0], [0], [0, 0, 1, 0], [], []>} : vector<4x16xbf16>, vector<4x16xbf16>, vector<4x4xf32> -> vector<4x4xf32>
    %c5_227 = arith.constant 5 : index
    %559 = memref.load %arg1[%c5_227] : memref<12xf32, #tpu.memory_space<smem>>
    %560 = vector.broadcast %559 : f32 to vector<4x4xf32>
    %561 = arith.mulf %558, %560 : vector<4x4xf32>
    %c1_228 = arith.constant 1 : index
    %c0_229 = arith.constant 0 : index
    %c0_230 = arith.constant 0 : index
    %562 = vector.load %arg7[%c1_228, %c0_229, %c0_230] : memref<4x4x4xf32, #tpu.memory_space<vmem>>, vector<1x4x4xf32>
    %563 = vector.shape_cast %562 : vector<1x4x4xf32> to vector<4x4xf32>
    %564 = arith.addf %561, %563 : vector<4x4xf32>
    %cst_231 = arith.constant dense<0xFF800000> : vector<4xf32>
    %565 = vector.multi_reduction <maximumf>, %564, %cst_231 [1] : vector<4x4xf32> to vector<4xf32>
    %566 = vector.shape_cast %565 : vector<4xf32> to vector<4x1xf32>
    %567 = vector.broadcast %566 : vector<4x1xf32> to vector<4x4xf32>
    %568 = arith.subf %564, %567 : vector<4x4xf32>
    %569 = math.exp %568 : vector<4x4xf32>
    %cst_232 = arith.constant dense<0.000000e+00> : vector<4xf32>
    %570 = vector.multi_reduction <add>, %569, %cst_232 [1] : vector<4x4xf32> to vector<4xf32>
    %571 = vector.shape_cast %570 : vector<4xf32> to vector<4x1xf32>
    %572 = vector.broadcast %571 : vector<4x1xf32> to vector<4x4xf32>
    %573 = arith.divf %569, %572 : vector<4x4xf32>
    %574 = arith.truncf %573 : vector<4x4xf32> to vector<4x4xbf16>
    %575 = arith.truncf %539 : vector<4x16xf32> to vector<4x16xbf16>
    %cst_233 = arith.constant dense<0.000000e+00> : vector<4x16xf32>
    %576 = tpu.matmul %574, %575, %cst_233 {dimension_numbers = #tpu.dot_dimension_numbers<[1], [0], [0], [1], [0, 0, 1, 1], [], []>} : vector<4x4xbf16>, vector<4x16xbf16>, vector<4x16xf32> -> vector<4x16xf32>
    %577 = vector.extract_strided_slice %482 {offsets = [0, 32], sizes = [4, 16], strides = [1, 1]} : vector<4x128xf32> to vector<4x16xf32>
    %578 = vector.extract_strided_slice %489 {offsets = [0, 32], sizes = [4, 16], strides = [1, 1]} : vector<4x128xf32> to vector<4x16xf32>
    %579 = vector.extract_strided_slice %496 {offsets = [0, 32], sizes = [4, 16], strides = [1, 1]} : vector<4x128xf32> to vector<4x16xf32>
    %580 = arith.mulf %577, %577 : vector<4x16xf32>
    %cst_234 = arith.constant dense<0.000000e+00> : vector<4xf32>
    %581 = vector.multi_reduction <add>, %580, %cst_234 [1] : vector<4x16xf32> to vector<4xf32>
    %582 = vector.shape_cast %581 : vector<4xf32> to vector<4x1xf32>
    %cst_235 = arith.constant 1.000000e-24 : f32
    %583 = vector.broadcast %cst_235 : f32 to vector<4x1xf32>
    %584 = arith.maximumf %582, %583 : vector<4x1xf32>
    %585 = math.rsqrt %584 : vector<4x1xf32>
    %586 = vector.broadcast %585 : vector<4x1xf32> to vector<4x16xf32>
    %587 = arith.mulf %577, %586 : vector<4x16xf32>
    %588 = arith.mulf %578, %578 : vector<4x16xf32>
    %cst_236 = arith.constant dense<0.000000e+00> : vector<4xf32>
    %589 = vector.multi_reduction <add>, %588, %cst_236 [1] : vector<4x16xf32> to vector<4xf32>
    %590 = vector.shape_cast %589 : vector<4xf32> to vector<4x1xf32>
    %cst_237 = arith.constant 1.000000e-24 : f32
    %591 = vector.broadcast %cst_237 : f32 to vector<4x1xf32>
    %592 = arith.maximumf %590, %591 : vector<4x1xf32>
    %593 = math.rsqrt %592 : vector<4x1xf32>
    %594 = vector.broadcast %593 : vector<4x1xf32> to vector<4x16xf32>
    %595 = arith.mulf %578, %594 : vector<4x16xf32>
    %596 = arith.truncf %587 : vector<4x16xf32> to vector<4x16xbf16>
    %597 = arith.truncf %595 : vector<4x16xf32> to vector<4x16xbf16>
    %cst_238 = arith.constant dense<0.000000e+00> : vector<4x4xf32>
    %598 = tpu.matmul %596, %597, %cst_238 {dimension_numbers = #tpu.dot_dimension_numbers<[1], [1], [0], [0], [0, 0, 1, 0], [], []>} : vector<4x16xbf16>, vector<4x16xbf16>, vector<4x4xf32> -> vector<4x4xf32>
    %c6_239 = arith.constant 6 : index
    %599 = memref.load %arg1[%c6_239] : memref<12xf32, #tpu.memory_space<smem>>
    %600 = vector.broadcast %599 : f32 to vector<4x4xf32>
    %601 = arith.mulf %598, %600 : vector<4x4xf32>
    %c2_240 = arith.constant 2 : index
    %c0_241 = arith.constant 0 : index
    %c0_242 = arith.constant 0 : index
    %602 = vector.load %arg7[%c2_240, %c0_241, %c0_242] : memref<4x4x4xf32, #tpu.memory_space<vmem>>, vector<1x4x4xf32>
    %603 = vector.shape_cast %602 : vector<1x4x4xf32> to vector<4x4xf32>
    %604 = arith.addf %601, %603 : vector<4x4xf32>
    %cst_243 = arith.constant dense<0xFF800000> : vector<4xf32>
    %605 = vector.multi_reduction <maximumf>, %604, %cst_243 [1] : vector<4x4xf32> to vector<4xf32>
    %606 = vector.shape_cast %605 : vector<4xf32> to vector<4x1xf32>
    %607 = vector.broadcast %606 : vector<4x1xf32> to vector<4x4xf32>
    %608 = arith.subf %604, %607 : vector<4x4xf32>
    %609 = math.exp %608 : vector<4x4xf32>
    %cst_244 = arith.constant dense<0.000000e+00> : vector<4xf32>
    %610 = vector.multi_reduction <add>, %609, %cst_244 [1] : vector<4x4xf32> to vector<4xf32>
    %611 = vector.shape_cast %610 : vector<4xf32> to vector<4x1xf32>
    %612 = vector.broadcast %611 : vector<4x1xf32> to vector<4x4xf32>
    %613 = arith.divf %609, %612 : vector<4x4xf32>
    %614 = arith.truncf %613 : vector<4x4xf32> to vector<4x4xbf16>
    %615 = arith.truncf %579 : vector<4x16xf32> to vector<4x16xbf16>
    %cst_245 = arith.constant dense<0.000000e+00> : vector<4x16xf32>
    %616 = tpu.matmul %614, %615, %cst_245 {dimension_numbers = #tpu.dot_dimension_numbers<[1], [0], [0], [1], [0, 0, 1, 1], [], []>} : vector<4x4xbf16>, vector<4x16xbf16>, vector<4x16xf32> -> vector<4x16xf32>
    %617 = vector.extract_strided_slice %482 {offsets = [0, 48], sizes = [4, 16], strides = [1, 1]} : vector<4x128xf32> to vector<4x16xf32>
    %618 = vector.extract_strided_slice %489 {offsets = [0, 48], sizes = [4, 16], strides = [1, 1]} : vector<4x128xf32> to vector<4x16xf32>
    %619 = vector.extract_strided_slice %496 {offsets = [0, 48], sizes = [4, 16], strides = [1, 1]} : vector<4x128xf32> to vector<4x16xf32>
    %620 = arith.mulf %617, %617 : vector<4x16xf32>
    %cst_246 = arith.constant dense<0.000000e+00> : vector<4xf32>
    %621 = vector.multi_reduction <add>, %620, %cst_246 [1] : vector<4x16xf32> to vector<4xf32>
    %622 = vector.shape_cast %621 : vector<4xf32> to vector<4x1xf32>
    %cst_247 = arith.constant 1.000000e-24 : f32
    %623 = vector.broadcast %cst_247 : f32 to vector<4x1xf32>
    %624 = arith.maximumf %622, %623 : vector<4x1xf32>
    %625 = math.rsqrt %624 : vector<4x1xf32>
    %626 = vector.broadcast %625 : vector<4x1xf32> to vector<4x16xf32>
    %627 = arith.mulf %617, %626 : vector<4x16xf32>
    %628 = arith.mulf %618, %618 : vector<4x16xf32>
    %cst_248 = arith.constant dense<0.000000e+00> : vector<4xf32>
    %629 = vector.multi_reduction <add>, %628, %cst_248 [1] : vector<4x16xf32> to vector<4xf32>
    %630 = vector.shape_cast %629 : vector<4xf32> to vector<4x1xf32>
    %cst_249 = arith.constant 1.000000e-24 : f32
    %631 = vector.broadcast %cst_249 : f32 to vector<4x1xf32>
    %632 = arith.maximumf %630, %631 : vector<4x1xf32>
    %633 = math.rsqrt %632 : vector<4x1xf32>
    %634 = vector.broadcast %633 : vector<4x1xf32> to vector<4x16xf32>
    %635 = arith.mulf %618, %634 : vector<4x16xf32>
    %636 = arith.truncf %627 : vector<4x16xf32> to vector<4x16xbf16>
    %637 = arith.truncf %635 : vector<4x16xf32> to vector<4x16xbf16>
    %cst_250 = arith.constant dense<0.000000e+00> : vector<4x4xf32>
    %638 = tpu.matmul %636, %637, %cst_250 {dimension_numbers = #tpu.dot_dimension_numbers<[1], [1], [0], [0], [0, 0, 1, 0], [], []>} : vector<4x16xbf16>, vector<4x16xbf16>, vector<4x4xf32> -> vector<4x4xf32>
    %c7_251 = arith.constant 7 : index
    %639 = memref.load %arg1[%c7_251] : memref<12xf32, #tpu.memory_space<smem>>
    %640 = vector.broadcast %639 : f32 to vector<4x4xf32>
    %641 = arith.mulf %638, %640 : vector<4x4xf32>
    %c3_252 = arith.constant 3 : index
    %c0_253 = arith.constant 0 : index
    %c0_254 = arith.constant 0 : index
    %642 = vector.load %arg7[%c3_252, %c0_253, %c0_254] : memref<4x4x4xf32, #tpu.memory_space<vmem>>, vector<1x4x4xf32>
    %643 = vector.shape_cast %642 : vector<1x4x4xf32> to vector<4x4xf32>
    %644 = arith.addf %641, %643 : vector<4x4xf32>
    %cst_255 = arith.constant dense<0xFF800000> : vector<4xf32>
    %645 = vector.multi_reduction <maximumf>, %644, %cst_255 [1] : vector<4x4xf32> to vector<4xf32>
    %646 = vector.shape_cast %645 : vector<4xf32> to vector<4x1xf32>
    %647 = vector.broadcast %646 : vector<4x1xf32> to vector<4x4xf32>
    %648 = arith.subf %644, %647 : vector<4x4xf32>
    %649 = math.exp %648 : vector<4x4xf32>
    %cst_256 = arith.constant dense<0.000000e+00> : vector<4xf32>
    %650 = vector.multi_reduction <add>, %649, %cst_256 [1] : vector<4x4xf32> to vector<4xf32>
    %651 = vector.shape_cast %650 : vector<4xf32> to vector<4x1xf32>
    %652 = vector.broadcast %651 : vector<4x1xf32> to vector<4x4xf32>
    %653 = arith.divf %649, %652 : vector<4x4xf32>
    %654 = arith.truncf %653 : vector<4x4xf32> to vector<4x4xbf16>
    %655 = arith.truncf %619 : vector<4x16xf32> to vector<4x16xbf16>
    %cst_257 = arith.constant dense<0.000000e+00> : vector<4x16xf32>
    %656 = tpu.matmul %654, %655, %cst_257 {dimension_numbers = #tpu.dot_dimension_numbers<[1], [0], [0], [1], [0, 0, 1, 1], [], []>} : vector<4x4xbf16>, vector<4x16xbf16>, vector<4x16xf32> -> vector<4x16xf32>
    %cst_258 = arith.constant 0.000000e+00 : f32
    %657 = vector.broadcast %cst_258 : f32 to vector<4x64xf32>
    %658 = tpu.concatenate %536, %576, %616, %656, %657 in 1 : vector<4x16xf32>, vector<4x16xf32>, vector<4x16xf32>, vector<4x16xf32>, vector<4x64xf32> -> vector<4x128xf32>
    %659 = arith.truncf %658 : vector<4x128xf32> to vector<4x128xbf16>
    %c16_259 = arith.constant 16 : index
    %c0_260 = arith.constant 0 : index
    %c0_261 = arith.constant 0 : index
    %660 = vector.load %arg3[%c16_259, %c0_260, %c0_261] : memref<34x128x128xbf16, #tpu.memory_space<vmem>>, vector<1x128x128xbf16>
    %661 = vector.shape_cast %660 : vector<1x128x128xbf16> to vector<128x128xbf16>
    %cst_262 = arith.constant dense<0.000000e+00> : vector<4x128xf32>
    %662 = tpu.matmul %659, %661, %cst_262 {dimension_numbers = #tpu.dot_dimension_numbers<[1], [0], [0], [1], [0, 0, 1, 1], [], []>} : vector<4x128xbf16>, vector<128x128xbf16>, vector<4x128xf32> -> vector<4x128xf32>
    %c26 = arith.constant 26 : index
    %c0_263 = arith.constant 0 : index
    %663 = vector.load %arg4[%c26, %c0_263] : memref<50x128xf32, #tpu.memory_space<vmem>>, vector<1x128xf32>
    %664 = vector.broadcast %663 : vector<1x128xf32> to vector<4x128xf32>
    %665 = arith.addf %662, %664 : vector<4x128xf32>
    %cst_264 = arith.constant dense<0.000000e+00> : vector<4xf32>
    %666 = vector.multi_reduction <add>, %665, %cst_264 [1] : vector<4x128xf32> to vector<4xf32>
    %667 = vector.shape_cast %666 : vector<4xf32> to vector<4x1xf32>
    %cst_265 = arith.constant 1.562500e-02 : f32
    %668 = vector.broadcast %cst_265 : f32 to vector<4x1xf32>
    %669 = arith.mulf %667, %668 : vector<4x1xf32>
    %670 = vector.broadcast %669 : vector<4x1xf32> to vector<4x128xf32>
    %671 = arith.subf %665, %670 : vector<4x128xf32>
    %672 = vector.broadcast %8 : vector<1x128xf32> to vector<4x128xf32>
    %673 = arith.mulf %671, %672 : vector<4x128xf32>
    %674 = arith.mulf %673, %673 : vector<4x128xf32>
    %cst_266 = arith.constant dense<0.000000e+00> : vector<4xf32>
    %675 = vector.multi_reduction <add>, %674, %cst_266 [1] : vector<4x128xf32> to vector<4xf32>
    %676 = vector.shape_cast %675 : vector<4xf32> to vector<4x1xf32>
    %cst_267 = arith.constant 1.562500e-02 : f32
    %677 = vector.broadcast %cst_267 : f32 to vector<4x1xf32>
    %678 = arith.mulf %676, %677 : vector<4x1xf32>
    %cst_268 = arith.constant 9.99999974E-6 : f32
    %679 = vector.broadcast %cst_268 : f32 to vector<4x1xf32>
    %680 = arith.addf %678, %679 : vector<4x1xf32>
    %681 = math.rsqrt %680 : vector<4x1xf32>
    %682 = vector.broadcast %681 : vector<4x1xf32> to vector<4x128xf32>
    %683 = arith.mulf %673, %682 : vector<4x128xf32>
    %c27 = arith.constant 27 : index
    %c0_269 = arith.constant 0 : index
    %684 = vector.load %arg4[%c27, %c0_269] : memref<50x128xf32, #tpu.memory_space<vmem>>, vector<1x128xf32>
    %685 = vector.broadcast %684 : vector<1x128xf32> to vector<4x128xf32>
    %686 = arith.mulf %683, %685 : vector<4x128xf32>
    %c28 = arith.constant 28 : index
    %c0_270 = arith.constant 0 : index
    %687 = vector.load %arg4[%c28, %c0_270] : memref<50x128xf32, #tpu.memory_space<vmem>>, vector<1x128xf32>
    %688 = vector.broadcast %687 : vector<1x128xf32> to vector<4x128xf32>
    %689 = arith.addf %686, %688 : vector<4x128xf32>
    %690 = arith.addf %475, %689 : vector<4x128xf32>
    %691 = arith.truncf %690 : vector<4x128xf32> to vector<4x128xbf16>
    %c17_271 = arith.constant 17 : index
    %c0_272 = arith.constant 0 : index
    %c0_273 = arith.constant 0 : index
    %692 = vector.load %arg3[%c17_271, %c0_272, %c0_273] : memref<34x128x128xbf16, #tpu.memory_space<vmem>>, vector<1x128x128xbf16>
    %693 = vector.shape_cast %692 : vector<1x128x128xbf16> to vector<128x128xbf16>
    %cst_274 = arith.constant dense<0.000000e+00> : vector<4x128xf32>
    %694 = tpu.matmul %691, %693, %cst_274 {dimension_numbers = #tpu.dot_dimension_numbers<[1], [0], [0], [1], [0, 0, 1, 1], [], []>} : vector<4x128xbf16>, vector<128x128xbf16>, vector<4x128xf32> -> vector<4x128xf32>
    %c29_275 = arith.constant 29 : index
    %c0_276 = arith.constant 0 : index
    %695 = vector.load %arg4[%c29_275, %c0_276] : memref<50x128xf32, #tpu.memory_space<vmem>>, vector<1x128xf32>
    %696 = vector.broadcast %695 : vector<1x128xf32> to vector<4x128xf32>
    %697 = arith.addf %694, %696 : vector<4x128xf32>
    %698 = arith.mulf %697, %697 : vector<4x128xf32>
    %699 = arith.mulf %697, %698 : vector<4x128xf32>
    %cst_277 = arith.constant 4.471500e-02 : f32
    %700 = vector.broadcast %cst_277 : f32 to vector<4x128xf32>
    %701 = arith.mulf %700, %699 : vector<4x128xf32>
    %702 = arith.addf %697, %701 : vector<4x128xf32>
    %cst_278 = arith.constant 0.797884583 : f32
    %703 = vector.broadcast %cst_278 : f32 to vector<4x128xf32>
    %704 = arith.mulf %703, %702 : vector<4x128xf32>
    %705 = math.tanh %704 : vector<4x128xf32>
    %cst_279 = arith.constant 1.000000e+00 : f32
    %706 = vector.broadcast %cst_279 : f32 to vector<4x128xf32>
    %707 = arith.addf %706, %705 : vector<4x128xf32>
    %cst_280 = arith.constant 5.000000e-01 : f32
    %708 = vector.broadcast %cst_280 : f32 to vector<4x128xf32>
    %709 = arith.mulf %708, %707 : vector<4x128xf32>
    %710 = arith.mulf %697, %709 : vector<4x128xf32>
    %711 = arith.truncf %690 : vector<4x128xf32> to vector<4x128xbf16>
    %c18_281 = arith.constant 18 : index
    %c0_282 = arith.constant 0 : index
    %c0_283 = arith.constant 0 : index
    %712 = vector.load %arg3[%c18_281, %c0_282, %c0_283] : memref<34x128x128xbf16, #tpu.memory_space<vmem>>, vector<1x128x128xbf16>
    %713 = vector.shape_cast %712 : vector<1x128x128xbf16> to vector<128x128xbf16>
    %cst_284 = arith.constant dense<0.000000e+00> : vector<4x128xf32>
    %714 = tpu.matmul %711, %713, %cst_284 {dimension_numbers = #tpu.dot_dimension_numbers<[1], [0], [0], [1], [0, 0, 1, 1], [], []>} : vector<4x128xbf16>, vector<128x128xbf16>, vector<4x128xf32> -> vector<4x128xf32>
    %c30_285 = arith.constant 30 : index
    %c0_286 = arith.constant 0 : index
    %715 = vector.load %arg4[%c30_285, %c0_286] : memref<50x128xf32, #tpu.memory_space<vmem>>, vector<1x128xf32>
    %716 = vector.broadcast %715 : vector<1x128xf32> to vector<4x128xf32>
    %717 = arith.addf %714, %716 : vector<4x128xf32>
    %718 = arith.mulf %717, %717 : vector<4x128xf32>
    %719 = arith.mulf %717, %718 : vector<4x128xf32>
    %cst_287 = arith.constant 4.471500e-02 : f32
    %720 = vector.broadcast %cst_287 : f32 to vector<4x128xf32>
    %721 = arith.mulf %720, %719 : vector<4x128xf32>
    %722 = arith.addf %717, %721 : vector<4x128xf32>
    %cst_288 = arith.constant 0.797884583 : f32
    %723 = vector.broadcast %cst_288 : f32 to vector<4x128xf32>
    %724 = arith.mulf %723, %722 : vector<4x128xf32>
    %725 = math.tanh %724 : vector<4x128xf32>
    %cst_289 = arith.constant 1.000000e+00 : f32
    %726 = vector.broadcast %cst_289 : f32 to vector<4x128xf32>
    %727 = arith.addf %726, %725 : vector<4x128xf32>
    %cst_290 = arith.constant 5.000000e-01 : f32
    %728 = vector.broadcast %cst_290 : f32 to vector<4x128xf32>
    %729 = arith.mulf %728, %727 : vector<4x128xf32>
    %730 = arith.mulf %717, %729 : vector<4x128xf32>
    %c31_291 = arith.constant 31 : index
    %c0_292 = arith.constant 0 : index
    %731 = vector.load %arg4[%c31_291, %c0_292] : memref<50x128xf32, #tpu.memory_space<vmem>>, vector<1x128xf32>
    %732 = arith.truncf %710 : vector<4x128xf32> to vector<4x128xbf16>
    %c19_293 = arith.constant 19 : index
    %c0_294 = arith.constant 0 : index
    %c0_295 = arith.constant 0 : index
    %733 = vector.load %arg3[%c19_293, %c0_294, %c0_295] : memref<34x128x128xbf16, #tpu.memory_space<vmem>>, vector<1x128x128xbf16>
    %734 = vector.shape_cast %733 : vector<1x128x128xbf16> to vector<128x128xbf16>
    %cst_296 = arith.constant dense<0.000000e+00> : vector<4x128xf32>
    %735 = tpu.matmul %732, %734, %cst_296 {dimension_numbers = #tpu.dot_dimension_numbers<[1], [0], [0], [1], [0, 0, 1, 1], [], []>} : vector<4x128xbf16>, vector<128x128xbf16>, vector<4x128xf32> -> vector<4x128xf32>
    %736 = vector.broadcast %731 : vector<1x128xf32> to vector<4x128xf32>
    %737 = arith.addf %736, %735 : vector<4x128xf32>
    %738 = arith.truncf %730 : vector<4x128xf32> to vector<4x128xbf16>
    %c20_297 = arith.constant 20 : index
    %c0_298 = arith.constant 0 : index
    %c0_299 = arith.constant 0 : index
    %739 = vector.load %arg3[%c20_297, %c0_298, %c0_299] : memref<34x128x128xbf16, #tpu.memory_space<vmem>>, vector<1x128x128xbf16>
    %740 = vector.shape_cast %739 : vector<1x128x128xbf16> to vector<128x128xbf16>
    %cst_300 = arith.constant dense<0.000000e+00> : vector<4x128xf32>
    %741 = tpu.matmul %738, %740, %cst_300 {dimension_numbers = #tpu.dot_dimension_numbers<[1], [0], [0], [1], [0, 0, 1, 1], [], []>} : vector<4x128xbf16>, vector<128x128xbf16>, vector<4x128xf32> -> vector<4x128xf32>
    %742 = arith.addf %737, %741 : vector<4x128xf32>
    %cst_301 = arith.constant dense<0.000000e+00> : vector<4xf32>
    %743 = vector.multi_reduction <add>, %742, %cst_301 [1] : vector<4x128xf32> to vector<4xf32>
    %744 = vector.shape_cast %743 : vector<4xf32> to vector<4x1xf32>
    %cst_302 = arith.constant 1.562500e-02 : f32
    %745 = vector.broadcast %cst_302 : f32 to vector<4x1xf32>
    %746 = arith.mulf %744, %745 : vector<4x1xf32>
    %747 = vector.broadcast %746 : vector<4x1xf32> to vector<4x128xf32>
    %748 = arith.subf %742, %747 : vector<4x128xf32>
    %749 = vector.broadcast %8 : vector<1x128xf32> to vector<4x128xf32>
    %750 = arith.mulf %748, %749 : vector<4x128xf32>
    %751 = arith.mulf %750, %750 : vector<4x128xf32>
    %cst_303 = arith.constant dense<0.000000e+00> : vector<4xf32>
    %752 = vector.multi_reduction <add>, %751, %cst_303 [1] : vector<4x128xf32> to vector<4xf32>
    %753 = vector.shape_cast %752 : vector<4xf32> to vector<4x1xf32>
    %cst_304 = arith.constant 1.562500e-02 : f32
    %754 = vector.broadcast %cst_304 : f32 to vector<4x1xf32>
    %755 = arith.mulf %753, %754 : vector<4x1xf32>
    %cst_305 = arith.constant 9.99999974E-6 : f32
    %756 = vector.broadcast %cst_305 : f32 to vector<4x1xf32>
    %757 = arith.addf %755, %756 : vector<4x1xf32>
    %758 = math.rsqrt %757 : vector<4x1xf32>
    %759 = vector.broadcast %758 : vector<4x1xf32> to vector<4x128xf32>
    %760 = arith.mulf %750, %759 : vector<4x128xf32>
    %c32_306 = arith.constant 32 : index
    %c0_307 = arith.constant 0 : index
    %761 = vector.load %arg4[%c32_306, %c0_307] : memref<50x128xf32, #tpu.memory_space<vmem>>, vector<1x128xf32>
    %762 = vector.broadcast %761 : vector<1x128xf32> to vector<4x128xf32>
    %763 = arith.mulf %760, %762 : vector<4x128xf32>
    %c33 = arith.constant 33 : index
    %c0_308 = arith.constant 0 : index
    %764 = vector.load %arg4[%c33, %c0_308] : memref<50x128xf32, #tpu.memory_space<vmem>>, vector<1x128xf32>
    %765 = vector.broadcast %764 : vector<1x128xf32> to vector<4x128xf32>
    %766 = arith.addf %763, %765 : vector<4x128xf32>
    %767 = arith.addf %690, %766 : vector<4x128xf32>
    %768 = arith.truncf %767 : vector<4x128xf32> to vector<4x128xbf16>
    %c21_309 = arith.constant 21 : index
    %c0_310 = arith.constant 0 : index
    %c0_311 = arith.constant 0 : index
    %769 = vector.load %arg3[%c21_309, %c0_310, %c0_311] : memref<34x128x128xbf16, #tpu.memory_space<vmem>>, vector<1x128x128xbf16>
    %770 = vector.shape_cast %769 : vector<1x128x128xbf16> to vector<128x128xbf16>
    %cst_312 = arith.constant dense<0.000000e+00> : vector<4x128xf32>
    %771 = tpu.matmul %768, %770, %cst_312 {dimension_numbers = #tpu.dot_dimension_numbers<[1], [0], [0], [1], [0, 0, 1, 1], [], []>} : vector<4x128xbf16>, vector<128x128xbf16>, vector<4x128xf32> -> vector<4x128xf32>
    %c34 = arith.constant 34 : index
    %c0_313 = arith.constant 0 : index
    %772 = vector.load %arg4[%c34, %c0_313] : memref<50x128xf32, #tpu.memory_space<vmem>>, vector<1x128xf32>
    %773 = vector.broadcast %772 : vector<1x128xf32> to vector<4x128xf32>
    %774 = arith.addf %771, %773 : vector<4x128xf32>
    %775 = arith.truncf %767 : vector<4x128xf32> to vector<4x128xbf16>
    %c22_314 = arith.constant 22 : index
    %c0_315 = arith.constant 0 : index
    %c0_316 = arith.constant 0 : index
    %776 = vector.load %arg3[%c22_314, %c0_315, %c0_316] : memref<34x128x128xbf16, #tpu.memory_space<vmem>>, vector<1x128x128xbf16>
    %777 = vector.shape_cast %776 : vector<1x128x128xbf16> to vector<128x128xbf16>
    %cst_317 = arith.constant dense<0.000000e+00> : vector<4x128xf32>
    %778 = tpu.matmul %775, %777, %cst_317 {dimension_numbers = #tpu.dot_dimension_numbers<[1], [0], [0], [1], [0, 0, 1, 1], [], []>} : vector<4x128xbf16>, vector<128x128xbf16>, vector<4x128xf32> -> vector<4x128xf32>
    %c35 = arith.constant 35 : index
    %c0_318 = arith.constant 0 : index
    %779 = vector.load %arg4[%c35, %c0_318] : memref<50x128xf32, #tpu.memory_space<vmem>>, vector<1x128xf32>
    %780 = vector.broadcast %779 : vector<1x128xf32> to vector<4x128xf32>
    %781 = arith.addf %778, %780 : vector<4x128xf32>
    %782 = arith.truncf %767 : vector<4x128xf32> to vector<4x128xbf16>
    %c23_319 = arith.constant 23 : index
    %c0_320 = arith.constant 0 : index
    %c0_321 = arith.constant 0 : index
    %783 = vector.load %arg3[%c23_319, %c0_320, %c0_321] : memref<34x128x128xbf16, #tpu.memory_space<vmem>>, vector<1x128x128xbf16>
    %784 = vector.shape_cast %783 : vector<1x128x128xbf16> to vector<128x128xbf16>
    %cst_322 = arith.constant dense<0.000000e+00> : vector<4x128xf32>
    %785 = tpu.matmul %782, %784, %cst_322 {dimension_numbers = #tpu.dot_dimension_numbers<[1], [0], [0], [1], [0, 0, 1, 1], [], []>} : vector<4x128xbf16>, vector<128x128xbf16>, vector<4x128xf32> -> vector<4x128xf32>
    %c36 = arith.constant 36 : index
    %c0_323 = arith.constant 0 : index
    %786 = vector.load %arg4[%c36, %c0_323] : memref<50x128xf32, #tpu.memory_space<vmem>>, vector<1x128xf32>
    %787 = vector.broadcast %786 : vector<1x128xf32> to vector<4x128xf32>
    %788 = arith.addf %785, %787 : vector<4x128xf32>
    %789 = vector.extract_strided_slice %774 {offsets = [0, 0], sizes = [4, 16], strides = [1, 1]} : vector<4x128xf32> to vector<4x16xf32>
    %790 = vector.extract_strided_slice %781 {offsets = [0, 0], sizes = [4, 16], strides = [1, 1]} : vector<4x128xf32> to vector<4x16xf32>
    %791 = vector.extract_strided_slice %788 {offsets = [0, 0], sizes = [4, 16], strides = [1, 1]} : vector<4x128xf32> to vector<4x16xf32>
    %792 = arith.mulf %789, %789 : vector<4x16xf32>
    %cst_324 = arith.constant dense<0.000000e+00> : vector<4xf32>
    %793 = vector.multi_reduction <add>, %792, %cst_324 [1] : vector<4x16xf32> to vector<4xf32>
    %794 = vector.shape_cast %793 : vector<4xf32> to vector<4x1xf32>
    %cst_325 = arith.constant 1.000000e-24 : f32
    %795 = vector.broadcast %cst_325 : f32 to vector<4x1xf32>
    %796 = arith.maximumf %794, %795 : vector<4x1xf32>
    %797 = math.rsqrt %796 : vector<4x1xf32>
    %798 = vector.broadcast %797 : vector<4x1xf32> to vector<4x16xf32>
    %799 = arith.mulf %789, %798 : vector<4x16xf32>
    %800 = arith.mulf %790, %790 : vector<4x16xf32>
    %cst_326 = arith.constant dense<0.000000e+00> : vector<4xf32>
    %801 = vector.multi_reduction <add>, %800, %cst_326 [1] : vector<4x16xf32> to vector<4xf32>
    %802 = vector.shape_cast %801 : vector<4xf32> to vector<4x1xf32>
    %cst_327 = arith.constant 1.000000e-24 : f32
    %803 = vector.broadcast %cst_327 : f32 to vector<4x1xf32>
    %804 = arith.maximumf %802, %803 : vector<4x1xf32>
    %805 = math.rsqrt %804 : vector<4x1xf32>
    %806 = vector.broadcast %805 : vector<4x1xf32> to vector<4x16xf32>
    %807 = arith.mulf %790, %806 : vector<4x16xf32>
    %808 = arith.truncf %799 : vector<4x16xf32> to vector<4x16xbf16>
    %809 = arith.truncf %807 : vector<4x16xf32> to vector<4x16xbf16>
    %cst_328 = arith.constant dense<0.000000e+00> : vector<4x4xf32>
    %810 = tpu.matmul %808, %809, %cst_328 {dimension_numbers = #tpu.dot_dimension_numbers<[1], [1], [0], [0], [0, 0, 1, 0], [], []>} : vector<4x16xbf16>, vector<4x16xbf16>, vector<4x4xf32> -> vector<4x4xf32>
    %c8_329 = arith.constant 8 : index
    %811 = memref.load %arg1[%c8_329] : memref<12xf32, #tpu.memory_space<smem>>
    %812 = vector.broadcast %811 : f32 to vector<4x4xf32>
    %813 = arith.mulf %810, %812 : vector<4x4xf32>
    %c0_330 = arith.constant 0 : index
    %c0_331 = arith.constant 0 : index
    %c0_332 = arith.constant 0 : index
    %814 = vector.load %arg8[%c0_330, %c0_331, %c0_332] : memref<4x4x4xf32, #tpu.memory_space<vmem>>, vector<1x4x4xf32>
    %815 = vector.shape_cast %814 : vector<1x4x4xf32> to vector<4x4xf32>
    %816 = arith.addf %813, %815 : vector<4x4xf32>
    %cst_333 = arith.constant dense<0xFF800000> : vector<4xf32>
    %817 = vector.multi_reduction <maximumf>, %816, %cst_333 [1] : vector<4x4xf32> to vector<4xf32>
    %818 = vector.shape_cast %817 : vector<4xf32> to vector<4x1xf32>
    %819 = vector.broadcast %818 : vector<4x1xf32> to vector<4x4xf32>
    %820 = arith.subf %816, %819 : vector<4x4xf32>
    %821 = math.exp %820 : vector<4x4xf32>
    %cst_334 = arith.constant dense<0.000000e+00> : vector<4xf32>
    %822 = vector.multi_reduction <add>, %821, %cst_334 [1] : vector<4x4xf32> to vector<4xf32>
    %823 = vector.shape_cast %822 : vector<4xf32> to vector<4x1xf32>
    %824 = vector.broadcast %823 : vector<4x1xf32> to vector<4x4xf32>
    %825 = arith.divf %821, %824 : vector<4x4xf32>
    %826 = arith.truncf %825 : vector<4x4xf32> to vector<4x4xbf16>
    %827 = arith.truncf %791 : vector<4x16xf32> to vector<4x16xbf16>
    %cst_335 = arith.constant dense<0.000000e+00> : vector<4x16xf32>
    %828 = tpu.matmul %826, %827, %cst_335 {dimension_numbers = #tpu.dot_dimension_numbers<[1], [0], [0], [1], [0, 0, 1, 1], [], []>} : vector<4x4xbf16>, vector<4x16xbf16>, vector<4x16xf32> -> vector<4x16xf32>
    %829 = vector.extract_strided_slice %774 {offsets = [0, 16], sizes = [4, 16], strides = [1, 1]} : vector<4x128xf32> to vector<4x16xf32>
    %830 = vector.extract_strided_slice %781 {offsets = [0, 16], sizes = [4, 16], strides = [1, 1]} : vector<4x128xf32> to vector<4x16xf32>
    %831 = vector.extract_strided_slice %788 {offsets = [0, 16], sizes = [4, 16], strides = [1, 1]} : vector<4x128xf32> to vector<4x16xf32>
    %832 = arith.mulf %829, %829 : vector<4x16xf32>
    %cst_336 = arith.constant dense<0.000000e+00> : vector<4xf32>
    %833 = vector.multi_reduction <add>, %832, %cst_336 [1] : vector<4x16xf32> to vector<4xf32>
    %834 = vector.shape_cast %833 : vector<4xf32> to vector<4x1xf32>
    %cst_337 = arith.constant 1.000000e-24 : f32
    %835 = vector.broadcast %cst_337 : f32 to vector<4x1xf32>
    %836 = arith.maximumf %834, %835 : vector<4x1xf32>
    %837 = math.rsqrt %836 : vector<4x1xf32>
    %838 = vector.broadcast %837 : vector<4x1xf32> to vector<4x16xf32>
    %839 = arith.mulf %829, %838 : vector<4x16xf32>
    %840 = arith.mulf %830, %830 : vector<4x16xf32>
    %cst_338 = arith.constant dense<0.000000e+00> : vector<4xf32>
    %841 = vector.multi_reduction <add>, %840, %cst_338 [1] : vector<4x16xf32> to vector<4xf32>
    %842 = vector.shape_cast %841 : vector<4xf32> to vector<4x1xf32>
    %cst_339 = arith.constant 1.000000e-24 : f32
    %843 = vector.broadcast %cst_339 : f32 to vector<4x1xf32>
    %844 = arith.maximumf %842, %843 : vector<4x1xf32>
    %845 = math.rsqrt %844 : vector<4x1xf32>
    %846 = vector.broadcast %845 : vector<4x1xf32> to vector<4x16xf32>
    %847 = arith.mulf %830, %846 : vector<4x16xf32>
    %848 = arith.truncf %839 : vector<4x16xf32> to vector<4x16xbf16>
    %849 = arith.truncf %847 : vector<4x16xf32> to vector<4x16xbf16>
    %cst_340 = arith.constant dense<0.000000e+00> : vector<4x4xf32>
    %850 = tpu.matmul %848, %849, %cst_340 {dimension_numbers = #tpu.dot_dimension_numbers<[1], [1], [0], [0], [0, 0, 1, 0], [], []>} : vector<4x16xbf16>, vector<4x16xbf16>, vector<4x4xf32> -> vector<4x4xf32>
    %c9_341 = arith.constant 9 : index
    %851 = memref.load %arg1[%c9_341] : memref<12xf32, #tpu.memory_space<smem>>
    %852 = vector.broadcast %851 : f32 to vector<4x4xf32>
    %853 = arith.mulf %850, %852 : vector<4x4xf32>
    %c1_342 = arith.constant 1 : index
    %c0_343 = arith.constant 0 : index
    %c0_344 = arith.constant 0 : index
    %854 = vector.load %arg8[%c1_342, %c0_343, %c0_344] : memref<4x4x4xf32, #tpu.memory_space<vmem>>, vector<1x4x4xf32>
    %855 = vector.shape_cast %854 : vector<1x4x4xf32> to vector<4x4xf32>
    %856 = arith.addf %853, %855 : vector<4x4xf32>
    %cst_345 = arith.constant dense<0xFF800000> : vector<4xf32>
    %857 = vector.multi_reduction <maximumf>, %856, %cst_345 [1] : vector<4x4xf32> to vector<4xf32>
    %858 = vector.shape_cast %857 : vector<4xf32> to vector<4x1xf32>
    %859 = vector.broadcast %858 : vector<4x1xf32> to vector<4x4xf32>
    %860 = arith.subf %856, %859 : vector<4x4xf32>
    %861 = math.exp %860 : vector<4x4xf32>
    %cst_346 = arith.constant dense<0.000000e+00> : vector<4xf32>
    %862 = vector.multi_reduction <add>, %861, %cst_346 [1] : vector<4x4xf32> to vector<4xf32>
    %863 = vector.shape_cast %862 : vector<4xf32> to vector<4x1xf32>
    %864 = vector.broadcast %863 : vector<4x1xf32> to vector<4x4xf32>
    %865 = arith.divf %861, %864 : vector<4x4xf32>
    %866 = arith.truncf %865 : vector<4x4xf32> to vector<4x4xbf16>
    %867 = arith.truncf %831 : vector<4x16xf32> to vector<4x16xbf16>
    %cst_347 = arith.constant dense<0.000000e+00> : vector<4x16xf32>
    %868 = tpu.matmul %866, %867, %cst_347 {dimension_numbers = #tpu.dot_dimension_numbers<[1], [0], [0], [1], [0, 0, 1, 1], [], []>} : vector<4x4xbf16>, vector<4x16xbf16>, vector<4x16xf32> -> vector<4x16xf32>
    %869 = vector.extract_strided_slice %774 {offsets = [0, 32], sizes = [4, 16], strides = [1, 1]} : vector<4x128xf32> to vector<4x16xf32>
    %870 = vector.extract_strided_slice %781 {offsets = [0, 32], sizes = [4, 16], strides = [1, 1]} : vector<4x128xf32> to vector<4x16xf32>
    %871 = vector.extract_strided_slice %788 {offsets = [0, 32], sizes = [4, 16], strides = [1, 1]} : vector<4x128xf32> to vector<4x16xf32>
    %872 = arith.mulf %869, %869 : vector<4x16xf32>
    %cst_348 = arith.constant dense<0.000000e+00> : vector<4xf32>
    %873 = vector.multi_reduction <add>, %872, %cst_348 [1] : vector<4x16xf32> to vector<4xf32>
    %874 = vector.shape_cast %873 : vector<4xf32> to vector<4x1xf32>
    %cst_349 = arith.constant 1.000000e-24 : f32
    %875 = vector.broadcast %cst_349 : f32 to vector<4x1xf32>
    %876 = arith.maximumf %874, %875 : vector<4x1xf32>
    %877 = math.rsqrt %876 : vector<4x1xf32>
    %878 = vector.broadcast %877 : vector<4x1xf32> to vector<4x16xf32>
    %879 = arith.mulf %869, %878 : vector<4x16xf32>
    %880 = arith.mulf %870, %870 : vector<4x16xf32>
    %cst_350 = arith.constant dense<0.000000e+00> : vector<4xf32>
    %881 = vector.multi_reduction <add>, %880, %cst_350 [1] : vector<4x16xf32> to vector<4xf32>
    %882 = vector.shape_cast %881 : vector<4xf32> to vector<4x1xf32>
    %cst_351 = arith.constant 1.000000e-24 : f32
    %883 = vector.broadcast %cst_351 : f32 to vector<4x1xf32>
    %884 = arith.maximumf %882, %883 : vector<4x1xf32>
    %885 = math.rsqrt %884 : vector<4x1xf32>
    %886 = vector.broadcast %885 : vector<4x1xf32> to vector<4x16xf32>
    %887 = arith.mulf %870, %886 : vector<4x16xf32>
    %888 = arith.truncf %879 : vector<4x16xf32> to vector<4x16xbf16>
    %889 = arith.truncf %887 : vector<4x16xf32> to vector<4x16xbf16>
    %cst_352 = arith.constant dense<0.000000e+00> : vector<4x4xf32>
    %890 = tpu.matmul %888, %889, %cst_352 {dimension_numbers = #tpu.dot_dimension_numbers<[1], [1], [0], [0], [0, 0, 1, 0], [], []>} : vector<4x16xbf16>, vector<4x16xbf16>, vector<4x4xf32> -> vector<4x4xf32>
    %c10_353 = arith.constant 10 : index
    %891 = memref.load %arg1[%c10_353] : memref<12xf32, #tpu.memory_space<smem>>
    %892 = vector.broadcast %891 : f32 to vector<4x4xf32>
    %893 = arith.mulf %890, %892 : vector<4x4xf32>
    %c2_354 = arith.constant 2 : index
    %c0_355 = arith.constant 0 : index
    %c0_356 = arith.constant 0 : index
    %894 = vector.load %arg8[%c2_354, %c0_355, %c0_356] : memref<4x4x4xf32, #tpu.memory_space<vmem>>, vector<1x4x4xf32>
    %895 = vector.shape_cast %894 : vector<1x4x4xf32> to vector<4x4xf32>
    %896 = arith.addf %893, %895 : vector<4x4xf32>
    %cst_357 = arith.constant dense<0xFF800000> : vector<4xf32>
    %897 = vector.multi_reduction <maximumf>, %896, %cst_357 [1] : vector<4x4xf32> to vector<4xf32>
    %898 = vector.shape_cast %897 : vector<4xf32> to vector<4x1xf32>
    %899 = vector.broadcast %898 : vector<4x1xf32> to vector<4x4xf32>
    %900 = arith.subf %896, %899 : vector<4x4xf32>
    %901 = math.exp %900 : vector<4x4xf32>
    %cst_358 = arith.constant dense<0.000000e+00> : vector<4xf32>
    %902 = vector.multi_reduction <add>, %901, %cst_358 [1] : vector<4x4xf32> to vector<4xf32>
    %903 = vector.shape_cast %902 : vector<4xf32> to vector<4x1xf32>
    %904 = vector.broadcast %903 : vector<4x1xf32> to vector<4x4xf32>
    %905 = arith.divf %901, %904 : vector<4x4xf32>
    %906 = arith.truncf %905 : vector<4x4xf32> to vector<4x4xbf16>
    %907 = arith.truncf %871 : vector<4x16xf32> to vector<4x16xbf16>
    %cst_359 = arith.constant dense<0.000000e+00> : vector<4x16xf32>
    %908 = tpu.matmul %906, %907, %cst_359 {dimension_numbers = #tpu.dot_dimension_numbers<[1], [0], [0], [1], [0, 0, 1, 1], [], []>} : vector<4x4xbf16>, vector<4x16xbf16>, vector<4x16xf32> -> vector<4x16xf32>
    %909 = vector.extract_strided_slice %774 {offsets = [0, 48], sizes = [4, 16], strides = [1, 1]} : vector<4x128xf32> to vector<4x16xf32>
    %910 = vector.extract_strided_slice %781 {offsets = [0, 48], sizes = [4, 16], strides = [1, 1]} : vector<4x128xf32> to vector<4x16xf32>
    %911 = vector.extract_strided_slice %788 {offsets = [0, 48], sizes = [4, 16], strides = [1, 1]} : vector<4x128xf32> to vector<4x16xf32>
    %912 = arith.mulf %909, %909 : vector<4x16xf32>
    %cst_360 = arith.constant dense<0.000000e+00> : vector<4xf32>
    %913 = vector.multi_reduction <add>, %912, %cst_360 [1] : vector<4x16xf32> to vector<4xf32>
    %914 = vector.shape_cast %913 : vector<4xf32> to vector<4x1xf32>
    %cst_361 = arith.constant 1.000000e-24 : f32
    %915 = vector.broadcast %cst_361 : f32 to vector<4x1xf32>
    %916 = arith.maximumf %914, %915 : vector<4x1xf32>
    %917 = math.rsqrt %916 : vector<4x1xf32>
    %918 = vector.broadcast %917 : vector<4x1xf32> to vector<4x16xf32>
    %919 = arith.mulf %909, %918 : vector<4x16xf32>
    %920 = arith.mulf %910, %910 : vector<4x16xf32>
    %cst_362 = arith.constant dense<0.000000e+00> : vector<4xf32>
    %921 = vector.multi_reduction <add>, %920, %cst_362 [1] : vector<4x16xf32> to vector<4xf32>
    %922 = vector.shape_cast %921 : vector<4xf32> to vector<4x1xf32>
    %cst_363 = arith.constant 1.000000e-24 : f32
    %923 = vector.broadcast %cst_363 : f32 to vector<4x1xf32>
    %924 = arith.maximumf %922, %923 : vector<4x1xf32>
    %925 = math.rsqrt %924 : vector<4x1xf32>
    %926 = vector.broadcast %925 : vector<4x1xf32> to vector<4x16xf32>
    %927 = arith.mulf %910, %926 : vector<4x16xf32>
    %928 = arith.truncf %919 : vector<4x16xf32> to vector<4x16xbf16>
    %929 = arith.truncf %927 : vector<4x16xf32> to vector<4x16xbf16>
    %cst_364 = arith.constant dense<0.000000e+00> : vector<4x4xf32>
    %930 = tpu.matmul %928, %929, %cst_364 {dimension_numbers = #tpu.dot_dimension_numbers<[1], [1], [0], [0], [0, 0, 1, 0], [], []>} : vector<4x16xbf16>, vector<4x16xbf16>, vector<4x4xf32> -> vector<4x4xf32>
    %c11_365 = arith.constant 11 : index
    %931 = memref.load %arg1[%c11_365] : memref<12xf32, #tpu.memory_space<smem>>
    %932 = vector.broadcast %931 : f32 to vector<4x4xf32>
    %933 = arith.mulf %930, %932 : vector<4x4xf32>
    %c3_366 = arith.constant 3 : index
    %c0_367 = arith.constant 0 : index
    %c0_368 = arith.constant 0 : index
    %934 = vector.load %arg8[%c3_366, %c0_367, %c0_368] : memref<4x4x4xf32, #tpu.memory_space<vmem>>, vector<1x4x4xf32>
    %935 = vector.shape_cast %934 : vector<1x4x4xf32> to vector<4x4xf32>
    %936 = arith.addf %933, %935 : vector<4x4xf32>
    %cst_369 = arith.constant dense<0xFF800000> : vector<4xf32>
    %937 = vector.multi_reduction <maximumf>, %936, %cst_369 [1] : vector<4x4xf32> to vector<4xf32>
    %938 = vector.shape_cast %937 : vector<4xf32> to vector<4x1xf32>
    %939 = vector.broadcast %938 : vector<4x1xf32> to vector<4x4xf32>
    %940 = arith.subf %936, %939 : vector<4x4xf32>
    %941 = math.exp %940 : vector<4x4xf32>
    %cst_370 = arith.constant dense<0.000000e+00> : vector<4xf32>
    %942 = vector.multi_reduction <add>, %941, %cst_370 [1] : vector<4x4xf32> to vector<4xf32>
    %943 = vector.shape_cast %942 : vector<4xf32> to vector<4x1xf32>
    %944 = vector.broadcast %943 : vector<4x1xf32> to vector<4x4xf32>
    %945 = arith.divf %941, %944 : vector<4x4xf32>
    %946 = arith.truncf %945 : vector<4x4xf32> to vector<4x4xbf16>
    %947 = arith.truncf %911 : vector<4x16xf32> to vector<4x16xbf16>
    %cst_371 = arith.constant dense<0.000000e+00> : vector<4x16xf32>
    %948 = tpu.matmul %946, %947, %cst_371 {dimension_numbers = #tpu.dot_dimension_numbers<[1], [0], [0], [1], [0, 0, 1, 1], [], []>} : vector<4x4xbf16>, vector<4x16xbf16>, vector<4x16xf32> -> vector<4x16xf32>
    %cst_372 = arith.constant 0.000000e+00 : f32
    %949 = vector.broadcast %cst_372 : f32 to vector<4x64xf32>
    %950 = tpu.concatenate %828, %868, %908, %948, %949 in 1 : vector<4x16xf32>, vector<4x16xf32>, vector<4x16xf32>, vector<4x16xf32>, vector<4x64xf32> -> vector<4x128xf32>
    %951 = arith.truncf %950 : vector<4x128xf32> to vector<4x128xbf16>
    %c24_373 = arith.constant 24 : index
    %c0_374 = arith.constant 0 : index
    %c0_375 = arith.constant 0 : index
    %952 = vector.load %arg3[%c24_373, %c0_374, %c0_375] : memref<34x128x128xbf16, #tpu.memory_space<vmem>>, vector<1x128x128xbf16>
    %953 = vector.shape_cast %952 : vector<1x128x128xbf16> to vector<128x128xbf16>
    %cst_376 = arith.constant dense<0.000000e+00> : vector<4x128xf32>
    %954 = tpu.matmul %951, %953, %cst_376 {dimension_numbers = #tpu.dot_dimension_numbers<[1], [0], [0], [1], [0, 0, 1, 1], [], []>} : vector<4x128xbf16>, vector<128x128xbf16>, vector<4x128xf32> -> vector<4x128xf32>
    %c37 = arith.constant 37 : index
    %c0_377 = arith.constant 0 : index
    %955 = vector.load %arg4[%c37, %c0_377] : memref<50x128xf32, #tpu.memory_space<vmem>>, vector<1x128xf32>
    %956 = vector.broadcast %955 : vector<1x128xf32> to vector<4x128xf32>
    %957 = arith.addf %954, %956 : vector<4x128xf32>
    %cst_378 = arith.constant dense<0.000000e+00> : vector<4xf32>
    %958 = vector.multi_reduction <add>, %957, %cst_378 [1] : vector<4x128xf32> to vector<4xf32>
    %959 = vector.shape_cast %958 : vector<4xf32> to vector<4x1xf32>
    %cst_379 = arith.constant 1.562500e-02 : f32
    %960 = vector.broadcast %cst_379 : f32 to vector<4x1xf32>
    %961 = arith.mulf %959, %960 : vector<4x1xf32>
    %962 = vector.broadcast %961 : vector<4x1xf32> to vector<4x128xf32>
    %963 = arith.subf %957, %962 : vector<4x128xf32>
    %964 = vector.broadcast %8 : vector<1x128xf32> to vector<4x128xf32>
    %965 = arith.mulf %963, %964 : vector<4x128xf32>
    %966 = arith.mulf %965, %965 : vector<4x128xf32>
    %cst_380 = arith.constant dense<0.000000e+00> : vector<4xf32>
    %967 = vector.multi_reduction <add>, %966, %cst_380 [1] : vector<4x128xf32> to vector<4xf32>
    %968 = vector.shape_cast %967 : vector<4xf32> to vector<4x1xf32>
    %cst_381 = arith.constant 1.562500e-02 : f32
    %969 = vector.broadcast %cst_381 : f32 to vector<4x1xf32>
    %970 = arith.mulf %968, %969 : vector<4x1xf32>
    %cst_382 = arith.constant 9.99999974E-6 : f32
    %971 = vector.broadcast %cst_382 : f32 to vector<4x1xf32>
    %972 = arith.addf %970, %971 : vector<4x1xf32>
    %973 = math.rsqrt %972 : vector<4x1xf32>
    %974 = vector.broadcast %973 : vector<4x1xf32> to vector<4x128xf32>
    %975 = arith.mulf %965, %974 : vector<4x128xf32>
    %c38 = arith.constant 38 : index
    %c0_383 = arith.constant 0 : index
    %976 = vector.load %arg4[%c38, %c0_383] : memref<50x128xf32, #tpu.memory_space<vmem>>, vector<1x128xf32>
    %977 = vector.broadcast %976 : vector<1x128xf32> to vector<4x128xf32>
    %978 = arith.mulf %975, %977 : vector<4x128xf32>
    %c39 = arith.constant 39 : index
    %c0_384 = arith.constant 0 : index
    %979 = vector.load %arg4[%c39, %c0_384] : memref<50x128xf32, #tpu.memory_space<vmem>>, vector<1x128xf32>
    %980 = vector.broadcast %979 : vector<1x128xf32> to vector<4x128xf32>
    %981 = arith.addf %978, %980 : vector<4x128xf32>
    %982 = arith.addf %767, %981 : vector<4x128xf32>
    %983 = arith.truncf %982 : vector<4x128xf32> to vector<4x128xbf16>
    %c25_385 = arith.constant 25 : index
    %c0_386 = arith.constant 0 : index
    %c0_387 = arith.constant 0 : index
    %984 = vector.load %arg3[%c25_385, %c0_386, %c0_387] : memref<34x128x128xbf16, #tpu.memory_space<vmem>>, vector<1x128x128xbf16>
    %985 = vector.shape_cast %984 : vector<1x128x128xbf16> to vector<128x128xbf16>
    %cst_388 = arith.constant dense<0.000000e+00> : vector<4x128xf32>
    %986 = tpu.matmul %983, %985, %cst_388 {dimension_numbers = #tpu.dot_dimension_numbers<[1], [0], [0], [1], [0, 0, 1, 1], [], []>} : vector<4x128xbf16>, vector<128x128xbf16>, vector<4x128xf32> -> vector<4x128xf32>
    %c40 = arith.constant 40 : index
    %c0_389 = arith.constant 0 : index
    %987 = vector.load %arg4[%c40, %c0_389] : memref<50x128xf32, #tpu.memory_space<vmem>>, vector<1x128xf32>
    %988 = vector.broadcast %987 : vector<1x128xf32> to vector<4x128xf32>
    %989 = arith.addf %986, %988 : vector<4x128xf32>
    %990 = arith.mulf %989, %989 : vector<4x128xf32>
    %991 = arith.mulf %989, %990 : vector<4x128xf32>
    %cst_390 = arith.constant 4.471500e-02 : f32
    %992 = vector.broadcast %cst_390 : f32 to vector<4x128xf32>
    %993 = arith.mulf %992, %991 : vector<4x128xf32>
    %994 = arith.addf %989, %993 : vector<4x128xf32>
    %cst_391 = arith.constant 0.797884583 : f32
    %995 = vector.broadcast %cst_391 : f32 to vector<4x128xf32>
    %996 = arith.mulf %995, %994 : vector<4x128xf32>
    %997 = math.tanh %996 : vector<4x128xf32>
    %cst_392 = arith.constant 1.000000e+00 : f32
    %998 = vector.broadcast %cst_392 : f32 to vector<4x128xf32>
    %999 = arith.addf %998, %997 : vector<4x128xf32>
    %cst_393 = arith.constant 5.000000e-01 : f32
    %1000 = vector.broadcast %cst_393 : f32 to vector<4x128xf32>
    %1001 = arith.mulf %1000, %999 : vector<4x128xf32>
    %1002 = arith.mulf %989, %1001 : vector<4x128xf32>
    %1003 = arith.truncf %982 : vector<4x128xf32> to vector<4x128xbf16>
    %c26_394 = arith.constant 26 : index
    %c0_395 = arith.constant 0 : index
    %c0_396 = arith.constant 0 : index
    %1004 = vector.load %arg3[%c26_394, %c0_395, %c0_396] : memref<34x128x128xbf16, #tpu.memory_space<vmem>>, vector<1x128x128xbf16>
    %1005 = vector.shape_cast %1004 : vector<1x128x128xbf16> to vector<128x128xbf16>
    %cst_397 = arith.constant dense<0.000000e+00> : vector<4x128xf32>
    %1006 = tpu.matmul %1003, %1005, %cst_397 {dimension_numbers = #tpu.dot_dimension_numbers<[1], [0], [0], [1], [0, 0, 1, 1], [], []>} : vector<4x128xbf16>, vector<128x128xbf16>, vector<4x128xf32> -> vector<4x128xf32>
    %c41 = arith.constant 41 : index
    %c0_398 = arith.constant 0 : index
    %1007 = vector.load %arg4[%c41, %c0_398] : memref<50x128xf32, #tpu.memory_space<vmem>>, vector<1x128xf32>
    %1008 = vector.broadcast %1007 : vector<1x128xf32> to vector<4x128xf32>
    %1009 = arith.addf %1006, %1008 : vector<4x128xf32>
    %1010 = arith.mulf %1009, %1009 : vector<4x128xf32>
    %1011 = arith.mulf %1009, %1010 : vector<4x128xf32>
    %cst_399 = arith.constant 4.471500e-02 : f32
    %1012 = vector.broadcast %cst_399 : f32 to vector<4x128xf32>
    %1013 = arith.mulf %1012, %1011 : vector<4x128xf32>
    %1014 = arith.addf %1009, %1013 : vector<4x128xf32>
    %cst_400 = arith.constant 0.797884583 : f32
    %1015 = vector.broadcast %cst_400 : f32 to vector<4x128xf32>
    %1016 = arith.mulf %1015, %1014 : vector<4x128xf32>
    %1017 = math.tanh %1016 : vector<4x128xf32>
    %cst_401 = arith.constant 1.000000e+00 : f32
    %1018 = vector.broadcast %cst_401 : f32 to vector<4x128xf32>
    %1019 = arith.addf %1018, %1017 : vector<4x128xf32>
    %cst_402 = arith.constant 5.000000e-01 : f32
    %1020 = vector.broadcast %cst_402 : f32 to vector<4x128xf32>
    %1021 = arith.mulf %1020, %1019 : vector<4x128xf32>
    %1022 = arith.mulf %1009, %1021 : vector<4x128xf32>
    %c42 = arith.constant 42 : index
    %c0_403 = arith.constant 0 : index
    %1023 = vector.load %arg4[%c42, %c0_403] : memref<50x128xf32, #tpu.memory_space<vmem>>, vector<1x128xf32>
    %1024 = arith.truncf %1002 : vector<4x128xf32> to vector<4x128xbf16>
    %c27_404 = arith.constant 27 : index
    %c0_405 = arith.constant 0 : index
    %c0_406 = arith.constant 0 : index
    %1025 = vector.load %arg3[%c27_404, %c0_405, %c0_406] : memref<34x128x128xbf16, #tpu.memory_space<vmem>>, vector<1x128x128xbf16>
    %1026 = vector.shape_cast %1025 : vector<1x128x128xbf16> to vector<128x128xbf16>
    %cst_407 = arith.constant dense<0.000000e+00> : vector<4x128xf32>
    %1027 = tpu.matmul %1024, %1026, %cst_407 {dimension_numbers = #tpu.dot_dimension_numbers<[1], [0], [0], [1], [0, 0, 1, 1], [], []>} : vector<4x128xbf16>, vector<128x128xbf16>, vector<4x128xf32> -> vector<4x128xf32>
    %1028 = vector.broadcast %1023 : vector<1x128xf32> to vector<4x128xf32>
    %1029 = arith.addf %1028, %1027 : vector<4x128xf32>
    %1030 = arith.truncf %1022 : vector<4x128xf32> to vector<4x128xbf16>
    %c28_408 = arith.constant 28 : index
    %c0_409 = arith.constant 0 : index
    %c0_410 = arith.constant 0 : index
    %1031 = vector.load %arg3[%c28_408, %c0_409, %c0_410] : memref<34x128x128xbf16, #tpu.memory_space<vmem>>, vector<1x128x128xbf16>
    %1032 = vector.shape_cast %1031 : vector<1x128x128xbf16> to vector<128x128xbf16>
    %cst_411 = arith.constant dense<0.000000e+00> : vector<4x128xf32>
    %1033 = tpu.matmul %1030, %1032, %cst_411 {dimension_numbers = #tpu.dot_dimension_numbers<[1], [0], [0], [1], [0, 0, 1, 1], [], []>} : vector<4x128xbf16>, vector<128x128xbf16>, vector<4x128xf32> -> vector<4x128xf32>
    %1034 = arith.addf %1029, %1033 : vector<4x128xf32>
    %cst_412 = arith.constant dense<0.000000e+00> : vector<4xf32>
    %1035 = vector.multi_reduction <add>, %1034, %cst_412 [1] : vector<4x128xf32> to vector<4xf32>
    %1036 = vector.shape_cast %1035 : vector<4xf32> to vector<4x1xf32>
    %cst_413 = arith.constant 1.562500e-02 : f32
    %1037 = vector.broadcast %cst_413 : f32 to vector<4x1xf32>
    %1038 = arith.mulf %1036, %1037 : vector<4x1xf32>
    %1039 = vector.broadcast %1038 : vector<4x1xf32> to vector<4x128xf32>
    %1040 = arith.subf %1034, %1039 : vector<4x128xf32>
    %1041 = vector.broadcast %8 : vector<1x128xf32> to vector<4x128xf32>
    %1042 = arith.mulf %1040, %1041 : vector<4x128xf32>
    %1043 = arith.mulf %1042, %1042 : vector<4x128xf32>
    %cst_414 = arith.constant dense<0.000000e+00> : vector<4xf32>
    %1044 = vector.multi_reduction <add>, %1043, %cst_414 [1] : vector<4x128xf32> to vector<4xf32>
    %1045 = vector.shape_cast %1044 : vector<4xf32> to vector<4x1xf32>
    %cst_415 = arith.constant 1.562500e-02 : f32
    %1046 = vector.broadcast %cst_415 : f32 to vector<4x1xf32>
    %1047 = arith.mulf %1045, %1046 : vector<4x1xf32>
    %cst_416 = arith.constant 9.99999974E-6 : f32
    %1048 = vector.broadcast %cst_416 : f32 to vector<4x1xf32>
    %1049 = arith.addf %1047, %1048 : vector<4x1xf32>
    %1050 = math.rsqrt %1049 : vector<4x1xf32>
    %1051 = vector.broadcast %1050 : vector<4x1xf32> to vector<4x128xf32>
    %1052 = arith.mulf %1042, %1051 : vector<4x128xf32>
    %c43 = arith.constant 43 : index
    %c0_417 = arith.constant 0 : index
    %1053 = vector.load %arg4[%c43, %c0_417] : memref<50x128xf32, #tpu.memory_space<vmem>>, vector<1x128xf32>
    %1054 = vector.broadcast %1053 : vector<1x128xf32> to vector<4x128xf32>
    %1055 = arith.mulf %1052, %1054 : vector<4x128xf32>
    %c44 = arith.constant 44 : index
    %c0_418 = arith.constant 0 : index
    %1056 = vector.load %arg4[%c44, %c0_418] : memref<50x128xf32, #tpu.memory_space<vmem>>, vector<1x128xf32>
    %1057 = vector.broadcast %1056 : vector<1x128xf32> to vector<4x128xf32>
    %1058 = arith.addf %1055, %1057 : vector<4x128xf32>
    %1059 = arith.addf %982, %1058 : vector<4x128xf32>
    %cst_419 = arith.constant dense<0.000000e+00> : vector<4xf32>
    %1060 = vector.multi_reduction <add>, %1059, %cst_419 [1] : vector<4x128xf32> to vector<4xf32>
    %1061 = vector.shape_cast %1060 : vector<4xf32> to vector<4x1xf32>
    %cst_420 = arith.constant 1.562500e-02 : f32
    %1062 = vector.broadcast %cst_420 : f32 to vector<4x1xf32>
    %1063 = arith.mulf %1061, %1062 : vector<4x1xf32>
    %1064 = vector.broadcast %1063 : vector<4x1xf32> to vector<4x128xf32>
    %1065 = arith.subf %1059, %1064 : vector<4x128xf32>
    %1066 = vector.broadcast %8 : vector<1x128xf32> to vector<4x128xf32>
    %1067 = arith.mulf %1065, %1066 : vector<4x128xf32>
    %1068 = arith.mulf %1067, %1067 : vector<4x128xf32>
    %cst_421 = arith.constant dense<0.000000e+00> : vector<4xf32>
    %1069 = vector.multi_reduction <add>, %1068, %cst_421 [1] : vector<4x128xf32> to vector<4xf32>
    %1070 = vector.shape_cast %1069 : vector<4xf32> to vector<4x1xf32>
    %cst_422 = arith.constant 1.562500e-02 : f32
    %1071 = vector.broadcast %cst_422 : f32 to vector<4x1xf32>
    %1072 = arith.mulf %1070, %1071 : vector<4x1xf32>
    %cst_423 = arith.constant 9.99999974E-6 : f32
    %1073 = vector.broadcast %cst_423 : f32 to vector<4x1xf32>
    %1074 = arith.addf %1072, %1073 : vector<4x1xf32>
    %1075 = math.rsqrt %1074 : vector<4x1xf32>
    %1076 = vector.broadcast %1075 : vector<4x1xf32> to vector<4x128xf32>
    %1077 = arith.mulf %1067, %1076 : vector<4x128xf32>
    %c47 = arith.constant 47 : index
    %c0_424 = arith.constant 0 : index
    %1078 = vector.load %arg4[%c47, %c0_424] : memref<50x128xf32, #tpu.memory_space<vmem>>, vector<1x128xf32>
    %1079 = vector.broadcast %1078 : vector<1x128xf32> to vector<4x128xf32>
    %1080 = arith.mulf %1077, %1079 : vector<4x128xf32>
    %c48 = arith.constant 48 : index
    %c0_425 = arith.constant 0 : index
    %1081 = vector.load %arg4[%c48, %c0_425] : memref<50x128xf32, #tpu.memory_space<vmem>>, vector<1x128xf32>
    %1082 = vector.broadcast %1081 : vector<1x128xf32> to vector<4x128xf32>
    %1083 = arith.addf %1080, %1082 : vector<4x128xf32>
    %cst_426 = arith.constant dense<0.000000e+00> : vector<128xf32>
    %1084 = vector.multi_reduction <add>, %1083, %cst_426 [0] : vector<4x128xf32> to vector<128xf32>
    %1085 = vector.shape_cast %1084 : vector<128xf32> to vector<1x128xf32>
    %cst_427 = arith.constant 4.000000e+00 : f32
    %1086 = vector.broadcast %cst_427 : f32 to vector<1x128xf32>
    %1087 = arith.divf %1085, %1086 : vector<1x128xf32>
    %1088 = arith.truncf %1087 : vector<1x128xf32> to vector<1x128xbf16>
    %c33_428 = arith.constant 33 : index
    %c0_429 = arith.constant 0 : index
    %c0_430 = arith.constant 0 : index
    %1089 = vector.load %arg3[%c33_428, %c0_429, %c0_430] : memref<34x128x128xbf16, #tpu.memory_space<vmem>>, vector<1x128x128xbf16>
    %1090 = vector.shape_cast %1089 : vector<1x128x128xbf16> to vector<128x128xbf16>
    %cst_431 = arith.constant dense<0.000000e+00> : vector<1x128xf32>
    %1091 = tpu.matmul %1088, %1090, %cst_431 {dimension_numbers = #tpu.dot_dimension_numbers<[1], [0], [0], [1], [0, 0, 1, 1], [], []>} : vector<1x128xbf16>, vector<128x128xbf16>, vector<1x128xf32> -> vector<1x128xf32>
    %c49 = arith.constant 49 : index
    %c0_432 = arith.constant 0 : index
    %1092 = vector.load %arg4[%c49, %c0_432] : memref<50x128xf32, #tpu.memory_space<vmem>>, vector<1x128xf32>
    %1093 = arith.addf %1091, %1092 : vector<1x128xf32>
    %1094 = vector.shape_cast %1093 : vector<1x128xf32> to vector<1x1x128xf32>
    %c0_433 = arith.constant 0 : index
    %c0_434 = arith.constant 0 : index
    %c0_435 = arith.constant 0 : index
    %1095 = vector.load %arg10[%c0_433, %c0_434, %c0_435] : memref<1x1x128xf32, #tpu.memory_space<vmem>>, vector<1x1x128xf32>
    tpu.vector_store %arg10[%c0_433, %c0_434, %c0_435], %1094 {strides = array<i32>} : memref<1x1x128xf32, #tpu.memory_space<vmem>>, vector<1x1x128xf32>,
    return
  }
  func.func @transform_0(%arg0: i32) -> i32 {
    %c0_i32 = arith.constant 0 : i32
    %c0_i32_0 = arith.constant 0 : i32
    return %c0_i32 : i32
  }
  func.func @transform_1(%arg0: i32) -> (i32, i32, i32) {
    %c0_i32 = arith.constant 0 : i32
    %c0_i32_0 = arith.constant 0 : i32
    %c0_i32_1 = arith.constant 0 : i32
    return %arg0, %c0_i32, %c0_i32_0 : i32, i32, i32
  }
  func.func @transform_2(%arg0: i32) -> (i32, i32, i32) {
    %c0_i32 = arith.constant 0 : i32
    %c0_i32_0 = arith.constant 0 : i32
    %c0_i32_1 = arith.constant 0 : i32
    %c0_i32_2 = arith.constant 0 : i32
    return %c0_i32, %c0_i32_0, %c0_i32_1 : i32, i32, i32
  }
  func.func @transform_3(%arg0: i32) -> (i32, i32) {
    %c0_i32 = arith.constant 0 : i32
    %c0_i32_0 = arith.constant 0 : i32
    %c0_i32_1 = arith.constant 0 : i32
    return %c0_i32, %c0_i32_0 : i32, i32
  }
  func.func @transform_4(%arg0: i32) -> (i32, i32, i32) {
    %c0_i32 = arith.constant 0 : i32
    %c0_i32_0 = arith.constant 0 : i32
    %c0_i32_1 = arith.constant 0 : i32
    %c0_i32_2 = arith.constant 0 : i32
    return %c0_i32, %c0_i32_0, %c0_i32_1 : i32, i32, i32
  }
  func.func @transform_5(%arg0: i32) -> (i32, i32, i32) {
    %c0_i32 = arith.constant 0 : i32
    %c0_i32_0 = arith.constant 0 : i32
    %c0_i32_1 = arith.constant 0 : i32
    %c0_i32_2 = arith.constant 0 : i32
    return %c0_i32, %c0_i32_0, %c0_i32_1 : i32, i32, i32
  }
  func.func @transform_6(%arg0: i32) -> (i32, i32, i32) {
    %c0_i32 = arith.constant 0 : i32
    %c0_i32_0 = arith.constant 0 : i32
    %c0_i32_1 = arith.constant 0 : i32
    %c0_i32_2 = arith.constant 0 : i32
    return %c0_i32, %c0_i32_0, %c0_i32_1 : i32, i32, i32
  }
  func.func @transform_7(%arg0: i32) -> (i32, i32, i32) {
    %c0_i32 = arith.constant 0 : i32
    %c0_i32_0 = arith.constant 0 : i32
    %c0_i32_1 = arith.constant 0 : i32
    %c0_i32_2 = arith.constant 0 : i32
    return %c0_i32, %c0_i32_0, %c0_i32_1 : i32, i32, i32
  }
  func.func @transform_8(%arg0: i32) -> (i32, i32, i32) {
    %c0_i32 = arith.constant 0 : i32
    %c0_i32_0 = arith.constant 0 : i32
    %c0_i32_1 = arith.constant 0 : i32
    %c0_i32_2 = arith.constant 0 : i32
    return %c0_i32, %c0_i32_0, %c0_i32_1 : i32, i32, i32
  }
  func.func @transform_9(%arg0: i32) -> (i32, i32, i32) {
    %c0_i32 = arith.constant 0 : i32
    %c0_i32_0 = arith.constant 0 : i32
    %c0_i32_1 = arith.constant 0 : i32
    return %arg0, %c0_i32, %c0_i32_0 : i32, i32, i32
  }
}

</mosaic_0001>

<llo_original>
// kernel: swin_forward.1
$region0: #{swin_forward.1}
  #allocation0 [shape = 'u32[]', space=smem, size = 0x4, offset = 0x4, fixed_abs, tag = 'smem constant byte address 0x4 - core index']
  #allocation1 [shape = 'u32[144,128]{1,0:T(1,128)}', space=vmem, size = 0x12000, scoped, tag = 'internal scratch']
  %s0 = inlined_call_operand.hbm [shape: f32[12], index: 0, kind: input, shape index: {}]
  %s1 = inlined_call_operand.vmem [shape: f32[2,16,128], index: 1, kind: input, shape index: {}]
  %s2 = inlined_call_operand.hbm [shape: bf16[34,128,128], index: 2, kind: input, shape index: {}]
  %s3 = inlined_call_operand.hbm [shape: f32[50,128], index: 3, kind: input, shape index: {}]
  %s4 = inlined_call_operand.hbm [shape: f32[2,16,16], index: 4, kind: input, shape index: {}]
  %s5 = inlined_call_operand.hbm [shape: f32[2,16,16], index: 5, kind: input, shape index: {}]
  %s6 = inlined_call_operand.hbm [shape: f32[4,4,4], index: 6, kind: input, shape index: {}]
  %s7 = inlined_call_operand.hbm [shape: f32[4,4,4], index: 7, kind: input, shape index: {}]
  %s8 = inlined_call_operand.hbm [shape: f32[4,4,16], index: 8, kind: input, shape index: {}]
  %s9 = inlined_call_operand.hbm [shape: f32[2,1,128], index: 9, kind: output, shape index: {}]
  %s10 = sld [smem:[#allocation0]]
  $region101: #{swin_forward.1} parent=0
    _
  %s12 = ssub.s32 1, %s10
  %s13 = scalar_select 0, %s12, %s10
  $region1: #{swin_forward.1} parent=0
    #allocation2 [shape = 'u8[512]{0}', space=smem, size = 0x200, scoped, tag = 'input window, operand 0, single buffered']
    #allocation3 [shape = 's32[2]{0}', space=sflag, size = 0x8, scoped, tag = 'scoped memory for swin_forward.1']
    #allocation4 [shape = 's32[2]{0}', space=sflag, size = 0x8, scoped, tag = 'scoped memory for swin_forward.1']
    #allocation5 [shape = 's32[2]{0}', space=sflag, size = 0x8, scoped, tag = 'scoped memory for swin_forward.1']
    #allocation6 [shape = 'u8[1114112]{0}', space=vmem, size = 0x110000, scoped, tag = 'input window, operand 2, single buffered']
    #allocation7 [shape = 'u8[28672]{0}', space=vmem, size = 0x7000, scoped, tag = 'input window, operand 3, single buffered']
    #allocation8 [shape = 's32[1]{0}', space=sflag, size = 0x4, scoped, tag = 'scoped memory for swin_forward.1']
    #allocation9 [shape = 'u8[16384]{0}', space=vmem, size = 0x4000, scoped, tag = 'input window, operand 4, single buffered']
    #allocation10 [shape = 'u8[16384]{0}', space=vmem, size = 0x4000, scoped, tag = 'input window, operand 5, single buffered']
    #allocation11 [shape = 's32[1]{0}', space=sflag, size = 0x4, scoped, tag = 'scoped memory for swin_forward.1']
    #allocation12 [shape = 'u8[8192]{0}', space=vmem, size = 0x2000, scoped, tag = 'input window, operand 6, single buffered']
    #allocation13 [shape = 'u8[8192]{0}', space=vmem, size = 0x2000, scoped, tag = 'input window, operand 7, single buffered']
    #allocation14 [shape = 's32[1]{0}', space=sflag, size = 0x4, scoped, tag = 'scoped memory for swin_forward.1']
    #allocation15 [shape = 'u8[8192]{0}', space=vmem, size = 0x2000, scoped, tag = 'input window, operand 8, single buffered']
    #allocation16 [shape = 'u8[1024]{0}', space=vmem, size = 0x400, scoped, tag = 'output window, operand 0']
    %14 = vsyncpa [#allocation5], 0
    %15 = vsyncpa [#allocation3], 0
    %16 = vsyncpa [#allocation8], 0
    %17 = vsyncpa [#allocation11], 0
    %18 = vsyncpa [#allocation14], 0
    %19 = vsyncpa [#allocation4], 0
    %s20 = scalar_lea.sflag [#allocation4], 1
    %21 = vsyncpa %s20, 0
    loop: start=0, step=1, limit=4
    $region2: #{swin_forward.1} parent=1 // loop_pre_header
      _
    $region3: #{swin_forward.1} parent=1 // loop_header
      %s23 = sphi 0, %s27
      %p24 = scmp.ge.s32.totalorder %s23, 4
      %s31 = sphi 0, %s31
      %s33 = sphi 0, %s31
      %s34 = sphi 0, %s33
      %s48 = sphi 0, %s34
      %s54 = sphi 0, %s56
      %s57 = sphi 0, %s54
      %s58 = sphi 0, %s57
      %s74 = sphi 0, %s58
      %s78 = sphi 0, %s78
      %s80 = sphi 0, %s78
      %s81 = sphi 0, %s80
      %s95 = sphi 0, %s81
      %s99 = sphi 0, %s99
      %s101 = sphi 0, %s99
      %s102 = sphi 0, %s101
      %s116 = sphi 0, %s102
      %s120 = sphi 0, %s120
      %s122 = sphi 0, %s120
      %s123 = sphi 0, %s122
      %s137 = sphi 0, %s123
      %s141 = sphi 0, %s141
      %s143 = sphi 0, %s141
      %s144 = sphi 0, %s143
      %s158 = sphi 0, %s144
      %s162 = sphi 0, %s162
      %s164 = sphi 0, %s162
      %s165 = sphi 0, %s164
      %s179 = sphi 0, %s165
      %s183 = sphi 0, %s183
      %s185 = sphi 0, %s183
      %s186 = sphi 0, %s185
      %s200 = sphi 0, %s186
      %s204 = sphi 0, %s204
      %s206 = sphi 0, %s204
      %s207 = sphi 0, %s206
      %s221 = sphi 0, %s207
      %s227 = sphi 0, %s229
      %s230 = sphi 0, %s227
      %s231 = sphi 0, %s230
      %s247 = sphi 0, %s231
    $region4: #{swin_forward.1} parent=1 // loop_header_branch
      %26 = sbr.rel (%p24) target = $region8
    $region5: #{swin_forward.1} parent=1 // loop_body
      %s28 = ssub.s32 %s23, 1
      %s29 = ssub.s32 %s23, 2
      %s30 = sadd.s32 %s23, 1
      %s32 = sadd.s32 %s31, 1
      %p35 = scmp.eq.s32.totalorder %s23, 1
      %p36 = scmp.ne.s32.totalorder %s31, %s33
      %p37 = scmp.eq.s32.totalorder %s23, 0
      %p38 = por %p36, %p37
      %p39 = scmp.ne.s32.totalorder %s31, %s33
      %p40 = scmp.eq.s32.totalorder %s28, 1
      %p41 = por %p39, %p40
      %p42 = scmp.ne.s32.totalorder %s33, %s34
      %p43 = scmp.eq.s32.totalorder %s28, 0
      %p44 = por %p42, %p43
      %p45 = scmp.ne.s32.totalorder %s33, %s34
      %p46 = scmp.eq.s32.totalorder %s29, 1
      %p47 = por %p45, %p46
      %p49 = scmp.ne.s32.totalorder %s34, %s48
      %p50 = scmp.eq.s32.totalorder %s29, 0
      %p51 = por %p49, %p50
      %s52 = ssub.s32 %s23, %s30
      %p53 = scmp.eq.s32.totalorder %s52, 0
      %s55 = sadd.s32 %s54, 1
      %s56 = scalar_select %p53, %s54, %s55
      %p59 = pneg %p53
      %p60 = scmp.eq.s32.totalorder %s23, 1
      %p61 = por %p59, %p60
      %p62 = scmp.ne.s32.totalorder %s54, %s57
      %p63 = scmp.eq.s32.totalorder %s23, 0
      %p64 = por %p62, %p63
      %p65 = scmp.ne.s32.totalorder %s54, %s57
      %p66 = scmp.eq.s32.totalorder %s28, 1
      %p67 = por %p65, %p66
      %p68 = scmp.ne.s32.totalorder %s57, %s58
      %p69 = scmp.eq.s32.totalorder %s28, 0
      %p70 = por %p68, %p69
      %p71 = scmp.ne.s32.totalorder %s57, %s58
      %p72 = scmp.eq.s32.totalorder %s29, 1
      %p73 = por %p71, %p72
      %p75 = scmp.ne.s32.totalorder %s58, %s74
      %p76 = scmp.eq.s32.totalorder %s29, 0
      %p77 = por %p75, %p76
      %s79 = sadd.s32 %s78, 1
      %p82 = scmp.eq.s32.totalorder %s23, 1
      %p83 = scmp.ne.s32.totalorder %s78, %s80
      %p84 = scmp.eq.s32.totalorder %s23, 0
      %p85 = por %p83, %p84
      %p86 = scmp.ne.s32.totalorder %s78, %s80
      %p87 = scmp.eq.s32.totalorder %s28, 1
      %p88 = por %p86, %p87
      %p89 = scmp.ne.s32.totalorder %s80, %s81
      %p90 = scmp.eq.s32.totalorder %s28, 0
      %p91 = por %p89, %p90
      %p92 = scmp.ne.s32.totalorder %s80, %s81
      %p93 = scmp.eq.s32.totalorder %s29, 1
      %p94 = por %p92, %p93
      %p96 = scmp.ne.s32.totalorder %s81, %s95
      %p97 = scmp.eq.s32.totalorder %s29, 0
      %p98 = por %p96, %p97
      %s100 = sadd.s32 %s99, 1
      %p103 = scmp.eq.s32.totalorder %s23, 1
      %p104 = scmp.ne.s32.totalorder %s99, %s101
      %p105 = scmp.eq.s32.totalorder %s23, 0
      %p106 = por %p104, %p105
      %p107 = scmp.ne.s32.totalorder %s99, %s101
      %p108 = scmp.eq.s32.totalorder %s28, 1
      %p109 = por %p107, %p108
      %p110 = scmp.ne.s32.totalorder %s101, %s102
      %p111 = scmp.eq.s32.totalorder %s28, 0
      %p112 = por %p110, %p111
      %p113 = scmp.ne.s32.totalorder %s101, %s102
      %p114 = scmp.eq.s32.totalorder %s29, 1
      %p115 = por %p113, %p114
      %p117 = scmp.ne.s32.totalorder %s102, %s116
      %p118 = scmp.eq.s32.totalorder %s29, 0
      %p119 = por %p117, %p118
      %s121 = sadd.s32 %s120, 1
      %p124 = scmp.eq.s32.totalorder %s23, 1
      %p125 = scmp.ne.s32.totalorder %s120, %s122
      %p126 = scmp.eq.s32.totalorder %s23, 0
      %p127 = por %p125, %p126
      %p128 = scmp.ne.s32.totalorder %s120, %s122
      %p129 = scmp.eq.s32.totalorder %s28, 1
      %p130 = por %p128, %p129
      %p131 = scmp.ne.s32.totalorder %s122, %s123
      %p132 = scmp.eq.s32.totalorder %s28, 0
      %p133 = por %p131, %p132
      %p134 = scmp.ne.s32.totalorder %s122, %s123
      %p135 = scmp.eq.s32.totalorder %s29, 1
      %p136 = por %p134, %p135
      %p138 = scmp.ne.s32.totalorder %s123, %s137
      %p139 = scmp.eq.s32.totalorder %s29, 0
      %p140 = por %p138, %p139
      %s142 = sadd.s32 %s141, 1
      %p145 = scmp.eq.s32.totalorder %s23, 1
      %p146 = scmp.ne.s32.totalorder %s141, %s143
      %p147 = scmp.eq.s32.totalorder %s23, 0
      %p148 = por %p146, %p147
      %p149 = scmp.ne.s32.totalorder %s141, %s143
      %p150 = scmp.eq.s32.totalorder %s28, 1
      %p151 = por %p149, %p150
      %p152 = scmp.ne.s32.totalorder %s143, %s144
      %p153 = scmp.eq.s32.totalorder %s28, 0
      %p154 = por %p152, %p153
      %p155 = scmp.ne.s32.totalorder %s143, %s144
      %p156 = scmp.eq.s32.totalorder %s29, 1
      %p157 = por %p155, %p156
      %p159 = scmp.ne.s32.totalorder %s144, %s158
      %p160 = scmp.eq.s32.totalorder %s29, 0
      %p161 = por %p159, %p160
      %s163 = sadd.s32 %s162, 1
      %p166 = scmp.eq.s32.totalorder %s23, 1
      %p167 = scmp.ne.s32.totalorder %s162, %s164
      %p168 = scmp.eq.s32.totalorder %s23, 0
      %p169 = por %p167, %p168
      %p170 = scmp.ne.s32.totalorder %s162, %s164
      %p171 = scmp.eq.s32.totalorder %s28, 1
      %p172 = por %p170, %p171
      %p173 = scmp.ne.s32.totalorder %s164, %s165
      %p174 = scmp.eq.s32.totalorder %s28, 0
      %p175 = por %p173, %p174
      %p176 = scmp.ne.s32.totalorder %s164, %s165
      %p177 = scmp.eq.s32.totalorder %s29, 1
      %p178 = por %p176, %p177
      %p180 = scmp.ne.s32.totalorder %s165, %s179
      %p181 = scmp.eq.s32.totalorder %s29, 0
      %p182 = por %p180, %p181
      %s184 = sadd.s32 %s183, 1
      %p187 = scmp.eq.s32.totalorder %s23, 1
      %p188 = scmp.ne.s32.totalorder %s183, %s185
      %p189 = scmp.eq.s32.totalorder %s23, 0
      %p190 = por %p188, %p189
      %p191 = scmp.ne.s32.totalorder %s183, %s185
      %p192 = scmp.eq.s32.totalorder %s28, 1
      %p193 = por %p191, %p192
      %p194 = scmp.ne.s32.totalorder %s185, %s186
      %p195 = scmp.eq.s32.totalorder %s28, 0
      %p196 = por %p194, %p195
      %p197 = scmp.ne.s32.totalorder %s185, %s186
      %p198 = scmp.eq.s32.totalorder %s29, 1
      %p199 = por %p197, %p198
      %p201 = scmp.ne.s32.totalorder %s186, %s200
      %p202 = scmp.eq.s32.totalorder %s29, 0
      %p203 = por %p201, %p202
      %s205 = sadd.s32 %s204, 1
      %p208 = scmp.eq.s32.totalorder %s23, 1
      %p209 = scmp.ne.s32.totalorder %s204, %s206
      %p210 = scmp.eq.s32.totalorder %s23, 0
      %p211 = por %p209, %p210
      %p212 = scmp.ne.s32.totalorder %s204, %s206
      %p213 = scmp.eq.s32.totalorder %s28, 1
      %p214 = por %p212, %p213
      %p215 = scmp.ne.s32.totalorder %s206, %s207
      %p216 = scmp.eq.s32.totalorder %s28, 0
      %p217 = por %p215, %p216
      %p218 = scmp.ne.s32.totalorder %s206, %s207
      %p219 = scmp.eq.s32.totalorder %s29, 1
      %p220 = por %p218, %p219
      %p222 = scmp.ne.s32.totalorder %s207, %s221
      %p223 = scmp.eq.s32.totalorder %s29, 0
      %p224 = por %p222, %p223
      %s225 = ssub.s32 %s23, %s30
      %p226 = scmp.eq.s32.totalorder %s225, 0
      %s228 = sadd.s32 %s227, 1
      %s229 = scalar_select %p226, %s227, %s228
      %p232 = pneg %p226
      %p233 = scmp.eq.s32.totalorder %s23, 1
      %p234 = por %p232, %p233
      %p235 = scmp.ne.s32.totalorder %s227, %s230
      %p236 = scmp.eq.s32.totalorder %s23, 0
      %p237 = por %p235, %p236
      %p238 = scmp.ne.s32.totalorder %s227, %s230
      %p239 = scmp.eq.s32.totalorder %s28, 1
      %p240 = por %p238, %p239
      %p241 = scmp.ne.s32.totalorder %s230, %s231
      %p242 = scmp.eq.s32.totalorder %s28, 0
      %p243 = por %p241, %p242
      %p244 = scmp.ne.s32.totalorder %s230, %s231
      %p245 = scmp.eq.s32.totalorder %s29, 1
      %p246 = por %p244, %p245
      %p248 = scmp.ne.s32.totalorder %s231, %s247
      %p249 = scmp.eq.s32.totalorder %s29, 0
      %p250 = por %p248, %p249
      %p251 = scmp.le.s32.totalorder 1, %s23
      %p252 = scmp.lt.s32.totalorder %s23, 3
      %p253 = pnand %p251, %p252
      %p254 = pneg %p253
      // Predicated region
      $region9: #{swin_forward.1} parent=5 // pred_check
        _
      $region10: #{swin_forward.1} parent=5 // pred_check_branch
        %256 = sbr.rel (%p253) target = $region12
      $region11: #{swin_forward.1} parent=5 // pred_region
        %s257 = ssub.s32 %s23, 1
        // Predicated region
        $region13: #{swin_forward.1} parent=11 // pred_check
          %p258 = pneg %p44
        $region14: #{swin_forward.1} parent=11 // pred_check_branch
          %260 = sbr.rel (%p258) target = $region16
        $region15: #{swin_forward.1} parent=11 // pred_region
          %s262 = ssub.s32 16, 16
          %263 = vsyncadd [#allocation5], %s262
          %266 = dma.hbm_to_smem %s0, 16, [#allocation2], [#allocation5]
        $region16: #{swin_forward.1} parent=11 // pred_fallthru
          _
        // Predicated region
        $region17: #{swin_forward.1} parent=11 // pred_check
          %p267 = pneg %p91
        $region18: #{swin_forward.1} parent=11 // pred_check_branch
          %269 = sbr.rel (%p267) target = $region20
        $region19: #{swin_forward.1} parent=11 // pred_region
          %s271 = ssub.s32 34816, 34816
          %272 = vsyncadd [#allocation3], %s271
          %s273 = sshll.u32 [#allocation6], 4
          %s274 = int_to_ptr.vmem [resolvable:$true] %s273
          %279 = dma.hbm_to_vmem [thread:$0]  %s2, 34816, %s274, [#allocation3], 64, 64, 4
        $region20: #{swin_forward.1} parent=11 // pred_fallthru
          _
        // Predicated region
        $region21: #{swin_forward.1} parent=11 // pred_check
          %p280 = pneg %p112
        $region22: #{swin_forward.1} parent=11 // pred_check_branch
          %282 = sbr.rel (%p280) target = $region24
        $region23: #{swin_forward.1} parent=11 // pred_region
          %s284 = ssub.s32 896, 896
          %285 = vsyncadd [#allocation8], %s284
          %s286 = sshll.u32 [#allocation7], 4
          %s287 = int_to_ptr.vmem [resolvable:$true] %s286
          %292 = dma.hbm_to_vmem [thread:$0]  %s3, 896, %s287, [#allocation8], 128, 128, 8
        $region24: #{swin_forward.1} parent=11 // pred_fallthru
          _
        // Predicated region
        $region25: #{swin_forward.1} parent=11 // pred_check
          %p293 = pneg %p133
        $region26: #{swin_forward.1} parent=11 // pred_check_branch
          %295 = sbr.rel (%p293) target = $region28
        $region27: #{swin_forward.1} parent=11 // pred_region
          %s297 = ssub.s32 512, 512
          %298 = vsyncadd [#allocation8], %s297
          %s299 = sshll.u32 [#allocation9], 4
          %s300 = int_to_ptr.vmem [resolvable:$true] %s299
          %305 = dma.hbm_to_vmem [thread:$0]  %s4, 512, %s300, [#allocation8], 128, 128, 8
        $region28: #{swin_forward.1} parent=11 // pred_fallthru
          _
        // Predicated region
        $region29: #{swin_forward.1} parent=11 // pred_check
          %p306 = pneg %p154
        $region30: #{swin_forward.1} parent=11 // pred_check_branch
          %308 = sbr.rel (%p306) target = $region32
        $region31: #{swin_forward.1} parent=11 // pred_region
          %s310 = ssub.s32 512, 512
          %311 = vsyncadd [#allocation11], %s310
          %s312 = sshll.u32 [#allocation10], 4
          %s313 = int_to_ptr.vmem [resolvable:$true] %s312
          %318 = dma.hbm_to_vmem [thread:$0]  %s5, 512, %s313, [#allocation11], 128, 128, 8
        $region32: #{swin_forward.1} parent=11 // pred_fallthru
          _
        // Predicated region
        $region33: #{swin_forward.1} parent=11 // pred_check
          %p319 = pneg %p175
        $region34: #{swin_forward.1} parent=11 // pred_check_branch
          %321 = sbr.rel (%p319) target = $region36
        $region35: #{swin_forward.1} parent=11 // pred_region
          %s323 = ssub.s32 256, 256
          %324 = vsyncadd [#allocation11], %s323
          %s325 = sshll.u32 [#allocation12], 4
          %s326 = int_to_ptr.vmem [resolvable:$true] %s325
          %331 = dma.hbm_to_vmem [thread:$0]  %s6, 256, %s326, [#allocation11], 64, 64, 4
        $region36: #{swin_forward.1} parent=11 // pred_fallthru
          _
        // Predicated region
        $region37: #{swin_forward.1} parent=11 // pred_check
          %p332 = pneg %p196
        $region38: #{swin_forward.1} parent=11 // pred_check_branch
          %334 = sbr.rel (%p332) target = $region40
        $region39: #{swin_forward.1} parent=11 // pred_region
          %s336 = ssub.s32 256, 256
          %337 = vsyncadd [#allocation14], %s336
          %s338 = sshll.u32 [#allocation13], 4
          %s339 = int_to_ptr.vmem [resolvable:$true] %s338
          %344 = dma.hbm_to_vmem [thread:$0]  %s7, 256, %s339, [#allocation14], 64, 64, 4
        $region40: #{swin_forward.1} parent=11 // pred_fallthru
          _
        // Predicated region
        $region41: #{swin_forward.1} parent=11 // pred_check
          %p345 = pneg %p217
        $region42: #{swin_forward.1} parent=11 // pred_check_branch
          %347 = sbr.rel (%p345) target = $region44
        $region43: #{swin_forward.1} parent=11 // pred_region
          %s349 = ssub.s32 256, 256
          %350 = vsyncadd [#allocation14], %s349
          %s351 = sshll.u32 [#allocation15], 4
          %s352 = int_to_ptr.vmem [resolvable:$true] %s351
          %357 = dma.hbm_to_vmem [thread:$0]  %s8, 256, %s352, [#allocation14], 64, 64, 4
        $region44: #{swin_forward.1} parent=11 // pred_fallthru
          _
      $region12: #{swin_forward.1} parent=5 // pred_fallthru
        _
      %p358 = scmp.lt.s32.totalorder %s23, 2
      // Predicated region
      $region45: #{swin_forward.1} parent=5 // pred_check
        %p359 = pneg %p358
      $region46: #{swin_forward.1} parent=5 // pred_check_branch
        %361 = sbr.rel (%p359) target = $region48
      $region47: #{swin_forward.1} parent=5 // pred_region
        // Predicated region
        $region49: #{swin_forward.1} parent=47 // pred_check
          %p362 = pneg %p64
        $region50: #{swin_forward.1} parent=47 // pred_check_branch
          %364 = sbr.rel (%p362) target = $region52
        $region51: #{swin_forward.1} parent=47 // pred_region
          %p365 = scmp.lt.s32.totalorder %s23, 1
          %s366 = scalar_select %p365, %s23, 1
          %s367 = smul.addr %s366, 2
          %s368 = smul.addr %s367, 8
          %s369 = scalar_lea.vmem %s1, %s368
        $region52: #{swin_forward.1} parent=47 // pred_fallthru
          _
      $region48: #{swin_forward.1} parent=5 // pred_fallthru
        _
      %p370 = scmp.le.s32.totalorder 1, %s23
      %p371 = scmp.lt.s32.totalorder %s23, 3
      %p372 = pnand %p370, %p371
      %p373 = pneg %p372
      // Predicated region
      $region53: #{swin_forward.1} parent=5 // pred_check
        _
      $region54: #{swin_forward.1} parent=5 // pred_check_branch
        %375 = sbr.rel (%p372) target = $region56
      $region55: #{swin_forward.1} parent=5 // pred_region
        %s376 = ssub.s32 %s23, 1
        // Predicated region
        $region57: #{swin_forward.1} parent=55 // pred_check
          %p377 = pneg %p44
        $region58: #{swin_forward.1} parent=55 // pred_check_branch
          %379 = sbr.rel (%p377) target = $region60
        $region59: #{swin_forward.1} parent=55 // pred_region
          %380 = dma.done [#allocation5], 16
        $region60: #{swin_forward.1} parent=55 // pred_fallthru
          _
        // Predicated region
        $region61: #{swin_forward.1} parent=55 // pred_check
          %p381 = pneg %p91
        $region62: #{swin_forward.1} parent=55 // pred_check_branch
          %383 = sbr.rel (%p381) target = $region64
        $region63: #{swin_forward.1} parent=55 // pred_region
          %384 = dma.done [#allocation3], 34816
        $region64: #{swin_forward.1} parent=55 // pred_fallthru
          _
        // Predicated region
        $region65: #{swin_forward.1} parent=55 // pred_check
          %p385 = pneg %p112
        $region66: #{swin_forward.1} parent=55 // pred_check_branch
          %387 = sbr.rel (%p385) target = $region68
        $region67: #{swin_forward.1} parent=55 // pred_region
          %388 = dma.done [#allocation8], 896
        $region68: #{swin_forward.1} parent=55 // pred_fallthru
          _
        // Predicated region
        $region69: #{swin_forward.1} parent=55 // pred_check
          %p389 = pneg %p133
        $region70: #{swin_forward.1} parent=55 // pred_check_branch
          %391 = sbr.rel (%p389) target = $region72
        $region71: #{swin_forward.1} parent=55 // pred_region
          %392 = dma.done [#allocation8], 512
        $region72: #{swin_forward.1} parent=55 // pred_fallthru
          _
        // Predicated region
        $region73: #{swin_forward.1} parent=55 // pred_check
          %p393 = pneg %p154
        $region74: #{swin_forward.1} parent=55 // pred_check_branch
          %395 = sbr.rel (%p393) target = $region76
        $region75: #{swin_forward.1} parent=55 // pred_region
          %396 = dma.done [#allocation11], 512
        $region76: #{swin_forward.1} parent=55 // pred_fallthru
          _
        // Predicated region
        $region77: #{swin_forward.1} parent=55 // pred_check
          %p397 = pneg %p175
        $region78: #{swin_forward.1} parent=55 // pred_check_branch
          %399 = sbr.rel (%p397) target = $region80
        $region79: #{swin_forward.1} parent=55 // pred_region
          %400 = dma.done [#allocation11], 256
        $region80: #{swin_forward.1} parent=55 // pred_fallthru
          _
        // Predicated region
        $region81: #{swin_forward.1} parent=55 // pred_check
          %p401 = pneg %p196
        $region82: #{swin_forward.1} parent=55 // pred_check_branch
          %403 = sbr.rel (%p401) target = $region84
        $region83: #{swin_forward.1} parent=55 // pred_region
          %404 = dma.done [#allocation14], 256
        $region84: #{swin_forward.1} parent=55 // pred_fallthru
          _
        // Predicated region
        $region85: #{swin_forward.1} parent=55 // pred_check
          %p405 = pneg %p217
        $region86: #{swin_forward.1} parent=55 // pred_check_branch
          %407 = sbr.rel (%p405) target = $region88
        $region87: #{swin_forward.1} parent=55 // pred_region
          %408 = dma.done [#allocation14], 256
        $region88: #{swin_forward.1} parent=55 // pred_fallthru
          _
        %409 = sfence
        %p410 = pneg %p44
        %p411 = pneg %p41
        %p412 = scmp.lt.s32.totalorder %s28, 1
        %s413 = scalar_select %p412, %s28, 1
        %s414 = smul.addr %s413, 2
        %s415 = smul.addr %s414, 8
        %s416 = scalar_lea.vmem %s1, %s415
        %p417 = pneg %p70
        %p418 = pneg %p67
        %p419 = pneg %p91
        %p420 = pneg %p88
        %p421 = pneg %p112
        %p422 = pneg %p109
        %p423 = pneg %p133
        %p424 = pneg %p130
        %p425 = pneg %p154
        %p426 = pneg %p151
        %p427 = pneg %p175
        %p428 = pneg %p172
        %p429 = pneg %p196
        %p430 = pneg %p193
        %p431 = pneg %p217
        %p432 = pneg %p214
        %p433 = pneg %p243
        %p434 = pneg %p240
        %s435 = sand.u32 %s230, 1
        %s436 = scalar_lea.sflag [#allocation4], %s435
        %s437 = sand.u32 %s230, 1
        %s438 = scalar_lea.vmem [#allocation16], %s437
        %p439 = scmp.lt.s32.totalorder %s28, 1
        %s440 = scalar_select %p439, %s28, 1
        %s441 = smul.addr %s440, 2
        %s442 = smul.addr %s441, 8
        %s443 = scalar_lea.vmem %s1, %s442
        %v445 = vlaneseq
        %v446 = vand.u32 %v445, 127
        %vm447 = vcmp.lt.s32.totalorder %v446, 32
        %v448 = vsel %vm447, 1, 0
        %v449 = vcvt.s32.f32 %v448
        %vm450 = vcmp.lt.s32.totalorder %v446, 64
        %v451 = vsel %vm450, 1, 0
        %v452 = vcvt.s32.f32 %v451
        %v453 = vld [vmem:[%s443] sm:$0xff]
        %v454 = vld [vmem:[%s443 + $0x8] sm:$0xff]
        %v455 = vpack.c.bf16 %v454, %v453
        %v456 = vld [vmem:[#allocation6] sm:$0xf]
        %v457 = vld [vmem:[#allocation6 + $0x4] sm:$0xf]
        %v458 = vld [vmem:[#allocation6 + $0x8] sm:$0xf]
        %v459 = vld [vmem:[#allocation6 + $0xc] sm:$0xf]
        %v460 = vld [vmem:[#allocation6 + $0x10] sm:$0xf]
        %v461 = vld [vmem:[#allocation6 + $0x14] sm:$0xf]
        %v462 = vld [vmem:[#allocation6 + $0x18] sm:$0xf]
        %v463 = vld [vmem:[#allocation6 + $0x1c] sm:$0xf]
        %v464 = vld [vmem:[#allocation6 + $0x20] sm:$0xf]
        %v465 = vld [vmem:[#allocation6 + $0x24] sm:$0xf]
        %v466 = vld [vmem:[#allocation6 + $0x28] sm:$0xf]
        %v467 = vld [vmem:[#allocation6 + $0x2c] sm:$0xf]
        %v468 = vld [vmem:[#allocation6 + $0x30] sm:$0xf]
        %v469 = vld [vmem:[#allocation6 + $0x34] sm:$0xf]
        %v470 = vld [vmem:[#allocation6 + $0x38] sm:$0xf]
        %v471 = vld [vmem:[#allocation6 + $0x3c] sm:$0xf]
        %v472 = vld [vmem:[#allocation7] sm:$0x1]
        %v473 = vlaneseq
        %v474 = vshrl.u32 %v473, 7
        %v475 = vsub.s32 0, %v474
        %v476 = vrot.slane %v472, %v475
        %v493 = vunpack.c.l.b16 %v456
        %v494 = vunpack.c.l.b16 %v457
        %v495 = vunpack.c.l.b16 %v458
        %v496 = vunpack.c.l.b16 %v459
        %v497 = vunpack.c.l.b16 %v460
        %v498 = vunpack.c.l.b16 %v461
        %v499 = vunpack.c.l.b16 %v462
        %v500 = vunpack.c.l.b16 %v463
        %v501 = vunpack.c.l.b16 %v464
        %v502 = vunpack.c.l.b16 %v465
        %v503 = vunpack.c.l.b16 %v466
        %v504 = vunpack.c.l.b16 %v467
        %v505 = vunpack.c.l.b16 %v468
        %v506 = vunpack.c.l.b16 %v469
        %v507 = vunpack.c.l.b16 %v470
        %v508 = vunpack.c.l.b16 %v471
        %v509 = vpack.c.b16 %v494, %v493
        %v510 = vpack.c.b16 %v496, %v495
        %v511 = vpack.c.b16 %v498, %v497
        %v512 = vpack.c.b16 %v500, %v499
        %v513 = vpack.c.b16 %v502, %v501
        %v514 = vpack.c.b16 %v504, %v503
        %v515 = vpack.c.b16 %v506, %v505
        %v516 = vpack.c.b16 %v508, %v507
        %525 = vmatprep.subr.bf16.mxu0 0
        %526 = vmatpush1.bf16.msra.mxu0 %v509
        %527 = vmatprep.subr.bf16.mxu0 0
        %528 = vmatpush1.bf16.msra.mxu0 %v510
        %529 = vmatprep.subr.bf16.mxu0 0
        %530 = vmatpush1.bf16.msra.mxu0 %v511
        %531 = vmatprep.subr.bf16.mxu0 0
        %532 = vmatpush1.bf16.msra.mxu0 %v512
        %533 = vmatprep.subr.bf16.mxu0 0
        %534 = vmatpush1.bf16.msra.mxu0 %v513
        %535 = vmatprep.subr.bf16.mxu0 0
        %536 = vmatpush1.bf16.msra.mxu0 %v514
        %537 = vmatprep.subr.bf16.mxu0 0
        %538 = vmatpush1.bf16.msra.mxu0 %v515
        %539 = vmatprep.subr.bf16.mxu0 0
        %540 = vmatpush1.bf16.msra.mxu0 %v516
        %541 = vmatprep.subr.bf16.mxu0 0
        %542 = vmatpush1.bf16.msra.mxu0 0
        %543 = vmatprep.subr.bf16.mxu0 0
        %544 = vmatpush1.bf16.msra.mxu0 0
        %545 = vmatprep.subr.bf16.mxu0 0
        %546 = vmatpush1.bf16.msra.mxu0 0
        %547 = vmatprep.subr.bf16.mxu0 0
        %548 = vmatpush1.bf16.msra.mxu0 0
        %549 = vmatprep.subr.bf16.mxu0 0
        %550 = vmatpush1.bf16.msra.mxu0 0
        %551 = vmatprep.subr.bf16.mxu0 0
        %552 = vmatpush1.bf16.msra.mxu0 0
        %553 = vmatprep.subr.bf16.mxu0 0
        %554 = vmatpush1.bf16.msra.mxu0 0
        %555 = vmatprep.subr.bf16.mxu0 0
        %556 = vmatpush1.bf16.msra.mxu0 0
        %557 = vmatprep.mubr.bf16.mxu0 0
        %558 = vmatmul.mubr.bf16.gmra.mrb[0].mxu0 %v455
        %v559 = vpop.f32.mrb[0].mxu0
        %v560 = vadd.f32 %v476, %v559
        %v561 = vpop.f32.mrb[0].mxu0
        %v562 = vpop.f32.mrb[0].mxu0
        %v563 = vadd.f32 %v476, %v562
        %v564 = vpop.f32.mrb[0].mxu0
        %565 = vdwg.mxu0
        %566 = vadd.xlane.f32.xlu0 %v560
        %v567 = vpop.xlane.xlu0 %566
        %568 = vadd.xlane.f32.xlu0 %v563
        %v569 = vpop.xlane.xlu0 %568
        %v570 = vmul.f32 %v567, 0.03125
        %v571 = vmul.f32 %v569, 0.03125
        %v572 = vsub.f32 %v560, %v570
        %v573 = vsub.f32 %v563, %v571
        %v574 = vmul.f32 %v572, %v449
        %v575 = vmul.f32 %v573, %v449
        %v576 = vmul.f32 %v574, %v574
        %v577 = vmul.f32 %v575, %v575
        %578 = vadd.xlane.f32.xlu0 %v576
        %v579 = vpop.xlane.xlu0 %578
        %580 = vadd.xlane.f32.xlu0 %v577
        %v581 = vpop.xlane.xlu0 %580
        %v582 = vmul.f32 %v579, 0.03125
        %v583 = vmul.f32 %v581, 0.03125
        %v584 = vadd.f32 %v582, 1e-05
        %v585 = vadd.f32 %v583, 1e-05
        %v586 = vrsqrt.pop %v584
        %v587 = vrsqrt.pop %v585
        %v588 = vmul.f32 %v574, %v586
        %v589 = vmul.f32 %v575, %v587
        %v590 = vld [vmem:[#allocation7 + $0x1] sm:$0x1]
        %v591 = vlaneseq
        %v592 = vshrl.u32 %v591, 7
        %v593 = vsub.s32 0, %v592
        %v594 = vrot.slane %v590, %v593
        %v595 = vmul.f32 %v588, %v594
        %v596 = vmul.f32 %v589, %v594
        %v597 = vld [vmem:[#allocation7 + $0x2] sm:$0x1]
        %v598 = vlaneseq
        %v599 = vshrl.u32 %v598, 7
        %v600 = vsub.s32 0, %v599
        %v601 = vrot.slane %v597, %v600
        %v602 = vadd.f32 %v595, %v601
        %v603 = vadd.f32 %v596, %v601
        %v604 = vpack.c.bf16 %v603, %v602
        %s605 = scalar_lea.vmem [#allocation6], 64
        %v606 = vld [vmem:[%s605] sm:$0xf]
        %v607 = vld [vmem:[%s605 + $0x4] sm:$0xf]
        %v608 = vld [vmem:[%s605 + $0x8] sm:$0xf]
        %v609 = vld [vmem:[%s605 + $0xc] sm:$0xf]
        %v610 = vld [vmem:[%s605 + $0x10] sm:$0xf]
        %v611 = vld [vmem:[%s605 + $0x14] sm:$0xf]
        %v612 = vld [vmem:[%s605 + $0x18] sm:$0xf]
        %v613 = vld [vmem:[%s605 + $0x1c] sm:$0xf]
        %v614 = vld [vmem:[%s605 + $0x20] sm:$0xf]
        %v615 = vld [vmem:[%s605 + $0x24] sm:$0xf]
        %v616 = vld [vmem:[%s605 + $0x28] sm:$0xf]
        %v617 = vld [vmem:[%s605 + $0x2c] sm:$0xf]
        %v618 = vld [vmem:[%s605 + $0x30] sm:$0xf]
        %v619 = vld [vmem:[%s605 + $0x34] sm:$0xf]
        %v620 = vld [vmem:[%s605 + $0x38] sm:$0xf]
        %v621 = vld [vmem:[%s605 + $0x3c] sm:$0xf]
        %v622 = vld [vmem:[#allocation7 + $0x3] sm:$0x1]
        %v623 = vlaneseq
        %v624 = vshrl.u32 %v623, 7
        %v625 = vsub.s32 0, %v624
        %v626 = vrot.slane %v622, %v625
        %v643 = vunpack.c.l.b16 %v606
        %v644 = vunpack.c.l.b16 %v607
        %v645 = vunpack.c.l.b16 %v608
        %v646 = vunpack.c.l.b16 %v609
        %v647 = vunpack.c.l.b16 %v610
        %v648 = vunpack.c.l.b16 %v611
        %v649 = vunpack.c.l.b16 %v612
        %v650 = vunpack.c.l.b16 %v613
        %v651 = vunpack.c.l.b16 %v614
        %v652 = vunpack.c.l.b16 %v615
        %v653 = vunpack.c.l.b16 %v616
        %v654 = vunpack.c.l.b16 %v617
        %v655 = vunpack.c.l.b16 %v618
        %v656 = vunpack.c.l.b16 %v619
        %v657 = vunpack.c.l.b16 %v620
        %v658 = vunpack.c.l.b16 %v621
        %v659 = vpack.c.b16 %v644, %v643
        %v660 = vpack.c.b16 %v646, %v645
        %v661 = vpack.c.b16 %v648, %v647
        %v662 = vpack.c.b16 %v650, %v649
        %v663 = vpack.c.b16 %v652, %v651
        %v664 = vpack.c.b16 %v654, %v653
        %v665 = vpack.c.b16 %v656, %v655
        %v666 = vpack.c.b16 %v658, %v657
        %675 = vmatprep.subr.bf16.mxu0 0
        %676 = vmatpush1.bf16.msra.mxu0 %v659
        %677 = vmatprep.subr.bf16.mxu0 0
        %678 = vmatpush1.bf16.msra.mxu0 %v660
        %679 = vmatprep.subr.bf16.mxu0 0
        %680 = vmatpush1.bf16.msra.mxu0 %v661
        %681 = vmatprep.subr.bf16.mxu0 0
        %682 = vmatpush1.bf16.msra.mxu0 %v662
        %683 = vmatprep.subr.bf16.mxu0 0
        %684 = vmatpush1.bf16.msra.mxu0 %v663
        %685 = vmatprep.subr.bf16.mxu0 0
        %686 = vmatpush1.bf16.msra.mxu0 %v664
        %687 = vmatprep.subr.bf16.mxu0 0
        %688 = vmatpush1.bf16.msra.mxu0 %v665
        %689 = vmatprep.subr.bf16.mxu0 0
        %690 = vmatpush1.bf16.msra.mxu0 %v666
        %691 = vmatprep.subr.bf16.mxu0 0
        %692 = vmatpush1.bf16.msra.mxu0 0
        %693 = vmatprep.subr.bf16.mxu0 0
        %694 = vmatpush1.bf16.msra.mxu0 0
        %695 = vmatprep.subr.bf16.mxu0 0
        %696 = vmatpush1.bf16.msra.mxu0 0
        %697 = vmatprep.subr.bf16.mxu0 0
        %698 = vmatpush1.bf16.msra.mxu0 0
        %699 = vmatprep.subr.bf16.mxu0 0
        %700 = vmatpush1.bf16.msra.mxu0 0
        %701 = vmatprep.subr.bf16.mxu0 0
        %702 = vmatpush1.bf16.msra.mxu0 0
        %703 = vmatprep.subr.bf16.mxu0 0
        %704 = vmatpush1.bf16.msra.mxu0 0
        %705 = vmatprep.subr.bf16.mxu0 0
        %706 = vmatpush1.bf16.msra.mxu0 0
        %707 = vmatprep.mubr.bf16.mxu0 0
        %708 = vmatmul.mubr.bf16.gmra.mrb[0].mxu0 %v604
        %v709 = vpop.f32.mrb[0].mxu0
        %v710 = vadd.f32 %v626, %v709
        %v711 = vpop.f32.mrb[0].mxu0
        %v712 = vpop.f32.mrb[0].mxu0
        %v713 = vadd.f32 %v626, %v712
        %v714 = vpop.f32.mrb[0].mxu0
        %715 = vdwg.mxu0
        %s716 = scalar_lea.vmem [#allocation6], 128
        %v717 = vld [vmem:[%s716] sm:$0xf]
        %v718 = vld [vmem:[%s716 + $0x4] sm:$0xf]
        %v719 = vld [vmem:[%s716 + $0x8] sm:$0xf]
        %v720 = vld [vmem:[%s716 + $0xc] sm:$0xf]
        %v721 = vld [vmem:[%s716 + $0x10] sm:$0xf]
        %v722 = vld [vmem:[%s716 + $0x14] sm:$0xf]
        %v723 = vld [vmem:[%s716 + $0x18] sm:$0xf]
        %v724 = vld [vmem:[%s716 + $0x1c] sm:$0xf]
        %v725 = vld [vmem:[%s716 + $0x20] sm:$0xf]
        %v726 = vld [vmem:[%s716 + $0x24] sm:$0xf]
        %v727 = vld [vmem:[%s716 + $0x28] sm:$0xf]
        %v728 = vld [vmem:[%s716 + $0x2c] sm:$0xf]
        %v729 = vld [vmem:[%s716 + $0x30] sm:$0xf]
        %v730 = vld [vmem:[%s716 + $0x34] sm:$0xf]
        %v731 = vld [vmem:[%s716 + $0x38] sm:$0xf]
        %v732 = vld [vmem:[%s716 + $0x3c] sm:$0xf]
        %v733 = vld [vmem:[#allocation7 + $0x4] sm:$0x1]
        %v734 = vlaneseq
        %v735 = vshrl.u32 %v734, 7
        %v736 = vsub.s32 0, %v735
        %v737 = vrot.slane %v733, %v736
        %v754 = vunpack.c.l.b16 %v717
        %v755 = vunpack.c.l.b16 %v718
        %v756 = vunpack.c.l.b16 %v719
        %v757 = vunpack.c.l.b16 %v720
        %v758 = vunpack.c.l.b16 %v721
        %v759 = vunpack.c.l.b16 %v722
        %v760 = vunpack.c.l.b16 %v723
        %v761 = vunpack.c.l.b16 %v724
        %v762 = vunpack.c.l.b16 %v725
        %v763 = vunpack.c.l.b16 %v726
        %v764 = vunpack.c.l.b16 %v727
        %v765 = vunpack.c.l.b16 %v728
        %v766 = vunpack.c.l.b16 %v729
        %v767 = vunpack.c.l.b16 %v730
        %v768 = vunpack.c.l.b16 %v731
        %v769 = vunpack.c.l.b16 %v732
        %v770 = vpack.c.b16 %v755, %v754
        %v771 = vpack.c.b16 %v757, %v756
        %v772 = vpack.c.b16 %v759, %v758
        %v773 = vpack.c.b16 %v761, %v760
        %v774 = vpack.c.b16 %v763, %v762
        %v775 = vpack.c.b16 %v765, %v764
        %v776 = vpack.c.b16 %v767, %v766
        %v777 = vpack.c.b16 %v769, %v768
        %786 = vmatprep.subr.bf16.mxu0 0
        %787 = vmatpush1.bf16.msra.mxu0 %v770
        %788 = vmatprep.subr.bf16.mxu0 0
        %789 = vmatpush1.bf16.msra.mxu0 %v771
        %790 = vmatprep.subr.bf16.mxu0 0
        %791 = vmatpush1.bf16.msra.mxu0 %v772
        %792 = vmatprep.subr.bf16.mxu0 0
        %793 = vmatpush1.bf16.msra.mxu0 %v773
        %794 = vmatprep.subr.bf16.mxu0 0
        %795 = vmatpush1.bf16.msra.mxu0 %v774
        %796 = vmatprep.subr.bf16.mxu0 0
        %797 = vmatpush1.bf16.msra.mxu0 %v775
        %798 = vmatprep.subr.bf16.mxu0 0
        %799 = vmatpush1.bf16.msra.mxu0 %v776
        %800 = vmatprep.subr.bf16.mxu0 0
        %801 = vmatpush1.bf16.msra.mxu0 %v777
        %802 = vmatprep.subr.bf16.mxu0 0
        %803 = vmatpush1.bf16.msra.mxu0 0
        %804 = vmatprep.subr.bf16.mxu0 0
        %805 = vmatpush1.bf16.msra.mxu0 0
        %806 = vmatprep.subr.bf16.mxu0 0
        %807 = vmatpush1.bf16.msra.mxu0 0
        %808 = vmatprep.subr.bf16.mxu0 0
        %809 = vmatpush1.bf16.msra.mxu0 0
        %810 = vmatprep.subr.bf16.mxu0 0
        %811 = vmatpush1.bf16.msra.mxu0 0
        %812 = vmatprep.subr.bf16.mxu0 0
        %813 = vmatpush1.bf16.msra.mxu0 0
        %814 = vmatprep.subr.bf16.mxu0 0
        %815 = vmatpush1.bf16.msra.mxu0 0
        %816 = vmatprep.subr.bf16.mxu0 0
        %817 = vmatpush1.bf16.msra.mxu0 0
        %818 = vmatprep.mubr.bf16.mxu0 0
        %819 = vmatmul.mubr.bf16.gmra.mrb[0].mxu0 %v604
        %v820 = vpop.f32.mrb[0].mxu0
        %v821 = vadd.f32 %v737, %v820
        %v822 = vpop.f32.mrb[0].mxu0
        %v823 = vpop.f32.mrb[0].mxu0
        %v824 = vadd.f32 %v737, %v823
        %v825 = vpop.f32.mrb[0].mxu0
        %826 = vdwg.mxu0
        %s827 = scalar_lea.vmem [#allocation6], 192
        %v828 = vld [vmem:[%s827] sm:$0xf]
        %v829 = vld [vmem:[%s827 + $0x4] sm:$0xf]
        %v830 = vld [vmem:[%s827 + $0x8] sm:$0xf]
        %v831 = vld [vmem:[%s827 + $0xc] sm:$0xf]
        %v832 = vld [vmem:[%s827 + $0x10] sm:$0xf]
        %v833 = vld [vmem:[%s827 + $0x14] sm:$0xf]
        %v834 = vld [vmem:[%s827 + $0x18] sm:$0xf]
        %v835 = vld [vmem:[%s827 + $0x1c] sm:$0xf]
        %v836 = vld [vmem:[%s827 + $0x20] sm:$0xf]
        %v837 = vld [vmem:[%s827 + $0x24] sm:$0xf]
        %v838 = vld [vmem:[%s827 + $0x28] sm:$0xf]
        %v839 = vld [vmem:[%s827 + $0x2c] sm:$0xf]
        %v840 = vld [vmem:[%s827 + $0x30] sm:$0xf]
        %v841 = vld [vmem:[%s827 + $0x34] sm:$0xf]
        %v842 = vld [vmem:[%s827 + $0x38] sm:$0xf]
        %v843 = vld [vmem:[%s827 + $0x3c] sm:$0xf]
        %v844 = vld [vmem:[#allocation7 + $0x5] sm:$0x1]
        %v845 = vlaneseq
        %v846 = vshrl.u32 %v845, 7
        %v847 = vsub.s32 0, %v846
        %v848 = vrot.slane %v844, %v847
        %v865 = vunpack.c.l.b16 %v828
        %v866 = vunpack.c.l.b16 %v829
        %v867 = vunpack.c.l.b16 %v830
        %v868 = vunpack.c.l.b16 %v831
        %v869 = vunpack.c.l.b16 %v832
        %v870 = vunpack.c.l.b16 %v833
        %v871 = vunpack.c.l.b16 %v834
        %v872 = vunpack.c.l.b16 %v835
        %v873 = vunpack.c.l.b16 %v836
        %v874 = vunpack.c.l.b16 %v837
        %v875 = vunpack.c.l.b16 %v838
        %v876 = vunpack.c.l.b16 %v839
        %v877 = vunpack.c.l.b16 %v840
        %v878 = vunpack.c.l.b16 %v841
        %v879 = vunpack.c.l.b16 %v842
        %v880 = vunpack.c.l.b16 %v843
        %v881 = vpack.c.b16 %v866, %v865
        %v882 = vpack.c.b16 %v868, %v867
        %v883 = vpack.c.b16 %v870, %v869
        %v884 = vpack.c.b16 %v872, %v871
        %v885 = vpack.c.b16 %v874, %v873
        %v886 = vpack.c.b16 %v876, %v875
        %v887 = vpack.c.b16 %v878, %v877
        %v888 = vpack.c.b16 %v880, %v879
        %897 = vmatprep.subr.bf16.mxu0 0
        %898 = vmatpush1.bf16.msra.mxu0 %v881
        %899 = vmatprep.subr.bf16.mxu0 0
        %900 = vmatpush1.bf16.msra.mxu0 %v882
        %901 = vmatprep.subr.bf16.mxu0 0
        %902 = vmatpush1.bf16.msra.mxu0 %v883
        %903 = vmatprep.subr.bf16.mxu0 0
        %904 = vmatpush1.bf16.msra.mxu0 %v884
        %905 = vmatprep.subr.bf16.mxu0 0
        %906 = vmatpush1.bf16.msra.mxu0 %v885
        %907 = vmatprep.subr.bf16.mxu0 0
        %908 = vmatpush1.bf16.msra.mxu0 %v886
        %909 = vmatprep.subr.bf16.mxu0 0
        %910 = vmatpush1.bf16.msra.mxu0 %v887
        %911 = vmatprep.subr.bf16.mxu0 0
        %912 = vmatpush1.bf16.msra.mxu0 %v888
        %913 = vmatprep.subr.bf16.mxu0 0
        %914 = vmatpush1.bf16.msra.mxu0 0
        %915 = vmatprep.subr.bf16.mxu0 0
        %916 = vmatpush1.bf16.msra.mxu0 0
        %917 = vmatprep.subr.bf16.mxu0 0
        %918 = vmatpush1.bf16.msra.mxu0 0
        %919 = vmatprep.subr.bf16.mxu0 0
        %920 = vmatpush1.bf16.msra.mxu0 0
        %921 = vmatprep.subr.bf16.mxu0 0
        %922 = vmatpush1.bf16.msra.mxu0 0
        %923 = vmatprep.subr.bf16.mxu0 0
        %924 = vmatpush1.bf16.msra.mxu0 0
        %925 = vmatprep.subr.bf16.mxu0 0
        %926 = vmatpush1.bf16.msra.mxu0 0
        %927 = vmatprep.subr.bf16.mxu0 0
        %928 = vmatpush1.bf16.msra.mxu0 0
        %929 = vmatprep.mubr.bf16.mxu0 0
        %930 = vmatmul.mubr.bf16.gmra.mrb[0].mxu0 %v604
        %v931 = vpop.f32.mrb[0].mxu0
        %v932 = vadd.f32 %v848, %v931
        %v933 = vpop.f32.mrb[0].mxu0
        %v934 = vpop.f32.mrb[0].mxu0
        %v935 = vadd.f32 %v848, %v934
        %v936 = vpop.f32.mrb[0].mxu0
        %937 = vdwg.mxu0
        %v938 = vmul.f32 %v710, %v710
        %v939 = vmul.f32 %v713, %v713
        %vm940 = vcmask 130048
        %v941 = vsel %vm940, %v938, 0.0
        %942 = vadd.xlane.f32.xlu0 %v941
        %v943 = vpop.xlane.xlu0 %942
        %v944 = vsel %vm940, %v939, 0.0
        %945 = vadd.xlane.f32.xlu0 %v944
        %v946 = vpop.xlane.xlu0 %945
        %v947 = vmax.f32 %v943, 1e-24
        %v948 = vmax.f32 %v946, 1e-24
        %v949 = vrsqrt.pop %v947
        %v950 = vrsqrt.pop %v948
        %v951 = vmul.f32 %v710, %v949
        %v952 = vmul.f32 %v713, %v950
        %v953 = vmul.f32 %v821, %v821
        %v954 = vmul.f32 %v824, %v824
        %v955 = vsel %vm940, %v953, 0.0
        %956 = vadd.xlane.f32.xlu0 %v955
        %v957 = vpop.xlane.xlu0 %956
        %v958 = vsel %vm940, %v954, 0.0
        %959 = vadd.xlane.f32.xlu0 %v958
        %v960 = vpop.xlane.xlu0 %959
        %v961 = vmax.f32 %v957, 1e-24
        %v962 = vmax.f32 %v960, 1e-24
        %v963 = vrsqrt.pop %v961
        %v964 = vrsqrt.pop %v962
        %v965 = vmul.f32 %v821, %v963
        %v966 = vmul.f32 %v824, %v964
        %v967 = vpack.c.bf16 %v952, %v951
        %v968 = vpack.c.bf16 %v966, %v965
        %v970 = vsel %vm940, %v967, 0
        %v973 = vsel %vm940, %v968, 0
        %975 = vmatprep.subr.bf16.mxu0 0
        %976 = vmatpush1.bf16.xpose.msra.mxu0 %v973
        %977 = vmatprep.subr.bf16.mxu0 0
        %978 = vmatpush1.bf16.xpose.msra.mxu0 0
        %979 = vmatprep.subr.bf16.mxu0 0
        %980 = vmatpush1.bf16.xpose.msra.mxu0 0
        %981 = vmatprep.subr.bf16.mxu0 0
        %982 = vmatpush1.bf16.xpose.msra.mxu0 0
        %983 = vmatprep.subr.bf16.mxu0 0
        %984 = vmatpush1.bf16.xpose.msra.mxu0 0
        %985 = vmatprep.subr.bf16.mxu0 0
        %986 = vmatpush1.bf16.xpose.msra.mxu0 0
        %987 = vmatprep.subr.bf16.mxu0 0
        %988 = vmatpush1.bf16.xpose.msra.mxu0 0
        %989 = vmatprep.subr.bf16.mxu0 0
        %990 = vmatpush1.bf16.xpose.msra.mxu0 0
        %991 = vmatprep.subr.bf16.mxu0 0
        %992 = vmatpush1.bf16.xpose.msra.mxu0 0
        %993 = vmatprep.subr.bf16.mxu0 0
        %994 = vmatpush1.bf16.xpose.msra.mxu0 0
        %995 = vmatprep.subr.bf16.mxu0 0
        %996 = vmatpush1.bf16.xpose.msra.mxu0 0
        %997 = vmatprep.subr.bf16.mxu0 0
        %998 = vmatpush1.bf16.xpose.msra.mxu0 0
        %999 = vmatprep.subr.bf16.mxu0 0
        %1000 = vmatpush1.bf16.xpose.msra.mxu0 0
        %1001 = vmatprep.subr.bf16.mxu0 0
        %1002 = vmatpush1.bf16.xpose.msra.mxu0 0
        %1003 = vmatprep.subr.bf16.mxu0 0
        %1004 = vmatpush1.bf16.xpose.msra.mxu0 0
        %1005 = vmatprep.subr.bf16.mxu0 0
        %1006 = vmatpush1.bf16.xpose.msra.mxu0 0
        %1007 = vmatprep.mubr.bf16.mxu0 0
        %1008 = vmatmul.mubr.bf16.gmra.mrb[0].mxu0 %v970
        %v1009 = vpop.f32.mrb[0].mxu0
        %v1010 = vadd.f32 0.0, %v1009
        %v1011 = vpop.f32.mrb[0].mxu0
        %v1012 = vpop.f32.mrb[0].mxu0
        %v1013 = vadd.f32 0.0, %v1012
        %v1014 = vpop.f32.mrb[0].mxu0
        %1015 = vdwg.mxu0
        %s1016 = sld [smem:[#allocation2]]
        %v1017 = vstv %s1016
        %v1018 = vmul.f32 %v1010, %v1017
        %v1019 = vmul.f32 %v1013, %v1017
        %v1020 = vld [vmem:[#allocation9] sm:$0xff]
        %v1021 = vld [vmem:[#allocation9 + $0x8] sm:$0xff]
        %v1022 = vadd.f32 %v1018, %v1020
        %v1023 = vadd.f32 %v1019, %v1021
        %v1024 = vsel %vm940, %v1022, -inf
        %1025 = vmax.xlane.f32.xlu0 %v1024
        %v1026 = vpop.xlane.xlu0 %1025
        %v1027 = vsel %vm940, %v1023, -inf
        %1028 = vmax.xlane.f32.xlu0 %v1027
        %v1029 = vpop.xlane.xlu0 %1028
        %v1030 = vsub.f32 %v1022, %v1026
        %v1031 = vsub.f32 %v1023, %v1029
        %v1032 = vmul.f32 %v1030, 1.442695
        %v1033 = vpow.pop %v1032
        %v1034 = vmul.f32 %v1031, 1.442695
        %v1035 = vpow.pop %v1034
        %v1036 = vsel %vm940, %v1033, 0.0
        %1037 = vadd.xlane.f32.xlu0 %v1036
        %v1038 = vpop.xlane.xlu0 %1037
        %v1039 = vsel %vm940, %v1035, 0.0
        %1040 = vadd.xlane.f32.xlu0 %v1039
        %v1041 = vpop.xlane.xlu0 %1040
        %v1042 = vrcp.pop %v1038
        %v1043 = vmul.f32 %v1033, %v1042
        %v1044 = vrcp.pop %v1041
        %v1045 = vmul.f32 %v1035, %v1044
        %v1046 = vpack.c.bf16 %v1045, %v1043
        %v1047 = vpack.c.bf16 %v935, %v932
        %v1049 = vsel %vm940, %v1046, 0
        %1051 = vmatprep.subr.bf16.mxu0 0
        %1052 = vmatpush1.bf16.msra.mxu0 %v1047
        %1053 = vmatprep.subr.bf16.mxu0 0
        %1054 = vmatpush1.bf16.msra.mxu0 0
        %1055 = vmatprep.subr.bf16.mxu0 0
        %1056 = vmatpush1.bf16.msra.mxu0 0
        %1057 = vmatprep.subr.bf16.mxu0 0
        %1058 = vmatpush1.bf16.msra.mxu0 0
        %1059 = vmatprep.subr.bf16.mxu0 0
        %1060 = vmatpush1.bf16.msra.mxu0 0
        %1061 = vmatprep.subr.bf16.mxu0 0
        %1062 = vmatpush1.bf16.msra.mxu0 0
        %1063 = vmatprep.subr.bf16.mxu0 0
        %1064 = vmatpush1.bf16.msra.mxu0 0
        %1065 = vmatprep.subr.bf16.mxu0 0
        %1066 = vmatpush1.bf16.msra.mxu0 0
        %1067 = vmatprep.subr.bf16.mxu0 0
        %1068 = vmatpush1.bf16.msra.mxu0 0
        %1069 = vmatprep.subr.bf16.mxu0 0
        %1070 = vmatpush1.bf16.msra.mxu0 0
        %1071 = vmatprep.subr.bf16.mxu0 0
        %1072 = vmatpush1.bf16.msra.mxu0 0
        %1073 = vmatprep.subr.bf16.mxu0 0
        %1074 = vmatpush1.bf16.msra.mxu0 0
        %1075 = vmatprep.subr.bf16.mxu0 0
        %1076 = vmatpush1.bf16.msra.mxu0 0
        %1077 = vmatprep.subr.bf16.mxu0 0
        %1078 = vmatpush1.bf16.msra.mxu0 0
        %1079 = vmatprep.subr.bf16.mxu0 0
        %1080 = vmatpush1.bf16.msra.mxu0 0
        %1081 = vmatprep.subr.bf16.mxu0 0
        %1082 = vmatpush1.bf16.msra.mxu0 0
        %1083 = vmatprep.mubr.bf16.mxu0 0
        %1084 = vmatmul.mubr.bf16.gmra.mrb[0].mxu0 %v1049
        %v1085 = vpop.f32.mrb[0].mxu0
        %v1086 = vadd.f32 0.0, %v1085
        %v1087 = vpop.f32.mrb[0].mxu0
        %v1088 = vpop.f32.mrb[0].mxu0
        %v1089 = vadd.f32 0.0, %v1088
        %v1090 = vpop.f32.mrb[0].mxu0
        %1091 = vdwg.mxu0
        %1094 = vrot.lane.b32.xlu0 %v938, 112
        %v1095 = vpop.permute.xlu0 %1094
        %1096 = vrot.lane.b32.xlu0 %v939, 112
        %v1097 = vpop.permute.xlu0 %1096
        %v1100 = vsel %vm940, %v1095, 0.0
        %1101 = vadd.xlane.f32.xlu0 %v1100
        %v1102 = vpop.xlane.xlu0 %1101
        %v1103 = vsel %vm940, %v1097, 0.0
        %1104 = vadd.xlane.f32.xlu0 %v1103
        %v1105 = vpop.xlane.xlu0 %1104
        %v1106 = vmax.f32 %v1102, 1e-24
        %v1107 = vmax.f32 %v1105, 1e-24
        %v1108 = vrsqrt.pop %v1106
        %v1109 = vrsqrt.pop %v1107
        %v1110 = vmul.f32 %v710, %v1108
        %v1111 = vmul.f32 %v713, %v1109
        %1114 = vrot.lane.b32.xlu0 %v953, 112
        %v1115 = vpop.permute.xlu0 %1114
        %1116 = vrot.lane.b32.xlu0 %v954, 112
        %v1117 = vpop.permute.xlu0 %1116
        %v1120 = vsel %vm940, %v1115, 0.0
        %1121 = vadd.xlane.f32.xlu0 %v1120
        %v1122 = vpop.xlane.xlu0 %1121
        %v1123 = vsel %vm940, %v1117, 0.0
        %1124 = vadd.xlane.f32.xlu0 %v1123
        %v1125 = vpop.xlane.xlu0 %1124
        %v1126 = vmax.f32 %v1122, 1e-24
        %v1127 = vmax.f32 %v1125, 1e-24
        %v1128 = vrsqrt.pop %v1126
        %v1129 = vrsqrt.pop %v1127
        %v1130 = vmul.f32 %v821, %v1128
        %v1131 = vmul.f32 %v824, %v1129
        %v1132 = vpack.c.bf16 %v1111, %v1110
        %v1133 = vpack.c.bf16 %v1131, %v1130
        %1135 = vrot.lane.b32.xlu0 %v1132, 112
        %v1136 = vpop.permute.xlu0 %1135
        %1138 = vrot.lane.b32.xlu0 %v1133, 112
        %v1139 = vpop.permute.xlu0 %1138
        %v1141 = vsel %vm940, %v1136, 0
        %v1144 = vsel %vm940, %v1139, 0
        %1146 = vmatprep.subr.bf16.mxu0 0
        %1147 = vmatpush1.bf16.xpose.msra.mxu0 %v1144
        %1148 = vmatprep.subr.bf16.mxu0 0
        %1149 = vmatpush1.bf16.xpose.msra.mxu0 0
        %1150 = vmatprep.subr.bf16.mxu0 0
        %1151 = vmatpush1.bf16.xpose.msra.mxu0 0
        %1152 = vmatprep.subr.bf16.mxu0 0
        %1153 = vmatpush1.bf16.xpose.msra.mxu0 0
        %1154 = vmatprep.subr.bf16.mxu0 0
        %1155 = vmatpush1.bf16.xpose.msra.mxu0 0
        %1156 = vmatprep.subr.bf16.mxu0 0
        %1157 = vmatpush1.bf16.xpose.msra.mxu0 0
        %1158 = vmatprep.subr.bf16.mxu0 0
        %1159 = vmatpush1.bf16.xpose.msra.mxu0 0
        %1160 = vmatprep.subr.bf16.mxu0 0
        %1161 = vmatpush1.bf16.xpose.msra.mxu0 0
        %1162 = vmatprep.subr.bf16.mxu0 0
        %1163 = vmatpush1.bf16.xpose.msra.mxu0 0
        %1164 = vmatprep.subr.bf16.mxu0 0
        %1165 = vmatpush1.bf16.xpose.msra.mxu0 0
        %1166 = vmatprep.subr.bf16.mxu0 0
        %1167 = vmatpush1.bf16.xpose.msra.mxu0 0
        %1168 = vmatprep.subr.bf16.mxu0 0
        %1169 = vmatpush1.bf16.xpose.msra.mxu0 0
        %1170 = vmatprep.subr.bf16.mxu0 0
        %1171 = vmatpush1.bf16.xpose.msra.mxu0 0
        %1172 = vmatprep.subr.bf16.mxu0 0
        %1173 = vmatpush1.bf16.xpose.msra.mxu0 0
        %1174 = vmatprep.subr.bf16.mxu0 0
        %1175 = vmatpush1.bf16.xpose.msra.mxu0 0
        %1176 = vmatprep.subr.bf16.mxu0 0
        %1177 = vmatpush1.bf16.xpose.msra.mxu0 0
        %1178 = vmatprep.mubr.bf16.mxu0 0
        %1179 = vmatmul.mubr.bf16.gmra.mrb[0].mxu0 %v1141
        %v1180 = vpop.f32.mrb[0].mxu0
        %v1181 = vadd.f32 0.0, %v1180
        %v1182 = vpop.f32.mrb[0].mxu0
        %v1183 = vpop.f32.mrb[0].mxu0
        %v1184 = vadd.f32 0.0, %v1183
        %v1185 = vpop.f32.mrb[0].mxu0
        %1186 = vdwg.mxu0
        %s1187 = sld [smem:[#allocation2 + $0x1]]
        %v1188 = vstv %s1187
        %v1189 = vmul.f32 %v1181, %v1188
        %v1190 = vmul.f32 %v1184, %v1188
        %s1191 = scalar_lea.vmem [#allocation9], 16
        %v1192 = vld [vmem:[%s1191] sm:$0xff]
        %v1193 = vld [vmem:[%s1191 + $0x8] sm:$0xff]
        %v1194 = vadd.f32 %v1189, %v1192
        %v1195 = vadd.f32 %v1190, %v1193
        %v1196 = vsel %vm940, %v1194, -inf
        %1197 = vmax.xlane.f32.xlu0 %v1196
        %v1198 = vpop.xlane.xlu0 %1197
        %v1199 = vsel %vm940, %v1195, -inf
        %1200 = vmax.xlane.f32.xlu0 %v1199
        %v1201 = vpop.xlane.xlu0 %1200
        %v1202 = vsub.f32 %v1194, %v1198
        %v1203 = vsub.f32 %v1195, %v1201
        %v1204 = vmul.f32 %v1202, 1.442695
        %v1205 = vpow.pop %v1204
        %v1206 = vmul.f32 %v1203, 1.442695
        %v1207 = vpow.pop %v1206
        %v1208 = vsel %vm940, %v1205, 0.0
        %1209 = vadd.xlane.f32.xlu0 %v1208
        %v1210 = vpop.xlane.xlu0 %1209
        %v1211 = vsel %vm940, %v1207, 0.0
        %1212 = vadd.xlane.f32.xlu0 %v1211
        %v1213 = vpop.xlane.xlu0 %1212
        %v1214 = vrcp.pop %v1210
        %v1215 = vmul.f32 %v1205, %v1214
        %v1216 = vrcp.pop %v1213
        %v1217 = vmul.f32 %v1207, %v1216
        %v1218 = vpack.c.bf16 %v1217, %v1215
        %1220 = vrot.lane.b32.xlu0 %v1047, 112
        %v1221 = vpop.permute.xlu0 %1220
        %v1224 = vsel %vm940, %v1218, 0
        %1226 = vmatprep.subr.bf16.mxu0 0
        %1227 = vmatpush1.bf16.msra.mxu0 %v1221
        %1228 = vmatprep.subr.bf16.mxu0 0
        %1229 = vmatpush1.bf16.msra.mxu0 0
        %1230 = vmatprep.subr.bf16.mxu0 0
        %1231 = vmatpush1.bf16.msra.mxu0 0
        %1232 = vmatprep.subr.bf16.mxu0 0
        %1233 = vmatpush1.bf16.msra.mxu0 0
        %1234 = vmatprep.subr.bf16.mxu0 0
        %1235 = vmatpush1.bf16.msra.mxu0 0
        %1236 = vmatprep.subr.bf16.mxu0 0
        %1237 = vmatpush1.bf16.msra.mxu0 0
        %1238 = vmatprep.subr.bf16.mxu0 0
        %1239 = vmatpush1.bf16.msra.mxu0 0
        %1240 = vmatprep.subr.bf16.mxu0 0
        %1241 = vmatpush1.bf16.msra.mxu0 0
        %1242 = vmatprep.subr.bf16.mxu0 0
        %1243 = vmatpush1.bf16.msra.mxu0 0
        %1244 = vmatprep.subr.bf16.mxu0 0
        %1245 = vmatpush1.bf16.msra.mxu0 0
        %1246 = vmatprep.subr.bf16.mxu0 0
        %1247 = vmatpush1.bf16.msra.mxu0 0
        %1248 = vmatprep.subr.bf16.mxu0 0
        %1249 = vmatpush1.bf16.msra.mxu0 0
        %1250 = vmatprep.subr.bf16.mxu0 0
        %1251 = vmatpush1.bf16.msra.mxu0 0
        %1252 = vmatprep.subr.bf16.mxu0 0
        %1253 = vmatpush1.bf16.msra.mxu0 0
        %1254 = vmatprep.subr.bf16.mxu0 0
        %1255 = vmatpush1.bf16.msra.mxu0 0
        %1256 = vmatprep.subr.bf16.mxu0 0
        %1257 = vmatpush1.bf16.msra.mxu0 0
        %1258 = vmatprep.mubr.bf16.mxu0 0
        %1259 = vmatmul.mubr.bf16.gmra.mrb[0].mxu0 %v1224
        %v1260 = vpop.f32.mrb[0].mxu0
        %v1261 = vadd.f32 0.0, %v1260
        %v1262 = vpop.f32.mrb[0].mxu0
        %v1263 = vpop.f32.mrb[0].mxu0
        %v1264 = vadd.f32 0.0, %v1263
        %v1265 = vpop.f32.mrb[0].mxu0
        %1266 = vdwg.mxu0
        %1269 = vrot.lane.b32.xlu0 %v1261, 16
        %v1270 = vpop.permute.xlu0 %1269
        %1271 = vrot.lane.b32.xlu0 %v1264, 16
        %v1272 = vpop.permute.xlu0 %1271
        %v1275 = vsel %vm940, %v1086, %v1270
        %v1276 = vsel %vm940, %v1089, %v1272
        %vm1277 = vcmask 261120
        %v1278 = vsel %vm1277, %v1275, 0.0
        %v1279 = vsel %vm1277, %v1276, 0.0
        %v1280 = vpack.c.bf16 %v1279, %v1278
        %s1281 = scalar_lea.vmem [#allocation6], 256
        %v1282 = vld [vmem:[%s1281] sm:$0xf]
        %v1283 = vld [vmem:[%s1281 + $0x4] sm:$0xf]
        %v1284 = vld [vmem:[%s1281 + $0x8] sm:$0xf]
        %v1285 = vld [vmem:[%s1281 + $0xc] sm:$0xf]
        %v1286 = vld [vmem:[%s1281 + $0x10] sm:$0xf]
        %v1287 = vld [vmem:[%s1281 + $0x14] sm:$0xf]
        %v1288 = vld [vmem:[%s1281 + $0x18] sm:$0xf]
        %v1289 = vld [vmem:[%s1281 + $0x1c] sm:$0xf]
        %v1290 = vld [vmem:[%s1281 + $0x20] sm:$0xf]
        %v1291 = vld [vmem:[%s1281 + $0x24] sm:$0xf]
        %v1292 = vld [vmem:[%s1281 + $0x28] sm:$0xf]
        %v1293 = vld [vmem:[%s1281 + $0x2c] sm:$0xf]
        %v1294 = vld [vmem:[%s1281 + $0x30] sm:$0xf]
        %v1295 = vld [vmem:[%s1281 + $0x34] sm:$0xf]
        %v1296 = vld [vmem:[%s1281 + $0x38] sm:$0xf]
        %v1297 = vld [vmem:[%s1281 + $0x3c] sm:$0xf]
        %v1298 = vld [vmem:[#allocation7 + $0x6] sm:$0x1]
        %v1299 = vlaneseq
        %v1300 = vshrl.u32 %v1299, 7
        %v1301 = vsub.s32 0, %v1300
        %v1302 = vrot.slane %v1298, %v1301
        %v1319 = vunpack.c.l.b16 %v1282
        %v1320 = vunpack.c.l.b16 %v1283
        %v1321 = vunpack.c.l.b16 %v1284
        %v1322 = vunpack.c.l.b16 %v1285
        %v1323 = vunpack.c.l.b16 %v1286
        %v1324 = vunpack.c.l.b16 %v1287
        %v1325 = vunpack.c.l.b16 %v1288
        %v1326 = vunpack.c.l.b16 %v1289
        %v1327 = vunpack.c.l.b16 %v1290
        %v1328 = vunpack.c.l.b16 %v1291
        %v1329 = vunpack.c.l.b16 %v1292
        %v1330 = vunpack.c.l.b16 %v1293
        %v1331 = vunpack.c.l.b16 %v1294
        %v1332 = vunpack.c.l.b16 %v1295
        %v1333 = vunpack.c.l.b16 %v1296
        %v1334 = vunpack.c.l.b16 %v1297
        %v1335 = vpack.c.b16 %v1320, %v1319
        %v1336 = vpack.c.b16 %v1322, %v1321
        %v1337 = vpack.c.b16 %v1324, %v1323
        %v1338 = vpack.c.b16 %v1326, %v1325
        %v1339 = vpack.c.b16 %v1328, %v1327
        %v1340 = vpack.c.b16 %v1330, %v1329
        %v1341 = vpack.c.b16 %v1332, %v1331
        %v1342 = vpack.c.b16 %v1334, %v1333
        %1351 = vmatprep.subr.bf16.mxu0 0
        %1352 = vmatpush1.bf16.msra.mxu0 %v1335
        %1353 = vmatprep.subr.bf16.mxu0 0
        %1354 = vmatpush1.bf16.msra.mxu0 %v1336
        %1355 = vmatprep.subr.bf16.mxu0 0
        %1356 = vmatpush1.bf16.msra.mxu0 %v1337
        %1357 = vmatprep.subr.bf16.mxu0 0
        %1358 = vmatpush1.bf16.msra.mxu0 %v1338
        %1359 = vmatprep.subr.bf16.mxu0 0
        %1360 = vmatpush1.bf16.msra.mxu0 %v1339
        %1361 = vmatprep.subr.bf16.mxu0 0
        %1362 = vmatpush1.bf16.msra.mxu0 %v1340
        %1363 = vmatprep.subr.bf16.mxu0 0
        %1364 = vmatpush1.bf16.msra.mxu0 %v1341
        %1365 = vmatprep.subr.bf16.mxu0 0
        %1366 = vmatpush1.bf16.msra.mxu0 %v1342
        %1367 = vmatprep.subr.bf16.mxu0 0
        %1368 = vmatpush1.bf16.msra.mxu0 0
        %1369 = vmatprep.subr.bf16.mxu0 0
        %1370 = vmatpush1.bf16.msra.mxu0 0
        %1371 = vmatprep.subr.bf16.mxu0 0
        %1372 = vmatpush1.bf16.msra.mxu0 0
        %1373 = vmatprep.subr.bf16.mxu0 0
        %1374 = vmatpush1.bf16.msra.mxu0 0
        %1375 = vmatprep.subr.bf16.mxu0 0
        %1376 = vmatpush1.bf16.msra.mxu0 0
        %1377 = vmatprep.subr.bf16.mxu0 0
        %1378 = vmatpush1.bf16.msra.mxu0 0
        %1379 = vmatprep.subr.bf16.mxu0 0
        %1380 = vmatpush1.bf16.msra.mxu0 0
        %1381 = vmatprep.subr.bf16.mxu0 0
        %1382 = vmatpush1.bf16.msra.mxu0 0
        %1383 = vmatprep.mubr.bf16.mxu0 0
        %1384 = vmatmul.mubr.bf16.gmra.mrb[0].mxu0 %v1280
        %v1385 = vpop.f32.mrb[0].mxu0
        %v1386 = vadd.f32 %v1302, %v1385
        %v1387 = vpop.f32.mrb[0].mxu0
        %v1388 = vpop.f32.mrb[0].mxu0
        %v1389 = vadd.f32 %v1302, %v1388
        %v1390 = vpop.f32.mrb[0].mxu0
        %1391 = vdwg.mxu0
        %1392 = vadd.xlane.f32.xlu0 %v1386
        %v1393 = vpop.xlane.xlu0 %1392
        %1394 = vadd.xlane.f32.xlu0 %v1389
        %v1395 = vpop.xlane.xlu0 %1394
        %v1396 = vmul.f32 %v1393, 0.03125
        %v1397 = vmul.f32 %v1395, 0.03125
        %v1398 = vsub.f32 %v1386, %v1396
        %v1399 = vsub.f32 %v1389, %v1397
        %v1400 = vmul.f32 %v1398, %v449
        %v1401 = vmul.f32 %v1399, %v449
        %v1402 = vmul.f32 %v1400, %v1400
        %v1403 = vmul.f32 %v1401, %v1401
        %1404 = vadd.xlane.f32.xlu0 %v1402
        %v1405 = vpop.xlane.xlu0 %1404
        %1406 = vadd.xlane.f32.xlu0 %v1403
        %v1407 = vpop.xlane.xlu0 %1406
        %v1408 = vmul.f32 %v1405, 0.03125
        %v1409 = vmul.f32 %v1407, 0.03125
        %v1410 = vadd.f32 %v1408, 1e-05
        %v1411 = vadd.f32 %v1409, 1e-05
        %v1412 = vrsqrt.pop %v1410
        %v1413 = vrsqrt.pop %v1411
        %v1414 = vmul.f32 %v1400, %v1412
        %v1415 = vmul.f32 %v1401, %v1413
        %v1416 = vld [vmem:[#allocation7 + $0x7] sm:$0x1]
        %v1417 = vlaneseq
        %v1418 = vshrl.u32 %v1417, 7
        %v1419 = vsub.s32 0, %v1418
        %v1420 = vrot.slane %v1416, %v1419
        %v1421 = vmul.f32 %v1414, %v1420
        %v1422 = vmul.f32 %v1415, %v1420
        %v1423 = vld [vmem:[#allocation7 + $0x8] sm:$0x1]
        %v1424 = vlaneseq
        %v1425 = vshrl.u32 %v1424, 7
        %v1426 = vsub.s32 0, %v1425
        %v1427 = vrot.slane %v1423, %v1426
        %v1428 = vadd.f32 %v1421, %v1427
        %v1429 = vadd.f32 %v1422, %v1427
        %v1430 = vadd.f32 %v602, %v1428
        %v1431 = vadd.f32 %v603, %v1429
        %v1432 = vpack.c.bf16 %v1431, %v1430
        %s1433 = scalar_lea.vmem [#allocation6], 320
        %v1434 = vld [vmem:[%s1433] sm:$0xf]
        %v1435 = vld [vmem:[%s1433 + $0x4] sm:$0xf]
        %v1436 = vld [vmem:[%s1433 + $0x8] sm:$0xf]
        %v1437 = vld [vmem:[%s1433 + $0xc] sm:$0xf]
        %v1438 = vld [vmem:[%s1433 + $0x10] sm:$0xf]
        %v1439 = vld [vmem:[%s1433 + $0x14] sm:$0xf]
        %v1440 = vld [vmem:[%s1433 + $0x18] sm:$0xf]
        %v1441 = vld [vmem:[%s1433 + $0x1c] sm:$0xf]
        %v1442 = vld [vmem:[%s1433 + $0x20] sm:$0xf]
        %v1443 = vld [vmem:[%s1433 + $0x24] sm:$0xf]
        %v1444 = vld [vmem:[%s1433 + $0x28] sm:$0xf]
        %v1445 = vld [vmem:[%s1433 + $0x2c] sm:$0xf]
        %v1446 = vld [vmem:[%s1433 + $0x30] sm:$0xf]
        %v1447 = vld [vmem:[%s1433 + $0x34] sm:$0xf]
        %v1448 = vld [vmem:[%s1433 + $0x38] sm:$0xf]
        %v1449 = vld [vmem:[%s1433 + $0x3c] sm:$0xf]
        %v1450 = vld [vmem:[#allocation7 + $0x9] sm:$0x1]
        %v1451 = vlaneseq
        %v1452 = vshrl.u32 %v1451, 7
        %v1453 = vsub.s32 0, %v1452
        %v1454 = vrot.slane %v1450, %v1453
        %v1471 = vunpack.c.l.b16 %v1434
        %v1472 = vunpack.c.l.b16 %v1435
        %v1473 = vunpack.c.l.b16 %v1436
        %v1474 = vunpack.c.l.b16 %v1437
        %v1475 = vunpack.c.l.b16 %v1438
        %v1476 = vunpack.c.l.b16 %v1439
        %v1477 = vunpack.c.l.b16 %v1440
        %v1478 = vunpack.c.l.b16 %v1441
        %v1479 = vunpack.c.l.b16 %v1442
        %v1480 = vunpack.c.l.b16 %v1443
        %v1481 = vunpack.c.l.b16 %v1444
        %v1482 = vunpack.c.l.b16 %v1445
        %v1483 = vunpack.c.l.b16 %v1446
        %v1484 = vunpack.c.l.b16 %v1447
        %v1485 = vunpack.c.l.b16 %v1448
        %v1486 = vunpack.c.l.b16 %v1449
        %v1487 = vpack.c.b16 %v1472, %v1471
        %v1488 = vpack.c.b16 %v1474, %v1473
        %v1489 = vpack.c.b16 %v1476, %v1475
        %v1490 = vpack.c.b16 %v1478, %v1477
        %v1491 = vpack.c.b16 %v1480, %v1479
        %v1492 = vpack.c.b16 %v1482, %v1481
        %v1493 = vpack.c.b16 %v1484, %v1483
        %v1494 = vpack.c.b16 %v1486, %v1485
        %1503 = vmatprep.subr.bf16.mxu0 0
        %1504 = vmatpush1.bf16.msra.mxu0 %v1487
        %1505 = vmatprep.subr.bf16.mxu0 0
        %1506 = vmatpush1.bf16.msra.mxu0 %v1488
        %1507 = vmatprep.subr.bf16.mxu0 0
        %1508 = vmatpush1.bf16.msra.mxu0 %v1489
        %1509 = vmatprep.subr.bf16.mxu0 0
        %1510 = vmatpush1.bf16.msra.mxu0 %v1490
        %1511 = vmatprep.subr.bf16.mxu0 0
        %1512 = vmatpush1.bf16.msra.mxu0 %v1491
        %1513 = vmatprep.subr.bf16.mxu0 0
        %1514 = vmatpush1.bf16.msra.mxu0 %v1492
        %1515 = vmatprep.subr.bf16.mxu0 0
        %1516 = vmatpush1.bf16.msra.mxu0 %v1493
        %1517 = vmatprep.subr.bf16.mxu0 0
        %1518 = vmatpush1.bf16.msra.mxu0 %v1494
        %1519 = vmatprep.subr.bf16.mxu0 0
        %1520 = vmatpush1.bf16.msra.mxu0 0
        %1521 = vmatprep.subr.bf16.mxu0 0
        %1522 = vmatpush1.bf16.msra.mxu0 0
        %1523 = vmatprep.subr.bf16.mxu0 0
        %1524 = vmatpush1.bf16.msra.mxu0 0
        %1525 = vmatprep.subr.bf16.mxu0 0
        %1526 = vmatpush1.bf16.msra.mxu0 0
        %1527 = vmatprep.subr.bf16.mxu0 0
        %1528 = vmatpush1.bf16.msra.mxu0 0
        %1529 = vmatprep.subr.bf16.mxu0 0
        %1530 = vmatpush1.bf16.msra.mxu0 0
        %1531 = vmatprep.subr.bf16.mxu0 0
        %1532 = vmatpush1.bf16.msra.mxu0 0
        %1533 = vmatprep.subr.bf16.mxu0 0
        %1534 = vmatpush1.bf16.msra.mxu0 0
        %1535 = vmatprep.mubr.bf16.mxu0 0
        %1536 = vmatmul.mubr.bf16.gmra.mrb[0].mxu0 %v1432
        %v1537 = vpop.f32.mrb[0].mxu0
        %v1538 = vadd.f32 %v1454, %v1537
        %v1539 = vpop.f32.mrb[0].mxu0
        %v1540 = vpop.f32.mrb[0].mxu0
        %v1541 = vadd.f32 %v1454, %v1540
        %v1542 = vpop.f32.mrb[0].mxu0
        %1543 = vdwg.mxu0
        %v1544 = vmul.f32 %v1538, %v1538
        %v1545 = vmul.f32 %v1541, %v1541
        %v1546 = vmul.f32 %v1538, %v1544
        %v1547 = vmul.f32 %v1541, %v1545
        %v1548 = vmul.f32 %v1546, 0.044715
        %v1549 = vmul.f32 %v1547, 0.044715
        %v1550 = vadd.f32 %v1538, %v1548
        %v1551 = vadd.f32 %v1541, %v1549
        %v1552 = vmul.f32 %v1550, 0.7978846
        %v1553 = vmul.f32 %v1551, 0.7978846
        %v1554 = vtanh.pop %v1552
        %v1555 = vtanh.pop %v1553
        %v1556 = vadd.f32 %v1554, 1.0
        %v1557 = vadd.f32 %v1555, 1.0
        %v1558 = vmul.f32 %v1556, 0.5
        %v1559 = vmul.f32 %v1557, 0.5
        %v1560 = vmul.f32 %v1538, %v1558
        %v1561 = vmul.f32 %v1541, %v1559
        %v1562 = vld [vmem:[#allocation7 + $0xa] sm:$0x1]
        %v1563 = vpack.c.bf16 %v1561, %v1560
        %s1564 = scalar_lea.vmem [#allocation6], 384
        %v1565 = vld [vmem:[%s1564] sm:$0xf]
        %v1566 = vld [vmem:[%s1564 + $0x4] sm:$0xf]
        %v1567 = vld [vmem:[%s1564 + $0x8] sm:$0xf]
        %v1568 = vld [vmem:[%s1564 + $0xc] sm:$0xf]
        %v1569 = vld [vmem:[%s1564 + $0x10] sm:$0xf]
        %v1570 = vld [vmem:[%s1564 + $0x14] sm:$0xf]
        %v1571 = vld [vmem:[%s1564 + $0x18] sm:$0xf]
        %v1572 = vld [vmem:[%s1564 + $0x1c] sm:$0xf]
        %v1573 = vld [vmem:[%s1564 + $0x20] sm:$0xf]
        %v1574 = vld [vmem:[%s1564 + $0x24] sm:$0xf]
        %v1575 = vld [vmem:[%s1564 + $0x28] sm:$0xf]
        %v1576 = vld [vmem:[%s1564 + $0x2c] sm:$0xf]
        %v1577 = vld [vmem:[%s1564 + $0x30] sm:$0xf]
        %v1578 = vld [vmem:[%s1564 + $0x34] sm:$0xf]
        %v1579 = vld [vmem:[%s1564 + $0x38] sm:$0xf]
        %v1580 = vld [vmem:[%s1564 + $0x3c] sm:$0xf]
        %v1597 = vunpack.c.l.b16 %v1565
        %v1598 = vunpack.c.l.b16 %v1566
        %v1599 = vunpack.c.l.b16 %v1567
        %v1600 = vunpack.c.l.b16 %v1568
        %v1601 = vunpack.c.l.b16 %v1569
        %v1602 = vunpack.c.l.b16 %v1570
        %v1603 = vunpack.c.l.b16 %v1571
        %v1604 = vunpack.c.l.b16 %v1572
        %v1605 = vunpack.c.l.b16 %v1573
        %v1606 = vunpack.c.l.b16 %v1574
        %v1607 = vunpack.c.l.b16 %v1575
        %v1608 = vunpack.c.l.b16 %v1576
        %v1609 = vunpack.c.l.b16 %v1577
        %v1610 = vunpack.c.l.b16 %v1578
        %v1611 = vunpack.c.l.b16 %v1579
        %v1612 = vunpack.c.l.b16 %v1580
        %v1613 = vpack.c.b16 %v1598, %v1597
        %v1614 = vpack.c.b16 %v1600, %v1599
        %v1615 = vpack.c.b16 %v1602, %v1601
        %v1616 = vpack.c.b16 %v1604, %v1603
        %v1617 = vpack.c.b16 %v1606, %v1605
        %v1618 = vpack.c.b16 %v1608, %v1607
        %v1619 = vpack.c.b16 %v1610, %v1609
        %v1620 = vpack.c.b16 %v1612, %v1611
        %1629 = vmatprep.subr.bf16.mxu0 0
        %1630 = vmatpush1.bf16.msra.mxu0 %v1613
        %1631 = vmatprep.subr.bf16.mxu0 0
        %1632 = vmatpush1.bf16.msra.mxu0 %v1614
        %1633 = vmatprep.subr.bf16.mxu0 0
        %1634 = vmatpush1.bf16.msra.mxu0 %v1615
        %1635 = vmatprep.subr.bf16.mxu0 0
        %1636 = vmatpush1.bf16.msra.mxu0 %v1616
        %1637 = vmatprep.subr.bf16.mxu0 0
        %1638 = vmatpush1.bf16.msra.mxu0 %v1617
        %1639 = vmatprep.subr.bf16.mxu0 0
        %1640 = vmatpush1.bf16.msra.mxu0 %v1618
        %1641 = vmatprep.subr.bf16.mxu0 0
        %1642 = vmatpush1.bf16.msra.mxu0 %v1619
        %1643 = vmatprep.subr.bf16.mxu0 0
        %1644 = vmatpush1.bf16.msra.mxu0 %v1620
        %1645 = vmatprep.subr.bf16.mxu0 0
        %1646 = vmatpush1.bf16.msra.mxu0 0
        %1647 = vmatprep.subr.bf16.mxu0 0
        %1648 = vmatpush1.bf16.msra.mxu0 0
        %1649 = vmatprep.subr.bf16.mxu0 0
        %1650 = vmatpush1.bf16.msra.mxu0 0
        %1651 = vmatprep.subr.bf16.mxu0 0
        %1652 = vmatpush1.bf16.msra.mxu0 0
        %1653 = vmatprep.subr.bf16.mxu0 0
        %1654 = vmatpush1.bf16.msra.mxu0 0
        %1655 = vmatprep.subr.bf16.mxu0 0
        %1656 = vmatpush1.bf16.msra.mxu0 0
        %1657 = vmatprep.subr.bf16.mxu0 0
        %1658 = vmatpush1.bf16.msra.mxu0 0
        %1659 = vmatprep.subr.bf16.mxu0 0
        %1660 = vmatpush1.bf16.msra.mxu0 0
        %1661 = vmatprep.mubr.bf16.mxu0 0
        %1662 = vmatmul.mubr.bf16.gmra.mrb[0].mxu0 %v1563
        %v1663 = vpop.f32.mrb[0].mxu0
        %v1664 = vadd.f32 0.0, %v1663
        %v1665 = vpop.f32.mrb[0].mxu0
        %v1666 = vpop.f32.mrb[0].mxu0
        %v1667 = vadd.f32 0.0, %v1666
        %v1668 = vpop.f32.mrb[0].mxu0
        %1669 = vdwg.mxu0
        %v1670 = vlaneseq
        %v1671 = vshrl.u32 %v1670, 7
        %v1672 = vsub.s32 0, %v1671
        %v1673 = vrot.slane %v1562, %v1672
        %v1674 = vadd.f32 %v1673, %v1664
        %v1675 = vadd.f32 %v1673, %v1667
        %1676 = vadd.xlane.f32.xlu0 %v1674
        %v1677 = vpop.xlane.xlu0 %1676
        %1678 = vadd.xlane.f32.xlu0 %v1675
        %v1679 = vpop.xlane.xlu0 %1678
        %v1680 = vmul.f32 %v1677, 0.03125
        %v1681 = vmul.f32 %v1679, 0.03125
        %v1682 = vsub.f32 %v1674, %v1680
        %v1683 = vsub.f32 %v1675, %v1681
        %v1684 = vmul.f32 %v1682, %v449
        %v1685 = vmul.f32 %v1683, %v449
        %v1686 = vmul.f32 %v1684, %v1684
        %v1687 = vmul.f32 %v1685, %v1685
        %1688 = vadd.xlane.f32.xlu0 %v1686
        %v1689 = vpop.xlane.xlu0 %1688
        %1690 = vadd.xlane.f32.xlu0 %v1687
        %v1691 = vpop.xlane.xlu0 %1690
        %v1692 = vmul.f32 %v1689, 0.03125
        %v1693 = vmul.f32 %v1691, 0.03125
        %v1694 = vadd.f32 %v1692, 1e-05
        %v1695 = vadd.f32 %v1693, 1e-05
        %v1696 = vrsqrt.pop %v1694
        %v1697 = vrsqrt.pop %v1695
        %v1698 = vmul.f32 %v1684, %v1696
        %v1699 = vmul.f32 %v1685, %v1697
        %v1700 = vld [vmem:[#allocation7 + $0xb] sm:$0x1]
        %v1701 = vlaneseq
        %v1702 = vshrl.u32 %v1701, 7
        %v1703 = vsub.s32 0, %v1702
        %v1704 = vrot.slane %v1700, %v1703
        %v1705 = vmul.f32 %v1698, %v1704
        %v1706 = vmul.f32 %v1699, %v1704
        %v1707 = vld [vmem:[#allocation7 + $0xc] sm:$0x1]
        %v1708 = vlaneseq
        %v1709 = vshrl.u32 %v1708, 7
        %v1710 = vsub.s32 0, %v1709
        %v1711 = vrot.slane %v1707, %v1710
        %v1712 = vadd.f32 %v1705, %v1711
        %v1713 = vadd.f32 %v1706, %v1711
        %v1714 = vadd.f32 %v1430, %v1712
        %v1715 = vadd.f32 %v1431, %v1713
        %v1716 = vpack.c.bf16 %v1715, %v1714
        %s1717 = scalar_lea.vmem [#allocation6], 448
        %v1718 = vld [vmem:[%s1717] sm:$0xf]
        %v1719 = vld [vmem:[%s1717 + $0x4] sm:$0xf]
        %v1720 = vld [vmem:[%s1717 + $0x8] sm:$0xf]
        %v1721 = vld [vmem:[%s1717 + $0xc] sm:$0xf]
        %v1722 = vld [vmem:[%s1717 + $0x10] sm:$0xf]
        %v1723 = vld [vmem:[%s1717 + $0x14] sm:$0xf]
        %v1724 = vld [vmem:[%s1717 + $0x18] sm:$0xf]
        %v1725 = vld [vmem:[%s1717 + $0x1c] sm:$0xf]
        %v1726 = vld [vmem:[%s1717 + $0x20] sm:$0xf]
        %v1727 = vld [vmem:[%s1717 + $0x24] sm:$0xf]
        %v1728 = vld [vmem:[%s1717 + $0x28] sm:$0xf]
        %v1729 = vld [vmem:[%s1717 + $0x2c] sm:$0xf]
        %v1730 = vld [vmem:[%s1717 + $0x30] sm:$0xf]
        %v1731 = vld [vmem:[%s1717 + $0x34] sm:$0xf]
        %v1732 = vld [vmem:[%s1717 + $0x38] sm:$0xf]
        %v1733 = vld [vmem:[%s1717 + $0x3c] sm:$0xf]
        %v1734 = vld [vmem:[#allocation7 + $0xd] sm:$0x1]
        %v1735 = vlaneseq
        %v1736 = vshrl.u32 %v1735, 7
        %v1737 = vsub.s32 0, %v1736
        %v1738 = vrot.slane %v1734, %v1737
        %v1755 = vunpack.c.l.b16 %v1718
        %v1756 = vunpack.c.l.b16 %v1719
        %v1757 = vunpack.c.l.b16 %v1720
        %v1758 = vunpack.c.l.b16 %v1721
        %v1759 = vunpack.c.l.b16 %v1722
        %v1760 = vunpack.c.l.b16 %v1723
        %v1761 = vunpack.c.l.b16 %v1724
        %v1762 = vunpack.c.l.b16 %v1725
        %v1763 = vunpack.c.l.b16 %v1726
        %v1764 = vunpack.c.l.b16 %v1727
        %v1765 = vunpack.c.l.b16 %v1728
        %v1766 = vunpack.c.l.b16 %v1729
        %v1767 = vunpack.c.l.b16 %v1730
        %v1768 = vunpack.c.l.b16 %v1731
        %v1769 = vunpack.c.l.b16 %v1732
        %v1770 = vunpack.c.l.b16 %v1733
        %v1771 = vpack.c.b16 %v1756, %v1755
        %v1772 = vpack.c.b16 %v1758, %v1757
        %v1773 = vpack.c.b16 %v1760, %v1759
        %v1774 = vpack.c.b16 %v1762, %v1761
        %v1775 = vpack.c.b16 %v1764, %v1763
        %v1776 = vpack.c.b16 %v1766, %v1765
        %v1777 = vpack.c.b16 %v1768, %v1767
        %v1778 = vpack.c.b16 %v1770, %v1769
        %1787 = vmatprep.subr.bf16.mxu0 0
        %1788 = vmatpush1.bf16.msra.mxu0 %v1771
        %1789 = vmatprep.subr.bf16.mxu0 0
        %1790 = vmatpush1.bf16.msra.mxu0 %v1772
        %1791 = vmatprep.subr.bf16.mxu0 0
        %1792 = vmatpush1.bf16.msra.mxu0 %v1773
        %1793 = vmatprep.subr.bf16.mxu0 0
        %1794 = vmatpush1.bf16.msra.mxu0 %v1774
        %1795 = vmatprep.subr.bf16.mxu0 0
        %1796 = vmatpush1.bf16.msra.mxu0 %v1775
        %1797 = vmatprep.subr.bf16.mxu0 0
        %1798 = vmatpush1.bf16.msra.mxu0 %v1776
        %1799 = vmatprep.subr.bf16.mxu0 0
        %1800 = vmatpush1.bf16.msra.mxu0 %v1777
        %1801 = vmatprep.subr.bf16.mxu0 0
        %1802 = vmatpush1.bf16.msra.mxu0 %v1778
        %1803 = vmatprep.subr.bf16.mxu0 0
        %1804 = vmatpush1.bf16.msra.mxu0 0
        %1805 = vmatprep.subr.bf16.mxu0 0
        %1806 = vmatpush1.bf16.msra.mxu0 0
        %1807 = vmatprep.subr.bf16.mxu0 0
        %1808 = vmatpush1.bf16.msra.mxu0 0
        %1809 = vmatprep.subr.bf16.mxu0 0
        %1810 = vmatpush1.bf16.msra.mxu0 0
        %1811 = vmatprep.subr.bf16.mxu0 0
        %1812 = vmatpush1.bf16.msra.mxu0 0
        %1813 = vmatprep.subr.bf16.mxu0 0
        %1814 = vmatpush1.bf16.msra.mxu0 0
        %1815 = vmatprep.subr.bf16.mxu0 0
        %1816 = vmatpush1.bf16.msra.mxu0 0
        %1817 = vmatprep.subr.bf16.mxu0 0
        %1818 = vmatpush1.bf16.msra.mxu0 0
        %1819 = vmatprep.mubr.bf16.mxu0 0
        %1820 = vmatmul.mubr.bf16.gmra.mrb[0].mxu0 %v1716
        %v1821 = vpop.f32.mrb[0].mxu0
        %v1822 = vadd.f32 %v1738, %v1821
        %v1823 = vpop.f32.mrb[0].mxu0
        %v1824 = vpop.f32.mrb[0].mxu0
        %v1825 = vadd.f32 %v1738, %v1824
        %v1826 = vpop.f32.mrb[0].mxu0
        %1827 = vdwg.mxu0
        %s1828 = scalar_lea.vmem [#allocation6], 512
        %v1829 = vld [vmem:[%s1828] sm:$0xf]
        %v1830 = vld [vmem:[%s1828 + $0x4] sm:$0xf]
        %v1831 = vld [vmem:[%s1828 + $0x8] sm:$0xf]
        %v1832 = vld [vmem:[%s1828 + $0xc] sm:$0xf]
        %v1833 = vld [vmem:[%s1828 + $0x10] sm:$0xf]
        %v1834 = vld [vmem:[%s1828 + $0x14] sm:$0xf]
        %v1835 = vld [vmem:[%s1828 + $0x18] sm:$0xf]
        %v1836 = vld [vmem:[%s1828 + $0x1c] sm:$0xf]
        %v1837 = vld [vmem:[%s1828 + $0x20] sm:$0xf]
        %v1838 = vld [vmem:[%s1828 + $0x24] sm:$0xf]
        %v1839 = vld [vmem:[%s1828 + $0x28] sm:$0xf]
        %v1840 = vld [vmem:[%s1828 + $0x2c] sm:$0xf]
        %v1841 = vld [vmem:[%s1828 + $0x30] sm:$0xf]
        %v1842 = vld [vmem:[%s1828 + $0x34] sm:$0xf]
        %v1843 = vld [vmem:[%s1828 + $0x38] sm:$0xf]
        %v1844 = vld [vmem:[%s1828 + $0x3c] sm:$0xf]
        %v1845 = vld [vmem:[#allocation7 + $0xe] sm:$0x1]
        %v1846 = vlaneseq
        %v1847 = vshrl.u32 %v1846, 7
        %v1848 = vsub.s32 0, %v1847
        %v1849 = vrot.slane %v1845, %v1848
        %v1866 = vunpack.c.l.b16 %v1829
        %v1867 = vunpack.c.l.b16 %v1830
        %v1868 = vunpack.c.l.b16 %v1831
        %v1869 = vunpack.c.l.b16 %v1832
        %v1870 = vunpack.c.l.b16 %v1833
        %v1871 = vunpack.c.l.b16 %v1834
        %v1872 = vunpack.c.l.b16 %v1835
        %v1873 = vunpack.c.l.b16 %v1836
        %v1874 = vunpack.c.l.b16 %v1837
        %v1875 = vunpack.c.l.b16 %v1838
        %v1876 = vunpack.c.l.b16 %v1839
        %v1877 = vunpack.c.l.b16 %v1840
        %v1878 = vunpack.c.l.b16 %v1841
        %v1879 = vunpack.c.l.b16 %v1842
        %v1880 = vunpack.c.l.b16 %v1843
        %v1881 = vunpack.c.l.b16 %v1844
        %v1882 = vpack.c.b16 %v1867, %v1866
        %v1883 = vpack.c.b16 %v1869, %v1868
        %v1884 = vpack.c.b16 %v1871, %v1870
        %v1885 = vpack.c.b16 %v1873, %v1872
        %v1886 = vpack.c.b16 %v1875, %v1874
        %v1887 = vpack.c.b16 %v1877, %v1876
        %v1888 = vpack.c.b16 %v1879, %v1878
        %v1889 = vpack.c.b16 %v1881, %v1880
        %1898 = vmatprep.subr.bf16.mxu0 0
        %1899 = vmatpush1.bf16.msra.mxu0 %v1882
        %1900 = vmatprep.subr.bf16.mxu0 0
        %1901 = vmatpush1.bf16.msra.mxu0 %v1883
        %1902 = vmatprep.subr.bf16.mxu0 0
        %1903 = vmatpush1.bf16.msra.mxu0 %v1884
        %1904 = vmatprep.subr.bf16.mxu0 0
        %1905 = vmatpush1.bf16.msra.mxu0 %v1885
        %1906 = vmatprep.subr.bf16.mxu0 0
        %1907 = vmatpush1.bf16.msra.mxu0 %v1886
        %1908 = vmatprep.subr.bf16.mxu0 0
        %1909 = vmatpush1.bf16.msra.mxu0 %v1887
        %1910 = vmatprep.subr.bf16.mxu0 0
        %1911 = vmatpush1.bf16.msra.mxu0 %v1888
        %1912 = vmatprep.subr.bf16.mxu0 0
        %1913 = vmatpush1.bf16.msra.mxu0 %v1889
        %1914 = vmatprep.subr.bf16.mxu0 0
        %1915 = vmatpush1.bf16.msra.mxu0 0
        %1916 = vmatprep.subr.bf16.mxu0 0
        %1917 = vmatpush1.bf16.msra.mxu0 0
        %1918 = vmatprep.subr.bf16.mxu0 0
        %1919 = vmatpush1.bf16.msra.mxu0 0
        %1920 = vmatprep.subr.bf16.mxu0 0
        %1921 = vmatpush1.bf16.msra.mxu0 0
        %1922 = vmatprep.subr.bf16.mxu0 0
        %1923 = vmatpush1.bf16.msra.mxu0 0
        %1924 = vmatprep.subr.bf16.mxu0 0
        %1925 = vmatpush1.bf16.msra.mxu0 0
        %1926 = vmatprep.subr.bf16.mxu0 0
        %1927 = vmatpush1.bf16.msra.mxu0 0
        %1928 = vmatprep.subr.bf16.mxu0 0
        %1929 = vmatpush1.bf16.msra.mxu0 0
        %1930 = vmatprep.mubr.bf16.mxu0 0
        %1931 = vmatmul.mubr.bf16.gmra.mrb[0].mxu0 %v1716
        %v1932 = vpop.f32.mrb[0].mxu0
        %v1933 = vadd.f32 %v1849, %v1932
        %v1934 = vpop.f32.mrb[0].mxu0
        %v1935 = vpop.f32.mrb[0].mxu0
        %v1936 = vadd.f32 %v1849, %v1935
        %v1937 = vpop.f32.mrb[0].mxu0
        %1938 = vdwg.mxu0
        %s1939 = scalar_lea.vmem [#allocation6], 576
        %v1940 = vld [vmem:[%s1939] sm:$0xf]
        %v1941 = vld [vmem:[%s1939 + $0x4] sm:$0xf]
        %v1942 = vld [vmem:[%s1939 + $0x8] sm:$0xf]
        %v1943 = vld [vmem:[%s1939 + $0xc] sm:$0xf]
        %v1944 = vld [vmem:[%s1939 + $0x10] sm:$0xf]
        %v1945 = vld [vmem:[%s1939 + $0x14] sm:$0xf]
        %v1946 = vld [vmem:[%s1939 + $0x18] sm:$0xf]
        %v1947 = vld [vmem:[%s1939 + $0x1c] sm:$0xf]
        %v1948 = vld [vmem:[%s1939 + $0x20] sm:$0xf]
        %v1949 = vld [vmem:[%s1939 + $0x24] sm:$0xf]
        %v1950 = vld [vmem:[%s1939 + $0x28] sm:$0xf]
        %v1951 = vld [vmem:[%s1939 + $0x2c] sm:$0xf]
        %v1952 = vld [vmem:[%s1939 + $0x30] sm:$0xf]
        %v1953 = vld [vmem:[%s1939 + $0x34] sm:$0xf]
        %v1954 = vld [vmem:[%s1939 + $0x38] sm:$0xf]
        %v1955 = vld [vmem:[%s1939 + $0x3c] sm:$0xf]
        %v1956 = vld [vmem:[#allocation7 + $0xf] sm:$0x1]
        %v1957 = vlaneseq
        %v1958 = vshrl.u32 %v1957, 7
        %v1959 = vsub.s32 0, %v1958
        %v1960 = vrot.slane %v1956, %v1959
        %v1977 = vunpack.c.l.b16 %v1940
        %v1978 = vunpack.c.l.b16 %v1941
        %v1979 = vunpack.c.l.b16 %v1942
        %v1980 = vunpack.c.l.b16 %v1943
        %v1981 = vunpack.c.l.b16 %v1944
        %v1982 = vunpack.c.l.b16 %v1945
        %v1983 = vunpack.c.l.b16 %v1946
        %v1984 = vunpack.c.l.b16 %v1947
        %v1985 = vunpack.c.l.b16 %v1948
        %v1986 = vunpack.c.l.b16 %v1949
        %v1987 = vunpack.c.l.b16 %v1950
        %v1988 = vunpack.c.l.b16 %v1951
        %v1989 = vunpack.c.l.b16 %v1952
        %v1990 = vunpack.c.l.b16 %v1953
        %v1991 = vunpack.c.l.b16 %v1954
        %v1992 = vunpack.c.l.b16 %v1955
        %v1993 = vpack.c.b16 %v1978, %v1977
        %v1994 = vpack.c.b16 %v1980, %v1979
        %v1995 = vpack.c.b16 %v1982, %v1981
        %v1996 = vpack.c.b16 %v1984, %v1983
        %v1997 = vpack.c.b16 %v1986, %v1985
        %v1998 = vpack.c.b16 %v1988, %v1987
        %v1999 = vpack.c.b16 %v1990, %v1989
        %v2000 = vpack.c.b16 %v1992, %v1991
        %2009 = vmatprep.subr.bf16.mxu0 0
        %2010 = vmatpush1.bf16.msra.mxu0 %v1993
        %2011 = vmatprep.subr.bf16.mxu0 0
        %2012 = vmatpush1.bf16.msra.mxu0 %v1994
        %2013 = vmatprep.subr.bf16.mxu0 0
        %2014 = vmatpush1.bf16.msra.mxu0 %v1995
        %2015 = vmatprep.subr.bf16.mxu0 0
        %2016 = vmatpush1.bf16.msra.mxu0 %v1996
        %2017 = vmatprep.subr.bf16.mxu0 0
        %2018 = vmatpush1.bf16.msra.mxu0 %v1997
        %2019 = vmatprep.subr.bf16.mxu0 0
        %2020 = vmatpush1.bf16.msra.mxu0 %v1998
        %2021 = vmatprep.subr.bf16.mxu0 0
        %2022 = vmatpush1.bf16.msra.mxu0 %v1999
        %2023 = vmatprep.subr.bf16.mxu0 0
        %2024 = vmatpush1.bf16.msra.mxu0 %v2000
        %2025 = vmatprep.subr.bf16.mxu0 0
        %2026 = vmatpush1.bf16.msra.mxu0 0
        %2027 = vmatprep.subr.bf16.mxu0 0
        %2028 = vmatpush1.bf16.msra.mxu0 0
        %2029 = vmatprep.subr.bf16.mxu0 0
        %2030 = vmatpush1.bf16.msra.mxu0 0
        %2031 = vmatprep.subr.bf16.mxu0 0
        %2032 = vmatpush1.bf16.msra.mxu0 0
        %2033 = vmatprep.subr.bf16.mxu0 0
        %2034 = vmatpush1.bf16.msra.mxu0 0
        %2035 = vmatprep.subr.bf16.mxu0 0
        %2036 = vmatpush1.bf16.msra.mxu0 0
        %2037 = vmatprep.subr.bf16.mxu0 0
        %2038 = vmatpush1.bf16.msra.mxu0 0
        %2039 = vmatprep.subr.bf16.mxu0 0
        %2040 = vmatpush1.bf16.msra.mxu0 0
        %2041 = vmatprep.mubr.bf16.mxu0 0
        %2042 = vmatmul.mubr.bf16.gmra.mrb[0].mxu0 %v1716
        %v2043 = vpop.f32.mrb[0].mxu0
        %v2044 = vadd.f32 %v1960, %v2043
        %v2045 = vpop.f32.mrb[0].mxu0
        %v2046 = vpop.f32.mrb[0].mxu0
        %v2047 = vadd.f32 %v1960, %v2046
        %v2048 = vpop.f32.mrb[0].mxu0
        %2049 = vdwg.mxu0
        %v2050 = vmul.f32 %v1822, %v1822
        %v2051 = vmul.f32 %v1825, %v1825
        %v2052 = vsel %vm940, %v2050, 0.0
        %2053 = vadd.xlane.f32.xlu0 %v2052
        %v2054 = vpop.xlane.xlu0 %2053
        %v2055 = vsel %vm940, %v2051, 0.0
        %2056 = vadd.xlane.f32.xlu0 %v2055
        %v2057 = vpop.xlane.xlu0 %2056
        %v2058 = vmax.f32 %v2054, 1e-24
        %v2059 = vmax.f32 %v2057, 1e-24
        %v2060 = vrsqrt.pop %v2058
        %v2061 = vrsqrt.pop %v2059
        %v2062 = vmul.f32 %v1822, %v2060
        %v2063 = vmul.f32 %v1825, %v2061
        %v2064 = vmul.f32 %v1933, %v1933
        %v2065 = vmul.f32 %v1936, %v1936
        %v2066 = vsel %vm940, %v2064, 0.0
        %2067 = vadd.xlane.f32.xlu0 %v2066
        %v2068 = vpop.xlane.xlu0 %2067
        %v2069 = vsel %vm940, %v2065, 0.0
        %2070 = vadd.xlane.f32.xlu0 %v2069
        %v2071 = vpop.xlane.xlu0 %2070
        %v2072 = vmax.f32 %v2068, 1e-24
        %v2073 = vmax.f32 %v2071, 1e-24
        %v2074 = vrsqrt.pop %v2072
        %v2075 = vrsqrt.pop %v2073
        %v2076 = vmul.f32 %v1933, %v2074
        %v2077 = vmul.f32 %v1936, %v2075
        %v2078 = vpack.c.bf16 %v2063, %v2062
        %v2079 = vpack.c.bf16 %v2077, %v2076
        %v2081 = vsel %vm940, %v2078, 0
        %v2084 = vsel %vm940, %v2079, 0
        %2086 = vmatprep.subr.bf16.mxu0 0
        %2087 = vmatpush1.bf16.xpose.msra.mxu0 %v2084
        %2088 = vmatprep.subr.bf16.mxu0 0
        %2089 = vmatpush1.bf16.xpose.msra.mxu0 0
        %2090 = vmatprep.subr.bf16.mxu0 0
        %2091 = vmatpush1.bf16.xpose.msra.mxu0 0
        %2092 = vmatprep.subr.bf16.mxu0 0
        %2093 = vmatpush1.bf16.xpose.msra.mxu0 0
        %2094 = vmatprep.subr.bf16.mxu0 0
        %2095 = vmatpush1.bf16.xpose.msra.mxu0 0
        %2096 = vmatprep.subr.bf16.mxu0 0
        %2097 = vmatpush1.bf16.xpose.msra.mxu0 0
        %2098 = vmatprep.subr.bf16.mxu0 0
        %2099 = vmatpush1.bf16.xpose.msra.mxu0 0
        %2100 = vmatprep.subr.bf16.mxu0 0
        %2101 = vmatpush1.bf16.xpose.msra.mxu0 0
        %2102 = vmatprep.subr.bf16.mxu0 0
        %2103 = vmatpush1.bf16.xpose.msra.mxu0 0
        %2104 = vmatprep.subr.bf16.mxu0 0
        %2105 = vmatpush1.bf16.xpose.msra.mxu0 0
        %2106 = vmatprep.subr.bf16.mxu0 0
        %2107 = vmatpush1.bf16.xpose.msra.mxu0 0
        %2108 = vmatprep.subr.bf16.mxu0 0
        %2109 = vmatpush1.bf16.xpose.msra.mxu0 0
        %2110 = vmatprep.subr.bf16.mxu0 0
        %2111 = vmatpush1.bf16.xpose.msra.mxu0 0
        %2112 = vmatprep.subr.bf16.mxu0 0
        %2113 = vmatpush1.bf16.xpose.msra.mxu0 0
        %2114 = vmatprep.subr.bf16.mxu0 0
        %2115 = vmatpush1.bf16.xpose.msra.mxu0 0
        %2116 = vmatprep.subr.bf16.mxu0 0
        %2117 = vmatpush1.bf16.xpose.msra.mxu0 0
        %2118 = vmatprep.mubr.bf16.mxu0 0
        %2119 = vmatmul.mubr.bf16.gmra.mrb[0].mxu0 %v2081
        %v2120 = vpop.f32.mrb[0].mxu0
        %v2121 = vadd.f32 0.0, %v2120
        %v2122 = vpop.f32.mrb[0].mxu0
        %v2123 = vpop.f32.mrb[0].mxu0
        %v2124 = vadd.f32 0.0, %v2123
        %v2125 = vpop.f32.mrb[0].mxu0
        %2126 = vdwg.mxu0
        %s2127 = sld [smem:[#allocation2 + $0x2]]
        %v2128 = vstv %s2127
        %v2129 = vmul.f32 %v2121, %v2128
        %v2130 = vmul.f32 %v2124, %v2128
        %v2131 = vld [vmem:[#allocation10] sm:$0xff]
        %v2132 = vld [vmem:[#allocation10 + $0x8] sm:$0xff]
        %v2133 = vadd.f32 %v2129, %v2131
        %v2134 = vadd.f32 %v2130, %v2132
        %v2135 = vsel %vm940, %v2133, -inf
        %2136 = vmax.xlane.f32.xlu0 %v2135
        %v2137 = vpop.xlane.xlu0 %2136
        %v2138 = vsel %vm940, %v2134, -inf
        %2139 = vmax.xlane.f32.xlu0 %v2138
        %v2140 = vpop.xlane.xlu0 %2139
        %v2141 = vsub.f32 %v2133, %v2137
        %v2142 = vsub.f32 %v2134, %v2140
        %v2143 = vmul.f32 %v2141, 1.442695
        %v2144 = vpow.pop %v2143
        %v2145 = vmul.f32 %v2142, 1.442695
        %v2146 = vpow.pop %v2145
        %v2147 = vsel %vm940, %v2144, 0.0
        %2148 = vadd.xlane.f32.xlu0 %v2147
        %v2149 = vpop.xlane.xlu0 %2148
        %v2150 = vsel %vm940, %v2146, 0.0
        %2151 = vadd.xlane.f32.xlu0 %v2150
        %v2152 = vpop.xlane.xlu0 %2151
        %v2153 = vrcp.pop %v2149
        %v2154 = vmul.f32 %v2144, %v2153
        %v2155 = vrcp.pop %v2152
        %v2156 = vmul.f32 %v2146, %v2155
        %v2157 = vpack.c.bf16 %v2156, %v2154
        %v2158 = vpack.c.bf16 %v2047, %v2044
        %v2160 = vsel %vm940, %v2157, 0
        %2162 = vmatprep.subr.bf16.mxu0 0
        %2163 = vmatpush1.bf16.msra.mxu0 %v2158
        %2164 = vmatprep.subr.bf16.mxu0 0
        %2165 = vmatpush1.bf16.msra.mxu0 0
        %2166 = vmatprep.subr.bf16.mxu0 0
        %2167 = vmatpush1.bf16.msra.mxu0 0
        %2168 = vmatprep.subr.bf16.mxu0 0
        %2169 = vmatpush1.bf16.msra.mxu0 0
        %2170 = vmatprep.subr.bf16.mxu0 0
        %2171 = vmatpush1.bf16.msra.mxu0 0
        %2172 = vmatprep.subr.bf16.mxu0 0
        %2173 = vmatpush1.bf16.msra.mxu0 0
        %2174 = vmatprep.subr.bf16.mxu0 0
        %2175 = vmatpush1.bf16.msra.mxu0 0
        %2176 = vmatprep.subr.bf16.mxu0 0
        %2177 = vmatpush1.bf16.msra.mxu0 0
        %2178 = vmatprep.subr.bf16.mxu0 0
        %2179 = vmatpush1.bf16.msra.mxu0 0
        %2180 = vmatprep.subr.bf16.mxu0 0
        %2181 = vmatpush1.bf16.msra.mxu0 0
        %2182 = vmatprep.subr.bf16.mxu0 0
        %2183 = vmatpush1.bf16.msra.mxu0 0
        %2184 = vmatprep.subr.bf16.mxu0 0
        %2185 = vmatpush1.bf16.msra.mxu0 0
        %2186 = vmatprep.subr.bf16.mxu0 0
        %2187 = vmatpush1.bf16.msra.mxu0 0
        %2188 = vmatprep.subr.bf16.mxu0 0
        %2189 = vmatpush1.bf16.msra.mxu0 0
        %2190 = vmatprep.subr.bf16.mxu0 0
        %2191 = vmatpush1.bf16.msra.mxu0 0
        %2192 = vmatprep.subr.bf16.mxu0 0
        %2193 = vmatpush1.bf16.msra.mxu0 0
        %2194 = vmatprep.mubr.bf16.mxu0 0
        %2195 = vmatmul.mubr.bf16.gmra.mrb[0].mxu0 %v2160
        %v2196 = vpop.f32.mrb[0].mxu0
        %v2197 = vadd.f32 0.0, %v2196
        %v2198 = vpop.f32.mrb[0].mxu0
        %v2199 = vpop.f32.mrb[0].mxu0
        %v2200 = vadd.f32 0.0, %v2199
        %v2201 = vpop.f32.mrb[0].mxu0
        %2202 = vdwg.mxu0
        %2205 = vrot.lane.b32.xlu0 %v2050, 112
        %v2206 = vpop.permute.xlu0 %2205
        %2207 = vrot.lane.b32.xlu0 %v2051, 112
        %v2208 = vpop.permute.xlu0 %2207
        %v2211 = vsel %vm940, %v2206, 0.0
        %2212 = vadd.xlane.f32.xlu0 %v2211
        %v2213 = vpop.xlane.xlu0 %2212
        %v2214 = vsel %vm940, %v2208, 0.0
        %2215 = vadd.xlane.f32.xlu0 %v2214
        %v2216 = vpop.xlane.xlu0 %2215
        %v2217 = vmax.f32 %v2213, 1e-24
        %v2218 = vmax.f32 %v2216, 1e-24
        %v2219 = vrsqrt.pop %v2217
        %v2220 = vrsqrt.pop %v2218
        %v2221 = vmul.f32 %v1822, %v2219
        %v2222 = vmul.f32 %v1825, %v2220
        %2225 = vrot.lane.b32.xlu0 %v2064, 112
        %v2226 = vpop.permute.xlu0 %2225
        %2227 = vrot.lane.b32.xlu0 %v2065, 112
        %v2228 = vpop.permute.xlu0 %2227
        %v2231 = vsel %vm940, %v2226, 0.0
        %2232 = vadd.xlane.f32.xlu0 %v2231
        %v2233 = vpop.xlane.xlu0 %2232
        %v2234 = vsel %vm940, %v2228, 0.0
        %2235 = vadd.xlane.f32.xlu0 %v2234
        %v2236 = vpop.xlane.xlu0 %2235
        %v2237 = vmax.f32 %v2233, 1e-24
        %v2238 = vmax.f32 %v2236, 1e-24
        %v2239 = vrsqrt.pop %v2237
        %v2240 = vrsqrt.pop %v2238
        %v2241 = vmul.f32 %v1933, %v2239
        %v2242 = vmul.f32 %v1936, %v2240
        %v2243 = vpack.c.bf16 %v2222, %v2221
        %v2244 = vpack.c.bf16 %v2242, %v2241
        %2246 = vrot.lane.b32.xlu0 %v2243, 112
        %v2247 = vpop.permute.xlu0 %2246
        %2249 = vrot.lane.b32.xlu0 %v2244, 112
        %v2250 = vpop.permute.xlu0 %2249
        %v2252 = vsel %vm940, %v2247, 0
        %v2255 = vsel %vm940, %v2250, 0
        %2257 = vmatprep.subr.bf16.mxu0 0
        %2258 = vmatpush1.bf16.xpose.msra.mxu0 %v2255
        %2259 = vmatprep.subr.bf16.mxu0 0
        %2260 = vmatpush1.bf16.xpose.msra.mxu0 0
        %2261 = vmatprep.subr.bf16.mxu0 0
        %2262 = vmatpush1.bf16.xpose.msra.mxu0 0
        %2263 = vmatprep.subr.bf16.mxu0 0
        %2264 = vmatpush1.bf16.xpose.msra.mxu0 0
        %2265 = vmatprep.subr.bf16.mxu0 0
        %2266 = vmatpush1.bf16.xpose.msra.mxu0 0
        %2267 = vmatprep.subr.bf16.mxu0 0
        %2268 = vmatpush1.bf16.xpose.msra.mxu0 0
        %2269 = vmatprep.subr.bf16.mxu0 0
        %2270 = vmatpush1.bf16.xpose.msra.mxu0 0
        %2271 = vmatprep.subr.bf16.mxu0 0
        %2272 = vmatpush1.bf16.xpose.msra.mxu0 0
        %2273 = vmatprep.subr.bf16.mxu0 0
        %2274 = vmatpush1.bf16.xpose.msra.mxu0 0
        %2275 = vmatprep.subr.bf16.mxu0 0
        %2276 = vmatpush1.bf16.xpose.msra.mxu0 0
        %2277 = vmatprep.subr.bf16.mxu0 0
        %2278 = vmatpush1.bf16.xpose.msra.mxu0 0
        %2279 = vmatprep.subr.bf16.mxu0 0
        %2280 = vmatpush1.bf16.xpose.msra.mxu0 0
        %2281 = vmatprep.subr.bf16.mxu0 0
        %2282 = vmatpush1.bf16.xpose.msra.mxu0 0
        %2283 = vmatprep.subr.bf16.mxu0 0
        %2284 = vmatpush1.bf16.xpose.msra.mxu0 0
        %2285 = vmatprep.subr.bf16.mxu0 0
        %2286 = vmatpush1.bf16.xpose.msra.mxu0 0
        %2287 = vmatprep.subr.bf16.mxu0 0
        %2288 = vmatpush1.bf16.xpose.msra.mxu0 0
        %2289 = vmatprep.mubr.bf16.mxu0 0
        %2290 = vmatmul.mubr.bf16.gmra.mrb[0].mxu0 %v2252
        %v2291 = vpop.f32.mrb[0].mxu0
        %v2292 = vadd.f32 0.0, %v2291
        %v2293 = vpop.f32.mrb[0].mxu0
        %v2294 = vpop.f32.mrb[0].mxu0
        %v2295 = vadd.f32 0.0, %v2294
        %v2296 = vpop.f32.mrb[0].mxu0
        %2297 = vdwg.mxu0
        %s2298 = sld [smem:[#allocation2 + $0x3]]
        %v2299 = vstv %s2298
        %v2300 = vmul.f32 %v2292, %v2299
        %v2301 = vmul.f32 %v2295, %v2299
        %s2302 = scalar_lea.vmem [#allocation10], 16
        %v2303 = vld [vmem:[%s2302] sm:$0xff]
        %v2304 = vld [vmem:[%s2302 + $0x8] sm:$0xff]
        %v2305 = vadd.f32 %v2300, %v2303
        %v2306 = vadd.f32 %v2301, %v2304
        %v2307 = vsel %vm940, %v2305, -inf
        %2308 = vmax.xlane.f32.xlu0 %v2307
        %v2309 = vpop.xlane.xlu0 %2308
        %v2310 = vsel %vm940, %v2306, -inf
        %2311 = vmax.xlane.f32.xlu0 %v2310
        %v2312 = vpop.xlane.xlu0 %2311
        %v2313 = vsub.f32 %v2305, %v2309
        %v2314 = vsub.f32 %v2306, %v2312
        %v2315 = vmul.f32 %v2313, 1.442695
        %v2316 = vpow.pop %v2315
        %v2317 = vmul.f32 %v2314, 1.442695
        %v2318 = vpow.pop %v2317
        %v2319 = vsel %vm940, %v2316, 0.0
        %2320 = vadd.xlane.f32.xlu0 %v2319
        %v2321 = vpop.xlane.xlu0 %2320
        %v2322 = vsel %vm940, %v2318, 0.0
        %2323 = vadd.xlane.f32.xlu0 %v2322
        %v2324 = vpop.xlane.xlu0 %2323
        %v2325 = vrcp.pop %v2321
        %v2326 = vmul.f32 %v2316, %v2325
        %v2327 = vrcp.pop %v2324
        %v2328 = vmul.f32 %v2318, %v2327
        %v2329 = vpack.c.bf16 %v2328, %v2326
        %2331 = vrot.lane.b32.xlu0 %v2158, 112
        %v2332 = vpop.permute.xlu0 %2331
        %v2335 = vsel %vm940, %v2329, 0
        %2337 = vmatprep.subr.bf16.mxu0 0
        %2338 = vmatpush1.bf16.msra.mxu0 %v2332
        %2339 = vmatprep.subr.bf16.mxu0 0
        %2340 = vmatpush1.bf16.msra.mxu0 0
        %2341 = vmatprep.subr.bf16.mxu0 0
        %2342 = vmatpush1.bf16.msra.mxu0 0
        %2343 = vmatprep.subr.bf16.mxu0 0
        %2344 = vmatpush1.bf16.msra.mxu0 0
        %2345 = vmatprep.subr.bf16.mxu0 0
        %2346 = vmatpush1.bf16.msra.mxu0 0
        %2347 = vmatprep.subr.bf16.mxu0 0
        %2348 = vmatpush1.bf16.msra.mxu0 0
        %2349 = vmatprep.subr.bf16.mxu0 0
        %2350 = vmatpush1.bf16.msra.mxu0 0
        %2351 = vmatprep.subr.bf16.mxu0 0
        %2352 = vmatpush1.bf16.msra.mxu0 0
        %2353 = vmatprep.subr.bf16.mxu0 0
        %2354 = vmatpush1.bf16.msra.mxu0 0
        %2355 = vmatprep.subr.bf16.mxu0 0
        %2356 = vmatpush1.bf16.msra.mxu0 0
        %2357 = vmatprep.subr.bf16.mxu0 0
        %2358 = vmatpush1.bf16.msra.mxu0 0
        %2359 = vmatprep.subr.bf16.mxu0 0
        %2360 = vmatpush1.bf16.msra.mxu0 0
        %2361 = vmatprep.subr.bf16.mxu0 0
        %2362 = vmatpush1.bf16.msra.mxu0 0
        %2363 = vmatprep.subr.bf16.mxu0 0
        %2364 = vmatpush1.bf16.msra.mxu0 0
        %2365 = vmatprep.subr.bf16.mxu0 0
        %2366 = vmatpush1.bf16.msra.mxu0 0
        %2367 = vmatprep.subr.bf16.mxu0 0
        %2368 = vmatpush1.bf16.msra.mxu0 0
        %2369 = vmatprep.mubr.bf16.mxu0 0
        %2370 = vmatmul.mubr.bf16.gmra.mrb[0].mxu0 %v2335
        %v2371 = vpop.f32.mrb[0].mxu0
        %v2372 = vadd.f32 0.0, %v2371
        %v2373 = vpop.f32.mrb[0].mxu0
        %v2374 = vpop.f32.mrb[0].mxu0
        %v2375 = vadd.f32 0.0, %v2374
        %v2376 = vpop.f32.mrb[0].mxu0
        %2377 = vdwg.mxu0
        %2380 = vrot.lane.b32.xlu0 %v2372, 16
        %v2381 = vpop.permute.xlu0 %2380
        %2382 = vrot.lane.b32.xlu0 %v2375, 16
        %v2383 = vpop.permute.xlu0 %2382
        %v2386 = vsel %vm940, %v2197, %v2381
        %v2387 = vsel %vm940, %v2200, %v2383
        %v2388 = vsel %vm1277, %v2386, 0.0
        %v2389 = vsel %vm1277, %v2387, 0.0
        %v2390 = vpack.c.bf16 %v2389, %v2388
        %s2391 = scalar_lea.vmem [#allocation6], 640
        %v2392 = vld [vmem:[%s2391] sm:$0xf]
        %v2393 = vld [vmem:[%s2391 + $0x4] sm:$0xf]
        %v2394 = vld [vmem:[%s2391 + $0x8] sm:$0xf]
        %v2395 = vld [vmem:[%s2391 + $0xc] sm:$0xf]
        %v2396 = vld [vmem:[%s2391 + $0x10] sm:$0xf]
        %v2397 = vld [vmem:[%s2391 + $0x14] sm:$0xf]
        %v2398 = vld [vmem:[%s2391 + $0x18] sm:$0xf]
        %v2399 = vld [vmem:[%s2391 + $0x1c] sm:$0xf]
        %v2400 = vld [vmem:[%s2391 + $0x20] sm:$0xf]
        %v2401 = vld [vmem:[%s2391 + $0x24] sm:$0xf]
        %v2402 = vld [vmem:[%s2391 + $0x28] sm:$0xf]
        %v2403 = vld [vmem:[%s2391 + $0x2c] sm:$0xf]
        %v2404 = vld [vmem:[%s2391 + $0x30] sm:$0xf]
        %v2405 = vld [vmem:[%s2391 + $0x34] sm:$0xf]
        %v2406 = vld [vmem:[%s2391 + $0x38] sm:$0xf]
        %v2407 = vld [vmem:[%s2391 + $0x3c] sm:$0xf]
        %v2408 = vld [vmem:[#allocation7 + $0x10] sm:$0x1]
        %v2409 = vlaneseq
        %v2410 = vshrl.u32 %v2409, 7
        %v2411 = vsub.s32 0, %v2410
        %v2412 = vrot.slane %v2408, %v2411
        %v2429 = vunpack.c.l.b16 %v2392
        %v2430 = vunpack.c.l.b16 %v2393
        %v2431 = vunpack.c.l.b16 %v2394
        %v2432 = vunpack.c.l.b16 %v2395
        %v2433 = vunpack.c.l.b16 %v2396
        %v2434 = vunpack.c.l.b16 %v2397
        %v2435 = vunpack.c.l.b16 %v2398
        %v2436 = vunpack.c.l.b16 %v2399
        %v2437 = vunpack.c.l.b16 %v2400
        %v2438 = vunpack.c.l.b16 %v2401
        %v2439 = vunpack.c.l.b16 %v2402
        %v2440 = vunpack.c.l.b16 %v2403
        %v2441 = vunpack.c.l.b16 %v2404
        %v2442 = vunpack.c.l.b16 %v2405
        %v2443 = vunpack.c.l.b16 %v2406
        %v2444 = vunpack.c.l.b16 %v2407
        %v2445 = vpack.c.b16 %v2430, %v2429
        %v2446 = vpack.c.b16 %v2432, %v2431
        %v2447 = vpack.c.b16 %v2434, %v2433
        %v2448 = vpack.c.b16 %v2436, %v2435
        %v2449 = vpack.c.b16 %v2438, %v2437
        %v2450 = vpack.c.b16 %v2440, %v2439
        %v2451 = vpack.c.b16 %v2442, %v2441
        %v2452 = vpack.c.b16 %v2444, %v2443
        %2461 = vmatprep.subr.bf16.mxu0 0
        %2462 = vmatpush1.bf16.msra.mxu0 %v2445
        %2463 = vmatprep.subr.bf16.mxu0 0
        %2464 = vmatpush1.bf16.msra.mxu0 %v2446
        %2465 = vmatprep.subr.bf16.mxu0 0
        %2466 = vmatpush1.bf16.msra.mxu0 %v2447
        %2467 = vmatprep.subr.bf16.mxu0 0
        %2468 = vmatpush1.bf16.msra.mxu0 %v2448
        %2469 = vmatprep.subr.bf16.mxu0 0
        %2470 = vmatpush1.bf16.msra.mxu0 %v2449
        %2471 = vmatprep.subr.bf16.mxu0 0
        %2472 = vmatpush1.bf16.msra.mxu0 %v2450
        %2473 = vmatprep.subr.bf16.mxu0 0
        %2474 = vmatpush1.bf16.msra.mxu0 %v2451
        %2475 = vmatprep.subr.bf16.mxu0 0
        %2476 = vmatpush1.bf16.msra.mxu0 %v2452
        %2477 = vmatprep.subr.bf16.mxu0 0
        %2478 = vmatpush1.bf16.msra.mxu0 0
        %2479 = vmatprep.subr.bf16.mxu0 0
        %2480 = vmatpush1.bf16.msra.mxu0 0
        %2481 = vmatprep.subr.bf16.mxu0 0
        %2482 = vmatpush1.bf16.msra.mxu0 0
        %2483 = vmatprep.subr.bf16.mxu0 0
        %2484 = vmatpush1.bf16.msra.mxu0 0
        %2485 = vmatprep.subr.bf16.mxu0 0
        %2486 = vmatpush1.bf16.msra.mxu0 0
        %2487 = vmatprep.subr.bf16.mxu0 0
        %2488 = vmatpush1.bf16.msra.mxu0 0
        %2489 = vmatprep.subr.bf16.mxu0 0
        %2490 = vmatpush1.bf16.msra.mxu0 0
        %2491 = vmatprep.subr.bf16.mxu0 0
        %2492 = vmatpush1.bf16.msra.mxu0 0
        %2493 = vmatprep.mubr.bf16.mxu0 0
        %2494 = vmatmul.mubr.bf16.gmra.mrb[0].mxu0 %v2390
        %v2495 = vpop.f32.mrb[0].mxu0
        %v2496 = vadd.f32 %v2412, %v2495
        %v2497 = vpop.f32.mrb[0].mxu0
        %v2498 = vpop.f32.mrb[0].mxu0
        %v2499 = vadd.f32 %v2412, %v2498
        %v2500 = vpop.f32.mrb[0].mxu0
        %2501 = vdwg.mxu0
        %2502 = vadd.xlane.f32.xlu0 %v2496
        %v2503 = vpop.xlane.xlu0 %2502
        %2504 = vadd.xlane.f32.xlu0 %v2499
        %v2505 = vpop.xlane.xlu0 %2504
        %v2506 = vmul.f32 %v2503, 0.03125
        %v2507 = vmul.f32 %v2505, 0.03125
        %v2508 = vsub.f32 %v2496, %v2506
        %v2509 = vsub.f32 %v2499, %v2507
        %v2510 = vmul.f32 %v2508, %v449
        %v2511 = vmul.f32 %v2509, %v449
        %v2512 = vmul.f32 %v2510, %v2510
        %v2513 = vmul.f32 %v2511, %v2511
        %2514 = vadd.xlane.f32.xlu0 %v2512
        %v2515 = vpop.xlane.xlu0 %2514
        %2516 = vadd.xlane.f32.xlu0 %v2513
        %v2517 = vpop.xlane.xlu0 %2516
        %v2518 = vmul.f32 %v2515, 0.03125
        %v2519 = vmul.f32 %v2517, 0.03125
        %v2520 = vadd.f32 %v2518, 1e-05
        %v2521 = vadd.f32 %v2519, 1e-05
        %v2522 = vrsqrt.pop %v2520
        %v2523 = vrsqrt.pop %v2521
        %v2524 = vmul.f32 %v2510, %v2522
        %v2525 = vmul.f32 %v2511, %v2523
        %v2526 = vld [vmem:[#allocation7 + $0x11] sm:$0x1]
        %v2527 = vlaneseq
        %v2528 = vshrl.u32 %v2527, 7
        %v2529 = vsub.s32 0, %v2528
        %v2530 = vrot.slane %v2526, %v2529
        %v2531 = vmul.f32 %v2524, %v2530
        %v2532 = vmul.f32 %v2525, %v2530
        %v2533 = vld [vmem:[#allocation7 + $0x12] sm:$0x1]
        %v2534 = vlaneseq
        %v2535 = vshrl.u32 %v2534, 7
        %v2536 = vsub.s32 0, %v2535
        %v2537 = vrot.slane %v2533, %v2536
        %v2538 = vadd.f32 %v2531, %v2537
        %v2539 = vadd.f32 %v2532, %v2537
        %v2540 = vadd.f32 %v1714, %v2538
        %v2541 = vadd.f32 %v1715, %v2539
        %v2542 = vpack.c.bf16 %v2541, %v2540
        %s2543 = scalar_lea.vmem [#allocation6], 704
        %v2544 = vld [vmem:[%s2543] sm:$0xf]
        %v2545 = vld [vmem:[%s2543 + $0x4] sm:$0xf]
        %v2546 = vld [vmem:[%s2543 + $0x8] sm:$0xf]
        %v2547 = vld [vmem:[%s2543 + $0xc] sm:$0xf]
        %v2548 = vld [vmem:[%s2543 + $0x10] sm:$0xf]
        %v2549 = vld [vmem:[%s2543 + $0x14] sm:$0xf]
        %v2550 = vld [vmem:[%s2543 + $0x18] sm:$0xf]
        %v2551 = vld [vmem:[%s2543 + $0x1c] sm:$0xf]
        %v2552 = vld [vmem:[%s2543 + $0x20] sm:$0xf]
        %v2553 = vld [vmem:[%s2543 + $0x24] sm:$0xf]
        %v2554 = vld [vmem:[%s2543 + $0x28] sm:$0xf]
        %v2555 = vld [vmem:[%s2543 + $0x2c] sm:$0xf]
        %v2556 = vld [vmem:[%s2543 + $0x30] sm:$0xf]
        %v2557 = vld [vmem:[%s2543 + $0x34] sm:$0xf]
        %v2558 = vld [vmem:[%s2543 + $0x38] sm:$0xf]
        %v2559 = vld [vmem:[%s2543 + $0x3c] sm:$0xf]
        %v2560 = vld [vmem:[#allocation7 + $0x13] sm:$0x1]
        %v2561 = vlaneseq
        %v2562 = vshrl.u32 %v2561, 7
        %v2563 = vsub.s32 0, %v2562
        %v2564 = vrot.slane %v2560, %v2563
        %v2581 = vunpack.c.l.b16 %v2544
        %v2582 = vunpack.c.l.b16 %v2545
        %v2583 = vunpack.c.l.b16 %v2546
        %v2584 = vunpack.c.l.b16 %v2547
        %v2585 = vunpack.c.l.b16 %v2548
        %v2586 = vunpack.c.l.b16 %v2549
        %v2587 = vunpack.c.l.b16 %v2550
        %v2588 = vunpack.c.l.b16 %v2551
        %v2589 = vunpack.c.l.b16 %v2552
        %v2590 = vunpack.c.l.b16 %v2553
        %v2591 = vunpack.c.l.b16 %v2554
        %v2592 = vunpack.c.l.b16 %v2555
        %v2593 = vunpack.c.l.b16 %v2556
        %v2594 = vunpack.c.l.b16 %v2557
        %v2595 = vunpack.c.l.b16 %v2558
        %v2596 = vunpack.c.l.b16 %v2559
        %v2597 = vpack.c.b16 %v2582, %v2581
        %v2598 = vpack.c.b16 %v2584, %v2583
        %v2599 = vpack.c.b16 %v2586, %v2585
        %v2600 = vpack.c.b16 %v2588, %v2587
        %v2601 = vpack.c.b16 %v2590, %v2589
        %v2602 = vpack.c.b16 %v2592, %v2591
        %v2603 = vpack.c.b16 %v2594, %v2593
        %v2604 = vpack.c.b16 %v2596, %v2595
        %2613 = vmatprep.subr.bf16.mxu0 0
        %2614 = vmatpush1.bf16.msra.mxu0 %v2597
        %2615 = vmatprep.subr.bf16.mxu0 0
        %2616 = vmatpush1.bf16.msra.mxu0 %v2598
        %2617 = vmatprep.subr.bf16.mxu0 0
        %2618 = vmatpush1.bf16.msra.mxu0 %v2599
        %2619 = vmatprep.subr.bf16.mxu0 0
        %2620 = vmatpush1.bf16.msra.mxu0 %v2600
        %2621 = vmatprep.subr.bf16.mxu0 0
        %2622 = vmatpush1.bf16.msra.mxu0 %v2601
        %2623 = vmatprep.subr.bf16.mxu0 0
        %2624 = vmatpush1.bf16.msra.mxu0 %v2602
        %2625 = vmatprep.subr.bf16.mxu0 0
        %2626 = vmatpush1.bf16.msra.mxu0 %v2603
        %2627 = vmatprep.subr.bf16.mxu0 0
        %2628 = vmatpush1.bf16.msra.mxu0 %v2604
        %2629 = vmatprep.subr.bf16.mxu0 0
        %2630 = vmatpush1.bf16.msra.mxu0 0
        %2631 = vmatprep.subr.bf16.mxu0 0
        %2632 = vmatpush1.bf16.msra.mxu0 0
        %2633 = vmatprep.subr.bf16.mxu0 0
        %2634 = vmatpush1.bf16.msra.mxu0 0
        %2635 = vmatprep.subr.bf16.mxu0 0
        %2636 = vmatpush1.bf16.msra.mxu0 0
        %2637 = vmatprep.subr.bf16.mxu0 0
        %2638 = vmatpush1.bf16.msra.mxu0 0
        %2639 = vmatprep.subr.bf16.mxu0 0
        %2640 = vmatpush1.bf16.msra.mxu0 0
        %2641 = vmatprep.subr.bf16.mxu0 0
        %2642 = vmatpush1.bf16.msra.mxu0 0
        %2643 = vmatprep.subr.bf16.mxu0 0
        %2644 = vmatpush1.bf16.msra.mxu0 0
        %2645 = vmatprep.mubr.bf16.mxu0 0
        %2646 = vmatmul.mubr.bf16.gmra.mrb[0].mxu0 %v2542
        %v2647 = vpop.f32.mrb[0].mxu0
        %v2648 = vadd.f32 %v2564, %v2647
        %v2649 = vpop.f32.mrb[0].mxu0
        %v2650 = vpop.f32.mrb[0].mxu0
        %v2651 = vadd.f32 %v2564, %v2650
        %v2652 = vpop.f32.mrb[0].mxu0
        %2653 = vdwg.mxu0
        %v2654 = vmul.f32 %v2648, %v2648
        %v2655 = vmul.f32 %v2651, %v2651
        %v2656 = vmul.f32 %v2648, %v2654
        %v2657 = vmul.f32 %v2651, %v2655
        %v2658 = vmul.f32 %v2656, 0.044715
        %v2659 = vmul.f32 %v2657, 0.044715
        %v2660 = vadd.f32 %v2648, %v2658
        %v2661 = vadd.f32 %v2651, %v2659
        %v2662 = vmul.f32 %v2660, 0.7978846
        %v2663 = vmul.f32 %v2661, 0.7978846
        %v2664 = vtanh.pop %v2662
        %v2665 = vtanh.pop %v2663
        %v2666 = vadd.f32 %v2664, 1.0
        %v2667 = vadd.f32 %v2665, 1.0
        %v2668 = vmul.f32 %v2666, 0.5
        %v2669 = vmul.f32 %v2667, 0.5
        %v2670 = vmul.f32 %v2648, %v2668
        %v2671 = vmul.f32 %v2651, %v2669
        %v2672 = vld [vmem:[#allocation7 + $0x14] sm:$0x1]
        %v2673 = vpack.c.bf16 %v2671, %v2670
        %s2674 = scalar_lea.vmem [#allocation6], 768
        %v2675 = vld [vmem:[%s2674] sm:$0xf]
        %v2676 = vld [vmem:[%s2674 + $0x4] sm:$0xf]
        %v2677 = vld [vmem:[%s2674 + $0x8] sm:$0xf]
        %v2678 = vld [vmem:[%s2674 + $0xc] sm:$0xf]
        %v2679 = vld [vmem:[%s2674 + $0x10] sm:$0xf]
        %v2680 = vld [vmem:[%s2674 + $0x14] sm:$0xf]
        %v2681 = vld [vmem:[%s2674 + $0x18] sm:$0xf]
        %v2682 = vld [vmem:[%s2674 + $0x1c] sm:$0xf]
        %v2683 = vld [vmem:[%s2674 + $0x20] sm:$0xf]
        %v2684 = vld [vmem:[%s2674 + $0x24] sm:$0xf]
        %v2685 = vld [vmem:[%s2674 + $0x28] sm:$0xf]
        %v2686 = vld [vmem:[%s2674 + $0x2c] sm:$0xf]
        %v2687 = vld [vmem:[%s2674 + $0x30] sm:$0xf]
        %v2688 = vld [vmem:[%s2674 + $0x34] sm:$0xf]
        %v2689 = vld [vmem:[%s2674 + $0x38] sm:$0xf]
        %v2690 = vld [vmem:[%s2674 + $0x3c] sm:$0xf]
        %v2707 = vunpack.c.l.b16 %v2675
        %v2708 = vunpack.c.l.b16 %v2676
        %v2709 = vunpack.c.l.b16 %v2677
        %v2710 = vunpack.c.l.b16 %v2678
        %v2711 = vunpack.c.l.b16 %v2679
        %v2712 = vunpack.c.l.b16 %v2680
        %v2713 = vunpack.c.l.b16 %v2681
        %v2714 = vunpack.c.l.b16 %v2682
        %v2715 = vunpack.c.l.b16 %v2683
        %v2716 = vunpack.c.l.b16 %v2684
        %v2717 = vunpack.c.l.b16 %v2685
        %v2718 = vunpack.c.l.b16 %v2686
        %v2719 = vunpack.c.l.b16 %v2687
        %v2720 = vunpack.c.l.b16 %v2688
        %v2721 = vunpack.c.l.b16 %v2689
        %v2722 = vunpack.c.l.b16 %v2690
        %v2723 = vpack.c.b16 %v2708, %v2707
        %v2724 = vpack.c.b16 %v2710, %v2709
        %v2725 = vpack.c.b16 %v2712, %v2711
        %v2726 = vpack.c.b16 %v2714, %v2713
        %v2727 = vpack.c.b16 %v2716, %v2715
        %v2728 = vpack.c.b16 %v2718, %v2717
        %v2729 = vpack.c.b16 %v2720, %v2719
        %v2730 = vpack.c.b16 %v2722, %v2721
        %2739 = vmatprep.subr.bf16.mxu0 0
        %2740 = vmatpush1.bf16.msra.mxu0 %v2723
        %2741 = vmatprep.subr.bf16.mxu0 0
        %2742 = vmatpush1.bf16.msra.mxu0 %v2724
        %2743 = vmatprep.subr.bf16.mxu0 0
        %2744 = vmatpush1.bf16.msra.mxu0 %v2725
        %2745 = vmatprep.subr.bf16.mxu0 0
        %2746 = vmatpush1.bf16.msra.mxu0 %v2726
        %2747 = vmatprep.subr.bf16.mxu0 0
        %2748 = vmatpush1.bf16.msra.mxu0 %v2727
        %2749 = vmatprep.subr.bf16.mxu0 0
        %2750 = vmatpush1.bf16.msra.mxu0 %v2728
        %2751 = vmatprep.subr.bf16.mxu0 0
        %2752 = vmatpush1.bf16.msra.mxu0 %v2729
        %2753 = vmatprep.subr.bf16.mxu0 0
        %2754 = vmatpush1.bf16.msra.mxu0 %v2730
        %2755 = vmatprep.subr.bf16.mxu0 0
        %2756 = vmatpush1.bf16.msra.mxu0 0
        %2757 = vmatprep.subr.bf16.mxu0 0
        %2758 = vmatpush1.bf16.msra.mxu0 0
        %2759 = vmatprep.subr.bf16.mxu0 0
        %2760 = vmatpush1.bf16.msra.mxu0 0
        %2761 = vmatprep.subr.bf16.mxu0 0
        %2762 = vmatpush1.bf16.msra.mxu0 0
        %2763 = vmatprep.subr.bf16.mxu0 0
        %2764 = vmatpush1.bf16.msra.mxu0 0
        %2765 = vmatprep.subr.bf16.mxu0 0
        %2766 = vmatpush1.bf16.msra.mxu0 0
        %2767 = vmatprep.subr.bf16.mxu0 0
        %2768 = vmatpush1.bf16.msra.mxu0 0
        %2769 = vmatprep.subr.bf16.mxu0 0
        %2770 = vmatpush1.bf16.msra.mxu0 0
        %2771 = vmatprep.mubr.bf16.mxu0 0
        %2772 = vmatmul.mubr.bf16.gmra.mrb[0].mxu0 %v2673
        %v2773 = vpop.f32.mrb[0].mxu0
        %v2774 = vadd.f32 0.0, %v2773
        %v2775 = vpop.f32.mrb[0].mxu0
        %v2776 = vpop.f32.mrb[0].mxu0
        %v2777 = vadd.f32 0.0, %v2776
        %v2778 = vpop.f32.mrb[0].mxu0
        %2779 = vdwg.mxu0
        %v2780 = vlaneseq
        %v2781 = vshrl.u32 %v2780, 7
        %v2782 = vsub.s32 0, %v2781
        %v2783 = vrot.slane %v2672, %v2782
        %v2784 = vadd.f32 %v2783, %v2774
        %v2785 = vadd.f32 %v2783, %v2777
        %2786 = vadd.xlane.f32.xlu0 %v2784
        %v2787 = vpop.xlane.xlu0 %2786
        %2788 = vadd.xlane.f32.xlu0 %v2785
        %v2789 = vpop.xlane.xlu0 %2788
        %v2790 = vmul.f32 %v2787, 0.03125
        %v2791 = vmul.f32 %v2789, 0.03125
        %v2792 = vsub.f32 %v2784, %v2790
        %v2793 = vsub.f32 %v2785, %v2791
        %v2794 = vmul.f32 %v2792, %v449
        %v2795 = vmul.f32 %v2793, %v449
        %v2796 = vmul.f32 %v2794, %v2794
        %v2797 = vmul.f32 %v2795, %v2795
        %2798 = vadd.xlane.f32.xlu0 %v2796
        %v2799 = vpop.xlane.xlu0 %2798
        %2800 = vadd.xlane.f32.xlu0 %v2797
        %v2801 = vpop.xlane.xlu0 %2800
        %v2802 = vmul.f32 %v2799, 0.03125
        %v2803 = vmul.f32 %v2801, 0.03125
        %v2804 = vadd.f32 %v2802, 1e-05
        %v2805 = vadd.f32 %v2803, 1e-05
        %v2806 = vrsqrt.pop %v2804
        %v2807 = vrsqrt.pop %v2805
        %v2808 = vmul.f32 %v2794, %v2806
        %v2809 = vmul.f32 %v2795, %v2807
        %v2810 = vld [vmem:[#allocation7 + $0x15] sm:$0x1]
        %v2811 = vlaneseq
        %v2812 = vshrl.u32 %v2811, 7
        %v2813 = vsub.s32 0, %v2812
        %v2814 = vrot.slane %v2810, %v2813
        %v2815 = vmul.f32 %v2808, %v2814
        %v2816 = vmul.f32 %v2809, %v2814
        %v2817 = vld [vmem:[#allocation7 + $0x16] sm:$0x1]
        %v2818 = vlaneseq
        %v2819 = vshrl.u32 %v2818, 7
        %v2820 = vsub.s32 0, %v2819
        %v2821 = vrot.slane %v2817, %v2820
        %v2822 = vadd.f32 %v2815, %v2821
        %v2823 = vadd.f32 %v2816, %v2821
        %v2824 = vadd.f32 %v2540, %v2822
        %v2825 = vadd.f32 %v2541, %v2823
        %v2826 = vpack.c.bf16 %v2825, %v2824
        %v2827 = vld [vmem:[#allocation15] sm:$0xf]
        %v2828 = vpack.c.bf16 %v2827, %v2827
        %v2830 = vsel %vm940, %v2828, 0
        %2832 = vmatprep.subr.bf16.mxu0 0
        %2833 = vmatpush1.bf16.msra.mxu0 %v2826
        %2834 = vmatprep.subr.bf16.mxu0 0
        %2835 = vmatpush1.bf16.msra.mxu0 0
        %2836 = vmatprep.subr.bf16.mxu0 0
        %2837 = vmatpush1.bf16.msra.mxu0 0
        %2838 = vmatprep.subr.bf16.mxu0 0
        %2839 = vmatpush1.bf16.msra.mxu0 0
        %2840 = vmatprep.subr.bf16.mxu0 0
        %2841 = vmatpush1.bf16.msra.mxu0 0
        %2842 = vmatprep.subr.bf16.mxu0 0
        %2843 = vmatpush1.bf16.msra.mxu0 0
        %2844 = vmatprep.subr.bf16.mxu0 0
        %2845 = vmatpush1.bf16.msra.mxu0 0
        %2846 = vmatprep.subr.bf16.mxu0 0
        %2847 = vmatpush1.bf16.msra.mxu0 0
        %2848 = vmatprep.subr.bf16.mxu0 0
        %2849 = vmatpush1.bf16.msra.mxu0 0
        %2850 = vmatprep.subr.bf16.mxu0 0
        %2851 = vmatpush1.bf16.msra.mxu0 0
        %2852 = vmatprep.subr.bf16.mxu0 0
        %2853 = vmatpush1.bf16.msra.mxu0 0
        %2854 = vmatprep.subr.bf16.mxu0 0
        %2855 = vmatpush1.bf16.msra.mxu0 0
        %2856 = vmatprep.subr.bf16.mxu0 0
        %2857 = vmatpush1.bf16.msra.mxu0 0
        %2858 = vmatprep.subr.bf16.mxu0 0
        %2859 = vmatpush1.bf16.msra.mxu0 0
        %2860 = vmatprep.subr.bf16.mxu0 0
        %2861 = vmatpush1.bf16.msra.mxu0 0
        %2862 = vmatprep.subr.bf16.mxu0 0
        %2863 = vmatpush1.bf16.msra.mxu0 0
        %2864 = vmatprep.mubr.bf16.mxu0 0
        %2865 = vmatmul.mubr.bf16.gmra.mrb[0].mxu0 %v2830
        %v2866 = vpop.f32.mrb[0].mxu0
        %v2867 = vadd.f32 0.0, %v2866
        %v2868 = vpop.f32.mrb[0].mxu0
        %v2869 = vpop.f32.mrb[0].mxu0
        %v2870 = vpop.f32.mrb[0].mxu0
        %2871 = vdwg.mxu0
        %v2872 = vpack.c.bf16 %v2867, %v2867
        %s2873 = scalar_lea.vmem [#allocation6], 1856
        %v2874 = vld [vmem:[%s2873] sm:$0xf]
        %v2875 = vld [vmem:[%s2873 + $0x4] sm:$0xf]
        %v2876 = vld [vmem:[%s2873 + $0x8] sm:$0xf]
        %v2877 = vld [vmem:[%s2873 + $0xc] sm:$0xf]
        %v2878 = vld [vmem:[%s2873 + $0x10] sm:$0xf]
        %v2879 = vld [vmem:[%s2873 + $0x14] sm:$0xf]
        %v2880 = vld [vmem:[%s2873 + $0x18] sm:$0xf]
        %v2881 = vld [vmem:[%s2873 + $0x1c] sm:$0xf]
        %v2882 = vld [vmem:[%s2873 + $0x20] sm:$0xf]
        %v2883 = vld [vmem:[%s2873 + $0x24] sm:$0xf]
        %v2884 = vld [vmem:[%s2873 + $0x28] sm:$0xf]
        %v2885 = vld [vmem:[%s2873 + $0x2c] sm:$0xf]
        %v2886 = vld [vmem:[%s2873 + $0x30] sm:$0xf]
        %v2887 = vld [vmem:[%s2873 + $0x34] sm:$0xf]
        %v2888 = vld [vmem:[%s2873 + $0x38] sm:$0xf]
        %v2889 = vld [vmem:[%s2873 + $0x3c] sm:$0xf]
        %s2890 = scalar_lea.vmem [#allocation15], 4
        %v2891 = vld [vmem:[%s2890] sm:$0xf]
        %v2892 = vpack.c.bf16 %v2891, %v2891
        %v2894 = vsel %vm940, %v2892, 0
        %2896 = vmatprep.subr.bf16.mxu0 0
        %2897 = vmatpush1.bf16.msra.mxu0 %v2826
        %2898 = vmatprep.subr.bf16.mxu0 0
        %2899 = vmatpush1.bf16.msra.mxu0 0
        %2900 = vmatprep.subr.bf16.mxu0 0
        %2901 = vmatpush1.bf16.msra.mxu0 0
        %2902 = vmatprep.subr.bf16.mxu0 0
        %2903 = vmatpush1.bf16.msra.mxu0 0
        %2904 = vmatprep.subr.bf16.mxu0 0
        %2905 = vmatpush1.bf16.msra.mxu0 0
        %2906 = vmatprep.subr.bf16.mxu0 0
        %2907 = vmatpush1.bf16.msra.mxu0 0
        %2908 = vmatprep.subr.bf16.mxu0 0
        %2909 = vmatpush1.bf16.msra.mxu0 0
        %2910 = vmatprep.subr.bf16.mxu0 0
        %2911 = vmatpush1.bf16.msra.mxu0 0
        %2912 = vmatprep.subr.bf16.mxu0 0
        %2913 = vmatpush1.bf16.msra.mxu0 0
        %2914 = vmatprep.subr.bf16.mxu0 0
        %2915 = vmatpush1.bf16.msra.mxu0 0
        %2916 = vmatprep.subr.bf16.mxu0 0
        %2917 = vmatpush1.bf16.msra.mxu0 0
        %2918 = vmatprep.subr.bf16.mxu0 0
        %2919 = vmatpush1.bf16.msra.mxu0 0
        %2920 = vmatprep.subr.bf16.mxu0 0
        %2921 = vmatpush1.bf16.msra.mxu0 0
        %2922 = vmatprep.subr.bf16.mxu0 0
        %2923 = vmatpush1.bf16.msra.mxu0 0
        %2924 = vmatprep.subr.bf16.mxu0 0
        %2925 = vmatpush1.bf16.msra.mxu0 0
        %2926 = vmatprep.subr.bf16.mxu0 0
        %2927 = vmatpush1.bf16.msra.mxu0 0
        %2928 = vmatprep.mubr.bf16.mxu0 0
        %2929 = vmatmul.mubr.bf16.gmra.mrb[0].mxu0 %v2894
        %v2930 = vpop.f32.mrb[0].mxu0
        %v2931 = vadd.f32 0.0, %v2930
        %v2932 = vpop.f32.mrb[0].mxu0
        %v2933 = vpop.f32.mrb[0].mxu0
        %v2934 = vpop.f32.mrb[0].mxu0
        %2935 = vdwg.mxu0
        %v2936 = vpack.c.bf16 %v2931, %v2931
        %s2937 = scalar_lea.vmem [#allocation6], 1920
        %v2938 = vld [vmem:[%s2937] sm:$0xf]
        %v2939 = vld [vmem:[%s2937 + $0x4] sm:$0xf]
        %v2940 = vld [vmem:[%s2937 + $0x8] sm:$0xf]
        %v2941 = vld [vmem:[%s2937 + $0xc] sm:$0xf]
        %v2942 = vld [vmem:[%s2937 + $0x10] sm:$0xf]
        %v2943 = vld [vmem:[%s2937 + $0x14] sm:$0xf]
        %v2944 = vld [vmem:[%s2937 + $0x18] sm:$0xf]
        %v2945 = vld [vmem:[%s2937 + $0x1c] sm:$0xf]
        %v2946 = vld [vmem:[%s2937 + $0x20] sm:$0xf]
        %v2947 = vld [vmem:[%s2937 + $0x24] sm:$0xf]
        %v2948 = vld [vmem:[%s2937 + $0x28] sm:$0xf]
        %v2949 = vld [vmem:[%s2937 + $0x2c] sm:$0xf]
        %v2950 = vld [vmem:[%s2937 + $0x30] sm:$0xf]
        %v2951 = vld [vmem:[%s2937 + $0x34] sm:$0xf]
        %v2952 = vld [vmem:[%s2937 + $0x38] sm:$0xf]
        %v2953 = vld [vmem:[%s2937 + $0x3c] sm:$0xf]
        %v2970 = vunpack.c.l.b16 %v2938
        %v2971 = vunpack.c.l.b16 %v2939
        %v2972 = vunpack.c.l.b16 %v2940
        %v2973 = vunpack.c.l.b16 %v2941
        %v2974 = vunpack.c.l.b16 %v2942
        %v2975 = vunpack.c.l.b16 %v2943
        %v2976 = vunpack.c.l.b16 %v2944
        %v2977 = vunpack.c.l.b16 %v2945
        %v2978 = vunpack.c.l.b16 %v2946
        %v2979 = vunpack.c.l.b16 %v2947
        %v2980 = vunpack.c.l.b16 %v2948
        %v2981 = vunpack.c.l.b16 %v2949
        %v2982 = vunpack.c.l.b16 %v2950
        %v2983 = vunpack.c.l.b16 %v2951
        %v2984 = vunpack.c.l.b16 %v2952
        %v2985 = vunpack.c.l.b16 %v2953
        %v2986 = vpack.c.b16 %v2971, %v2970
        %v2987 = vpack.c.b16 %v2973, %v2972
        %v2988 = vpack.c.b16 %v2975, %v2974
        %v2989 = vpack.c.b16 %v2977, %v2976
        %v2990 = vpack.c.b16 %v2979, %v2978
        %v2991 = vpack.c.b16 %v2981, %v2980
        %v2992 = vpack.c.b16 %v2983, %v2982
        %v2993 = vpack.c.b16 %v2985, %v2984
        %3002 = vmatprep.subr.bf16.mxu0 0
        %3003 = vmatpush1.bf16.msra.mxu0 %v2986
        %3004 = vmatprep.subr.bf16.mxu0 0
        %3005 = vmatpush1.bf16.msra.mxu0 %v2987
        %3006 = vmatprep.subr.bf16.mxu0 0
        %3007 = vmatpush1.bf16.msra.mxu0 %v2988
        %3008 = vmatprep.subr.bf16.mxu0 0
        %3009 = vmatpush1.bf16.msra.mxu0 %v2989
        %3010 = vmatprep.subr.bf16.mxu0 0
        %3011 = vmatpush1.bf16.msra.mxu0 %v2990
        %3012 = vmatprep.subr.bf16.mxu0 0
        %3013 = vmatpush1.bf16.msra.mxu0 %v2991
        %3014 = vmatprep.subr.bf16.mxu0 0
        %3015 = vmatpush1.bf16.msra.mxu0 %v2992
        %3016 = vmatprep.subr.bf16.mxu0 0
        %3017 = vmatpush1.bf16.msra.mxu0 %v2993
        %3018 = vmatprep.subr.bf16.mxu0 0
        %3019 = vmatpush1.bf16.msra.mxu0 0
        %3020 = vmatprep.subr.bf16.mxu0 0
        %3021 = vmatpush1.bf16.msra.mxu0 0
        %3022 = vmatprep.subr.bf16.mxu0 0
        %3023 = vmatpush1.bf16.msra.mxu0 0
        %3024 = vmatprep.subr.bf16.mxu0 0
        %3025 = vmatpush1.bf16.msra.mxu0 0
        %3026 = vmatprep.subr.bf16.mxu0 0
        %3027 = vmatpush1.bf16.msra.mxu0 0
        %3028 = vmatprep.subr.bf16.mxu0 0
        %3029 = vmatpush1.bf16.msra.mxu0 0
        %3030 = vmatprep.subr.bf16.mxu0 0
        %3031 = vmatpush1.bf16.msra.mxu0 0
        %3032 = vmatprep.subr.bf16.mxu0 0
        %3033 = vmatpush1.bf16.msra.mxu0 0
        %3034 = vmatprep.mubr.bf16.mxu0 0
        %3035 = vmatmul.mubr.bf16.gmra.mrb[0].mxu0 %v2936
        %v3036 = vpop.f32.mrb[0].mxu0
        %v3037 = vadd.f32 0.0, %v3036
        %v3038 = vpop.f32.mrb[0].mxu0
        %v3039 = vpop.f32.mrb[0].mxu0
        %v3040 = vpop.f32.mrb[0].mxu0
        %3041 = vdwg.mxu0
        %v3058 = vunpack.c.l.b16 %v2874
        %v3059 = vunpack.c.l.b16 %v2875
        %v3060 = vunpack.c.l.b16 %v2876
        %v3061 = vunpack.c.l.b16 %v2877
        %v3062 = vunpack.c.l.b16 %v2878
        %v3063 = vunpack.c.l.b16 %v2879
        %v3064 = vunpack.c.l.b16 %v2880
        %v3065 = vunpack.c.l.b16 %v2881
        %v3066 = vunpack.c.l.b16 %v2882
        %v3067 = vunpack.c.l.b16 %v2883
        %v3068 = vunpack.c.l.b16 %v2884
        %v3069 = vunpack.c.l.b16 %v2885
        %v3070 = vunpack.c.l.b16 %v2886
        %v3071 = vunpack.c.l.b16 %v2887
        %v3072 = vunpack.c.l.b16 %v2888
        %v3073 = vunpack.c.l.b16 %v2889
        %v3074 = vpack.c.b16 %v3059, %v3058
        %v3075 = vpack.c.b16 %v3061, %v3060
        %v3076 = vpack.c.b16 %v3063, %v3062
        %v3077 = vpack.c.b16 %v3065, %v3064
        %v3078 = vpack.c.b16 %v3067, %v3066
        %v3079 = vpack.c.b16 %v3069, %v3068
        %v3080 = vpack.c.b16 %v3071, %v3070
        %v3081 = vpack.c.b16 %v3073, %v3072
        %3090 = vmatprep.subr.bf16.mxu0 0
        %3091 = vmatpush1.bf16.msra.mxu0 %v3074
        %3092 = vmatprep.subr.bf16.mxu0 0
        %3093 = vmatpush1.bf16.msra.mxu0 %v3075
        %3094 = vmatprep.subr.bf16.mxu0 0
        %3095 = vmatpush1.bf16.msra.mxu0 %v3076
        %3096 = vmatprep.subr.bf16.mxu0 0
        %3097 = vmatpush1.bf16.msra.mxu0 %v3077
        %3098 = vmatprep.subr.bf16.mxu0 0
        %3099 = vmatpush1.bf16.msra.mxu0 %v3078
        %3100 = vmatprep.subr.bf16.mxu0 0
        %3101 = vmatpush1.bf16.msra.mxu0 %v3079
        %3102 = vmatprep.subr.bf16.mxu0 0
        %3103 = vmatpush1.bf16.msra.mxu0 %v3080
        %3104 = vmatprep.subr.bf16.mxu0 0
        %3105 = vmatpush1.bf16.msra.mxu0 %v3081
        %3106 = vmatprep.subr.bf16.mxu0 0
        %3107 = vmatpush1.bf16.msra.mxu0 0
        %3108 = vmatprep.subr.bf16.mxu0 0
        %3109 = vmatpush1.bf16.msra.mxu0 0
        %3110 = vmatprep.subr.bf16.mxu0 0
        %3111 = vmatpush1.bf16.msra.mxu0 0
        %3112 = vmatprep.subr.bf16.mxu0 0
        %3113 = vmatpush1.bf16.msra.mxu0 0
        %3114 = vmatprep.subr.bf16.mxu0 0
        %3115 = vmatpush1.bf16.msra.mxu0 0
        %3116 = vmatprep.subr.bf16.mxu0 0
        %3117 = vmatpush1.bf16.msra.mxu0 0
        %3118 = vmatprep.subr.bf16.mxu0 0
        %3119 = vmatpush1.bf16.msra.mxu0 0
        %3120 = vmatprep.subr.bf16.mxu0 0
        %3121 = vmatpush1.bf16.msra.mxu0 0
        %3122 = vmatprep.mubr.bf16.mxu0 0
        %3123 = vmatmul.mubr.bf16.gmra.mrb[0].mxu0 %v2872
        %v3124 = vpop.f32.mrb[0].mxu0
        %v3125 = vadd.f32 %v3037, %v3124
        %v3126 = vpop.f32.mrb[0].mxu0
        %v3127 = vpop.f32.mrb[0].mxu0
        %v3128 = vpop.f32.mrb[0].mxu0
        %3129 = vdwg.mxu0
        %s3130 = scalar_lea.vmem [#allocation15], 8
        %v3131 = vld [vmem:[%s3130] sm:$0xf]
        %v3132 = vpack.c.bf16 %v3131, %v3131
        %v3134 = vsel %vm940, %v3132, 0
        %3136 = vmatprep.subr.bf16.mxu0 0
        %3137 = vmatpush1.bf16.msra.mxu0 %v2826
        %3138 = vmatprep.subr.bf16.mxu0 0
        %3139 = vmatpush1.bf16.msra.mxu0 0
        %3140 = vmatprep.subr.bf16.mxu0 0
        %3141 = vmatpush1.bf16.msra.mxu0 0
        %3142 = vmatprep.subr.bf16.mxu0 0
        %3143 = vmatpush1.bf16.msra.mxu0 0
        %3144 = vmatprep.subr.bf16.mxu0 0
        %3145 = vmatpush1.bf16.msra.mxu0 0
        %3146 = vmatprep.subr.bf16.mxu0 0
        %3147 = vmatpush1.bf16.msra.mxu0 0
        %3148 = vmatprep.subr.bf16.mxu0 0
        %3149 = vmatpush1.bf16.msra.mxu0 0
        %3150 = vmatprep.subr.bf16.mxu0 0
        %3151 = vmatpush1.bf16.msra.mxu0 0
        %3152 = vmatprep.subr.bf16.mxu0 0
        %3153 = vmatpush1.bf16.msra.mxu0 0
        %3154 = vmatprep.subr.bf16.mxu0 0
        %3155 = vmatpush1.bf16.msra.mxu0 0
        %3156 = vmatprep.subr.bf16.mxu0 0
        %3157 = vmatpush1.bf16.msra.mxu0 0
        %3158 = vmatprep.subr.bf16.mxu0 0
        %3159 = vmatpush1.bf16.msra.mxu0 0
        %3160 = vmatprep.subr.bf16.mxu0 0
        %3161 = vmatpush1.bf16.msra.mxu0 0
        %3162 = vmatprep.subr.bf16.mxu0 0
        %3163 = vmatpush1.bf16.msra.mxu0 0
        %3164 = vmatprep.subr.bf16.mxu0 0
        %3165 = vmatpush1.bf16.msra.mxu0 0
        %3166 = vmatprep.subr.bf16.mxu0 0
        %3167 = vmatpush1.bf16.msra.mxu0 0
        %3168 = vmatprep.mubr.bf16.mxu0 0
        %3169 = vmatmul.mubr.bf16.gmra.mrb[0].mxu0 %v3134
        %v3170 = vpop.f32.mrb[0].mxu0
        %v3171 = vadd.f32 0.0, %v3170
        %v3172 = vpop.f32.mrb[0].mxu0
        %v3173 = vpop.f32.mrb[0].mxu0
        %v3174 = vpop.f32.mrb[0].mxu0
        %3175 = vdwg.mxu0
        %v3176 = vpack.c.bf16 %v3171, %v3171
        %s3177 = scalar_lea.vmem [#allocation6], 1984
        %v3178 = vld [vmem:[%s3177] sm:$0xf]
        %v3179 = vld [vmem:[%s3177 + $0x4] sm:$0xf]
        %v3180 = vld [vmem:[%s3177 + $0x8] sm:$0xf]
        %v3181 = vld [vmem:[%s3177 + $0xc] sm:$0xf]
        %v3182 = vld [vmem:[%s3177 + $0x10] sm:$0xf]
        %v3183 = vld [vmem:[%s3177 + $0x14] sm:$0xf]
        %v3184 = vld [vmem:[%s3177 + $0x18] sm:$0xf]
        %v3185 = vld [vmem:[%s3177 + $0x1c] sm:$0xf]
        %v3186 = vld [vmem:[%s3177 + $0x20] sm:$0xf]
        %v3187 = vld [vmem:[%s3177 + $0x24] sm:$0xf]
        %v3188 = vld [vmem:[%s3177 + $0x28] sm:$0xf]
        %v3189 = vld [vmem:[%s3177 + $0x2c] sm:$0xf]
        %v3190 = vld [vmem:[%s3177 + $0x30] sm:$0xf]
        %v3191 = vld [vmem:[%s3177 + $0x34] sm:$0xf]
        %v3192 = vld [vmem:[%s3177 + $0x38] sm:$0xf]
        %v3193 = vld [vmem:[%s3177 + $0x3c] sm:$0xf]
        %v3210 = vunpack.c.l.b16 %v3178
        %v3211 = vunpack.c.l.b16 %v3179
        %v3212 = vunpack.c.l.b16 %v3180
        %v3213 = vunpack.c.l.b16 %v3181
        %v3214 = vunpack.c.l.b16 %v3182
        %v3215 = vunpack.c.l.b16 %v3183
        %v3216 = vunpack.c.l.b16 %v3184
        %v3217 = vunpack.c.l.b16 %v3185
        %v3218 = vunpack.c.l.b16 %v3186
        %v3219 = vunpack.c.l.b16 %v3187
        %v3220 = vunpack.c.l.b16 %v3188
        %v3221 = vunpack.c.l.b16 %v3189
        %v3222 = vunpack.c.l.b16 %v3190
        %v3223 = vunpack.c.l.b16 %v3191
        %v3224 = vunpack.c.l.b16 %v3192
        %v3225 = vunpack.c.l.b16 %v3193
        %v3226 = vpack.c.b16 %v3211, %v3210
        %v3227 = vpack.c.b16 %v3213, %v3212
        %v3228 = vpack.c.b16 %v3215, %v3214
        %v3229 = vpack.c.b16 %v3217, %v3216
        %v3230 = vpack.c.b16 %v3219, %v3218
        %v3231 = vpack.c.b16 %v3221, %v3220
        %v3232 = vpack.c.b16 %v3223, %v3222
        %v3233 = vpack.c.b16 %v3225, %v3224
        %3242 = vmatprep.subr.bf16.mxu0 0
        %3243 = vmatpush1.bf16.msra.mxu0 %v3226
        %3244 = vmatprep.subr.bf16.mxu0 0
        %3245 = vmatpush1.bf16.msra.mxu0 %v3227
        %3246 = vmatprep.subr.bf16.mxu0 0
        %3247 = vmatpush1.bf16.msra.mxu0 %v3228
        %3248 = vmatprep.subr.bf16.mxu0 0
        %3249 = vmatpush1.bf16.msra.mxu0 %v3229
        %3250 = vmatprep.subr.bf16.mxu0 0
        %3251 = vmatpush1.bf16.msra.mxu0 %v3230
        %3252 = vmatprep.subr.bf16.mxu0 0
        %3253 = vmatpush1.bf16.msra.mxu0 %v3231
        %3254 = vmatprep.subr.bf16.mxu0 0
        %3255 = vmatpush1.bf16.msra.mxu0 %v3232
        %3256 = vmatprep.subr.bf16.mxu0 0
        %3257 = vmatpush1.bf16.msra.mxu0 %v3233
        %3258 = vmatprep.subr.bf16.mxu0 0
        %3259 = vmatpush1.bf16.msra.mxu0 0
        %3260 = vmatprep.subr.bf16.mxu0 0
        %3261 = vmatpush1.bf16.msra.mxu0 0
        %3262 = vmatprep.subr.bf16.mxu0 0
        %3263 = vmatpush1.bf16.msra.mxu0 0
        %3264 = vmatprep.subr.bf16.mxu0 0
        %3265 = vmatpush1.bf16.msra.mxu0 0
        %3266 = vmatprep.subr.bf16.mxu0 0
        %3267 = vmatpush1.bf16.msra.mxu0 0
        %3268 = vmatprep.subr.bf16.mxu0 0
        %3269 = vmatpush1.bf16.msra.mxu0 0
        %3270 = vmatprep.subr.bf16.mxu0 0
        %3271 = vmatpush1.bf16.msra.mxu0 0
        %3272 = vmatprep.subr.bf16.mxu0 0
        %3273 = vmatpush1.bf16.msra.mxu0 0
        %3274 = vmatprep.mubr.bf16.mxu0 0
        %3275 = vmatmul.mubr.bf16.gmra.mrb[0].mxu0 %v3176
        %v3276 = vpop.f32.mrb[0].mxu0
        %v3277 = vadd.f32 0.0, %v3276
        %v3278 = vpop.f32.mrb[0].mxu0
        %v3279 = vpop.f32.mrb[0].mxu0
        %v3280 = vpop.f32.mrb[0].mxu0
        %3281 = vdwg.mxu0
        %v3282 = vadd.f32 %v3125, %v3277
        %s3283 = scalar_lea.vmem [#allocation15], 12
        %v3284 = vld [vmem:[%s3283] sm:$0xf]
        %v3285 = vpack.c.bf16 %v3284, %v3284
        %v3287 = vsel %vm940, %v3285, 0
        %3289 = vmatprep.subr.bf16.mxu0 0
        %3290 = vmatpush1.bf16.msra.mxu0 %v2826
        %3291 = vmatprep.subr.bf16.mxu0 0
        %3292 = vmatpush1.bf16.msra.mxu0 0
        %3293 = vmatprep.subr.bf16.mxu0 0
        %3294 = vmatpush1.bf16.msra.mxu0 0
        %3295 = vmatprep.subr.bf16.mxu0 0
        %3296 = vmatpush1.bf16.msra.mxu0 0
        %3297 = vmatprep.subr.bf16.mxu0 0
        %3298 = vmatpush1.bf16.msra.mxu0 0
        %3299 = vmatprep.subr.bf16.mxu0 0
        %3300 = vmatpush1.bf16.msra.mxu0 0
        %3301 = vmatprep.subr.bf16.mxu0 0
        %3302 = vmatpush1.bf16.msra.mxu0 0
        %3303 = vmatprep.subr.bf16.mxu0 0
        %3304 = vmatpush1.bf16.msra.mxu0 0
        %3305 = vmatprep.subr.bf16.mxu0 0
        %3306 = vmatpush1.bf16.msra.mxu0 0
        %3307 = vmatprep.subr.bf16.mxu0 0
        %3308 = vmatpush1.bf16.msra.mxu0 0
        %3309 = vmatprep.subr.bf16.mxu0 0
        %3310 = vmatpush1.bf16.msra.mxu0 0
        %3311 = vmatprep.subr.bf16.mxu0 0
        %3312 = vmatpush1.bf16.msra.mxu0 0
        %3313 = vmatprep.subr.bf16.mxu0 0
        %3314 = vmatpush1.bf16.msra.mxu0 0
        %3315 = vmatprep.subr.bf16.mxu0 0
        %3316 = vmatpush1.bf16.msra.mxu0 0
        %3317 = vmatprep.subr.bf16.mxu0 0
        %3318 = vmatpush1.bf16.msra.mxu0 0
        %3319 = vmatprep.subr.bf16.mxu0 0
        %3320 = vmatpush1.bf16.msra.mxu0 0
        %3321 = vmatprep.mubr.bf16.mxu0 0
        %3322 = vmatmul.mubr.bf16.gmra.mrb[0].mxu0 %v3287
        %v3323 = vpop.f32.mrb[0].mxu0
        %v3324 = vadd.f32 0.0, %v3323
        %v3325 = vpop.f32.mrb[0].mxu0
        %v3326 = vpop.f32.mrb[0].mxu0
        %v3327 = vpop.f32.mrb[0].mxu0
        %3328 = vdwg.mxu0
        %v3329 = vpack.c.bf16 %v3324, %v3324
        %s3330 = scalar_lea.vmem [#allocation6], 2048
        %v3331 = vld [vmem:[%s3330] sm:$0xf]
        %v3332 = vld [vmem:[%s3330 + $0x4] sm:$0xf]
        %v3333 = vld [vmem:[%s3330 + $0x8] sm:$0xf]
        %v3334 = vld [vmem:[%s3330 + $0xc] sm:$0xf]
        %v3335 = vld [vmem:[%s3330 + $0x10] sm:$0xf]
        %v3336 = vld [vmem:[%s3330 + $0x14] sm:$0xf]
        %v3337 = vld [vmem:[%s3330 + $0x18] sm:$0xf]
        %v3338 = vld [vmem:[%s3330 + $0x1c] sm:$0xf]
        %v3339 = vld [vmem:[%s3330 + $0x20] sm:$0xf]
        %v3340 = vld [vmem:[%s3330 + $0x24] sm:$0xf]
        %v3341 = vld [vmem:[%s3330 + $0x28] sm:$0xf]
        %v3342 = vld [vmem:[%s3330 + $0x2c] sm:$0xf]
        %v3343 = vld [vmem:[%s3330 + $0x30] sm:$0xf]
        %v3344 = vld [vmem:[%s3330 + $0x34] sm:$0xf]
        %v3345 = vld [vmem:[%s3330 + $0x38] sm:$0xf]
        %v3346 = vld [vmem:[%s3330 + $0x3c] sm:$0xf]
        %v3363 = vunpack.c.l.b16 %v3331
        %v3364 = vunpack.c.l.b16 %v3332
        %v3365 = vunpack.c.l.b16 %v3333
        %v3366 = vunpack.c.l.b16 %v3334
        %v3367 = vunpack.c.l.b16 %v3335
        %v3368 = vunpack.c.l.b16 %v3336
        %v3369 = vunpack.c.l.b16 %v3337
        %v3370 = vunpack.c.l.b16 %v3338
        %v3371 = vunpack.c.l.b16 %v3339
        %v3372 = vunpack.c.l.b16 %v3340
        %v3373 = vunpack.c.l.b16 %v3341
        %v3374 = vunpack.c.l.b16 %v3342
        %v3375 = vunpack.c.l.b16 %v3343
        %v3376 = vunpack.c.l.b16 %v3344
        %v3377 = vunpack.c.l.b16 %v3345
        %v3378 = vunpack.c.l.b16 %v3346
        %v3379 = vpack.c.b16 %v3364, %v3363
        %v3380 = vpack.c.b16 %v3366, %v3365
        %v3381 = vpack.c.b16 %v3368, %v3367
        %v3382 = vpack.c.b16 %v3370, %v3369
        %v3383 = vpack.c.b16 %v3372, %v3371
        %v3384 = vpack.c.b16 %v3374, %v3373
        %v3385 = vpack.c.b16 %v3376, %v3375
        %v3386 = vpack.c.b16 %v3378, %v3377
        %3395 = vmatprep.subr.bf16.mxu0 0
        %3396 = vmatpush1.bf16.msra.mxu0 %v3379
        %3397 = vmatprep.subr.bf16.mxu0 0
        %3398 = vmatpush1.bf16.msra.mxu0 %v3380
        %3399 = vmatprep.subr.bf16.mxu0 0
        %3400 = vmatpush1.bf16.msra.mxu0 %v3381
        %3401 = vmatprep.subr.bf16.mxu0 0
        %3402 = vmatpush1.bf16.msra.mxu0 %v3382
        %3403 = vmatprep.subr.bf16.mxu0 0
        %3404 = vmatpush1.bf16.msra.mxu0 %v3383
        %3405 = vmatprep.subr.bf16.mxu0 0
        %3406 = vmatpush1.bf16.msra.mxu0 %v3384
        %3407 = vmatprep.subr.bf16.mxu0 0
        %3408 = vmatpush1.bf16.msra.mxu0 %v3385
        %3409 = vmatprep.subr.bf16.mxu0 0
        %3410 = vmatpush1.bf16.msra.mxu0 %v3386
        %3411 = vmatprep.subr.bf16.mxu0 0
        %3412 = vmatpush1.bf16.msra.mxu0 0
        %3413 = vmatprep.subr.bf16.mxu0 0
        %3414 = vmatpush1.bf16.msra.mxu0 0
        %3415 = vmatprep.subr.bf16.mxu0 0
        %3416 = vmatpush1.bf16.msra.mxu0 0
        %3417 = vmatprep.subr.bf16.mxu0 0
        %3418 = vmatpush1.bf16.msra.mxu0 0
        %3419 = vmatprep.subr.bf16.mxu0 0
        %3420 = vmatpush1.bf16.msra.mxu0 0
        %3421 = vmatprep.subr.bf16.mxu0 0
        %3422 = vmatpush1.bf16.msra.mxu0 0
        %3423 = vmatprep.subr.bf16.mxu0 0
        %3424 = vmatpush1.bf16.msra.mxu0 0
        %3425 = vmatprep.subr.bf16.mxu0 0
        %3426 = vmatpush1.bf16.msra.mxu0 0
        %3427 = vmatprep.mubr.bf16.mxu0 0
        %3428 = vmatmul.mubr.bf16.gmra.mrb[0].mxu0 %v3329
        %v3429 = vpop.f32.mrb[0].mxu0
        %v3430 = vadd.f32 0.0, %v3429
        %v3431 = vpop.f32.mrb[0].mxu0
        %v3432 = vpop.f32.mrb[0].mxu0
        %v3433 = vpop.f32.mrb[0].mxu0
        %3434 = vdwg.mxu0
        %v3435 = vadd.f32 %v3282, %v3430
        %vm3436 = vcmask 1043456
        %v3437 = vsel %vm3436, %v3435, 0.0
        %3438 = vadd.xlane.f32.xlu0 %v3437
        %v3439 = vpop.xlane.xlu0 %3438
        %v3440 = vmul.f32 %v3439, 0.015625
        %v3441 = vsub.f32 %v3435, %v3440
        %v3442 = vmul.f32 %v3441, %v452
        %v3443 = vmul.f32 %v3442, %v3442
        %v3444 = vsel %vm3436, %v3443, 0.0
        %3445 = vadd.xlane.f32.xlu0 %v3444
        %v3446 = vpop.xlane.xlu0 %3445
        %v3447 = vmul.f32 %v3446, 0.015625
        %v3448 = vadd.f32 %v3447, 1e-05
        %v3449 = vrsqrt.pop %v3448
        %v3450 = vmul.f32 %v3442, %v3449
        %v3451 = vld [vmem:[#allocation7 + $0x2d] sm:$0x1]
        %v3452 = vlaneseq
        %v3453 = vshrl.u32 %v3452, 7
        %v3454 = vsub.s32 0, %v3453
        %v3455 = vrot.slane %v3451, %v3454
        %v3456 = vmul.f32 %v3450, %v3455
        %v3457 = vld [vmem:[#allocation7 + $0x2e] sm:$0x1]
        %v3458 = vlaneseq
        %v3459 = vshrl.u32 %v3458, 7
        %v3460 = vsub.s32 0, %v3459
        %v3461 = vrot.slane %v3457, %v3460
        %v3462 = vadd.f32 %v3456, %v3461
        %v3463 = vpack.c.bf16 %v3462, %v3462
        %s3464 = scalar_lea.vmem [#allocation6], 832
        %v3465 = vld [vmem:[%s3464] sm:$0xf]
        %v3466 = vld [vmem:[%s3464 + $0x4] sm:$0xf]
        %v3467 = vld [vmem:[%s3464 + $0x8] sm:$0xf]
        %v3468 = vld [vmem:[%s3464 + $0xc] sm:$0xf]
        %v3469 = vld [vmem:[%s3464 + $0x10] sm:$0xf]
        %v3470 = vld [vmem:[%s3464 + $0x14] sm:$0xf]
        %v3471 = vld [vmem:[%s3464 + $0x18] sm:$0xf]
        %v3472 = vld [vmem:[%s3464 + $0x1c] sm:$0xf]
        %v3473 = vld [vmem:[%s3464 + $0x20] sm:$0xf]
        %v3474 = vld [vmem:[%s3464 + $0x24] sm:$0xf]
        %v3475 = vld [vmem:[%s3464 + $0x28] sm:$0xf]
        %v3476 = vld [vmem:[%s3464 + $0x2c] sm:$0xf]
        %v3477 = vld [vmem:[%s3464 + $0x30] sm:$0xf]
        %v3478 = vld [vmem:[%s3464 + $0x34] sm:$0xf]
        %v3479 = vld [vmem:[%s3464 + $0x38] sm:$0xf]
        %v3480 = vld [vmem:[%s3464 + $0x3c] sm:$0xf]
        %v3481 = vld [vmem:[#allocation7 + $0x17] sm:$0x1]
        %v3482 = vlaneseq
        %v3483 = vshrl.u32 %v3482, 7
        %v3484 = vsub.s32 0, %v3483
        %v3485 = vrot.slane %v3481, %v3484
        %v3502 = vunpack.c.l.b16 %v3465
        %v3503 = vunpack.c.l.b16 %v3466
        %v3504 = vunpack.c.l.b16 %v3467
        %v3505 = vunpack.c.l.b16 %v3468
        %v3506 = vunpack.c.l.b16 %v3469
        %v3507 = vunpack.c.l.b16 %v3470
        %v3508 = vunpack.c.l.b16 %v3471
        %v3509 = vunpack.c.l.b16 %v3472
        %v3510 = vunpack.c.l.b16 %v3473
        %v3511 = vunpack.c.l.b16 %v3474
        %v3512 = vunpack.c.l.b16 %v3475
        %v3513 = vunpack.c.l.b16 %v3476
        %v3514 = vunpack.c.l.b16 %v3477
        %v3515 = vunpack.c.l.b16 %v3478
        %v3516 = vunpack.c.l.b16 %v3479
        %v3517 = vunpack.c.l.b16 %v3480
        %v3518 = vpack.c.b16 %v3503, %v3502
        %v3519 = vpack.c.b16 %v3505, %v3504
        %v3520 = vpack.c.b16 %v3507, %v3506
        %v3521 = vpack.c.b16 %v3509, %v3508
        %v3522 = vpack.c.b16 %v3511, %v3510
        %v3523 = vpack.c.b16 %v3513, %v3512
        %v3524 = vpack.c.b16 %v3515, %v3514
        %v3525 = vpack.c.b16 %v3517, %v3516
        %3534 = vmatprep.subr.bf16.mxu0 0
        %3535 = vmatpush1.bf16.msra.mxu0 %v3518
        %3536 = vmatprep.subr.bf16.mxu0 0
        %3537 = vmatpush1.bf16.msra.mxu0 %v3519
        %3538 = vmatprep.subr.bf16.mxu0 0
        %3539 = vmatpush1.bf16.msra.mxu0 %v3520
        %3540 = vmatprep.subr.bf16.mxu0 0
        %3541 = vmatpush1.bf16.msra.mxu0 %v3521
        %3542 = vmatprep.subr.bf16.mxu0 0
        %3543 = vmatpush1.bf16.msra.mxu0 %v3522
        %3544 = vmatprep.subr.bf16.mxu0 0
        %3545 = vmatpush1.bf16.msra.mxu0 %v3523
        %3546 = vmatprep.subr.bf16.mxu0 0
        %3547 = vmatpush1.bf16.msra.mxu0 %v3524
        %3548 = vmatprep.subr.bf16.mxu0 0
        %3549 = vmatpush1.bf16.msra.mxu0 %v3525
        %3550 = vmatprep.subr.bf16.mxu0 0
        %3551 = vmatpush1.bf16.msra.mxu0 0
        %3552 = vmatprep.subr.bf16.mxu0 0
        %3553 = vmatpush1.bf16.msra.mxu0 0
        %3554 = vmatprep.subr.bf16.mxu0 0
        %3555 = vmatpush1.bf16.msra.mxu0 0
        %3556 = vmatprep.subr.bf16.mxu0 0
        %3557 = vmatpush1.bf16.msra.mxu0 0
        %3558 = vmatprep.subr.bf16.mxu0 0
        %3559 = vmatpush1.bf16.msra.mxu0 0
        %3560 = vmatprep.subr.bf16.mxu0 0
        %3561 = vmatpush1.bf16.msra.mxu0 0
        %3562 = vmatprep.subr.bf16.mxu0 0
        %3563 = vmatpush1.bf16.msra.mxu0 0
        %3564 = vmatprep.subr.bf16.mxu0 0
        %3565 = vmatpush1.bf16.msra.mxu0 0
        %3566 = vmatprep.mubr.bf16.mxu0 0
        %3567 = vmatmul.mubr.bf16.gmra.mrb[0].mxu0 %v3463
        %v3568 = vpop.f32.mrb[0].mxu0
        %v3569 = vadd.f32 %v3485, %v3568
        %v3570 = vpop.f32.mrb[0].mxu0
        %v3571 = vpop.f32.mrb[0].mxu0
        %v3572 = vpop.f32.mrb[0].mxu0
        %3573 = vdwg.mxu0
        %s3574 = scalar_lea.vmem [#allocation6], 896
        %v3575 = vld [vmem:[%s3574] sm:$0xf]
        %v3576 = vld [vmem:[%s3574 + $0x4] sm:$0xf]
        %v3577 = vld [vmem:[%s3574 + $0x8] sm:$0xf]
        %v3578 = vld [vmem:[%s3574 + $0xc] sm:$0xf]
        %v3579 = vld [vmem:[%s3574 + $0x10] sm:$0xf]
        %v3580 = vld [vmem:[%s3574 + $0x14] sm:$0xf]
        %v3581 = vld [vmem:[%s3574 + $0x18] sm:$0xf]
        %v3582 = vld [vmem:[%s3574 + $0x1c] sm:$0xf]
        %v3583 = vld [vmem:[%s3574 + $0x20] sm:$0xf]
        %v3584 = vld [vmem:[%s3574 + $0x24] sm:$0xf]
        %v3585 = vld [vmem:[%s3574 + $0x28] sm:$0xf]
        %v3586 = vld [vmem:[%s3574 + $0x2c] sm:$0xf]
        %v3587 = vld [vmem:[%s3574 + $0x30] sm:$0xf]
        %v3588 = vld [vmem:[%s3574 + $0x34] sm:$0xf]
        %v3589 = vld [vmem:[%s3574 + $0x38] sm:$0xf]
        %v3590 = vld [vmem:[%s3574 + $0x3c] sm:$0xf]
        %v3591 = vld [vmem:[#allocation7 + $0x18] sm:$0x1]
        %v3592 = vlaneseq
        %v3593 = vshrl.u32 %v3592, 7
        %v3594 = vsub.s32 0, %v3593
        %v3595 = vrot.slane %v3591, %v3594
        %v3612 = vunpack.c.l.b16 %v3575
        %v3613 = vunpack.c.l.b16 %v3576
        %v3614 = vunpack.c.l.b16 %v3577
        %v3615 = vunpack.c.l.b16 %v3578
        %v3616 = vunpack.c.l.b16 %v3579
        %v3617 = vunpack.c.l.b16 %v3580
        %v3618 = vunpack.c.l.b16 %v3581
        %v3619 = vunpack.c.l.b16 %v3582
        %v3620 = vunpack.c.l.b16 %v3583
        %v3621 = vunpack.c.l.b16 %v3584
        %v3622 = vunpack.c.l.b16 %v3585
        %v3623 = vunpack.c.l.b16 %v3586
        %v3624 = vunpack.c.l.b16 %v3587
        %v3625 = vunpack.c.l.b16 %v3588
        %v3626 = vunpack.c.l.b16 %v3589
        %v3627 = vunpack.c.l.b16 %v3590
        %v3628 = vpack.c.b16 %v3613, %v3612
        %v3629 = vpack.c.b16 %v3615, %v3614
        %v3630 = vpack.c.b16 %v3617, %v3616
        %v3631 = vpack.c.b16 %v3619, %v3618
        %v3632 = vpack.c.b16 %v3621, %v3620
        %v3633 = vpack.c.b16 %v3623, %v3622
        %v3634 = vpack.c.b16 %v3625, %v3624
        %v3635 = vpack.c.b16 %v3627, %v3626
        %3644 = vmatprep.subr.bf16.mxu0 0
        %3645 = vmatpush1.bf16.msra.mxu0 %v3628
        %3646 = vmatprep.subr.bf16.mxu0 0
        %3647 = vmatpush1.bf16.msra.mxu0 %v3629
        %3648 = vmatprep.subr.bf16.mxu0 0
        %3649 = vmatpush1.bf16.msra.mxu0 %v3630
        %3650 = vmatprep.subr.bf16.mxu0 0
        %3651 = vmatpush1.bf16.msra.mxu0 %v3631
        %3652 = vmatprep.subr.bf16.mxu0 0
        %3653 = vmatpush1.bf16.msra.mxu0 %v3632
        %3654 = vmatprep.subr.bf16.mxu0 0
        %3655 = vmatpush1.bf16.msra.mxu0 %v3633
        %3656 = vmatprep.subr.bf16.mxu0 0
        %3657 = vmatpush1.bf16.msra.mxu0 %v3634
        %3658 = vmatprep.subr.bf16.mxu0 0
        %3659 = vmatpush1.bf16.msra.mxu0 %v3635
        %3660 = vmatprep.subr.bf16.mxu0 0
        %3661 = vmatpush1.bf16.msra.mxu0 0
        %3662 = vmatprep.subr.bf16.mxu0 0
        %3663 = vmatpush1.bf16.msra.mxu0 0
        %3664 = vmatprep.subr.bf16.mxu0 0
        %3665 = vmatpush1.bf16.msra.mxu0 0
        %3666 = vmatprep.subr.bf16.mxu0 0
        %3667 = vmatpush1.bf16.msra.mxu0 0
        %3668 = vmatprep.subr.bf16.mxu0 0
        %3669 = vmatpush1.bf16.msra.mxu0 0
        %3670 = vmatprep.subr.bf16.mxu0 0
        %3671 = vmatpush1.bf16.msra.mxu0 0
        %3672 = vmatprep.subr.bf16.mxu0 0
        %3673 = vmatpush1.bf16.msra.mxu0 0
        %3674 = vmatprep.subr.bf16.mxu0 0
        %3675 = vmatpush1.bf16.msra.mxu0 0
        %3676 = vmatprep.mubr.bf16.mxu0 0
        %3677 = vmatmul.mubr.bf16.gmra.mrb[0].mxu0 %v3463
        %v3678 = vpop.f32.mrb[0].mxu0
        %v3679 = vadd.f32 %v3595, %v3678
        %v3680 = vpop.f32.mrb[0].mxu0
        %v3681 = vpop.f32.mrb[0].mxu0
        %v3682 = vpop.f32.mrb[0].mxu0
        %3683 = vdwg.mxu0
        %s3684 = scalar_lea.vmem [#allocation6], 960
        %v3685 = vld [vmem:[%s3684] sm:$0xf]
        %v3686 = vld [vmem:[%s3684 + $0x4] sm:$0xf]
        %v3687 = vld [vmem:[%s3684 + $0x8] sm:$0xf]
        %v3688 = vld [vmem:[%s3684 + $0xc] sm:$0xf]
        %v3689 = vld [vmem:[%s3684 + $0x10] sm:$0xf]
        %v3690 = vld [vmem:[%s3684 + $0x14] sm:$0xf]
        %v3691 = vld [vmem:[%s3684 + $0x18] sm:$0xf]
        %v3692 = vld [vmem:[%s3684 + $0x1c] sm:$0xf]
        %v3693 = vld [vmem:[%s3684 + $0x20] sm:$0xf]
        %v3694 = vld [vmem:[%s3684 + $0x24] sm:$0xf]
        %v3695 = vld [vmem:[%s3684 + $0x28] sm:$0xf]
        %v3696 = vld [vmem:[%s3684 + $0x2c] sm:$0xf]
        %v3697 = vld [vmem:[%s3684 + $0x30] sm:$0xf]
        %v3698 = vld [vmem:[%s3684 + $0x34] sm:$0xf]
        %v3699 = vld [vmem:[%s3684 + $0x38] sm:$0xf]
        %v3700 = vld [vmem:[%s3684 + $0x3c] sm:$0xf]
        %v3701 = vld [vmem:[#allocation7 + $0x19] sm:$0x1]
        %v3702 = vlaneseq
        %v3703 = vshrl.u32 %v3702, 7
        %v3704 = vsub.s32 0, %v3703
        %v3705 = vrot.slane %v3701, %v3704
        %v3722 = vunpack.c.l.b16 %v3685
        %v3723 = vunpack.c.l.b16 %v3686
        %v3724 = vunpack.c.l.b16 %v3687
        %v3725 = vunpack.c.l.b16 %v3688
        %v3726 = vunpack.c.l.b16 %v3689
        %v3727 = vunpack.c.l.b16 %v3690
        %v3728 = vunpack.c.l.b16 %v3691
        %v3729 = vunpack.c.l.b16 %v3692
        %v3730 = vunpack.c.l.b16 %v3693
        %v3731 = vunpack.c.l.b16 %v3694
        %v3732 = vunpack.c.l.b16 %v3695
        %v3733 = vunpack.c.l.b16 %v3696
        %v3734 = vunpack.c.l.b16 %v3697
        %v3735 = vunpack.c.l.b16 %v3698
        %v3736 = vunpack.c.l.b16 %v3699
        %v3737 = vunpack.c.l.b16 %v3700
        %v3738 = vpack.c.b16 %v3723, %v3722
        %v3739 = vpack.c.b16 %v3725, %v3724
        %v3740 = vpack.c.b16 %v3727, %v3726
        %v3741 = vpack.c.b16 %v3729, %v3728
        %v3742 = vpack.c.b16 %v3731, %v3730
        %v3743 = vpack.c.b16 %v3733, %v3732
        %v3744 = vpack.c.b16 %v3735, %v3734
        %v3745 = vpack.c.b16 %v3737, %v3736
        %3754 = vmatprep.subr.bf16.mxu0 0
        %3755 = vmatpush1.bf16.msra.mxu0 %v3738
        %3756 = vmatprep.subr.bf16.mxu0 0
        %3757 = vmatpush1.bf16.msra.mxu0 %v3739
        %3758 = vmatprep.subr.bf16.mxu0 0
        %3759 = vmatpush1.bf16.msra.mxu0 %v3740
        %3760 = vmatprep.subr.bf16.mxu0 0
        %3761 = vmatpush1.bf16.msra.mxu0 %v3741
        %3762 = vmatprep.subr.bf16.mxu0 0
        %3763 = vmatpush1.bf16.msra.mxu0 %v3742
        %3764 = vmatprep.subr.bf16.mxu0 0
        %3765 = vmatpush1.bf16.msra.mxu0 %v3743
        %3766 = vmatprep.subr.bf16.mxu0 0
        %3767 = vmatpush1.bf16.msra.mxu0 %v3744
        %3768 = vmatprep.subr.bf16.mxu0 0
        %3769 = vmatpush1.bf16.msra.mxu0 %v3745
        %3770 = vmatprep.subr.bf16.mxu0 0
        %3771 = vmatpush1.bf16.msra.mxu0 0
        %3772 = vmatprep.subr.bf16.mxu0 0
        %3773 = vmatpush1.bf16.msra.mxu0 0
        %3774 = vmatprep.subr.bf16.mxu0 0
        %3775 = vmatpush1.bf16.msra.mxu0 0
        %3776 = vmatprep.subr.bf16.mxu0 0
        %3777 = vmatpush1.bf16.msra.mxu0 0
        %3778 = vmatprep.subr.bf16.mxu0 0
        %3779 = vmatpush1.bf16.msra.mxu0 0
        %3780 = vmatprep.subr.bf16.mxu0 0
        %3781 = vmatpush1.bf16.msra.mxu0 0
        %3782 = vmatprep.subr.bf16.mxu0 0
        %3783 = vmatpush1.bf16.msra.mxu0 0
        %3784 = vmatprep.subr.bf16.mxu0 0
        %3785 = vmatpush1.bf16.msra.mxu0 0
        %3786 = vmatprep.mubr.bf16.mxu0 0
        %3787 = vmatmul.mubr.bf16.gmra.mrb[0].mxu0 %v3463
        %v3788 = vpop.f32.mrb[0].mxu0
        %v3789 = vadd.f32 %v3705, %v3788
        %v3790 = vpop.f32.mrb[0].mxu0
        %v3791 = vpop.f32.mrb[0].mxu0
        %v3792 = vpop.f32.mrb[0].mxu0
        %3793 = vdwg.mxu0
        %v3794 = vmul.f32 %v3569, %v3569
        %vm3795 = vcmask 125952
        %v3796 = vsel %vm3795, %v3794, 0.0
        %3797 = vadd.xlane.f32.xlu0 %v3796
        %v3798 = vpop.xlane.xlu0 %3797
        %v3799 = vmax.f32 %v3798, 1e-24
        %v3800 = vrsqrt.pop %v3799
        %v3801 = vmul.f32 %v3569, %v3800
        %v3802 = vmul.f32 %v3679, %v3679
        %v3803 = vsel %vm3795, %v3802, 0.0
        %3804 = vadd.xlane.f32.xlu0 %v3803
        %v3805 = vpop.xlane.xlu0 %3804
        %v3806 = vmax.f32 %v3805, 1e-24
        %v3807 = vrsqrt.pop %v3806
        %v3808 = vmul.f32 %v3679, %v3807
        %v3809 = vpack.c.bf16 %v3801, %v3801
        %v3810 = vpack.c.bf16 %v3808, %v3808
        %v3812 = vsel %vm940, %v3809, 0
        %v3815 = vsel %vm940, %v3810, 0
        %3817 = vmatprep.subr.bf16.mxu0 0
        %3818 = vmatpush1.bf16.xpose.msra.mxu0 %v3815
        %3819 = vmatprep.subr.bf16.mxu0 0
        %3820 = vmatpush1.bf16.xpose.msra.mxu0 0
        %3821 = vmatprep.subr.bf16.mxu0 0
        %3822 = vmatpush1.bf16.xpose.msra.mxu0 0
        %3823 = vmatprep.subr.bf16.mxu0 0
        %3824 = vmatpush1.bf16.xpose.msra.mxu0 0
        %3825 = vmatprep.subr.bf16.mxu0 0
        %3826 = vmatpush1.bf16.xpose.msra.mxu0 0
        %3827 = vmatprep.subr.bf16.mxu0 0
        %3828 = vmatpush1.bf16.xpose.msra.mxu0 0
        %3829 = vmatprep.subr.bf16.mxu0 0
        %3830 = vmatpush1.bf16.xpose.msra.mxu0 0
        %3831 = vmatprep.subr.bf16.mxu0 0
        %3832 = vmatpush1.bf16.xpose.msra.mxu0 0
        %3833 = vmatprep.subr.bf16.mxu0 0
        %3834 = vmatpush1.bf16.xpose.msra.mxu0 0
        %3835 = vmatprep.subr.bf16.mxu0 0
        %3836 = vmatpush1.bf16.xpose.msra.mxu0 0
        %3837 = vmatprep.subr.bf16.mxu0 0
        %3838 = vmatpush1.bf16.xpose.msra.mxu0 0
        %3839 = vmatprep.subr.bf16.mxu0 0
        %3840 = vmatpush1.bf16.xpose.msra.mxu0 0
        %3841 = vmatprep.subr.bf16.mxu0 0
        %3842 = vmatpush1.bf16.xpose.msra.mxu0 0
        %3843 = vmatprep.subr.bf16.mxu0 0
        %3844 = vmatpush1.bf16.xpose.msra.mxu0 0
        %3845 = vmatprep.subr.bf16.mxu0 0
        %3846 = vmatpush1.bf16.xpose.msra.mxu0 0
        %3847 = vmatprep.subr.bf16.mxu0 0
        %3848 = vmatpush1.bf16.xpose.msra.mxu0 0
        %3849 = vmatprep.mubr.bf16.mxu0 0
        %3850 = vmatmul.mubr.bf16.gmra.mrb[0].mxu0 %v3812
        %v3851 = vpop.f32.mrb[0].mxu0
        %v3852 = vadd.f32 0.0, %v3851
        %v3853 = vpop.f32.mrb[0].mxu0
        %v3854 = vpop.f32.mrb[0].mxu0
        %v3855 = vpop.f32.mrb[0].mxu0
        %3856 = vdwg.mxu0
        %s3857 = sld [smem:[#allocation2 + $0x4]]
        %v3858 = vstv %s3857
        %v3859 = vmul.f32 %v3852, %v3858
        %v3860 = vld [vmem:[#allocation12] sm:$0xf]
        %v3861 = vadd.f32 %v3859, %v3860
        %vm3862 = vcmask 27648
        %v3863 = vsel %vm3862, %v3861, -inf
        %3864 = vmax.xlane.f32.xlu0 %v3863
        %v3865 = vpop.xlane.xlu0 %3864
        %v3866 = vsub.f32 %v3861, %v3865
        %v3867 = vmul.f32 %v3866, 1.442695
        %v3868 = vpow.pop %v3867
        %v3869 = vsel %vm3862, %v3868, 0.0
        %3870 = vadd.xlane.f32.xlu0 %v3869
        %v3871 = vpop.xlane.xlu0 %3870
        %v3872 = vrcp.pop %v3871
        %v3873 = vmul.f32 %v3868, %v3872
        %v3874 = vpack.c.bf16 %v3873, %v3873
        %v3875 = vpack.c.bf16 %v3789, %v3789
        %vm3876 = vcmask 31744
        %v3878 = vsel %vm3876, %v3874, 0
        %vm3880 = vcmask 1041408
        %v3882 = vsel %vm3880, %v3875, 0
        %3884 = vmatprep.subr.bf16.mxu0 0
        %3885 = vmatpush1.bf16.msra.mxu0 %v3882
        %3886 = vmatprep.subr.bf16.mxu0 0
        %3887 = vmatpush1.bf16.msra.mxu0 0
        %3888 = vmatprep.subr.bf16.mxu0 0
        %3889 = vmatpush1.bf16.msra.mxu0 0
        %3890 = vmatprep.subr.bf16.mxu0 0
        %3891 = vmatpush1.bf16.msra.mxu0 0
        %3892 = vmatprep.subr.bf16.mxu0 0
        %3893 = vmatpush1.bf16.msra.mxu0 0
        %3894 = vmatprep.subr.bf16.mxu0 0
        %3895 = vmatpush1.bf16.msra.mxu0 0
        %3896 = vmatprep.subr.bf16.mxu0 0
        %3897 = vmatpush1.bf16.msra.mxu0 0
        %3898 = vmatprep.subr.bf16.mxu0 0
        %3899 = vmatpush1.bf16.msra.mxu0 0
        %3900 = vmatprep.subr.bf16.mxu0 0
        %3901 = vmatpush1.bf16.msra.mxu0 0
        %3902 = vmatprep.subr.bf16.mxu0 0
        %3903 = vmatpush1.bf16.msra.mxu0 0
        %3904 = vmatprep.subr.bf16.mxu0 0
        %3905 = vmatpush1.bf16.msra.mxu0 0
        %3906 = vmatprep.subr.bf16.mxu0 0
        %3907 = vmatpush1.bf16.msra.mxu0 0
        %3908 = vmatprep.subr.bf16.mxu0 0
        %3909 = vmatpush1.bf16.msra.mxu0 0
        %3910 = vmatprep.subr.bf16.mxu0 0
        %3911 = vmatpush1.bf16.msra.mxu0 0
        %3912 = vmatprep.subr.bf16.mxu0 0
        %3913 = vmatpush1.bf16.msra.mxu0 0
        %3914 = vmatprep.subr.bf16.mxu0 0
        %3915 = vmatpush1.bf16.msra.mxu0 0
        %3916 = vmatprep.mubr.bf16.mxu0 0
        %3917 = vmatmul.mubr.bf16.gmra.mrb[0].mxu0 %v3878
        %v3918 = vpop.f32.mrb[0].mxu0
        %v3919 = vadd.f32 0.0, %v3918
        %v3920 = vpop.f32.mrb[0].mxu0
        %v3921 = vpop.f32.mrb[0].mxu0
        %v3922 = vpop.f32.mrb[0].mxu0
        %3923 = vdwg.mxu0
        %3925 = vrot.lane.b32.xlu0 %v3794, 112
        %v3926 = vpop.permute.xlu0 %3925
        %v3928 = vsel %vm3795, %v3926, 0.0
        %3929 = vadd.xlane.f32.xlu0 %v3928
        %v3930 = vpop.xlane.xlu0 %3929
        %v3931 = vmax.f32 %v3930, 1e-24
        %v3932 = vrsqrt.pop %v3931
        %v3933 = vmul.f32 %v3569, %v3932
        %3935 = vrot.lane.b32.xlu0 %v3802, 112
        %v3936 = vpop.permute.xlu0 %3935
        %v3938 = vsel %vm3795, %v3936, 0.0
        %3939 = vadd.xlane.f32.xlu0 %v3938
        %v3940 = vpop.xlane.xlu0 %3939
        %v3941 = vmax.f32 %v3940, 1e-24
        %v3942 = vrsqrt.pop %v3941
        %v3943 = vmul.f32 %v3679, %v3942
        %v3944 = vpack.c.bf16 %v3933, %v3933
        %v3945 = vpack.c.bf16 %v3943, %v3943
        %3947 = vrot.lane.b32.xlu0 %v3944, 112
        %v3948 = vpop.permute.xlu0 %3947
        %3950 = vrot.lane.b32.xlu0 %v3945, 112
        %v3951 = vpop.permute.xlu0 %3950
        %v3953 = vsel %vm940, %v3948, 0
        %v3956 = vsel %vm940, %v3951, 0
        %3958 = vmatprep.subr.bf16.mxu0 0
        %3959 = vmatpush1.bf16.xpose.msra.mxu0 %v3956
        %3960 = vmatprep.subr.bf16.mxu0 0
        %3961 = vmatpush1.bf16.xpose.msra.mxu0 0
        %3962 = vmatprep.subr.bf16.mxu0 0
        %3963 = vmatpush1.bf16.xpose.msra.mxu0 0
        %3964 = vmatprep.subr.bf16.mxu0 0
        %3965 = vmatpush1.bf16.xpose.msra.mxu0 0
        %3966 = vmatprep.subr.bf16.mxu0 0
        %3967 = vmatpush1.bf16.xpose.msra.mxu0 0
        %3968 = vmatprep.subr.bf16.mxu0 0
        %3969 = vmatpush1.bf16.xpose.msra.mxu0 0
        %3970 = vmatprep.subr.bf16.mxu0 0
        %3971 = vmatpush1.bf16.xpose.msra.mxu0 0
        %3972 = vmatprep.subr.bf16.mxu0 0
        %3973 = vmatpush1.bf16.xpose.msra.mxu0 0
        %3974 = vmatprep.subr.bf16.mxu0 0
        %3975 = vmatpush1.bf16.xpose.msra.mxu0 0
        %3976 = vmatprep.subr.bf16.mxu0 0
        %3977 = vmatpush1.bf16.xpose.msra.mxu0 0
        %3978 = vmatprep.subr.bf16.mxu0 0
        %3979 = vmatpush1.bf16.xpose.msra.mxu0 0
        %3980 = vmatprep.subr.bf16.mxu0 0
        %3981 = vmatpush1.bf16.xpose.msra.mxu0 0
        %3982 = vmatprep.subr.bf16.mxu0 0
        %3983 = vmatpush1.bf16.xpose.msra.mxu0 0
        %3984 = vmatprep.subr.bf16.mxu0 0
        %3985 = vmatpush1.bf16.xpose.msra.mxu0 0
        %3986 = vmatprep.subr.bf16.mxu0 0
        %3987 = vmatpush1.bf16.xpose.msra.mxu0 0
        %3988 = vmatprep.subr.bf16.mxu0 0
        %3989 = vmatpush1.bf16.xpose.msra.mxu0 0
        %3990 = vmatprep.mubr.bf16.mxu0 0
        %3991 = vmatmul.mubr.bf16.gmra.mrb[0].mxu0 %v3953
        %v3992 = vpop.f32.mrb[0].mxu0
        %v3993 = vadd.f32 0.0, %v3992
        %v3994 = vpop.f32.mrb[0].mxu0
        %v3995 = vpop.f32.mrb[0].mxu0
        %v3996 = vpop.f32.mrb[0].mxu0
        %3997 = vdwg.mxu0
        %s3998 = sld [smem:[#allocation2 + $0x5]]
        %v3999 = vstv %s3998
        %v4000 = vmul.f32 %v3993, %v3999
        %s4001 = scalar_lea.vmem [#allocation12], 4
        %v4002 = vld [vmem:[%s4001] sm:$0xf]
        %v4003 = vadd.f32 %v4000, %v4002
        %v4004 = vsel %vm3862, %v4003, -inf
        %4005 = vmax.xlane.f32.xlu0 %v4004
        %v4006 = vpop.xlane.xlu0 %4005
        %v4007 = vsub.f32 %v4003, %v4006
        %v4008 = vmul.f32 %v4007, 1.442695
        %v4009 = vpow.pop %v4008
        %v4010 = vsel %vm3862, %v4009, 0.0
        %4011 = vadd.xlane.f32.xlu0 %v4010
        %v4012 = vpop.xlane.xlu0 %4011
        %v4013 = vrcp.pop %v4012
        %v4014 = vmul.f32 %v4009, %v4013
        %v4015 = vpack.c.bf16 %v4014, %v4014
        %4017 = vrot.lane.b32.xlu0 %v3875, 112
        %v4018 = vpop.permute.xlu0 %4017
        %v4020 = vsel %vm3876, %v4015, 0
        %v4023 = vsel %vm3880, %v4018, 0
        %4025 = vmatprep.subr.bf16.mxu0 0
        %4026 = vmatpush1.bf16.msra.mxu0 %v4023
        %4027 = vmatprep.subr.bf16.mxu0 0
        %4028 = vmatpush1.bf16.msra.mxu0 0
        %4029 = vmatprep.subr.bf16.mxu0 0
        %4030 = vmatpush1.bf16.msra.mxu0 0
        %4031 = vmatprep.subr.bf16.mxu0 0
        %4032 = vmatpush1.bf16.msra.mxu0 0
        %4033 = vmatprep.subr.bf16.mxu0 0
        %4034 = vmatpush1.bf16.msra.mxu0 0
        %4035 = vmatprep.subr.bf16.mxu0 0
        %4036 = vmatpush1.bf16.msra.mxu0 0
        %4037 = vmatprep.subr.bf16.mxu0 0
        %4038 = vmatpush1.bf16.msra.mxu0 0
        %4039 = vmatprep.subr.bf16.mxu0 0
        %4040 = vmatpush1.bf16.msra.mxu0 0
        %4041 = vmatprep.subr.bf16.mxu0 0
        %4042 = vmatpush1.bf16.msra.mxu0 0
        %4043 = vmatprep.subr.bf16.mxu0 0
        %4044 = vmatpush1.bf16.msra.mxu0 0
        %4045 = vmatprep.subr.bf16.mxu0 0
        %4046 = vmatpush1.bf16.msra.mxu0 0
        %4047 = vmatprep.subr.bf16.mxu0 0
        %4048 = vmatpush1.bf16.msra.mxu0 0
        %4049 = vmatprep.subr.bf16.mxu0 0
        %4050 = vmatpush1.bf16.msra.mxu0 0
        %4051 = vmatprep.subr.bf16.mxu0 0
        %4052 = vmatpush1.bf16.msra.mxu0 0
        %4053 = vmatprep.subr.bf16.mxu0 0
        %4054 = vmatpush1.bf16.msra.mxu0 0
        %4055 = vmatprep.subr.bf16.mxu0 0
        %4056 = vmatpush1.bf16.msra.mxu0 0
        %4057 = vmatprep.mubr.bf16.mxu0 0
        %4058 = vmatmul.mubr.bf16.gmra.mrb[0].mxu0 %v4020
        %v4059 = vpop.f32.mrb[0].mxu0
        %v4060 = vadd.f32 0.0, %v4059
        %v4061 = vpop.f32.mrb[0].mxu0
        %v4062 = vpop.f32.mrb[0].mxu0
        %v4063 = vpop.f32.mrb[0].mxu0
        %4064 = vdwg.mxu0
        %4065 = vrot.lane.b32.xlu0 %v3794, 96
        %v4066 = vpop.permute.xlu0 %4065
        %v4068 = vsel %vm3795, %v4066, 0.0
        %4069 = vadd.xlane.f32.xlu0 %v4068
        %v4070 = vpop.xlane.xlu0 %4069
        %v4071 = vmax.f32 %v4070, 1e-24
        %v4072 = vrsqrt.pop %v4071
        %v4073 = vmul.f32 %v3569, %v4072
        %4074 = vrot.lane.b32.xlu0 %v3802, 96
        %v4075 = vpop.permute.xlu0 %4074
        %v4077 = vsel %vm3795, %v4075, 0.0
        %4078 = vadd.xlane.f32.xlu0 %v4077
        %v4079 = vpop.xlane.xlu0 %4078
        %v4080 = vmax.f32 %v4079, 1e-24
        %v4081 = vrsqrt.pop %v4080
        %v4082 = vmul.f32 %v3679, %v4081
        %v4083 = vpack.c.bf16 %v4073, %v4073
        %v4084 = vpack.c.bf16 %v4082, %v4082
        %4086 = vrot.lane.b32.xlu0 %v4083, 96
        %v4087 = vpop.permute.xlu0 %4086
        %4089 = vrot.lane.b32.xlu0 %v4084, 96
        %v4090 = vpop.permute.xlu0 %4089
        %v4092 = vsel %vm940, %v4087, 0
        %v4095 = vsel %vm940, %v4090, 0
        %4097 = vmatprep.subr.bf16.mxu0 0
        %4098 = vmatpush1.bf16.xpose.msra.mxu0 %v4095
        %4099 = vmatprep.subr.bf16.mxu0 0
        %4100 = vmatpush1.bf16.xpose.msra.mxu0 0
        %4101 = vmatprep.subr.bf16.mxu0 0
        %4102 = vmatpush1.bf16.xpose.msra.mxu0 0
        %4103 = vmatprep.subr.bf16.mxu0 0
        %4104 = vmatpush1.bf16.xpose.msra.mxu0 0
        %4105 = vmatprep.subr.bf16.mxu0 0
        %4106 = vmatpush1.bf16.xpose.msra.mxu0 0
        %4107 = vmatprep.subr.bf16.mxu0 0
        %4108 = vmatpush1.bf16.xpose.msra.mxu0 0
        %4109 = vmatprep.subr.bf16.mxu0 0
        %4110 = vmatpush1.bf16.xpose.msra.mxu0 0
        %4111 = vmatprep.subr.bf16.mxu0 0
        %4112 = vmatpush1.bf16.xpose.msra.mxu0 0
        %4113 = vmatprep.subr.bf16.mxu0 0
        %4114 = vmatpush1.bf16.xpose.msra.mxu0 0
        %4115 = vmatprep.subr.bf16.mxu0 0
        %4116 = vmatpush1.bf16.xpose.msra.mxu0 0
        %4117 = vmatprep.subr.bf16.mxu0 0
        %4118 = vmatpush1.bf16.xpose.msra.mxu0 0
        %4119 = vmatprep.subr.bf16.mxu0 0
        %4120 = vmatpush1.bf16.xpose.msra.mxu0 0
        %4121 = vmatprep.subr.bf16.mxu0 0
        %4122 = vmatpush1.bf16.xpose.msra.mxu0 0
        %4123 = vmatprep.subr.bf16.mxu0 0
        %4124 = vmatpush1.bf16.xpose.msra.mxu0 0
        %4125 = vmatprep.subr.bf16.mxu0 0
        %4126 = vmatpush1.bf16.xpose.msra.mxu0 0
        %4127 = vmatprep.subr.bf16.mxu0 0
        %4128 = vmatpush1.bf16.xpose.msra.mxu0 0
        %4129 = vmatprep.mubr.bf16.mxu0 0
        %4130 = vmatmul.mubr.bf16.gmra.mrb[0].mxu0 %v4092
        %v4131 = vpop.f32.mrb[0].mxu0
        %v4132 = vadd.f32 0.0, %v4131
        %v4133 = vpop.f32.mrb[0].mxu0
        %v4134 = vpop.f32.mrb[0].mxu0
        %v4135 = vpop.f32.mrb[0].mxu0
        %4136 = vdwg.mxu0
        %s4137 = sld [smem:[#allocation2 + $0x6]]
        %v4138 = vstv %s4137
        %v4139 = vmul.f32 %v4132, %v4138
        %s4140 = scalar_lea.vmem [#allocation12], 8
        %v4141 = vld [vmem:[%s4140] sm:$0xf]
        %v4142 = vadd.f32 %v4139, %v4141
        %v4143 = vsel %vm3862, %v4142, -inf
        %4144 = vmax.xlane.f32.xlu0 %v4143
        %v4145 = vpop.xlane.xlu0 %4144
        %v4146 = vsub.f32 %v4142, %v4145
        %v4147 = vmul.f32 %v4146, 1.442695
        %v4148 = vpow.pop %v4147
        %v4149 = vsel %vm3862, %v4148, 0.0
        %4150 = vadd.xlane.f32.xlu0 %v4149
        %v4151 = vpop.xlane.xlu0 %4150
        %v4152 = vrcp.pop %v4151
        %v4153 = vmul.f32 %v4148, %v4152
        %v4154 = vpack.c.bf16 %v4153, %v4153
        %4155 = vrot.lane.b32.xlu0 %v3875, 96
        %v4156 = vpop.permute.xlu0 %4155
        %v4158 = vsel %vm3876, %v4154, 0
        %v4161 = vsel %vm3880, %v4156, 0
        %4163 = vmatprep.subr.bf16.mxu0 0
        %4164 = vmatpush1.bf16.msra.mxu0 %v4161
        %4165 = vmatprep.subr.bf16.mxu0 0
        %4166 = vmatpush1.bf16.msra.mxu0 0
        %4167 = vmatprep.subr.bf16.mxu0 0
        %4168 = vmatpush1.bf16.msra.mxu0 0
        %4169 = vmatprep.subr.bf16.mxu0 0
        %4170 = vmatpush1.bf16.msra.mxu0 0
        %4171 = vmatprep.subr.bf16.mxu0 0
        %4172 = vmatpush1.bf16.msra.mxu0 0
        %4173 = vmatprep.subr.bf16.mxu0 0
        %4174 = vmatpush1.bf16.msra.mxu0 0
        %4175 = vmatprep.subr.bf16.mxu0 0
        %4176 = vmatpush1.bf16.msra.mxu0 0
        %4177 = vmatprep.subr.bf16.mxu0 0
        %4178 = vmatpush1.bf16.msra.mxu0 0
        %4179 = vmatprep.subr.bf16.mxu0 0
        %4180 = vmatpush1.bf16.msra.mxu0 0
        %4181 = vmatprep.subr.bf16.mxu0 0
        %4182 = vmatpush1.bf16.msra.mxu0 0
        %4183 = vmatprep.subr.bf16.mxu0 0
        %4184 = vmatpush1.bf16.msra.mxu0 0
        %4185 = vmatprep.subr.bf16.mxu0 0
        %4186 = vmatpush1.bf16.msra.mxu0 0
        %4187 = vmatprep.subr.bf16.mxu0 0
        %4188 = vmatpush1.bf16.msra.mxu0 0
        %4189 = vmatprep.subr.bf16.mxu0 0
        %4190 = vmatpush1.bf16.msra.mxu0 0
        %4191 = vmatprep.subr.bf16.mxu0 0
        %4192 = vmatpush1.bf16.msra.mxu0 0
        %4193 = vmatprep.subr.bf16.mxu0 0
        %4194 = vmatpush1.bf16.msra.mxu0 0
        %4195 = vmatprep.mubr.bf16.mxu0 0
        %4196 = vmatmul.mubr.bf16.gmra.mrb[0].mxu0 %v4158
        %v4197 = vpop.f32.mrb[0].mxu0
        %v4198 = vadd.f32 0.0, %v4197
        %v4199 = vpop.f32.mrb[0].mxu0
        %v4200 = vpop.f32.mrb[0].mxu0
        %v4201 = vpop.f32.mrb[0].mxu0
        %4202 = vdwg.mxu0
        %4203 = vrot.lane.b32.xlu0 %v3794, 80
        %v4204 = vpop.permute.xlu0 %4203
        %v4206 = vsel %vm3795, %v4204, 0.0
        %4207 = vadd.xlane.f32.xlu0 %v4206
        %v4208 = vpop.xlane.xlu0 %4207
        %v4209 = vmax.f32 %v4208, 1e-24
        %v4210 = vrsqrt.pop %v4209
        %v4211 = vmul.f32 %v3569, %v4210
        %4212 = vrot.lane.b32.xlu0 %v3802, 80
        %v4213 = vpop.permute.xlu0 %4212
        %v4215 = vsel %vm3795, %v4213, 0.0
        %4216 = vadd.xlane.f32.xlu0 %v4215
        %v4217 = vpop.xlane.xlu0 %4216
        %v4218 = vmax.f32 %v4217, 1e-24
        %v4219 = vrsqrt.pop %v4218
        %v4220 = vmul.f32 %v3679, %v4219
        %v4221 = vpack.c.bf16 %v4211, %v4211
        %v4222 = vpack.c.bf16 %v4220, %v4220
        %4224 = vrot.lane.b32.xlu0 %v4221, 80
        %v4225 = vpop.permute.xlu0 %4224
        %4227 = vrot.lane.b32.xlu0 %v4222, 80
        %v4228 = vpop.permute.xlu0 %4227
        %v4230 = vsel %vm940, %v4225, 0
        %v4233 = vsel %vm940, %v4228, 0
        %4235 = vmatprep.subr.bf16.mxu0 0
        %4236 = vmatpush1.bf16.xpose.msra.mxu0 %v4233
        %4237 = vmatprep.subr.bf16.mxu0 0
        %4238 = vmatpush1.bf16.xpose.msra.mxu0 0
        %4239 = vmatprep.subr.bf16.mxu0 0
        %4240 = vmatpush1.bf16.xpose.msra.mxu0 0
        %4241 = vmatprep.subr.bf16.mxu0 0
        %4242 = vmatpush1.bf16.xpose.msra.mxu0 0
        %4243 = vmatprep.subr.bf16.mxu0 0
        %4244 = vmatpush1.bf16.xpose.msra.mxu0 0
        %4245 = vmatprep.subr.bf16.mxu0 0
        %4246 = vmatpush1.bf16.xpose.msra.mxu0 0
        %4247 = vmatprep.subr.bf16.mxu0 0
        %4248 = vmatpush1.bf16.xpose.msra.mxu0 0
        %4249 = vmatprep.subr.bf16.mxu0 0
        %4250 = vmatpush1.bf16.xpose.msra.mxu0 0
        %4251 = vmatprep.subr.bf16.mxu0 0
        %4252 = vmatpush1.bf16.xpose.msra.mxu0 0
        %4253 = vmatprep.subr.bf16.mxu0 0
        %4254 = vmatpush1.bf16.xpose.msra.mxu0 0
        %4255 = vmatprep.subr.bf16.mxu0 0
        %4256 = vmatpush1.bf16.xpose.msra.mxu0 0
        %4257 = vmatprep.subr.bf16.mxu0 0
        %4258 = vmatpush1.bf16.xpose.msra.mxu0 0
        %4259 = vmatprep.subr.bf16.mxu0 0
        %4260 = vmatpush1.bf16.xpose.msra.mxu0 0
        %4261 = vmatprep.subr.bf16.mxu0 0
        %4262 = vmatpush1.bf16.xpose.msra.mxu0 0
        %4263 = vmatprep.subr.bf16.mxu0 0
        %4264 = vmatpush1.bf16.xpose.msra.mxu0 0
        %4265 = vmatprep.subr.bf16.mxu0 0
        %4266 = vmatpush1.bf16.xpose.msra.mxu0 0
        %4267 = vmatprep.mubr.bf16.mxu0 0
        %4268 = vmatmul.mubr.bf16.gmra.mrb[0].mxu0 %v4230
        %v4269 = vpop.f32.mrb[0].mxu0
        %v4270 = vadd.f32 0.0, %v4269
        %v4271 = vpop.f32.mrb[0].mxu0
        %v4272 = vpop.f32.mrb[0].mxu0
        %v4273 = vpop.f32.mrb[0].mxu0
        %4274 = vdwg.mxu0
        %s4275 = sld [smem:[#allocation2 + $0x7]]
        %v4276 = vstv %s4275
        %v4277 = vmul.f32 %v4270, %v4276
        %s4278 = scalar_lea.vmem [#allocation12], 12
        %v4279 = vld [vmem:[%s4278] sm:$0xf]
        %v4280 = vadd.f32 %v4277, %v4279
        %v4281 = vsel %vm3862, %v4280, -inf
        %4282 = vmax.xlane.f32.xlu0 %v4281
        %v4283 = vpop.xlane.xlu0 %4282
        %v4284 = vsub.f32 %v4280, %v4283
        %v4285 = vmul.f32 %v4284, 1.442695
        %v4286 = vpow.pop %v4285
        %v4287 = vsel %vm3862, %v4286, 0.0
        %4288 = vadd.xlane.f32.xlu0 %v4287
        %v4289 = vpop.xlane.xlu0 %4288
        %v4290 = vrcp.pop %v4289
        %v4291 = vmul.f32 %v4286, %v4290
        %v4292 = vpack.c.bf16 %v4291, %v4291
        %4293 = vrot.lane.b32.xlu0 %v3875, 80
        %v4294 = vpop.permute.xlu0 %4293
        %v4296 = vsel %vm3876, %v4292, 0
        %v4299 = vsel %vm3880, %v4294, 0
        %4301 = vmatprep.subr.bf16.mxu0 0
        %4302 = vmatpush1.bf16.msra.mxu0 %v4299
        %4303 = vmatprep.subr.bf16.mxu0 0
        %4304 = vmatpush1.bf16.msra.mxu0 0
        %4305 = vmatprep.subr.bf16.mxu0 0
        %4306 = vmatpush1.bf16.msra.mxu0 0
        %4307 = vmatprep.subr.bf16.mxu0 0
        %4308 = vmatpush1.bf16.msra.mxu0 0
        %4309 = vmatprep.subr.bf16.mxu0 0
        %4310 = vmatpush1.bf16.msra.mxu0 0
        %4311 = vmatprep.subr.bf16.mxu0 0
        %4312 = vmatpush1.bf16.msra.mxu0 0
        %4313 = vmatprep.subr.bf16.mxu0 0
        %4314 = vmatpush1.bf16.msra.mxu0 0
        %4315 = vmatprep.subr.bf16.mxu0 0
        %4316 = vmatpush1.bf16.msra.mxu0 0
        %4317 = vmatprep.subr.bf16.mxu0 0
        %4318 = vmatpush1.bf16.msra.mxu0 0
        %4319 = vmatprep.subr.bf16.mxu0 0
        %4320 = vmatpush1.bf16.msra.mxu0 0
        %4321 = vmatprep.subr.bf16.mxu0 0
        %4322 = vmatpush1.bf16.msra.mxu0 0
        %4323 = vmatprep.subr.bf16.mxu0 0
        %4324 = vmatpush1.bf16.msra.mxu0 0
        %4325 = vmatprep.subr.bf16.mxu0 0
        %4326 = vmatpush1.bf16.msra.mxu0 0
        %4327 = vmatprep.subr.bf16.mxu0 0
        %4328 = vmatpush1.bf16.msra.mxu0 0
        %4329 = vmatprep.subr.bf16.mxu0 0
        %4330 = vmatpush1.bf16.msra.mxu0 0
        %4331 = vmatprep.subr.bf16.mxu0 0
        %4332 = vmatpush1.bf16.msra.mxu0 0
        %4333 = vmatprep.mubr.bf16.mxu0 0
        %4334 = vmatmul.mubr.bf16.gmra.mrb[0].mxu0 %v4296
        %v4335 = vpop.f32.mrb[0].mxu0
        %v4336 = vadd.f32 0.0, %v4335
        %v4337 = vpop.f32.mrb[0].mxu0
        %v4338 = vpop.f32.mrb[0].mxu0
        %v4339 = vpop.f32.mrb[0].mxu0
        %4340 = vdwg.mxu0
        %4342 = vrot.lane.b32.xlu0 %v4060, 16
        %v4343 = vpop.permute.xlu0 %4342
        %4346 = vrot.lane.b32.xlu0 %v4198, 32
        %v4347 = vpop.permute.xlu0 %4346
        %4350 = vrot.lane.b32.xlu0 %v4336, 48
        %v4351 = vpop.permute.xlu0 %4350
        %v4353 = vsel %vm940, %v3919, %v4343
        %v4354 = vsel %vm1277, %v4353, %v4347
        %vm4355 = vcmask 392192
        %v4356 = vsel %vm4355, %v4354, %v4351
        %vm4357 = vcmask 523264
        %v4358 = vsel %vm4357, %v4356, 0.0
        %v4359 = vpack.c.bf16 %v4358, %v4358
        %s4360 = scalar_lea.vmem [#allocation6], 1024
        %v4361 = vld [vmem:[%s4360] sm:$0xf]
        %v4362 = vld [vmem:[%s4360 + $0x4] sm:$0xf]
        %v4363 = vld [vmem:[%s4360 + $0x8] sm:$0xf]
        %v4364 = vld [vmem:[%s4360 + $0xc] sm:$0xf]
        %v4365 = vld [vmem:[%s4360 + $0x10] sm:$0xf]
        %v4366 = vld [vmem:[%s4360 + $0x14] sm:$0xf]
        %v4367 = vld [vmem:[%s4360 + $0x18] sm:$0xf]
        %v4368 = vld [vmem:[%s4360 + $0x1c] sm:$0xf]
        %v4369 = vld [vmem:[%s4360 + $0x20] sm:$0xf]
        %v4370 = vld [vmem:[%s4360 + $0x24] sm:$0xf]
        %v4371 = vld [vmem:[%s4360 + $0x28] sm:$0xf]
        %v4372 = vld [vmem:[%s4360 + $0x2c] sm:$0xf]
        %v4373 = vld [vmem:[%s4360 + $0x30] sm:$0xf]
        %v4374 = vld [vmem:[%s4360 + $0x34] sm:$0xf]
        %v4375 = vld [vmem:[%s4360 + $0x38] sm:$0xf]
        %v4376 = vld [vmem:[%s4360 + $0x3c] sm:$0xf]
        %v4377 = vld [vmem:[#allocation7 + $0x1a] sm:$0x1]
        %v4378 = vlaneseq
        %v4379 = vshrl.u32 %v4378, 7
        %v4380 = vsub.s32 0, %v4379
        %v4381 = vrot.slane %v4377, %v4380
        %v4398 = vunpack.c.l.b16 %v4361
        %v4399 = vunpack.c.l.b16 %v4362
        %v4400 = vunpack.c.l.b16 %v4363
        %v4401 = vunpack.c.l.b16 %v4364
        %v4402 = vunpack.c.l.b16 %v4365
        %v4403 = vunpack.c.l.b16 %v4366
        %v4404 = vunpack.c.l.b16 %v4367
        %v4405 = vunpack.c.l.b16 %v4368
        %v4406 = vunpack.c.l.b16 %v4369
        %v4407 = vunpack.c.l.b16 %v4370
        %v4408 = vunpack.c.l.b16 %v4371
        %v4409 = vunpack.c.l.b16 %v4372
        %v4410 = vunpack.c.l.b16 %v4373
        %v4411 = vunpack.c.l.b16 %v4374
        %v4412 = vunpack.c.l.b16 %v4375
        %v4413 = vunpack.c.l.b16 %v4376
        %v4414 = vpack.c.b16 %v4399, %v4398
        %v4415 = vpack.c.b16 %v4401, %v4400
        %v4416 = vpack.c.b16 %v4403, %v4402
        %v4417 = vpack.c.b16 %v4405, %v4404
        %v4418 = vpack.c.b16 %v4407, %v4406
        %v4419 = vpack.c.b16 %v4409, %v4408
        %v4420 = vpack.c.b16 %v4411, %v4410
        %v4421 = vpack.c.b16 %v4413, %v4412
        %4430 = vmatprep.subr.bf16.mxu0 0
        %4431 = vmatpush1.bf16.msra.mxu0 %v4414
        %4432 = vmatprep.subr.bf16.mxu0 0
        %4433 = vmatpush1.bf16.msra.mxu0 %v4415
        %4434 = vmatprep.subr.bf16.mxu0 0
        %4435 = vmatpush1.bf16.msra.mxu0 %v4416
        %4436 = vmatprep.subr.bf16.mxu0 0
        %4437 = vmatpush1.bf16.msra.mxu0 %v4417
        %4438 = vmatprep.subr.bf16.mxu0 0
        %4439 = vmatpush1.bf16.msra.mxu0 %v4418
        %4440 = vmatprep.subr.bf16.mxu0 0
        %4441 = vmatpush1.bf16.msra.mxu0 %v4419
        %4442 = vmatprep.subr.bf16.mxu0 0
        %4443 = vmatpush1.bf16.msra.mxu0 %v4420
        %4444 = vmatprep.subr.bf16.mxu0 0
        %4445 = vmatpush1.bf16.msra.mxu0 %v4421
        %4446 = vmatprep.subr.bf16.mxu0 0
        %4447 = vmatpush1.bf16.msra.mxu0 0
        %4448 = vmatprep.subr.bf16.mxu0 0
        %4449 = vmatpush1.bf16.msra.mxu0 0
        %4450 = vmatprep.subr.bf16.mxu0 0
        %4451 = vmatpush1.bf16.msra.mxu0 0
        %4452 = vmatprep.subr.bf16.mxu0 0
        %4453 = vmatpush1.bf16.msra.mxu0 0
        %4454 = vmatprep.subr.bf16.mxu0 0
        %4455 = vmatpush1.bf16.msra.mxu0 0
        %4456 = vmatprep.subr.bf16.mxu0 0
        %4457 = vmatpush1.bf16.msra.mxu0 0
        %4458 = vmatprep.subr.bf16.mxu0 0
        %4459 = vmatpush1.bf16.msra.mxu0 0
        %4460 = vmatprep.subr.bf16.mxu0 0
        %4461 = vmatpush1.bf16.msra.mxu0 0
        %4462 = vmatprep.mubr.bf16.mxu0 0
        %4463 = vmatmul.mubr.bf16.gmra.mrb[0].mxu0 %v4359
        %v4464 = vpop.f32.mrb[0].mxu0
        %v4465 = vadd.f32 %v4381, %v4464
        %v4466 = vpop.f32.mrb[0].mxu0
        %v4467 = vpop.f32.mrb[0].mxu0
        %v4468 = vpop.f32.mrb[0].mxu0
        %4469 = vdwg.mxu0
        %v4470 = vsel %vm3436, %v4465, 0.0
        %4471 = vadd.xlane.f32.xlu0 %v4470
        %v4472 = vpop.xlane.xlu0 %4471
        %v4473 = vmul.f32 %v4472, 0.015625
        %v4474 = vsub.f32 %v4465, %v4473
        %v4475 = vmul.f32 %v4474, %v452
        %v4476 = vmul.f32 %v4475, %v4475
        %v4477 = vsel %vm3436, %v4476, 0.0
        %4478 = vadd.xlane.f32.xlu0 %v4477
        %v4479 = vpop.xlane.xlu0 %4478
        %v4480 = vmul.f32 %v4479, 0.015625
        %v4481 = vadd.f32 %v4480, 1e-05
        %v4482 = vrsqrt.pop %v4481
        %v4483 = vmul.f32 %v4475, %v4482
        %v4484 = vld [vmem:[#allocation7 + $0x1b] sm:$0x1]
        %v4485 = vlaneseq
        %v4486 = vshrl.u32 %v4485, 7
        %v4487 = vsub.s32 0, %v4486
        %v4488 = vrot.slane %v4484, %v4487
        %v4489 = vmul.f32 %v4483, %v4488
        %v4490 = vld [vmem:[#allocation7 + $0x1c] sm:$0x1]
        %v4491 = vlaneseq
        %v4492 = vshrl.u32 %v4491, 7
        %v4493 = vsub.s32 0, %v4492
        %v4494 = vrot.slane %v4490, %v4493
        %v4495 = vadd.f32 %v4489, %v4494
        %v4496 = vadd.f32 %v3462, %v4495
        %v4497 = vpack.c.bf16 %v4496, %v4496
        %s4498 = scalar_lea.vmem [#allocation6], 1088
        %v4499 = vld [vmem:[%s4498] sm:$0xf]
        %v4500 = vld [vmem:[%s4498 + $0x4] sm:$0xf]
        %v4501 = vld [vmem:[%s4498 + $0x8] sm:$0xf]
        %v4502 = vld [vmem:[%s4498 + $0xc] sm:$0xf]
        %v4503 = vld [vmem:[%s4498 + $0x10] sm:$0xf]
        %v4504 = vld [vmem:[%s4498 + $0x14] sm:$0xf]
        %v4505 = vld [vmem:[%s4498 + $0x18] sm:$0xf]
        %v4506 = vld [vmem:[%s4498 + $0x1c] sm:$0xf]
        %v4507 = vld [vmem:[%s4498 + $0x20] sm:$0xf]
        %v4508 = vld [vmem:[%s4498 + $0x24] sm:$0xf]
        %v4509 = vld [vmem:[%s4498 + $0x28] sm:$0xf]
        %v4510 = vld [vmem:[%s4498 + $0x2c] sm:$0xf]
        %v4511 = vld [vmem:[%s4498 + $0x30] sm:$0xf]
        %v4512 = vld [vmem:[%s4498 + $0x34] sm:$0xf]
        %v4513 = vld [vmem:[%s4498 + $0x38] sm:$0xf]
        %v4514 = vld [vmem:[%s4498 + $0x3c] sm:$0xf]
        %v4515 = vld [vmem:[#allocation7 + $0x1d] sm:$0x1]
        %v4516 = vlaneseq
        %v4517 = vshrl.u32 %v4516, 7
        %v4518 = vsub.s32 0, %v4517
        %v4519 = vrot.slane %v4515, %v4518
        %v4536 = vunpack.c.l.b16 %v4499
        %v4537 = vunpack.c.l.b16 %v4500
        %v4538 = vunpack.c.l.b16 %v4501
        %v4539 = vunpack.c.l.b16 %v4502
        %v4540 = vunpack.c.l.b16 %v4503
        %v4541 = vunpack.c.l.b16 %v4504
        %v4542 = vunpack.c.l.b16 %v4505
        %v4543 = vunpack.c.l.b16 %v4506
        %v4544 = vunpack.c.l.b16 %v4507
        %v4545 = vunpack.c.l.b16 %v4508
        %v4546 = vunpack.c.l.b16 %v4509
        %v4547 = vunpack.c.l.b16 %v4510
        %v4548 = vunpack.c.l.b16 %v4511
        %v4549 = vunpack.c.l.b16 %v4512
        %v4550 = vunpack.c.l.b16 %v4513
        %v4551 = vunpack.c.l.b16 %v4514
        %v4552 = vpack.c.b16 %v4537, %v4536
        %v4553 = vpack.c.b16 %v4539, %v4538
        %v4554 = vpack.c.b16 %v4541, %v4540
        %v4555 = vpack.c.b16 %v4543, %v4542
        %v4556 = vpack.c.b16 %v4545, %v4544
        %v4557 = vpack.c.b16 %v4547, %v4546
        %v4558 = vpack.c.b16 %v4549, %v4548
        %v4559 = vpack.c.b16 %v4551, %v4550
        %4568 = vmatprep.subr.bf16.mxu0 0
        %4569 = vmatpush1.bf16.msra.mxu0 %v4552
        %4570 = vmatprep.subr.bf16.mxu0 0
        %4571 = vmatpush1.bf16.msra.mxu0 %v4553
        %4572 = vmatprep.subr.bf16.mxu0 0
        %4573 = vmatpush1.bf16.msra.mxu0 %v4554
        %4574 = vmatprep.subr.bf16.mxu0 0
        %4575 = vmatpush1.bf16.msra.mxu0 %v4555
        %4576 = vmatprep.subr.bf16.mxu0 0
        %4577 = vmatpush1.bf16.msra.mxu0 %v4556
        %4578 = vmatprep.subr.bf16.mxu0 0
        %4579 = vmatpush1.bf16.msra.mxu0 %v4557
        %4580 = vmatprep.subr.bf16.mxu0 0
        %4581 = vmatpush1.bf16.msra.mxu0 %v4558
        %4582 = vmatprep.subr.bf16.mxu0 0
        %4583 = vmatpush1.bf16.msra.mxu0 %v4559
        %4584 = vmatprep.subr.bf16.mxu0 0
        %4585 = vmatpush1.bf16.msra.mxu0 0
        %4586 = vmatprep.subr.bf16.mxu0 0
        %4587 = vmatpush1.bf16.msra.mxu0 0
        %4588 = vmatprep.subr.bf16.mxu0 0
        %4589 = vmatpush1.bf16.msra.mxu0 0
        %4590 = vmatprep.subr.bf16.mxu0 0
        %4591 = vmatpush1.bf16.msra.mxu0 0
        %4592 = vmatprep.subr.bf16.mxu0 0
        %4593 = vmatpush1.bf16.msra.mxu0 0
        %4594 = vmatprep.subr.bf16.mxu0 0
        %4595 = vmatpush1.bf16.msra.mxu0 0
        %4596 = vmatprep.subr.bf16.mxu0 0
        %4597 = vmatpush1.bf16.msra.mxu0 0
        %4598 = vmatprep.subr.bf16.mxu0 0
        %4599 = vmatpush1.bf16.msra.mxu0 0
        %4600 = vmatprep.mubr.bf16.mxu0 0
        %4601 = vmatmul.mubr.bf16.gmra.mrb[0].mxu0 %v4497
        %v4602 = vpop.f32.mrb[0].mxu0
        %v4603 = vadd.f32 %v4519, %v4602
        %v4604 = vpop.f32.mrb[0].mxu0
        %v4605 = vpop.f32.mrb[0].mxu0
        %v4606 = vpop.f32.mrb[0].mxu0
        %4607 = vdwg.mxu0
        %v4608 = vmul.f32 %v4603, %v4603
        %v4609 = vmul.f32 %v4603, %v4608
        %v4610 = vmul.f32 %v4609, 0.044715
        %v4611 = vadd.f32 %v4603, %v4610
        %v4612 = vmul.f32 %v4611, 0.7978846
        %v4613 = vtanh.pop %v4612
        %v4614 = vadd.f32 %v4613, 1.0
        %v4615 = vmul.f32 %v4614, 0.5
        %v4616 = vmul.f32 %v4603, %v4615
        %s4617 = scalar_lea.vmem [#allocation6], 1152
        %v4618 = vld [vmem:[%s4617] sm:$0xf]
        %v4619 = vld [vmem:[%s4617 + $0x4] sm:$0xf]
        %v4620 = vld [vmem:[%s4617 + $0x8] sm:$0xf]
        %v4621 = vld [vmem:[%s4617 + $0xc] sm:$0xf]
        %v4622 = vld [vmem:[%s4617 + $0x10] sm:$0xf]
        %v4623 = vld [vmem:[%s4617 + $0x14] sm:$0xf]
        %v4624 = vld [vmem:[%s4617 + $0x18] sm:$0xf]
        %v4625 = vld [vmem:[%s4617 + $0x1c] sm:$0xf]
        %v4626 = vld [vmem:[%s4617 + $0x20] sm:$0xf]
        %v4627 = vld [vmem:[%s4617 + $0x24] sm:$0xf]
        %v4628 = vld [vmem:[%s4617 + $0x28] sm:$0xf]
        %v4629 = vld [vmem:[%s4617 + $0x2c] sm:$0xf]
        %v4630 = vld [vmem:[%s4617 + $0x30] sm:$0xf]
        %v4631 = vld [vmem:[%s4617 + $0x34] sm:$0xf]
        %v4632 = vld [vmem:[%s4617 + $0x38] sm:$0xf]
        %v4633 = vld [vmem:[%s4617 + $0x3c] sm:$0xf]
        %v4634 = vld [vmem:[#allocation7 + $0x1e] sm:$0x1]
        %v4635 = vlaneseq
        %v4636 = vshrl.u32 %v4635, 7
        %v4637 = vsub.s32 0, %v4636
        %v4638 = vrot.slane %v4634, %v4637
        %v4655 = vunpack.c.l.b16 %v4618
        %v4656 = vunpack.c.l.b16 %v4619
        %v4657 = vunpack.c.l.b16 %v4620
        %v4658 = vunpack.c.l.b16 %v4621
        %v4659 = vunpack.c.l.b16 %v4622
        %v4660 = vunpack.c.l.b16 %v4623
        %v4661 = vunpack.c.l.b16 %v4624
        %v4662 = vunpack.c.l.b16 %v4625
        %v4663 = vunpack.c.l.b16 %v4626
        %v4664 = vunpack.c.l.b16 %v4627
        %v4665 = vunpack.c.l.b16 %v4628
        %v4666 = vunpack.c.l.b16 %v4629
        %v4667 = vunpack.c.l.b16 %v4630
        %v4668 = vunpack.c.l.b16 %v4631
        %v4669 = vunpack.c.l.b16 %v4632
        %v4670 = vunpack.c.l.b16 %v4633
        %v4671 = vpack.c.b16 %v4656, %v4655
        %v4672 = vpack.c.b16 %v4658, %v4657
        %v4673 = vpack.c.b16 %v4660, %v4659
        %v4674 = vpack.c.b16 %v4662, %v4661
        %v4675 = vpack.c.b16 %v4664, %v4663
        %v4676 = vpack.c.b16 %v4666, %v4665
        %v4677 = vpack.c.b16 %v4668, %v4667
        %v4678 = vpack.c.b16 %v4670, %v4669
        %4687 = vmatprep.subr.bf16.mxu0 0
        %4688 = vmatpush1.bf16.msra.mxu0 %v4671
        %4689 = vmatprep.subr.bf16.mxu0 0
        %4690 = vmatpush1.bf16.msra.mxu0 %v4672
        %4691 = vmatprep.subr.bf16.mxu0 0
        %4692 = vmatpush1.bf16.msra.mxu0 %v4673
        %4693 = vmatprep.subr.bf16.mxu0 0
        %4694 = vmatpush1.bf16.msra.mxu0 %v4674
        %4695 = vmatprep.subr.bf16.mxu0 0
        %4696 = vmatpush1.bf16.msra.mxu0 %v4675
        %4697 = vmatprep.subr.bf16.mxu0 0
        %4698 = vmatpush1.bf16.msra.mxu0 %v4676
        %4699 = vmatprep.subr.bf16.mxu0 0
        %4700 = vmatpush1.bf16.msra.mxu0 %v4677
        %4701 = vmatprep.subr.bf16.mxu0 0
        %4702 = vmatpush1.bf16.msra.mxu0 %v4678
        %4703 = vmatprep.subr.bf16.mxu0 0
        %4704 = vmatpush1.bf16.msra.mxu0 0
        %4705 = vmatprep.subr.bf16.mxu0 0
        %4706 = vmatpush1.bf16.msra.mxu0 0
        %4707 = vmatprep.subr.bf16.mxu0 0
        %4708 = vmatpush1.bf16.msra.mxu0 0
        %4709 = vmatprep.subr.bf16.mxu0 0
        %4710 = vmatpush1.bf16.msra.mxu0 0
        %4711 = vmatprep.subr.bf16.mxu0 0
        %4712 = vmatpush1.bf16.msra.mxu0 0
        %4713 = vmatprep.subr.bf16.mxu0 0
        %4714 = vmatpush1.bf16.msra.mxu0 0
        %4715 = vmatprep.subr.bf16.mxu0 0
        %4716 = vmatpush1.bf16.msra.mxu0 0
        %4717 = vmatprep.subr.bf16.mxu0 0
        %4718 = vmatpush1.bf16.msra.mxu0 0
        %4719 = vmatprep.mubr.bf16.mxu0 0
        %4720 = vmatmul.mubr.bf16.gmra.mrb[0].mxu0 %v4497
        %v4721 = vpop.f32.mrb[0].mxu0
        %v4722 = vadd.f32 %v4638, %v4721
        %v4723 = vpop.f32.mrb[0].mxu0
        %v4724 = vpop.f32.mrb[0].mxu0
        %v4725 = vpop.f32.mrb[0].mxu0
        %4726 = vdwg.mxu0
        %v4727 = vmul.f32 %v4722, %v4722
        %v4728 = vmul.f32 %v4722, %v4727
        %v4729 = vmul.f32 %v4728, 0.044715
        %v4730 = vadd.f32 %v4722, %v4729
        %v4731 = vmul.f32 %v4730, 0.7978846
        %v4732 = vtanh.pop %v4731
        %v4733 = vadd.f32 %v4732, 1.0
        %v4734 = vmul.f32 %v4733, 0.5
        %v4735 = vmul.f32 %v4722, %v4734
        %v4736 = vld [vmem:[#allocation7 + $0x1f] sm:$0x1]
        %v4737 = vpack.c.bf16 %v4616, %v4616
        %s4738 = scalar_lea.vmem [#allocation6], 1216
        %v4739 = vld [vmem:[%s4738] sm:$0xf]
        %v4740 = vld [vmem:[%s4738 + $0x4] sm:$0xf]
        %v4741 = vld [vmem:[%s4738 + $0x8] sm:$0xf]
        %v4742 = vld [vmem:[%s4738 + $0xc] sm:$0xf]
        %v4743 = vld [vmem:[%s4738 + $0x10] sm:$0xf]
        %v4744 = vld [vmem:[%s4738 + $0x14] sm:$0xf]
        %v4745 = vld [vmem:[%s4738 + $0x18] sm:$0xf]
        %v4746 = vld [vmem:[%s4738 + $0x1c] sm:$0xf]
        %v4747 = vld [vmem:[%s4738 + $0x20] sm:$0xf]
        %v4748 = vld [vmem:[%s4738 + $0x24] sm:$0xf]
        %v4749 = vld [vmem:[%s4738 + $0x28] sm:$0xf]
        %v4750 = vld [vmem:[%s4738 + $0x2c] sm:$0xf]
        %v4751 = vld [vmem:[%s4738 + $0x30] sm:$0xf]
        %v4752 = vld [vmem:[%s4738 + $0x34] sm:$0xf]
        %v4753 = vld [vmem:[%s4738 + $0x38] sm:$0xf]
        %v4754 = vld [vmem:[%s4738 + $0x3c] sm:$0xf]
        %v4771 = vunpack.c.l.b16 %v4739
        %v4772 = vunpack.c.l.b16 %v4740
        %v4773 = vunpack.c.l.b16 %v4741
        %v4774 = vunpack.c.l.b16 %v4742
        %v4775 = vunpack.c.l.b16 %v4743
        %v4776 = vunpack.c.l.b16 %v4744
        %v4777 = vunpack.c.l.b16 %v4745
        %v4778 = vunpack.c.l.b16 %v4746
        %v4779 = vunpack.c.l.b16 %v4747
        %v4780 = vunpack.c.l.b16 %v4748
        %v4781 = vunpack.c.l.b16 %v4749
        %v4782 = vunpack.c.l.b16 %v4750
        %v4783 = vunpack.c.l.b16 %v4751
        %v4784 = vunpack.c.l.b16 %v4752
        %v4785 = vunpack.c.l.b16 %v4753
        %v4786 = vunpack.c.l.b16 %v4754
        %v4787 = vpack.c.b16 %v4772, %v4771
        %v4788 = vpack.c.b16 %v4774, %v4773
        %v4789 = vpack.c.b16 %v4776, %v4775
        %v4790 = vpack.c.b16 %v4778, %v4777
        %v4791 = vpack.c.b16 %v4780, %v4779
        %v4792 = vpack.c.b16 %v4782, %v4781
        %v4793 = vpack.c.b16 %v4784, %v4783
        %v4794 = vpack.c.b16 %v4786, %v4785
        %4803 = vmatprep.subr.bf16.mxu0 0
        %4804 = vmatpush1.bf16.msra.mxu0 %v4787
        %4805 = vmatprep.subr.bf16.mxu0 0
        %4806 = vmatpush1.bf16.msra.mxu0 %v4788
        %4807 = vmatprep.subr.bf16.mxu0 0
        %4808 = vmatpush1.bf16.msra.mxu0 %v4789
        %4809 = vmatprep.subr.bf16.mxu0 0
        %4810 = vmatpush1.bf16.msra.mxu0 %v4790
        %4811 = vmatprep.subr.bf16.mxu0 0
        %4812 = vmatpush1.bf16.msra.mxu0 %v4791
        %4813 = vmatprep.subr.bf16.mxu0 0
        %4814 = vmatpush1.bf16.msra.mxu0 %v4792
        %4815 = vmatprep.subr.bf16.mxu0 0
        %4816 = vmatpush1.bf16.msra.mxu0 %v4793
        %4817 = vmatprep.subr.bf16.mxu0 0
        %4818 = vmatpush1.bf16.msra.mxu0 %v4794
        %4819 = vmatprep.subr.bf16.mxu0 0
        %4820 = vmatpush1.bf16.msra.mxu0 0
        %4821 = vmatprep.subr.bf16.mxu0 0
        %4822 = vmatpush1.bf16.msra.mxu0 0
        %4823 = vmatprep.subr.bf16.mxu0 0
        %4824 = vmatpush1.bf16.msra.mxu0 0
        %4825 = vmatprep.subr.bf16.mxu0 0
        %4826 = vmatpush1.bf16.msra.mxu0 0
        %4827 = vmatprep.subr.bf16.mxu0 0
        %4828 = vmatpush1.bf16.msra.mxu0 0
        %4829 = vmatprep.subr.bf16.mxu0 0
        %4830 = vmatpush1.bf16.msra.mxu0 0
        %4831 = vmatprep.subr.bf16.mxu0 0
        %4832 = vmatpush1.bf16.msra.mxu0 0
        %4833 = vmatprep.subr.bf16.mxu0 0
        %4834 = vmatpush1.bf16.msra.mxu0 0
        %4835 = vmatprep.mubr.bf16.mxu0 0
        %4836 = vmatmul.mubr.bf16.gmra.mrb[0].mxu0 %v4737
        %v4837 = vpop.f32.mrb[0].mxu0
        %v4838 = vadd.f32 0.0, %v4837
        %v4839 = vpop.f32.mrb[0].mxu0
        %v4840 = vpop.f32.mrb[0].mxu0
        %v4841 = vpop.f32.mrb[0].mxu0
        %4842 = vdwg.mxu0
        %v4843 = vlaneseq
        %v4844 = vshrl.u32 %v4843, 7
        %v4845 = vsub.s32 0, %v4844
        %v4846 = vrot.slane %v4736, %v4845
        %v4847 = vadd.f32 %v4846, %v4838
        %v4848 = vpack.c.bf16 %v4735, %v4735
        %s4849 = scalar_lea.vmem [#allocation6], 1280
        %v4850 = vld [vmem:[%s4849] sm:$0xf]
        %v4851 = vld [vmem:[%s4849 + $0x4] sm:$0xf]
        %v4852 = vld [vmem:[%s4849 + $0x8] sm:$0xf]
        %v4853 = vld [vmem:[%s4849 + $0xc] sm:$0xf]
        %v4854 = vld [vmem:[%s4849 + $0x10] sm:$0xf]
        %v4855 = vld [vmem:[%s4849 + $0x14] sm:$0xf]
        %v4856 = vld [vmem:[%s4849 + $0x18] sm:$0xf]
        %v4857 = vld [vmem:[%s4849 + $0x1c] sm:$0xf]
        %v4858 = vld [vmem:[%s4849 + $0x20] sm:$0xf]
        %v4859 = vld [vmem:[%s4849 + $0x24] sm:$0xf]
        %v4860 = vld [vmem:[%s4849 + $0x28] sm:$0xf]
        %v4861 = vld [vmem:[%s4849 + $0x2c] sm:$0xf]
        %v4862 = vld [vmem:[%s4849 + $0x30] sm:$0xf]
        %v4863 = vld [vmem:[%s4849 + $0x34] sm:$0xf]
        %v4864 = vld [vmem:[%s4849 + $0x38] sm:$0xf]
        %v4865 = vld [vmem:[%s4849 + $0x3c] sm:$0xf]
        %v4882 = vunpack.c.l.b16 %v4850
        %v4883 = vunpack.c.l.b16 %v4851
        %v4884 = vunpack.c.l.b16 %v4852
        %v4885 = vunpack.c.l.b16 %v4853
        %v4886 = vunpack.c.l.b16 %v4854
        %v4887 = vunpack.c.l.b16 %v4855
        %v4888 = vunpack.c.l.b16 %v4856
        %v4889 = vunpack.c.l.b16 %v4857
        %v4890 = vunpack.c.l.b16 %v4858
        %v4891 = vunpack.c.l.b16 %v4859
        %v4892 = vunpack.c.l.b16 %v4860
        %v4893 = vunpack.c.l.b16 %v4861
        %v4894 = vunpack.c.l.b16 %v4862
        %v4895 = vunpack.c.l.b16 %v4863
        %v4896 = vunpack.c.l.b16 %v4864
        %v4897 = vunpack.c.l.b16 %v4865
        %v4898 = vpack.c.b16 %v4883, %v4882
        %v4899 = vpack.c.b16 %v4885, %v4884
        %v4900 = vpack.c.b16 %v4887, %v4886
        %v4901 = vpack.c.b16 %v4889, %v4888
        %v4902 = vpack.c.b16 %v4891, %v4890
        %v4903 = vpack.c.b16 %v4893, %v4892
        %v4904 = vpack.c.b16 %v4895, %v4894
        %v4905 = vpack.c.b16 %v4897, %v4896
        %4914 = vmatprep.subr.bf16.mxu0 0
        %4915 = vmatpush1.bf16.msra.mxu0 %v4898
        %4916 = vmatprep.subr.bf16.mxu0 0
        %4917 = vmatpush1.bf16.msra.mxu0 %v4899
        %4918 = vmatprep.subr.bf16.mxu0 0
        %4919 = vmatpush1.bf16.msra.mxu0 %v4900
        %4920 = vmatprep.subr.bf16.mxu0 0
        %4921 = vmatpush1.bf16.msra.mxu0 %v4901
        %4922 = vmatprep.subr.bf16.mxu0 0
        %4923 = vmatpush1.bf16.msra.mxu0 %v4902
        %4924 = vmatprep.subr.bf16.mxu0 0
        %4925 = vmatpush1.bf16.msra.mxu0 %v4903
        %4926 = vmatprep.subr.bf16.mxu0 0
        %4927 = vmatpush1.bf16.msra.mxu0 %v4904
        %4928 = vmatprep.subr.bf16.mxu0 0
        %4929 = vmatpush1.bf16.msra.mxu0 %v4905
        %4930 = vmatprep.subr.bf16.mxu0 0
        %4931 = vmatpush1.bf16.msra.mxu0 0
        %4932 = vmatprep.subr.bf16.mxu0 0
        %4933 = vmatpush1.bf16.msra.mxu0 0
        %4934 = vmatprep.subr.bf16.mxu0 0
        %4935 = vmatpush1.bf16.msra.mxu0 0
        %4936 = vmatprep.subr.bf16.mxu0 0
        %4937 = vmatpush1.bf16.msra.mxu0 0
        %4938 = vmatprep.subr.bf16.mxu0 0
        %4939 = vmatpush1.bf16.msra.mxu0 0
        %4940 = vmatprep.subr.bf16.mxu0 0
        %4941 = vmatpush1.bf16.msra.mxu0 0
        %4942 = vmatprep.subr.bf16.mxu0 0
        %4943 = vmatpush1.bf16.msra.mxu0 0
        %4944 = vmatprep.subr.bf16.mxu0 0
        %4945 = vmatpush1.bf16.msra.mxu0 0
        %4946 = vmatprep.mubr.bf16.mxu0 0
        %4947 = vmatmul.mubr.bf16.gmra.mrb[0].mxu0 %v4848
        %v4948 = vpop.f32.mrb[0].mxu0
        %v4949 = vadd.f32 0.0, %v4948
        %v4950 = vpop.f32.mrb[0].mxu0
        %v4951 = vpop.f32.mrb[0].mxu0
        %v4952 = vpop.f32.mrb[0].mxu0
        %4953 = vdwg.mxu0
        %v4954 = vadd.f32 %v4847, %v4949
        %v4955 = vsel %vm3436, %v4954, 0.0
        %4956 = vadd.xlane.f32.xlu0 %v4955
        %v4957 = vpop.xlane.xlu0 %4956
        %v4958 = vmul.f32 %v4957, 0.015625
        %v4959 = vsub.f32 %v4954, %v4958
        %v4960 = vmul.f32 %v4959, %v452
        %v4961 = vmul.f32 %v4960, %v4960
        %v4962 = vsel %vm3436, %v4961, 0.0
        %4963 = vadd.xlane.f32.xlu0 %v4962
        %v4964 = vpop.xlane.xlu0 %4963
        %v4965 = vmul.f32 %v4964, 0.015625
        %v4966 = vadd.f32 %v4965, 1e-05
        %v4967 = vrsqrt.pop %v4966
        %v4968 = vmul.f32 %v4960, %v4967
        %v4969 = vld [vmem:[#allocation7 + $0x20] sm:$0x1]
        %v4970 = vlaneseq
        %v4971 = vshrl.u32 %v4970, 7
        %v4972 = vsub.s32 0, %v4971
        %v4973 = vrot.slane %v4969, %v4972
        %v4974 = vmul.f32 %v4968, %v4973
        %v4975 = vld [vmem:[#allocation7 + $0x21] sm:$0x1]
        %v4976 = vlaneseq
        %v4977 = vshrl.u32 %v4976, 7
        %v4978 = vsub.s32 0, %v4977
        %v4979 = vrot.slane %v4975, %v4978
        %v4980 = vadd.f32 %v4974, %v4979
        %v4981 = vadd.f32 %v4496, %v4980
        %v4982 = vpack.c.bf16 %v4981, %v4981
        %s4983 = scalar_lea.vmem [#allocation6], 1344
        %v4984 = vld [vmem:[%s4983] sm:$0xf]
        %v4985 = vld [vmem:[%s4983 + $0x4] sm:$0xf]
        %v4986 = vld [vmem:[%s4983 + $0x8] sm:$0xf]
        %v4987 = vld [vmem:[%s4983 + $0xc] sm:$0xf]
        %v4988 = vld [vmem:[%s4983 + $0x10] sm:$0xf]
        %v4989 = vld [vmem:[%s4983 + $0x14] sm:$0xf]
        %v4990 = vld [vmem:[%s4983 + $0x18] sm:$0xf]
        %v4991 = vld [vmem:[%s4983 + $0x1c] sm:$0xf]
        %v4992 = vld [vmem:[%s4983 + $0x20] sm:$0xf]
        %v4993 = vld [vmem:[%s4983 + $0x24] sm:$0xf]
        %v4994 = vld [vmem:[%s4983 + $0x28] sm:$0xf]
        %v4995 = vld [vmem:[%s4983 + $0x2c] sm:$0xf]
        %v4996 = vld [vmem:[%s4983 + $0x30] sm:$0xf]
        %v4997 = vld [vmem:[%s4983 + $0x34] sm:$0xf]
        %v4998 = vld [vmem:[%s4983 + $0x38] sm:$0xf]
        %v4999 = vld [vmem:[%s4983 + $0x3c] sm:$0xf]
        %v5000 = vld [vmem:[#allocation7 + $0x22] sm:$0x1]
        %v5001 = vlaneseq
        %v5002 = vshrl.u32 %v5001, 7
        %v5003 = vsub.s32 0, %v5002
        %v5004 = vrot.slane %v5000, %v5003
        %v5021 = vunpack.c.l.b16 %v4984
        %v5022 = vunpack.c.l.b16 %v4985
        %v5023 = vunpack.c.l.b16 %v4986
        %v5024 = vunpack.c.l.b16 %v4987
        %v5025 = vunpack.c.l.b16 %v4988
        %v5026 = vunpack.c.l.b16 %v4989
        %v5027 = vunpack.c.l.b16 %v4990
        %v5028 = vunpack.c.l.b16 %v4991
        %v5029 = vunpack.c.l.b16 %v4992
        %v5030 = vunpack.c.l.b16 %v4993
        %v5031 = vunpack.c.l.b16 %v4994
        %v5032 = vunpack.c.l.b16 %v4995
        %v5033 = vunpack.c.l.b16 %v4996
        %v5034 = vunpack.c.l.b16 %v4997
        %v5035 = vunpack.c.l.b16 %v4998
        %v5036 = vunpack.c.l.b16 %v4999
        %v5037 = vpack.c.b16 %v5022, %v5021
        %v5038 = vpack.c.b16 %v5024, %v5023
        %v5039 = vpack.c.b16 %v5026, %v5025
        %v5040 = vpack.c.b16 %v5028, %v5027
        %v5041 = vpack.c.b16 %v5030, %v5029
        %v5042 = vpack.c.b16 %v5032, %v5031
        %v5043 = vpack.c.b16 %v5034, %v5033
        %v5044 = vpack.c.b16 %v5036, %v5035
        %5053 = vmatprep.subr.bf16.mxu0 0
        %5054 = vmatpush1.bf16.msra.mxu0 %v5037
        %5055 = vmatprep.subr.bf16.mxu0 0
        %5056 = vmatpush1.bf16.msra.mxu0 %v5038
        %5057 = vmatprep.subr.bf16.mxu0 0
        %5058 = vmatpush1.bf16.msra.mxu0 %v5039
        %5059 = vmatprep.subr.bf16.mxu0 0
        %5060 = vmatpush1.bf16.msra.mxu0 %v5040
        %5061 = vmatprep.subr.bf16.mxu0 0
        %5062 = vmatpush1.bf16.msra.mxu0 %v5041
        %5063 = vmatprep.subr.bf16.mxu0 0
        %5064 = vmatpush1.bf16.msra.mxu0 %v5042
        %5065 = vmatprep.subr.bf16.mxu0 0
        %5066 = vmatpush1.bf16.msra.mxu0 %v5043
        %5067 = vmatprep.subr.bf16.mxu0 0
        %5068 = vmatpush1.bf16.msra.mxu0 %v5044
        %5069 = vmatprep.subr.bf16.mxu0 0
        %5070 = vmatpush1.bf16.msra.mxu0 0
        %5071 = vmatprep.subr.bf16.mxu0 0
        %5072 = vmatpush1.bf16.msra.mxu0 0
        %5073 = vmatprep.subr.bf16.mxu0 0
        %5074 = vmatpush1.bf16.msra.mxu0 0
        %5075 = vmatprep.subr.bf16.mxu0 0
        %5076 = vmatpush1.bf16.msra.mxu0 0
        %5077 = vmatprep.subr.bf16.mxu0 0
        %5078 = vmatpush1.bf16.msra.mxu0 0
        %5079 = vmatprep.subr.bf16.mxu0 0
        %5080 = vmatpush1.bf16.msra.mxu0 0
        %5081 = vmatprep.subr.bf16.mxu0 0
        %5082 = vmatpush1.bf16.msra.mxu0 0
        %5083 = vmatprep.subr.bf16.mxu0 0
        %5084 = vmatpush1.bf16.msra.mxu0 0
        %5085 = vmatprep.mubr.bf16.mxu0 0
        %5086 = vmatmul.mubr.bf16.gmra.mrb[0].mxu0 %v4982
        %v5087 = vpop.f32.mrb[0].mxu0
        %v5088 = vadd.f32 %v5004, %v5087
        %v5089 = vpop.f32.mrb[0].mxu0
        %v5090 = vpop.f32.mrb[0].mxu0
        %v5091 = vpop.f32.mrb[0].mxu0
        %5092 = vdwg.mxu0
        %s5093 = scalar_lea.vmem [#allocation6], 1408
        %v5094 = vld [vmem:[%s5093] sm:$0xf]
        %v5095 = vld [vmem:[%s5093 + $0x4] sm:$0xf]
        %v5096 = vld [vmem:[%s5093 + $0x8] sm:$0xf]
        %v5097 = vld [vmem:[%s5093 + $0xc] sm:$0xf]
        %v5098 = vld [vmem:[%s5093 + $0x10] sm:$0xf]
        %v5099 = vld [vmem:[%s5093 + $0x14] sm:$0xf]
        %v5100 = vld [vmem:[%s5093 + $0x18] sm:$0xf]
        %v5101 = vld [vmem:[%s5093 + $0x1c] sm:$0xf]
        %v5102 = vld [vmem:[%s5093 + $0x20] sm:$0xf]
        %v5103 = vld [vmem:[%s5093 + $0x24] sm:$0xf]
        %v5104 = vld [vmem:[%s5093 + $0x28] sm:$0xf]
        %v5105 = vld [vmem:[%s5093 + $0x2c] sm:$0xf]
        %v5106 = vld [vmem:[%s5093 + $0x30] sm:$0xf]
        %v5107 = vld [vmem:[%s5093 + $0x34] sm:$0xf]
        %v5108 = vld [vmem:[%s5093 + $0x38] sm:$0xf]
        %v5109 = vld [vmem:[%s5093 + $0x3c] sm:$0xf]
        %v5110 = vld [vmem:[#allocation7 + $0x23] sm:$0x1]
        %v5111 = vlaneseq
        %v5112 = vshrl.u32 %v5111, 7
        %v5113 = vsub.s32 0, %v5112
        %v5114 = vrot.slane %v5110, %v5113
        %v5131 = vunpack.c.l.b16 %v5094
        %v5132 = vunpack.c.l.b16 %v5095
        %v5133 = vunpack.c.l.b16 %v5096
        %v5134 = vunpack.c.l.b16 %v5097
        %v5135 = vunpack.c.l.b16 %v5098
        %v5136 = vunpack.c.l.b16 %v5099
        %v5137 = vunpack.c.l.b16 %v5100
        %v5138 = vunpack.c.l.b16 %v5101
        %v5139 = vunpack.c.l.b16 %v5102
        %v5140 = vunpack.c.l.b16 %v5103
        %v5141 = vunpack.c.l.b16 %v5104
        %v5142 = vunpack.c.l.b16 %v5105
        %v5143 = vunpack.c.l.b16 %v5106
        %v5144 = vunpack.c.l.b16 %v5107
        %v5145 = vunpack.c.l.b16 %v5108
        %v5146 = vunpack.c.l.b16 %v5109
        %v5147 = vpack.c.b16 %v5132, %v5131
        %v5148 = vpack.c.b16 %v5134, %v5133
        %v5149 = vpack.c.b16 %v5136, %v5135
        %v5150 = vpack.c.b16 %v5138, %v5137
        %v5151 = vpack.c.b16 %v5140, %v5139
        %v5152 = vpack.c.b16 %v5142, %v5141
        %v5153 = vpack.c.b16 %v5144, %v5143
        %v5154 = vpack.c.b16 %v5146, %v5145
        %5163 = vmatprep.subr.bf16.mxu0 0
        %5164 = vmatpush1.bf16.msra.mxu0 %v5147
        %5165 = vmatprep.subr.bf16.mxu0 0
        %5166 = vmatpush1.bf16.msra.mxu0 %v5148
        %5167 = vmatprep.subr.bf16.mxu0 0
        %5168 = vmatpush1.bf16.msra.mxu0 %v5149
        %5169 = vmatprep.subr.bf16.mxu0 0
        %5170 = vmatpush1.bf16.msra.mxu0 %v5150
        %5171 = vmatprep.subr.bf16.mxu0 0
        %5172 = vmatpush1.bf16.msra.mxu0 %v5151
        %5173 = vmatprep.subr.bf16.mxu0 0
        %5174 = vmatpush1.bf16.msra.mxu0 %v5152
        %5175 = vmatprep.subr.bf16.mxu0 0
        %5176 = vmatpush1.bf16.msra.mxu0 %v5153
        %5177 = vmatprep.subr.bf16.mxu0 0
        %5178 = vmatpush1.bf16.msra.mxu0 %v5154
        %5179 = vmatprep.subr.bf16.mxu0 0
        %5180 = vmatpush1.bf16.msra.mxu0 0
        %5181 = vmatprep.subr.bf16.mxu0 0
        %5182 = vmatpush1.bf16.msra.mxu0 0
        %5183 = vmatprep.subr.bf16.mxu0 0
        %5184 = vmatpush1.bf16.msra.mxu0 0
        %5185 = vmatprep.subr.bf16.mxu0 0
        %5186 = vmatpush1.bf16.msra.mxu0 0
        %5187 = vmatprep.subr.bf16.mxu0 0
        %5188 = vmatpush1.bf16.msra.mxu0 0
        %5189 = vmatprep.subr.bf16.mxu0 0
        %5190 = vmatpush1.bf16.msra.mxu0 0
        %5191 = vmatprep.subr.bf16.mxu0 0
        %5192 = vmatpush1.bf16.msra.mxu0 0
        %5193 = vmatprep.subr.bf16.mxu0 0
        %5194 = vmatpush1.bf16.msra.mxu0 0
        %5195 = vmatprep.mubr.bf16.mxu0 0
        %5196 = vmatmul.mubr.bf16.gmra.mrb[0].mxu0 %v4982
        %v5197 = vpop.f32.mrb[0].mxu0
        %v5198 = vadd.f32 %v5114, %v5197
        %v5199 = vpop.f32.mrb[0].mxu0
        %v5200 = vpop.f32.mrb[0].mxu0
        %v5201 = vpop.f32.mrb[0].mxu0
        %5202 = vdwg.mxu0
        %s5203 = scalar_lea.vmem [#allocation6], 1472
        %v5204 = vld [vmem:[%s5203] sm:$0xf]
        %v5205 = vld [vmem:[%s5203 + $0x4] sm:$0xf]
        %v5206 = vld [vmem:[%s5203 + $0x8] sm:$0xf]
        %v5207 = vld [vmem:[%s5203 + $0xc] sm:$0xf]
        %v5208 = vld [vmem:[%s5203 + $0x10] sm:$0xf]
        %v5209 = vld [vmem:[%s5203 + $0x14] sm:$0xf]
        %v5210 = vld [vmem:[%s5203 + $0x18] sm:$0xf]
        %v5211 = vld [vmem:[%s5203 + $0x1c] sm:$0xf]
        %v5212 = vld [vmem:[%s5203 + $0x20] sm:$0xf]
        %v5213 = vld [vmem:[%s5203 + $0x24] sm:$0xf]
        %v5214 = vld [vmem:[%s5203 + $0x28] sm:$0xf]
        %v5215 = vld [vmem:[%s5203 + $0x2c] sm:$0xf]
        %v5216 = vld [vmem:[%s5203 + $0x30] sm:$0xf]
        %v5217 = vld [vmem:[%s5203 + $0x34] sm:$0xf]
        %v5218 = vld [vmem:[%s5203 + $0x38] sm:$0xf]
        %v5219 = vld [vmem:[%s5203 + $0x3c] sm:$0xf]
        %v5220 = vld [vmem:[#allocation7 + $0x24] sm:$0x1]
        %v5221 = vlaneseq
        %v5222 = vshrl.u32 %v5221, 7
        %v5223 = vsub.s32 0, %v5222
        %v5224 = vrot.slane %v5220, %v5223
        %v5241 = vunpack.c.l.b16 %v5204
        %v5242 = vunpack.c.l.b16 %v5205
        %v5243 = vunpack.c.l.b16 %v5206
        %v5244 = vunpack.c.l.b16 %v5207
        %v5245 = vunpack.c.l.b16 %v5208
        %v5246 = vunpack.c.l.b16 %v5209
        %v5247 = vunpack.c.l.b16 %v5210
        %v5248 = vunpack.c.l.b16 %v5211
        %v5249 = vunpack.c.l.b16 %v5212
        %v5250 = vunpack.c.l.b16 %v5213
        %v5251 = vunpack.c.l.b16 %v5214
        %v5252 = vunpack.c.l.b16 %v5215
        %v5253 = vunpack.c.l.b16 %v5216
        %v5254 = vunpack.c.l.b16 %v5217
        %v5255 = vunpack.c.l.b16 %v5218
        %v5256 = vunpack.c.l.b16 %v5219
        %v5257 = vpack.c.b16 %v5242, %v5241
        %v5258 = vpack.c.b16 %v5244, %v5243
        %v5259 = vpack.c.b16 %v5246, %v5245
        %v5260 = vpack.c.b16 %v5248, %v5247
        %v5261 = vpack.c.b16 %v5250, %v5249
        %v5262 = vpack.c.b16 %v5252, %v5251
        %v5263 = vpack.c.b16 %v5254, %v5253
        %v5264 = vpack.c.b16 %v5256, %v5255
        %5273 = vmatprep.subr.bf16.mxu0 0
        %5274 = vmatpush1.bf16.msra.mxu0 %v5257
        %5275 = vmatprep.subr.bf16.mxu0 0
        %5276 = vmatpush1.bf16.msra.mxu0 %v5258
        %5277 = vmatprep.subr.bf16.mxu0 0
        %5278 = vmatpush1.bf16.msra.mxu0 %v5259
        %5279 = vmatprep.subr.bf16.mxu0 0
        %5280 = vmatpush1.bf16.msra.mxu0 %v5260
        %5281 = vmatprep.subr.bf16.mxu0 0
        %5282 = vmatpush1.bf16.msra.mxu0 %v5261
        %5283 = vmatprep.subr.bf16.mxu0 0
        %5284 = vmatpush1.bf16.msra.mxu0 %v5262
        %5285 = vmatprep.subr.bf16.mxu0 0
        %5286 = vmatpush1.bf16.msra.mxu0 %v5263
        %5287 = vmatprep.subr.bf16.mxu0 0
        %5288 = vmatpush1.bf16.msra.mxu0 %v5264
        %5289 = vmatprep.subr.bf16.mxu0 0
        %5290 = vmatpush1.bf16.msra.mxu0 0
        %5291 = vmatprep.subr.bf16.mxu0 0
        %5292 = vmatpush1.bf16.msra.mxu0 0
        %5293 = vmatprep.subr.bf16.mxu0 0
        %5294 = vmatpush1.bf16.msra.mxu0 0
        %5295 = vmatprep.subr.bf16.mxu0 0
        %5296 = vmatpush1.bf16.msra.mxu0 0
        %5297 = vmatprep.subr.bf16.mxu0 0
        %5298 = vmatpush1.bf16.msra.mxu0 0
        %5299 = vmatprep.subr.bf16.mxu0 0
        %5300 = vmatpush1.bf16.msra.mxu0 0
        %5301 = vmatprep.subr.bf16.mxu0 0
        %5302 = vmatpush1.bf16.msra.mxu0 0
        %5303 = vmatprep.subr.bf16.mxu0 0
        %5304 = vmatpush1.bf16.msra.mxu0 0
        %5305 = vmatprep.mubr.bf16.mxu0 0
        %5306 = vmatmul.mubr.bf16.gmra.mrb[0].mxu0 %v4982
        %v5307 = vpop.f32.mrb[0].mxu0
        %v5308 = vadd.f32 %v5224, %v5307
        %v5309 = vpop.f32.mrb[0].mxu0
        %v5310 = vpop.f32.mrb[0].mxu0
        %v5311 = vpop.f32.mrb[0].mxu0
        %5312 = vdwg.mxu0
        %v5313 = vmul.f32 %v5088, %v5088
        %v5314 = vsel %vm3795, %v5313, 0.0
        %5315 = vadd.xlane.f32.xlu0 %v5314
        %v5316 = vpop.xlane.xlu0 %5315
        %v5317 = vmax.f32 %v5316, 1e-24
        %v5318 = vrsqrt.pop %v5317
        %v5319 = vmul.f32 %v5088, %v5318
        %v5320 = vmul.f32 %v5198, %v5198
        %v5321 = vsel %vm3795, %v5320, 0.0
        %5322 = vadd.xlane.f32.xlu0 %v5321
        %v5323 = vpop.xlane.xlu0 %5322
        %v5324 = vmax.f32 %v5323, 1e-24
        %v5325 = vrsqrt.pop %v5324
        %v5326 = vmul.f32 %v5198, %v5325
        %v5327 = vpack.c.bf16 %v5319, %v5319
        %v5328 = vpack.c.bf16 %v5326, %v5326
        %v5330 = vsel %vm940, %v5327, 0
        %v5333 = vsel %vm940, %v5328, 0
        %5335 = vmatprep.subr.bf16.mxu0 0
        %5336 = vmatpush1.bf16.xpose.msra.mxu0 %v5333
        %5337 = vmatprep.subr.bf16.mxu0 0
        %5338 = vmatpush1.bf16.xpose.msra.mxu0 0
        %5339 = vmatprep.subr.bf16.mxu0 0
        %5340 = vmatpush1.bf16.xpose.msra.mxu0 0
        %5341 = vmatprep.subr.bf16.mxu0 0
        %5342 = vmatpush1.bf16.xpose.msra.mxu0 0
        %5343 = vmatprep.subr.bf16.mxu0 0
        %5344 = vmatpush1.bf16.xpose.msra.mxu0 0
        %5345 = vmatprep.subr.bf16.mxu0 0
        %5346 = vmatpush1.bf16.xpose.msra.mxu0 0
        %5347 = vmatprep.subr.bf16.mxu0 0
        %5348 = vmatpush1.bf16.xpose.msra.mxu0 0
        %5349 = vmatprep.subr.bf16.mxu0 0
        %5350 = vmatpush1.bf16.xpose.msra.mxu0 0
        %5351 = vmatprep.subr.bf16.mxu0 0
        %5352 = vmatpush1.bf16.xpose.msra.mxu0 0
        %5353 = vmatprep.subr.bf16.mxu0 0
        %5354 = vmatpush1.bf16.xpose.msra.mxu0 0
        %5355 = vmatprep.subr.bf16.mxu0 0
        %5356 = vmatpush1.bf16.xpose.msra.mxu0 0
        %5357 = vmatprep.subr.bf16.mxu0 0
        %5358 = vmatpush1.bf16.xpose.msra.mxu0 0
        %5359 = vmatprep.subr.bf16.mxu0 0
        %5360 = vmatpush1.bf16.xpose.msra.mxu0 0
        %5361 = vmatprep.subr.bf16.mxu0 0
        %5362 = vmatpush1.bf16.xpose.msra.mxu0 0
        %5363 = vmatprep.subr.bf16.mxu0 0
        %5364 = vmatpush1.bf16.xpose.msra.mxu0 0
        %5365 = vmatprep.subr.bf16.mxu0 0
        %5366 = vmatpush1.bf16.xpose.msra.mxu0 0
        %5367 = vmatprep.mubr.bf16.mxu0 0
        %5368 = vmatmul.mubr.bf16.gmra.mrb[0].mxu0 %v5330
        %v5369 = vpop.f32.mrb[0].mxu0
        %v5370 = vadd.f32 0.0, %v5369
        %v5371 = vpop.f32.mrb[0].mxu0
        %v5372 = vpop.f32.mrb[0].mxu0
        %v5373 = vpop.f32.mrb[0].mxu0
        %5374 = vdwg.mxu0
        %s5375 = sld [smem:[#allocation2 + $0x8]]
        %v5376 = vstv %s5375
        %v5377 = vmul.f32 %v5370, %v5376
        %v5378 = vld [vmem:[#allocation13] sm:$0xf]
        %v5379 = vadd.f32 %v5377, %v5378
        %v5380 = vsel %vm3862, %v5379, -inf
        %5381 = vmax.xlane.f32.xlu0 %v5380
        %v5382 = vpop.xlane.xlu0 %5381
        %v5383 = vsub.f32 %v5379, %v5382
        %v5384 = vmul.f32 %v5383, 1.442695
        %v5385 = vpow.pop %v5384
        %v5386 = vsel %vm3862, %v5385, 0.0
        %5387 = vadd.xlane.f32.xlu0 %v5386
        %v5388 = vpop.xlane.xlu0 %5387
        %v5389 = vrcp.pop %v5388
        %v5390 = vmul.f32 %v5385, %v5389
        %v5391 = vpack.c.bf16 %v5390, %v5390
        %v5392 = vpack.c.bf16 %v5308, %v5308
        %v5394 = vsel %vm3876, %v5391, 0
        %v5397 = vsel %vm3880, %v5392, 0
        %5399 = vmatprep.subr.bf16.mxu0 0
        %5400 = vmatpush1.bf16.msra.mxu0 %v5397
        %5401 = vmatprep.subr.bf16.mxu0 0
        %5402 = vmatpush1.bf16.msra.mxu0 0
        %5403 = vmatprep.subr.bf16.mxu0 0
        %5404 = vmatpush1.bf16.msra.mxu0 0
        %5405 = vmatprep.subr.bf16.mxu0 0
        %5406 = vmatpush1.bf16.msra.mxu0 0
        %5407 = vmatprep.subr.bf16.mxu0 0
        %5408 = vmatpush1.bf16.msra.mxu0 0
        %5409 = vmatprep.subr.bf16.mxu0 0
        %5410 = vmatpush1.bf16.msra.mxu0 0
        %5411 = vmatprep.subr.bf16.mxu0 0
        %5412 = vmatpush1.bf16.msra.mxu0 0
        %5413 = vmatprep.subr.bf16.mxu0 0
        %5414 = vmatpush1.bf16.msra.mxu0 0
        %5415 = vmatprep.subr.bf16.mxu0 0
        %5416 = vmatpush1.bf16.msra.mxu0 0
        %5417 = vmatprep.subr.bf16.mxu0 0
        %5418 = vmatpush1.bf16.msra.mxu0 0
        %5419 = vmatprep.subr.bf16.mxu0 0
        %5420 = vmatpush1.bf16.msra.mxu0 0
        %5421 = vmatprep.subr.bf16.mxu0 0
        %5422 = vmatpush1.bf16.msra.mxu0 0
        %5423 = vmatprep.subr.bf16.mxu0 0
        %5424 = vmatpush1.bf16.msra.mxu0 0
        %5425 = vmatprep.subr.bf16.mxu0 0
        %5426 = vmatpush1.bf16.msra.mxu0 0
        %5427 = vmatprep.subr.bf16.mxu0 0
        %5428 = vmatpush1.bf16.msra.mxu0 0
        %5429 = vmatprep.subr.bf16.mxu0 0
        %5430 = vmatpush1.bf16.msra.mxu0 0
        %5431 = vmatprep.mubr.bf16.mxu0 0
        %5432 = vmatmul.mubr.bf16.gmra.mrb[0].mxu0 %v5394
        %v5433 = vpop.f32.mrb[0].mxu0
        %v5434 = vadd.f32 0.0, %v5433
        %v5435 = vpop.f32.mrb[0].mxu0
        %v5436 = vpop.f32.mrb[0].mxu0
        %v5437 = vpop.f32.mrb[0].mxu0
        %5438 = vdwg.mxu0
        %5440 = vrot.lane.b32.xlu0 %v5313, 112
        %v5441 = vpop.permute.xlu0 %5440
        %v5443 = vsel %vm3795, %v5441, 0.0
        %5444 = vadd.xlane.f32.xlu0 %v5443
        %v5445 = vpop.xlane.xlu0 %5444
        %v5446 = vmax.f32 %v5445, 1e-24
        %v5447 = vrsqrt.pop %v5446
        %v5448 = vmul.f32 %v5088, %v5447
        %5450 = vrot.lane.b32.xlu0 %v5320, 112
        %v5451 = vpop.permute.xlu0 %5450
        %v5453 = vsel %vm3795, %v5451, 0.0
        %5454 = vadd.xlane.f32.xlu0 %v5453
        %v5455 = vpop.xlane.xlu0 %5454
        %v5456 = vmax.f32 %v5455, 1e-24
        %v5457 = vrsqrt.pop %v5456
        %v5458 = vmul.f32 %v5198, %v5457
        %v5459 = vpack.c.bf16 %v5448, %v5448
        %v5460 = vpack.c.bf16 %v5458, %v5458
        %5462 = vrot.lane.b32.xlu0 %v5459, 112
        %v5463 = vpop.permute.xlu0 %5462
        %5465 = vrot.lane.b32.xlu0 %v5460, 112
        %v5466 = vpop.permute.xlu0 %5465
        %v5468 = vsel %vm940, %v5463, 0
        %v5471 = vsel %vm940, %v5466, 0
        %5473 = vmatprep.subr.bf16.mxu0 0
        %5474 = vmatpush1.bf16.xpose.msra.mxu0 %v5471
        %5475 = vmatprep.subr.bf16.mxu0 0
        %5476 = vmatpush1.bf16.xpose.msra.mxu0 0
        %5477 = vmatprep.subr.bf16.mxu0 0
        %5478 = vmatpush1.bf16.xpose.msra.mxu0 0
        %5479 = vmatprep.subr.bf16.mxu0 0
        %5480 = vmatpush1.bf16.xpose.msra.mxu0 0
        %5481 = vmatprep.subr.bf16.mxu0 0
        %5482 = vmatpush1.bf16.xpose.msra.mxu0 0
        %5483 = vmatprep.subr.bf16.mxu0 0
        %5484 = vmatpush1.bf16.xpose.msra.mxu0 0
        %5485 = vmatprep.subr.bf16.mxu0 0
        %5486 = vmatpush1.bf16.xpose.msra.mxu0 0
        %5487 = vmatprep.subr.bf16.mxu0 0
        %5488 = vmatpush1.bf16.xpose.msra.mxu0 0
        %5489 = vmatprep.subr.bf16.mxu0 0
        %5490 = vmatpush1.bf16.xpose.msra.mxu0 0
        %5491 = vmatprep.subr.bf16.mxu0 0
        %5492 = vmatpush1.bf16.xpose.msra.mxu0 0
        %5493 = vmatprep.subr.bf16.mxu0 0
        %5494 = vmatpush1.bf16.xpose.msra.mxu0 0
        %5495 = vmatprep.subr.bf16.mxu0 0
        %5496 = vmatpush1.bf16.xpose.msra.mxu0 0
        %5497 = vmatprep.subr.bf16.mxu0 0
        %5498 = vmatpush1.bf16.xpose.msra.mxu0 0
        %5499 = vmatprep.subr.bf16.mxu0 0
        %5500 = vmatpush1.bf16.xpose.msra.mxu0 0
        %5501 = vmatprep.subr.bf16.mxu0 0
        %5502 = vmatpush1.bf16.xpose.msra.mxu0 0
        %5503 = vmatprep.subr.bf16.mxu0 0
        %5504 = vmatpush1.bf16.xpose.msra.mxu0 0
        %5505 = vmatprep.mubr.bf16.mxu0 0
        %5506 = vmatmul.mubr.bf16.gmra.mrb[0].mxu0 %v5468
        %v5507 = vpop.f32.mrb[0].mxu0
        %v5508 = vadd.f32 0.0, %v5507
        %v5509 = vpop.f32.mrb[0].mxu0
        %v5510 = vpop.f32.mrb[0].mxu0
        %v5511 = vpop.f32.mrb[0].mxu0
        %5512 = vdwg.mxu0
        %s5513 = sld [smem:[#allocation2 + $0x9]]
        %v5514 = vstv %s5513
        %v5515 = vmul.f32 %v5508, %v5514
        %s5516 = scalar_lea.vmem [#allocation13], 4
        %v5517 = vld [vmem:[%s5516] sm:$0xf]
        %v5518 = vadd.f32 %v5515, %v5517
        %v5519 = vsel %vm3862, %v5518, -inf
        %5520 = vmax.xlane.f32.xlu0 %v5519
        %v5521 = vpop.xlane.xlu0 %5520
        %v5522 = vsub.f32 %v5518, %v5521
        %v5523 = vmul.f32 %v5522, 1.442695
        %v5524 = vpow.pop %v5523
        %v5525 = vsel %vm3862, %v5524, 0.0
        %5526 = vadd.xlane.f32.xlu0 %v5525
        %v5527 = vpop.xlane.xlu0 %5526
        %v5528 = vrcp.pop %v5527
        %v5529 = vmul.f32 %v5524, %v5528
        %v5530 = vpack.c.bf16 %v5529, %v5529
        %5532 = vrot.lane.b32.xlu0 %v5392, 112
        %v5533 = vpop.permute.xlu0 %5532
        %v5535 = vsel %vm3876, %v5530, 0
        %v5538 = vsel %vm3880, %v5533, 0
        %5540 = vmatprep.subr.bf16.mxu0 0
        %5541 = vmatpush1.bf16.msra.mxu0 %v5538
        %5542 = vmatprep.subr.bf16.mxu0 0
        %5543 = vmatpush1.bf16.msra.mxu0 0
        %5544 = vmatprep.subr.bf16.mxu0 0
        %5545 = vmatpush1.bf16.msra.mxu0 0
        %5546 = vmatprep.subr.bf16.mxu0 0
        %5547 = vmatpush1.bf16.msra.mxu0 0
        %5548 = vmatprep.subr.bf16.mxu0 0
        %5549 = vmatpush1.bf16.msra.mxu0 0
        %5550 = vmatprep.subr.bf16.mxu0 0
        %5551 = vmatpush1.bf16.msra.mxu0 0
        %5552 = vmatprep.subr.bf16.mxu0 0
        %5553 = vmatpush1.bf16.msra.mxu0 0
        %5554 = vmatprep.subr.bf16.mxu0 0
        %5555 = vmatpush1.bf16.msra.mxu0 0
        %5556 = vmatprep.subr.bf16.mxu0 0
        %5557 = vmatpush1.bf16.msra.mxu0 0
        %5558 = vmatprep.subr.bf16.mxu0 0
        %5559 = vmatpush1.bf16.msra.mxu0 0
        %5560 = vmatprep.subr.bf16.mxu0 0
        %5561 = vmatpush1.bf16.msra.mxu0 0
        %5562 = vmatprep.subr.bf16.mxu0 0
        %5563 = vmatpush1.bf16.msra.mxu0 0
        %5564 = vmatprep.subr.bf16.mxu0 0
        %5565 = vmatpush1.bf16.msra.mxu0 0
        %5566 = vmatprep.subr.bf16.mxu0 0
        %5567 = vmatpush1.bf16.msra.mxu0 0
        %5568 = vmatprep.subr.bf16.mxu0 0
        %5569 = vmatpush1.bf16.msra.mxu0 0
        %5570 = vmatprep.subr.bf16.mxu0 0
        %5571 = vmatpush1.bf16.msra.mxu0 0
        %5572 = vmatprep.mubr.bf16.mxu0 0
        %5573 = vmatmul.mubr.bf16.gmra.mrb[0].mxu0 %v5535
        %v5574 = vpop.f32.mrb[0].mxu0
        %v5575 = vadd.f32 0.0, %v5574
        %v5576 = vpop.f32.mrb[0].mxu0
        %v5577 = vpop.f32.mrb[0].mxu0
        %v5578 = vpop.f32.mrb[0].mxu0
        %5579 = vdwg.mxu0
        %5580 = vrot.lane.b32.xlu0 %v5313, 96
        %v5581 = vpop.permute.xlu0 %5580
        %v5583 = vsel %vm3795, %v5581, 0.0
        %5584 = vadd.xlane.f32.xlu0 %v5583
        %v5585 = vpop.xlane.xlu0 %5584
        %v5586 = vmax.f32 %v5585, 1e-24
        %v5587 = vrsqrt.pop %v5586
        %v5588 = vmul.f32 %v5088, %v5587
        %5589 = vrot.lane.b32.xlu0 %v5320, 96
        %v5590 = vpop.permute.xlu0 %5589
        %v5592 = vsel %vm3795, %v5590, 0.0
        %5593 = vadd.xlane.f32.xlu0 %v5592
        %v5594 = vpop.xlane.xlu0 %5593
        %v5595 = vmax.f32 %v5594, 1e-24
        %v5596 = vrsqrt.pop %v5595
        %v5597 = vmul.f32 %v5198, %v5596
        %v5598 = vpack.c.bf16 %v5588, %v5588
        %v5599 = vpack.c.bf16 %v5597, %v5597
        %5601 = vrot.lane.b32.xlu0 %v5598, 96
        %v5602 = vpop.permute.xlu0 %5601
        %5604 = vrot.lane.b32.xlu0 %v5599, 96
        %v5605 = vpop.permute.xlu0 %5604
        %v5607 = vsel %vm940, %v5602, 0
        %v5610 = vsel %vm940, %v5605, 0
        %5612 = vmatprep.subr.bf16.mxu0 0
        %5613 = vmatpush1.bf16.xpose.msra.mxu0 %v5610
        %5614 = vmatprep.subr.bf16.mxu0 0
        %5615 = vmatpush1.bf16.xpose.msra.mxu0 0
        %5616 = vmatprep.subr.bf16.mxu0 0
        %5617 = vmatpush1.bf16.xpose.msra.mxu0 0
        %5618 = vmatprep.subr.bf16.mxu0 0
        %5619 = vmatpush1.bf16.xpose.msra.mxu0 0
        %5620 = vmatprep.subr.bf16.mxu0 0
        %5621 = vmatpush1.bf16.xpose.msra.mxu0 0
        %5622 = vmatprep.subr.bf16.mxu0 0
        %5623 = vmatpush1.bf16.xpose.msra.mxu0 0
        %5624 = vmatprep.subr.bf16.mxu0 0
        %5625 = vmatpush1.bf16.xpose.msra.mxu0 0
        %5626 = vmatprep.subr.bf16.mxu0 0
        %5627 = vmatpush1.bf16.xpose.msra.mxu0 0
        %5628 = vmatprep.subr.bf16.mxu0 0
        %5629 = vmatpush1.bf16.xpose.msra.mxu0 0
        %5630 = vmatprep.subr.bf16.mxu0 0
        %5631 = vmatpush1.bf16.xpose.msra.mxu0 0
        %5632 = vmatprep.subr.bf16.mxu0 0
        %5633 = vmatpush1.bf16.xpose.msra.mxu0 0
        %5634 = vmatprep.subr.bf16.mxu0 0
        %5635 = vmatpush1.bf16.xpose.msra.mxu0 0
        %5636 = vmatprep.subr.bf16.mxu0 0
        %5637 = vmatpush1.bf16.xpose.msra.mxu0 0
        %5638 = vmatprep.subr.bf16.mxu0 0
        %5639 = vmatpush1.bf16.xpose.msra.mxu0 0
        %5640 = vmatprep.subr.bf16.mxu0 0
        %5641 = vmatpush1.bf16.xpose.msra.mxu0 0
        %5642 = vmatprep.subr.bf16.mxu0 0
        %5643 = vmatpush1.bf16.xpose.msra.mxu0 0
        %5644 = vmatprep.mubr.bf16.mxu0 0
        %5645 = vmatmul.mubr.bf16.gmra.mrb[0].mxu0 %v5607
        %v5646 = vpop.f32.mrb[0].mxu0
        %v5647 = vadd.f32 0.0, %v5646
        %v5648 = vpop.f32.mrb[0].mxu0
        %v5649 = vpop.f32.mrb[0].mxu0
        %v5650 = vpop.f32.mrb[0].mxu0
        %5651 = vdwg.mxu0
        %s5652 = sld [smem:[#allocation2 + $0xa]]
        %v5653 = vstv %s5652
        %v5654 = vmul.f32 %v5647, %v5653
        %s5655 = scalar_lea.vmem [#allocation13], 8
        %v5656 = vld [vmem:[%s5655] sm:$0xf]
        %v5657 = vadd.f32 %v5654, %v5656
        %v5658 = vsel %vm3862, %v5657, -inf
        %5659 = vmax.xlane.f32.xlu0 %v5658
        %v5660 = vpop.xlane.xlu0 %5659
        %v5661 = vsub.f32 %v5657, %v5660
        %v5662 = vmul.f32 %v5661, 1.442695
        %v5663 = vpow.pop %v5662
        %v5664 = vsel %vm3862, %v5663, 0.0
        %5665 = vadd.xlane.f32.xlu0 %v5664
        %v5666 = vpop.xlane.xlu0 %5665
        %v5667 = vrcp.pop %v5666
        %v5668 = vmul.f32 %v5663, %v5667
        %v5669 = vpack.c.bf16 %v5668, %v5668
        %5670 = vrot.lane.b32.xlu0 %v5392, 96
        %v5671 = vpop.permute.xlu0 %5670
        %v5673 = vsel %vm3876, %v5669, 0
        %v5676 = vsel %vm3880, %v5671, 0
        %5678 = vmatprep.subr.bf16.mxu0 0
        %5679 = vmatpush1.bf16.msra.mxu0 %v5676
        %5680 = vmatprep.subr.bf16.mxu0 0
        %5681 = vmatpush1.bf16.msra.mxu0 0
        %5682 = vmatprep.subr.bf16.mxu0 0
        %5683 = vmatpush1.bf16.msra.mxu0 0
        %5684 = vmatprep.subr.bf16.mxu0 0
        %5685 = vmatpush1.bf16.msra.mxu0 0
        %5686 = vmatprep.subr.bf16.mxu0 0
        %5687 = vmatpush1.bf16.msra.mxu0 0
        %5688 = vmatprep.subr.bf16.mxu0 0
        %5689 = vmatpush1.bf16.msra.mxu0 0
        %5690 = vmatprep.subr.bf16.mxu0 0
        %5691 = vmatpush1.bf16.msra.mxu0 0
        %5692 = vmatprep.subr.bf16.mxu0 0
        %5693 = vmatpush1.bf16.msra.mxu0 0
        %5694 = vmatprep.subr.bf16.mxu0 0
        %5695 = vmatpush1.bf16.msra.mxu0 0
        %5696 = vmatprep.subr.bf16.mxu0 0
        %5697 = vmatpush1.bf16.msra.mxu0 0
        %5698 = vmatprep.subr.bf16.mxu0 0
        %5699 = vmatpush1.bf16.msra.mxu0 0
        %5700 = vmatprep.subr.bf16.mxu0 0
        %5701 = vmatpush1.bf16.msra.mxu0 0
        %5702 = vmatprep.subr.bf16.mxu0 0
        %5703 = vmatpush1.bf16.msra.mxu0 0
        %5704 = vmatprep.subr.bf16.mxu0 0
        %5705 = vmatpush1.bf16.msra.mxu0 0
        %5706 = vmatprep.subr.bf16.mxu0 0
        %5707 = vmatpush1.bf16.msra.mxu0 0
        %5708 = vmatprep.subr.bf16.mxu0 0
        %5709 = vmatpush1.bf16.msra.mxu0 0
        %5710 = vmatprep.mubr.bf16.mxu0 0
        %5711 = vmatmul.mubr.bf16.gmra.mrb[0].mxu0 %v5673
        %v5712 = vpop.f32.mrb[0].mxu0
        %v5713 = vadd.f32 0.0, %v5712
        %v5714 = vpop.f32.mrb[0].mxu0
        %v5715 = vpop.f32.mrb[0].mxu0
        %v5716 = vpop.f32.mrb[0].mxu0
        %5717 = vdwg.mxu0
        %5718 = vrot.lane.b32.xlu0 %v5313, 80
        %v5719 = vpop.permute.xlu0 %5718
        %v5721 = vsel %vm3795, %v5719, 0.0
        %5722 = vadd.xlane.f32.xlu0 %v5721
        %v5723 = vpop.xlane.xlu0 %5722
        %v5724 = vmax.f32 %v5723, 1e-24
        %v5725 = vrsqrt.pop %v5724
        %v5726 = vmul.f32 %v5088, %v5725
        %5727 = vrot.lane.b32.xlu0 %v5320, 80
        %v5728 = vpop.permute.xlu0 %5727
        %v5730 = vsel %vm3795, %v5728, 0.0
        %5731 = vadd.xlane.f32.xlu0 %v5730
        %v5732 = vpop.xlane.xlu0 %5731
        %v5733 = vmax.f32 %v5732, 1e-24
        %v5734 = vrsqrt.pop %v5733
        %v5735 = vmul.f32 %v5198, %v5734
        %v5736 = vpack.c.bf16 %v5726, %v5726
        %v5737 = vpack.c.bf16 %v5735, %v5735
        %5739 = vrot.lane.b32.xlu0 %v5736, 80
        %v5740 = vpop.permute.xlu0 %5739
        %5742 = vrot.lane.b32.xlu0 %v5737, 80
        %v5743 = vpop.permute.xlu0 %5742
        %v5745 = vsel %vm940, %v5740, 0
        %v5748 = vsel %vm940, %v5743, 0
        %5750 = vmatprep.subr.bf16.mxu0 0
        %5751 = vmatpush1.bf16.xpose.msra.mxu0 %v5748
        %5752 = vmatprep.subr.bf16.mxu0 0
        %5753 = vmatpush1.bf16.xpose.msra.mxu0 0
        %5754 = vmatprep.subr.bf16.mxu0 0
        %5755 = vmatpush1.bf16.xpose.msra.mxu0 0
        %5756 = vmatprep.subr.bf16.mxu0 0
        %5757 = vmatpush1.bf16.xpose.msra.mxu0 0
        %5758 = vmatprep.subr.bf16.mxu0 0
        %5759 = vmatpush1.bf16.xpose.msra.mxu0 0
        %5760 = vmatprep.subr.bf16.mxu0 0
        %5761 = vmatpush1.bf16.xpose.msra.mxu0 0
        %5762 = vmatprep.subr.bf16.mxu0 0
        %5763 = vmatpush1.bf16.xpose.msra.mxu0 0
        %5764 = vmatprep.subr.bf16.mxu0 0
        %5765 = vmatpush1.bf16.xpose.msra.mxu0 0
        %5766 = vmatprep.subr.bf16.mxu0 0
        %5767 = vmatpush1.bf16.xpose.msra.mxu0 0
        %5768 = vmatprep.subr.bf16.mxu0 0
        %5769 = vmatpush1.bf16.xpose.msra.mxu0 0
        %5770 = vmatprep.subr.bf16.mxu0 0
        %5771 = vmatpush1.bf16.xpose.msra.mxu0 0
        %5772 = vmatprep.subr.bf16.mxu0 0
        %5773 = vmatpush1.bf16.xpose.msra.mxu0 0
        %5774 = vmatprep.subr.bf16.mxu0 0
        %5775 = vmatpush1.bf16.xpose.msra.mxu0 0
        %5776 = vmatprep.subr.bf16.mxu0 0
        %5777 = vmatpush1.bf16.xpose.msra.mxu0 0
        %5778 = vmatprep.subr.bf16.mxu0 0
        %5779 = vmatpush1.bf16.xpose.msra.mxu0 0
        %5780 = vmatprep.subr.bf16.mxu0 0
        %5781 = vmatpush1.bf16.xpose.msra.mxu0 0
        %5782 = vmatprep.mubr.bf16.mxu0 0
        %5783 = vmatmul.mubr.bf16.gmra.mrb[0].mxu0 %v5745
        %v5784 = vpop.f32.mrb[0].mxu0
        %v5785 = vadd.f32 0.0, %v5784
        %v5786 = vpop.f32.mrb[0].mxu0
        %v5787 = vpop.f32.mrb[0].mxu0
        %v5788 = vpop.f32.mrb[0].mxu0
        %5789 = vdwg.mxu0
        %s5790 = sld [smem:[#allocation2 + $0xb]]
        %v5791 = vstv %s5790
        %v5792 = vmul.f32 %v5785, %v5791
        %s5793 = scalar_lea.vmem [#allocation13], 12
        %v5794 = vld [vmem:[%s5793] sm:$0xf]
        %v5795 = vadd.f32 %v5792, %v5794
        %v5796 = vsel %vm3862, %v5795, -inf
        %5797 = vmax.xlane.f32.xlu0 %v5796
        %v5798 = vpop.xlane.xlu0 %5797
        %v5799 = vsub.f32 %v5795, %v5798
        %v5800 = vmul.f32 %v5799, 1.442695
        %v5801 = vpow.pop %v5800
        %v5802 = vsel %vm3862, %v5801, 0.0
        %5803 = vadd.xlane.f32.xlu0 %v5802
        %v5804 = vpop.xlane.xlu0 %5803
        %v5805 = vrcp.pop %v5804
        %v5806 = vmul.f32 %v5801, %v5805
        %v5807 = vpack.c.bf16 %v5806, %v5806
        %5808 = vrot.lane.b32.xlu0 %v5392, 80
        %v5809 = vpop.permute.xlu0 %5808
        %v5811 = vsel %vm3876, %v5807, 0
        %v5814 = vsel %vm3880, %v5809, 0
        %5816 = vmatprep.subr.bf16.mxu0 0
        %5817 = vmatpush1.bf16.msra.mxu0 %v5814
        %5818 = vmatprep.subr.bf16.mxu0 0
        %5819 = vmatpush1.bf16.msra.mxu0 0
        %5820 = vmatprep.subr.bf16.mxu0 0
        %5821 = vmatpush1.bf16.msra.mxu0 0
        %5822 = vmatprep.subr.bf16.mxu0 0
        %5823 = vmatpush1.bf16.msra.mxu0 0
        %5824 = vmatprep.subr.bf16.mxu0 0
        %5825 = vmatpush1.bf16.msra.mxu0 0
        %5826 = vmatprep.subr.bf16.mxu0 0
        %5827 = vmatpush1.bf16.msra.mxu0 0
        %5828 = vmatprep.subr.bf16.mxu0 0
        %5829 = vmatpush1.bf16.msra.mxu0 0
        %5830 = vmatprep.subr.bf16.mxu0 0
        %5831 = vmatpush1.bf16.msra.mxu0 0
        %5832 = vmatprep.subr.bf16.mxu0 0
        %5833 = vmatpush1.bf16.msra.mxu0 0
        %5834 = vmatprep.subr.bf16.mxu0 0
        %5835 = vmatpush1.bf16.msra.mxu0 0
        %5836 = vmatprep.subr.bf16.mxu0 0
        %5837 = vmatpush1.bf16.msra.mxu0 0
        %5838 = vmatprep.subr.bf16.mxu0 0
        %5839 = vmatpush1.bf16.msra.mxu0 0
        %5840 = vmatprep.subr.bf16.mxu0 0
        %5841 = vmatpush1.bf16.msra.mxu0 0
        %5842 = vmatprep.subr.bf16.mxu0 0
        %5843 = vmatpush1.bf16.msra.mxu0 0
        %5844 = vmatprep.subr.bf16.mxu0 0
        %5845 = vmatpush1.bf16.msra.mxu0 0
        %5846 = vmatprep.subr.bf16.mxu0 0
        %5847 = vmatpush1.bf16.msra.mxu0 0
        %5848 = vmatprep.mubr.bf16.mxu0 0
        %5849 = vmatmul.mubr.bf16.gmra.mrb[0].mxu0 %v5811
        %v5850 = vpop.f32.mrb[0].mxu0
        %v5851 = vadd.f32 0.0, %v5850
        %v5852 = vpop.f32.mrb[0].mxu0
        %v5853 = vpop.f32.mrb[0].mxu0
        %v5854 = vpop.f32.mrb[0].mxu0
        %5855 = vdwg.mxu0
        %5857 = vrot.lane.b32.xlu0 %v5575, 16
        %v5858 = vpop.permute.xlu0 %5857
        %5861 = vrot.lane.b32.xlu0 %v5713, 32
        %v5862 = vpop.permute.xlu0 %5861
        %5865 = vrot.lane.b32.xlu0 %v5851, 48
        %v5866 = vpop.permute.xlu0 %5865
        %v5868 = vsel %vm940, %v5434, %v5858
        %v5869 = vsel %vm1277, %v5868, %v5862
        %v5870 = vsel %vm4355, %v5869, %v5866
        %v5871 = vsel %vm4357, %v5870, 0.0
        %v5872 = vpack.c.bf16 %v5871, %v5871
        %s5873 = scalar_lea.vmem [#allocation6], 1536
        %v5874 = vld [vmem:[%s5873] sm:$0xf]
        %v5875 = vld [vmem:[%s5873 + $0x4] sm:$0xf]
        %v5876 = vld [vmem:[%s5873 + $0x8] sm:$0xf]
        %v5877 = vld [vmem:[%s5873 + $0xc] sm:$0xf]
        %v5878 = vld [vmem:[%s5873 + $0x10] sm:$0xf]
        %v5879 = vld [vmem:[%s5873 + $0x14] sm:$0xf]
        %v5880 = vld [vmem:[%s5873 + $0x18] sm:$0xf]
        %v5881 = vld [vmem:[%s5873 + $0x1c] sm:$0xf]
        %v5882 = vld [vmem:[%s5873 + $0x20] sm:$0xf]
        %v5883 = vld [vmem:[%s5873 + $0x24] sm:$0xf]
        %v5884 = vld [vmem:[%s5873 + $0x28] sm:$0xf]
        %v5885 = vld [vmem:[%s5873 + $0x2c] sm:$0xf]
        %v5886 = vld [vmem:[%s5873 + $0x30] sm:$0xf]
        %v5887 = vld [vmem:[%s5873 + $0x34] sm:$0xf]
        %v5888 = vld [vmem:[%s5873 + $0x38] sm:$0xf]
        %v5889 = vld [vmem:[%s5873 + $0x3c] sm:$0xf]
        %v5890 = vld [vmem:[#allocation7 + $0x25] sm:$0x1]
        %v5891 = vlaneseq
        %v5892 = vshrl.u32 %v5891, 7
        %v5893 = vsub.s32 0, %v5892
        %v5894 = vrot.slane %v5890, %v5893
        %v5911 = vunpack.c.l.b16 %v5874
        %v5912 = vunpack.c.l.b16 %v5875
        %v5913 = vunpack.c.l.b16 %v5876
        %v5914 = vunpack.c.l.b16 %v5877
        %v5915 = vunpack.c.l.b16 %v5878
        %v5916 = vunpack.c.l.b16 %v5879
        %v5917 = vunpack.c.l.b16 %v5880
        %v5918 = vunpack.c.l.b16 %v5881
        %v5919 = vunpack.c.l.b16 %v5882
        %v5920 = vunpack.c.l.b16 %v5883
        %v5921 = vunpack.c.l.b16 %v5884
        %v5922 = vunpack.c.l.b16 %v5885
        %v5923 = vunpack.c.l.b16 %v5886
        %v5924 = vunpack.c.l.b16 %v5887
        %v5925 = vunpack.c.l.b16 %v5888
        %v5926 = vunpack.c.l.b16 %v5889
        %v5927 = vpack.c.b16 %v5912, %v5911
        %v5928 = vpack.c.b16 %v5914, %v5913
        %v5929 = vpack.c.b16 %v5916, %v5915
        %v5930 = vpack.c.b16 %v5918, %v5917
        %v5931 = vpack.c.b16 %v5920, %v5919
        %v5932 = vpack.c.b16 %v5922, %v5921
        %v5933 = vpack.c.b16 %v5924, %v5923
        %v5934 = vpack.c.b16 %v5926, %v5925
        %5943 = vmatprep.subr.bf16.mxu0 0
        %5944 = vmatpush1.bf16.msra.mxu0 %v5927
        %5945 = vmatprep.subr.bf16.mxu0 0
        %5946 = vmatpush1.bf16.msra.mxu0 %v5928
        %5947 = vmatprep.subr.bf16.mxu0 0
        %5948 = vmatpush1.bf16.msra.mxu0 %v5929
        %5949 = vmatprep.subr.bf16.mxu0 0
        %5950 = vmatpush1.bf16.msra.mxu0 %v5930
        %5951 = vmatprep.subr.bf16.mxu0 0
        %5952 = vmatpush1.bf16.msra.mxu0 %v5931
        %5953 = vmatprep.subr.bf16.mxu0 0
        %5954 = vmatpush1.bf16.msra.mxu0 %v5932
        %5955 = vmatprep.subr.bf16.mxu0 0
        %5956 = vmatpush1.bf16.msra.mxu0 %v5933
        %5957 = vmatprep.subr.bf16.mxu0 0
        %5958 = vmatpush1.bf16.msra.mxu0 %v5934
        %5959 = vmatprep.subr.bf16.mxu0 0
        %5960 = vmatpush1.bf16.msra.mxu0 0
        %5961 = vmatprep.subr.bf16.mxu0 0
        %5962 = vmatpush1.bf16.msra.mxu0 0
        %5963 = vmatprep.subr.bf16.mxu0 0
        %5964 = vmatpush1.bf16.msra.mxu0 0
        %5965 = vmatprep.subr.bf16.mxu0 0
        %5966 = vmatpush1.bf16.msra.mxu0 0
        %5967 = vmatprep.subr.bf16.mxu0 0
        %5968 = vmatpush1.bf16.msra.mxu0 0
        %5969 = vmatprep.subr.bf16.mxu0 0
        %5970 = vmatpush1.bf16.msra.mxu0 0
        %5971 = vmatprep.subr.bf16.mxu0 0
        %5972 = vmatpush1.bf16.msra.mxu0 0
        %5973 = vmatprep.subr.bf16.mxu0 0
        %5974 = vmatpush1.bf16.msra.mxu0 0
        %5975 = vmatprep.mubr.bf16.mxu0 0
        %5976 = vmatmul.mubr.bf16.gmra.mrb[0].mxu0 %v5872
        %v5977 = vpop.f32.mrb[0].mxu0
        %v5978 = vadd.f32 %v5894, %v5977
        %v5979 = vpop.f32.mrb[0].mxu0
        %v5980 = vpop.f32.mrb[0].mxu0
        %v5981 = vpop.f32.mrb[0].mxu0
        %5982 = vdwg.mxu0
        %v5983 = vsel %vm3436, %v5978, 0.0
        %5984 = vadd.xlane.f32.xlu0 %v5983
        %v5985 = vpop.xlane.xlu0 %5984
        %v5986 = vmul.f32 %v5985, 0.015625
        %v5987 = vsub.f32 %v5978, %v5986
        %v5988 = vmul.f32 %v5987, %v452
        %v5989 = vmul.f32 %v5988, %v5988
        %v5990 = vsel %vm3436, %v5989, 0.0
        %5991 = vadd.xlane.f32.xlu0 %v5990
        %v5992 = vpop.xlane.xlu0 %5991
        %v5993 = vmul.f32 %v5992, 0.015625
        %v5994 = vadd.f32 %v5993, 1e-05
        %v5995 = vrsqrt.pop %v5994
        %v5996 = vmul.f32 %v5988, %v5995
        %v5997 = vld [vmem:[#allocation7 + $0x26] sm:$0x1]
        %v5998 = vlaneseq
        %v5999 = vshrl.u32 %v5998, 7
        %v6000 = vsub.s32 0, %v5999
        %v6001 = vrot.slane %v5997, %v6000
        %v6002 = vmul.f32 %v5996, %v6001
        %v6003 = vld [vmem:[#allocation7 + $0x27] sm:$0x1]
        %v6004 = vlaneseq
        %v6005 = vshrl.u32 %v6004, 7
        %v6006 = vsub.s32 0, %v6005
        %v6007 = vrot.slane %v6003, %v6006
        %v6008 = vadd.f32 %v6002, %v6007
        %v6009 = vadd.f32 %v4981, %v6008
        %v6010 = vpack.c.bf16 %v6009, %v6009
        %s6011 = scalar_lea.vmem [#allocation6], 1600
        %v6012 = vld [vmem:[%s6011] sm:$0xf]
        %v6013 = vld [vmem:[%s6011 + $0x4] sm:$0xf]
        %v6014 = vld [vmem:[%s6011 + $0x8] sm:$0xf]
        %v6015 = vld [vmem:[%s6011 + $0xc] sm:$0xf]
        %v6016 = vld [vmem:[%s6011 + $0x10] sm:$0xf]
        %v6017 = vld [vmem:[%s6011 + $0x14] sm:$0xf]
        %v6018 = vld [vmem:[%s6011 + $0x18] sm:$0xf]
        %v6019 = vld [vmem:[%s6011 + $0x1c] sm:$0xf]
        %v6020 = vld [vmem:[%s6011 + $0x20] sm:$0xf]
        %v6021 = vld [vmem:[%s6011 + $0x24] sm:$0xf]
        %v6022 = vld [vmem:[%s6011 + $0x28] sm:$0xf]
        %v6023 = vld [vmem:[%s6011 + $0x2c] sm:$0xf]
        %v6024 = vld [vmem:[%s6011 + $0x30] sm:$0xf]
        %v6025 = vld [vmem:[%s6011 + $0x34] sm:$0xf]
        %v6026 = vld [vmem:[%s6011 + $0x38] sm:$0xf]
        %v6027 = vld [vmem:[%s6011 + $0x3c] sm:$0xf]
        %v6028 = vld [vmem:[#allocation7 + $0x28] sm:$0x1]
        %v6029 = vlaneseq
        %v6030 = vshrl.u32 %v6029, 7
        %v6031 = vsub.s32 0, %v6030
        %v6032 = vrot.slane %v6028, %v6031
        %v6049 = vunpack.c.l.b16 %v6012
        %v6050 = vunpack.c.l.b16 %v6013
        %v6051 = vunpack.c.l.b16 %v6014
        %v6052 = vunpack.c.l.b16 %v6015
        %v6053 = vunpack.c.l.b16 %v6016
        %v6054 = vunpack.c.l.b16 %v6017
        %v6055 = vunpack.c.l.b16 %v6018
        %v6056 = vunpack.c.l.b16 %v6019
        %v6057 = vunpack.c.l.b16 %v6020
        %v6058 = vunpack.c.l.b16 %v6021
        %v6059 = vunpack.c.l.b16 %v6022
        %v6060 = vunpack.c.l.b16 %v6023
        %v6061 = vunpack.c.l.b16 %v6024
        %v6062 = vunpack.c.l.b16 %v6025
        %v6063 = vunpack.c.l.b16 %v6026
        %v6064 = vunpack.c.l.b16 %v6027
        %v6065 = vpack.c.b16 %v6050, %v6049
        %v6066 = vpack.c.b16 %v6052, %v6051
        %v6067 = vpack.c.b16 %v6054, %v6053
        %v6068 = vpack.c.b16 %v6056, %v6055
        %v6069 = vpack.c.b16 %v6058, %v6057
        %v6070 = vpack.c.b16 %v6060, %v6059
        %v6071 = vpack.c.b16 %v6062, %v6061
        %v6072 = vpack.c.b16 %v6064, %v6063
        %6081 = vmatprep.subr.bf16.mxu0 0
        %6082 = vmatpush1.bf16.msra.mxu0 %v6065
        %6083 = vmatprep.subr.bf16.mxu0 0
        %6084 = vmatpush1.bf16.msra.mxu0 %v6066
        %6085 = vmatprep.subr.bf16.mxu0 0
        %6086 = vmatpush1.bf16.msra.mxu0 %v6067
        %6087 = vmatprep.subr.bf16.mxu0 0
        %6088 = vmatpush1.bf16.msra.mxu0 %v6068
        %6089 = vmatprep.subr.bf16.mxu0 0
        %6090 = vmatpush1.bf16.msra.mxu0 %v6069
        %6091 = vmatprep.subr.bf16.mxu0 0
        %6092 = vmatpush1.bf16.msra.mxu0 %v6070
        %6093 = vmatprep.subr.bf16.mxu0 0
        %6094 = vmatpush1.bf16.msra.mxu0 %v6071
        %6095 = vmatprep.subr.bf16.mxu0 0
        %6096 = vmatpush1.bf16.msra.mxu0 %v6072
        %6097 = vmatprep.subr.bf16.mxu0 0
        %6098 = vmatpush1.bf16.msra.mxu0 0
        %6099 = vmatprep.subr.bf16.mxu0 0
        %6100 = vmatpush1.bf16.msra.mxu0 0
        %6101 = vmatprep.subr.bf16.mxu0 0
        %6102 = vmatpush1.bf16.msra.mxu0 0
        %6103 = vmatprep.subr.bf16.mxu0 0
        %6104 = vmatpush1.bf16.msra.mxu0 0
        %6105 = vmatprep.subr.bf16.mxu0 0
        %6106 = vmatpush1.bf16.msra.mxu0 0
        %6107 = vmatprep.subr.bf16.mxu0 0
        %6108 = vmatpush1.bf16.msra.mxu0 0
        %6109 = vmatprep.subr.bf16.mxu0 0
        %6110 = vmatpush1.bf16.msra.mxu0 0
        %6111 = vmatprep.subr.bf16.mxu0 0
        %6112 = vmatpush1.bf16.msra.mxu0 0
        %6113 = vmatprep.mubr.bf16.mxu0 0
        %6114 = vmatmul.mubr.bf16.gmra.mrb[0].mxu0 %v6010
        %v6115 = vpop.f32.mrb[0].mxu0
        %v6116 = vadd.f32 %v6032, %v6115
        %v6117 = vpop.f32.mrb[0].mxu0
        %v6118 = vpop.f32.mrb[0].mxu0
        %v6119 = vpop.f32.mrb[0].mxu0
        %6120 = vdwg.mxu0
        %v6121 = vmul.f32 %v6116, %v6116
        %v6122 = vmul.f32 %v6116, %v6121
        %v6123 = vmul.f32 %v6122, 0.044715
        %v6124 = vadd.f32 %v6116, %v6123
        %v6125 = vmul.f32 %v6124, 0.7978846
        %v6126 = vtanh.pop %v6125
        %v6127 = vadd.f32 %v6126, 1.0
        %v6128 = vmul.f32 %v6127, 0.5
        %v6129 = vmul.f32 %v6116, %v6128
        %s6130 = scalar_lea.vmem [#allocation6], 1664
        %v6131 = vld [vmem:[%s6130] sm:$0xf]
        %v6132 = vld [vmem:[%s6130 + $0x4] sm:$0xf]
        %v6133 = vld [vmem:[%s6130 + $0x8] sm:$0xf]
        %v6134 = vld [vmem:[%s6130 + $0xc] sm:$0xf]
        %v6135 = vld [vmem:[%s6130 + $0x10] sm:$0xf]
        %v6136 = vld [vmem:[%s6130 + $0x14] sm:$0xf]
        %v6137 = vld [vmem:[%s6130 + $0x18] sm:$0xf]
        %v6138 = vld [vmem:[%s6130 + $0x1c] sm:$0xf]
        %v6139 = vld [vmem:[%s6130 + $0x20] sm:$0xf]
        %v6140 = vld [vmem:[%s6130 + $0x24] sm:$0xf]
        %v6141 = vld [vmem:[%s6130 + $0x28] sm:$0xf]
        %v6142 = vld [vmem:[%s6130 + $0x2c] sm:$0xf]
        %v6143 = vld [vmem:[%s6130 + $0x30] sm:$0xf]
        %v6144 = vld [vmem:[%s6130 + $0x34] sm:$0xf]
        %v6145 = vld [vmem:[%s6130 + $0x38] sm:$0xf]
        %v6146 = vld [vmem:[%s6130 + $0x3c] sm:$0xf]
        %v6147 = vld [vmem:[#allocation7 + $0x29] sm:$0x1]
        %v6148 = vlaneseq
        %v6149 = vshrl.u32 %v6148, 7
        %v6150 = vsub.s32 0, %v6149
        %v6151 = vrot.slane %v6147, %v6150
        %v6168 = vunpack.c.l.b16 %v6131
        %v6169 = vunpack.c.l.b16 %v6132
        %v6170 = vunpack.c.l.b16 %v6133
        %v6171 = vunpack.c.l.b16 %v6134
        %v6172 = vunpack.c.l.b16 %v6135
        %v6173 = vunpack.c.l.b16 %v6136
        %v6174 = vunpack.c.l.b16 %v6137
        %v6175 = vunpack.c.l.b16 %v6138
        %v6176 = vunpack.c.l.b16 %v6139
        %v6177 = vunpack.c.l.b16 %v6140
        %v6178 = vunpack.c.l.b16 %v6141
        %v6179 = vunpack.c.l.b16 %v6142
        %v6180 = vunpack.c.l.b16 %v6143
        %v6181 = vunpack.c.l.b16 %v6144
        %v6182 = vunpack.c.l.b16 %v6145
        %v6183 = vunpack.c.l.b16 %v6146
        %v6184 = vpack.c.b16 %v6169, %v6168
        %v6185 = vpack.c.b16 %v6171, %v6170
        %v6186 = vpack.c.b16 %v6173, %v6172
        %v6187 = vpack.c.b16 %v6175, %v6174
        %v6188 = vpack.c.b16 %v6177, %v6176
        %v6189 = vpack.c.b16 %v6179, %v6178
        %v6190 = vpack.c.b16 %v6181, %v6180
        %v6191 = vpack.c.b16 %v6183, %v6182
        %6200 = vmatprep.subr.bf16.mxu0 0
        %6201 = vmatpush1.bf16.msra.mxu0 %v6184
        %6202 = vmatprep.subr.bf16.mxu0 0
        %6203 = vmatpush1.bf16.msra.mxu0 %v6185
        %6204 = vmatprep.subr.bf16.mxu0 0
        %6205 = vmatpush1.bf16.msra.mxu0 %v6186
        %6206 = vmatprep.subr.bf16.mxu0 0
        %6207 = vmatpush1.bf16.msra.mxu0 %v6187
        %6208 = vmatprep.subr.bf16.mxu0 0
        %6209 = vmatpush1.bf16.msra.mxu0 %v6188
        %6210 = vmatprep.subr.bf16.mxu0 0
        %6211 = vmatpush1.bf16.msra.mxu0 %v6189
        %6212 = vmatprep.subr.bf16.mxu0 0
        %6213 = vmatpush1.bf16.msra.mxu0 %v6190
        %6214 = vmatprep.subr.bf16.mxu0 0
        %6215 = vmatpush1.bf16.msra.mxu0 %v6191
        %6216 = vmatprep.subr.bf16.mxu0 0
        %6217 = vmatpush1.bf16.msra.mxu0 0
        %6218 = vmatprep.subr.bf16.mxu0 0
        %6219 = vmatpush1.bf16.msra.mxu0 0
        %6220 = vmatprep.subr.bf16.mxu0 0
        %6221 = vmatpush1.bf16.msra.mxu0 0
        %6222 = vmatprep.subr.bf16.mxu0 0
        %6223 = vmatpush1.bf16.msra.mxu0 0
        %6224 = vmatprep.subr.bf16.mxu0 0
        %6225 = vmatpush1.bf16.msra.mxu0 0
        %6226 = vmatprep.subr.bf16.mxu0 0
        %6227 = vmatpush1.bf16.msra.mxu0 0
        %6228 = vmatprep.subr.bf16.mxu0 0
        %6229 = vmatpush1.bf16.msra.mxu0 0
        %6230 = vmatprep.subr.bf16.mxu0 0
        %6231 = vmatpush1.bf16.msra.mxu0 0
        %6232 = vmatprep.mubr.bf16.mxu0 0
        %6233 = vmatmul.mubr.bf16.gmra.mrb[0].mxu0 %v6010
        %v6234 = vpop.f32.mrb[0].mxu0
        %v6235 = vadd.f32 %v6151, %v6234
        %v6236 = vpop.f32.mrb[0].mxu0
        %v6237 = vpop.f32.mrb[0].mxu0
        %v6238 = vpop.f32.mrb[0].mxu0
        %6239 = vdwg.mxu0
        %v6240 = vmul.f32 %v6235, %v6235
        %v6241 = vmul.f32 %v6235, %v6240
        %v6242 = vmul.f32 %v6241, 0.044715
        %v6243 = vadd.f32 %v6235, %v6242
        %v6244 = vmul.f32 %v6243, 0.7978846
        %v6245 = vtanh.pop %v6244
        %v6246 = vadd.f32 %v6245, 1.0
        %v6247 = vmul.f32 %v6246, 0.5
        %v6248 = vmul.f32 %v6235, %v6247
        %v6249 = vld [vmem:[#allocation7 + $0x2a] sm:$0x1]
        %v6250 = vpack.c.bf16 %v6129, %v6129
        %s6251 = scalar_lea.vmem [#allocation6], 1728
        %v6252 = vld [vmem:[%s6251] sm:$0xf]
        %v6253 = vld [vmem:[%s6251 + $0x4] sm:$0xf]
        %v6254 = vld [vmem:[%s6251 + $0x8] sm:$0xf]
        %v6255 = vld [vmem:[%s6251 + $0xc] sm:$0xf]
        %v6256 = vld [vmem:[%s6251 + $0x10] sm:$0xf]
        %v6257 = vld [vmem:[%s6251 + $0x14] sm:$0xf]
        %v6258 = vld [vmem:[%s6251 + $0x18] sm:$0xf]
        %v6259 = vld [vmem:[%s6251 + $0x1c] sm:$0xf]
        %v6260 = vld [vmem:[%s6251 + $0x20] sm:$0xf]
        %v6261 = vld [vmem:[%s6251 + $0x24] sm:$0xf]
        %v6262 = vld [vmem:[%s6251 + $0x28] sm:$0xf]
        %v6263 = vld [vmem:[%s6251 + $0x2c] sm:$0xf]
        %v6264 = vld [vmem:[%s6251 + $0x30] sm:$0xf]
        %v6265 = vld [vmem:[%s6251 + $0x34] sm:$0xf]
        %v6266 = vld [vmem:[%s6251 + $0x38] sm:$0xf]
        %v6267 = vld [vmem:[%s6251 + $0x3c] sm:$0xf]
        %v6284 = vunpack.c.l.b16 %v6252
        %v6285 = vunpack.c.l.b16 %v6253
        %v6286 = vunpack.c.l.b16 %v6254
        %v6287 = vunpack.c.l.b16 %v6255
        %v6288 = vunpack.c.l.b16 %v6256
        %v6289 = vunpack.c.l.b16 %v6257
        %v6290 = vunpack.c.l.b16 %v6258
        %v6291 = vunpack.c.l.b16 %v6259
        %v6292 = vunpack.c.l.b16 %v6260
        %v6293 = vunpack.c.l.b16 %v6261
        %v6294 = vunpack.c.l.b16 %v6262
        %v6295 = vunpack.c.l.b16 %v6263
        %v6296 = vunpack.c.l.b16 %v6264
        %v6297 = vunpack.c.l.b16 %v6265
        %v6298 = vunpack.c.l.b16 %v6266
        %v6299 = vunpack.c.l.b16 %v6267
        %v6300 = vpack.c.b16 %v6285, %v6284
        %v6301 = vpack.c.b16 %v6287, %v6286
        %v6302 = vpack.c.b16 %v6289, %v6288
        %v6303 = vpack.c.b16 %v6291, %v6290
        %v6304 = vpack.c.b16 %v6293, %v6292
        %v6305 = vpack.c.b16 %v6295, %v6294
        %v6306 = vpack.c.b16 %v6297, %v6296
        %v6307 = vpack.c.b16 %v6299, %v6298
        %6316 = vmatprep.subr.bf16.mxu0 0
        %6317 = vmatpush1.bf16.msra.mxu0 %v6300
        %6318 = vmatprep.subr.bf16.mxu0 0
        %6319 = vmatpush1.bf16.msra.mxu0 %v6301
        %6320 = vmatprep.subr.bf16.mxu0 0
        %6321 = vmatpush1.bf16.msra.mxu0 %v6302
        %6322 = vmatprep.subr.bf16.mxu0 0
        %6323 = vmatpush1.bf16.msra.mxu0 %v6303
        %6324 = vmatprep.subr.bf16.mxu0 0
        %6325 = vmatpush1.bf16.msra.mxu0 %v6304
        %6326 = vmatprep.subr.bf16.mxu0 0
        %6327 = vmatpush1.bf16.msra.mxu0 %v6305
        %6328 = vmatprep.subr.bf16.mxu0 0
        %6329 = vmatpush1.bf16.msra.mxu0 %v6306
        %6330 = vmatprep.subr.bf16.mxu0 0
        %6331 = vmatpush1.bf16.msra.mxu0 %v6307
        %6332 = vmatprep.subr.bf16.mxu0 0
        %6333 = vmatpush1.bf16.msra.mxu0 0
        %6334 = vmatprep.subr.bf16.mxu0 0
        %6335 = vmatpush1.bf16.msra.mxu0 0
        %6336 = vmatprep.subr.bf16.mxu0 0
        %6337 = vmatpush1.bf16.msra.mxu0 0
        %6338 = vmatprep.subr.bf16.mxu0 0
        %6339 = vmatpush1.bf16.msra.mxu0 0
        %6340 = vmatprep.subr.bf16.mxu0 0
        %6341 = vmatpush1.bf16.msra.mxu0 0
        %6342 = vmatprep.subr.bf16.mxu0 0
        %6343 = vmatpush1.bf16.msra.mxu0 0
        %6344 = vmatprep.subr.bf16.mxu0 0
        %6345 = vmatpush1.bf16.msra.mxu0 0
        %6346 = vmatprep.subr.bf16.mxu0 0
        %6347 = vmatpush1.bf16.msra.mxu0 0
        %6348 = vmatprep.mubr.bf16.mxu0 0
        %6349 = vmatmul.mubr.bf16.gmra.mrb[0].mxu0 %v6250
        %v6350 = vpop.f32.mrb[0].mxu0
        %v6351 = vadd.f32 0.0, %v6350
        %v6352 = vpop.f32.mrb[0].mxu0
        %v6353 = vpop.f32.mrb[0].mxu0
        %v6354 = vpop.f32.mrb[0].mxu0
        %6355 = vdwg.mxu0
        %v6356 = vlaneseq
        %v6357 = vshrl.u32 %v6356, 7
        %v6358 = vsub.s32 0, %v6357
        %v6359 = vrot.slane %v6249, %v6358
        %v6360 = vadd.f32 %v6359, %v6351
        %v6361 = vpack.c.bf16 %v6248, %v6248
        %s6362 = scalar_lea.vmem [#allocation6], 1792
        %v6363 = vld [vmem:[%s6362] sm:$0xf]
        %v6364 = vld [vmem:[%s6362 + $0x4] sm:$0xf]
        %v6365 = vld [vmem:[%s6362 + $0x8] sm:$0xf]
        %v6366 = vld [vmem:[%s6362 + $0xc] sm:$0xf]
        %v6367 = vld [vmem:[%s6362 + $0x10] sm:$0xf]
        %v6368 = vld [vmem:[%s6362 + $0x14] sm:$0xf]
        %v6369 = vld [vmem:[%s6362 + $0x18] sm:$0xf]
        %v6370 = vld [vmem:[%s6362 + $0x1c] sm:$0xf]
        %v6371 = vld [vmem:[%s6362 + $0x20] sm:$0xf]
        %v6372 = vld [vmem:[%s6362 + $0x24] sm:$0xf]
        %v6373 = vld [vmem:[%s6362 + $0x28] sm:$0xf]
        %v6374 = vld [vmem:[%s6362 + $0x2c] sm:$0xf]
        %v6375 = vld [vmem:[%s6362 + $0x30] sm:$0xf]
        %v6376 = vld [vmem:[%s6362 + $0x34] sm:$0xf]
        %v6377 = vld [vmem:[%s6362 + $0x38] sm:$0xf]
        %v6378 = vld [vmem:[%s6362 + $0x3c] sm:$0xf]
        %v6395 = vunpack.c.l.b16 %v6363
        %v6396 = vunpack.c.l.b16 %v6364
        %v6397 = vunpack.c.l.b16 %v6365
        %v6398 = vunpack.c.l.b16 %v6366
        %v6399 = vunpack.c.l.b16 %v6367
        %v6400 = vunpack.c.l.b16 %v6368
        %v6401 = vunpack.c.l.b16 %v6369
        %v6402 = vunpack.c.l.b16 %v6370
        %v6403 = vunpack.c.l.b16 %v6371
        %v6404 = vunpack.c.l.b16 %v6372
        %v6405 = vunpack.c.l.b16 %v6373
        %v6406 = vunpack.c.l.b16 %v6374
        %v6407 = vunpack.c.l.b16 %v6375
        %v6408 = vunpack.c.l.b16 %v6376
        %v6409 = vunpack.c.l.b16 %v6377
        %v6410 = vunpack.c.l.b16 %v6378
        %v6411 = vpack.c.b16 %v6396, %v6395
        %v6412 = vpack.c.b16 %v6398, %v6397
        %v6413 = vpack.c.b16 %v6400, %v6399
        %v6414 = vpack.c.b16 %v6402, %v6401
        %v6415 = vpack.c.b16 %v6404, %v6403
        %v6416 = vpack.c.b16 %v6406, %v6405
        %v6417 = vpack.c.b16 %v6408, %v6407
        %v6418 = vpack.c.b16 %v6410, %v6409
        %6427 = vmatprep.subr.bf16.mxu0 0
        %6428 = vmatpush1.bf16.msra.mxu0 %v6411
        %6429 = vmatprep.subr.bf16.mxu0 0
        %6430 = vmatpush1.bf16.msra.mxu0 %v6412
        %6431 = vmatprep.subr.bf16.mxu0 0
        %6432 = vmatpush1.bf16.msra.mxu0 %v6413
        %6433 = vmatprep.subr.bf16.mxu0 0
        %6434 = vmatpush1.bf16.msra.mxu0 %v6414
        %6435 = vmatprep.subr.bf16.mxu0 0
        %6436 = vmatpush1.bf16.msra.mxu0 %v6415
        %6437 = vmatprep.subr.bf16.mxu0 0
        %6438 = vmatpush1.bf16.msra.mxu0 %v6416
        %6439 = vmatprep.subr.bf16.mxu0 0
        %6440 = vmatpush1.bf16.msra.mxu0 %v6417
        %6441 = vmatprep.subr.bf16.mxu0 0
        %6442 = vmatpush1.bf16.msra.mxu0 %v6418
        %6443 = vmatprep.subr.bf16.mxu0 0
        %6444 = vmatpush1.bf16.msra.mxu0 0
        %6445 = vmatprep.subr.bf16.mxu0 0
        %6446 = vmatpush1.bf16.msra.mxu0 0
        %6447 = vmatprep.subr.bf16.mxu0 0
        %6448 = vmatpush1.bf16.msra.mxu0 0
        %6449 = vmatprep.subr.bf16.mxu0 0
        %6450 = vmatpush1.bf16.msra.mxu0 0
        %6451 = vmatprep.subr.bf16.mxu0 0
        %6452 = vmatpush1.bf16.msra.mxu0 0
        %6453 = vmatprep.subr.bf16.mxu0 0
        %6454 = vmatpush1.bf16.msra.mxu0 0
        %6455 = vmatprep.subr.bf16.mxu0 0
        %6456 = vmatpush1.bf16.msra.mxu0 0
        %6457 = vmatprep.subr.bf16.mxu0 0
        %6458 = vmatpush1.bf16.msra.mxu0 0
        %6459 = vmatprep.mubr.bf16.mxu0 0
        %6460 = vmatmul.mubr.bf16.gmra.mrb[0].mxu0 %v6361
        %v6461 = vpop.f32.mrb[0].mxu0
        %v6462 = vadd.f32 0.0, %v6461
        %v6463 = vpop.f32.mrb[0].mxu0
        %v6464 = vpop.f32.mrb[0].mxu0
        %v6465 = vpop.f32.mrb[0].mxu0
        %6466 = vdwg.mxu0
        %v6467 = vadd.f32 %v6360, %v6462
        %v6468 = vsel %vm3436, %v6467, 0.0
        %6469 = vadd.xlane.f32.xlu0 %v6468
        %v6470 = vpop.xlane.xlu0 %6469
        %v6471 = vmul.f32 %v6470, 0.015625
        %v6472 = vsub.f32 %v6467, %v6471
        %v6473 = vmul.f32 %v6472, %v452
        %v6474 = vmul.f32 %v6473, %v6473
        %v6475 = vsel %vm3436, %v6474, 0.0
        %6476 = vadd.xlane.f32.xlu0 %v6475
        %v6477 = vpop.xlane.xlu0 %6476
        %v6478 = vmul.f32 %v6477, 0.015625
        %v6479 = vadd.f32 %v6478, 1e-05
        %v6480 = vrsqrt.pop %v6479
        %v6481 = vmul.f32 %v6473, %v6480
        %v6482 = vld [vmem:[#allocation7 + $0x2b] sm:$0x1]
        %v6483 = vlaneseq
        %v6484 = vshrl.u32 %v6483, 7
        %v6485 = vsub.s32 0, %v6484
        %v6486 = vrot.slane %v6482, %v6485
        %v6487 = vmul.f32 %v6481, %v6486
        %v6488 = vld [vmem:[#allocation7 + $0x2c] sm:$0x1]
        %v6489 = vlaneseq
        %v6490 = vshrl.u32 %v6489, 7
        %v6491 = vsub.s32 0, %v6490
        %v6492 = vrot.slane %v6488, %v6491
        %v6493 = vadd.f32 %v6487, %v6492
        %v6494 = vadd.f32 %v6009, %v6493
        %v6495 = vsel %vm3436, %v6494, 0.0
        %6496 = vadd.xlane.f32.xlu0 %v6495
        %v6497 = vpop.xlane.xlu0 %6496
        %v6498 = vmul.f32 %v6497, 0.015625
        %v6499 = vsub.f32 %v6494, %v6498
        %v6500 = vmul.f32 %v6499, %v452
        %v6501 = vmul.f32 %v6500, %v6500
        %v6502 = vsel %vm3436, %v6501, 0.0
        %6503 = vadd.xlane.f32.xlu0 %v6502
        %v6504 = vpop.xlane.xlu0 %6503
        %v6505 = vmul.f32 %v6504, 0.015625
        %v6506 = vadd.f32 %v6505, 1e-05
        %v6507 = vrsqrt.pop %v6506
        %v6508 = vmul.f32 %v6500, %v6507
        %v6509 = vld [vmem:[#allocation7 + $0x2f] sm:$0x1]
        %v6510 = vlaneseq
        %v6511 = vshrl.u32 %v6510, 7
        %v6512 = vsub.s32 0, %v6511
        %v6513 = vrot.slane %v6509, %v6512
        %v6514 = vmul.f32 %v6508, %v6513
        %v6515 = vld [vmem:[#allocation7 + $0x30] sm:$0x1]
        %v6516 = vlaneseq
        %v6517 = vshrl.u32 %v6516, 7
        %v6518 = vsub.s32 0, %v6517
        %v6519 = vrot.slane %v6515, %v6518
        %v6520 = vadd.f32 %v6514, %v6519
        %v6521 = vsel %vm3436, %v6520, 0.0
        %v6522 = vrot.slane %v6521, 4
        %v6523 = vadd.f32 %v6521, %v6522
        %v6524 = vrot.slane %v6523, 2
        %v6525 = vadd.f32 %v6523, %v6524
        %v6526 = vrot.slane %v6525, 1
        %v6527 = vadd.f32 %v6525, %v6526
        %v6528 = vrcp.pop 4.0
        %v6529 = vmul.f32 %v6527, %v6528
        %v6530 = vpack.c.bf16 %v6529, %v6529
        %s6531 = scalar_lea.vmem [#allocation6], 2112
        %v6532 = vld [vmem:[%s6531] sm:$0xf]
        %v6533 = vld [vmem:[%s6531 + $0x4] sm:$0xf]
        %v6534 = vld [vmem:[%s6531 + $0x8] sm:$0xf]
        %v6535 = vld [vmem:[%s6531 + $0xc] sm:$0xf]
        %v6536 = vld [vmem:[%s6531 + $0x10] sm:$0xf]
        %v6537 = vld [vmem:[%s6531 + $0x14] sm:$0xf]
        %v6538 = vld [vmem:[%s6531 + $0x18] sm:$0xf]
        %v6539 = vld [vmem:[%s6531 + $0x1c] sm:$0xf]
        %v6540 = vld [vmem:[%s6531 + $0x20] sm:$0xf]
        %v6541 = vld [vmem:[%s6531 + $0x24] sm:$0xf]
        %v6542 = vld [vmem:[%s6531 + $0x28] sm:$0xf]
        %v6543 = vld [vmem:[%s6531 + $0x2c] sm:$0xf]
        %v6544 = vld [vmem:[%s6531 + $0x30] sm:$0xf]
        %v6545 = vld [vmem:[%s6531 + $0x34] sm:$0xf]
        %v6546 = vld [vmem:[%s6531 + $0x38] sm:$0xf]
        %v6547 = vld [vmem:[%s6531 + $0x3c] sm:$0xf]
        %v6548 = vld [vmem:[#allocation7 + $0x31] sm:$0x1]
        %v6565 = vunpack.c.l.b16 %v6532
        %v6566 = vunpack.c.l.b16 %v6533
        %v6567 = vunpack.c.l.b16 %v6534
        %v6568 = vunpack.c.l.b16 %v6535
        %v6569 = vunpack.c.l.b16 %v6536
        %v6570 = vunpack.c.l.b16 %v6537
        %v6571 = vunpack.c.l.b16 %v6538
        %v6572 = vunpack.c.l.b16 %v6539
        %v6573 = vunpack.c.l.b16 %v6540
        %v6574 = vunpack.c.l.b16 %v6541
        %v6575 = vunpack.c.l.b16 %v6542
        %v6576 = vunpack.c.l.b16 %v6543
        %v6577 = vunpack.c.l.b16 %v6544
        %v6578 = vunpack.c.l.b16 %v6545
        %v6579 = vunpack.c.l.b16 %v6546
        %v6580 = vunpack.c.l.b16 %v6547
        %v6581 = vpack.c.b16 %v6566, %v6565
        %v6582 = vpack.c.b16 %v6568, %v6567
        %v6583 = vpack.c.b16 %v6570, %v6569
        %v6584 = vpack.c.b16 %v6572, %v6571
        %v6585 = vpack.c.b16 %v6574, %v6573
        %v6586 = vpack.c.b16 %v6576, %v6575
        %v6587 = vpack.c.b16 %v6578, %v6577
        %v6588 = vpack.c.b16 %v6580, %v6579
        %6597 = vmatprep.subr.bf16.mxu0 0
        %6598 = vmatpush1.bf16.msra.mxu0 %v6581
        %6599 = vmatprep.subr.bf16.mxu0 0
        %6600 = vmatpush1.bf16.msra.mxu0 %v6582
        %6601 = vmatprep.subr.bf16.mxu0 0
        %6602 = vmatpush1.bf16.msra.mxu0 %v6583
        %6603 = vmatprep.subr.bf16.mxu0 0
        %6604 = vmatpush1.bf16.msra.mxu0 %v6584
        %6605 = vmatprep.subr.bf16.mxu0 0
        %6606 = vmatpush1.bf16.msra.mxu0 %v6585
        %6607 = vmatprep.subr.bf16.mxu0 0
        %6608 = vmatpush1.bf16.msra.mxu0 %v6586
        %6609 = vmatprep.subr.bf16.mxu0 0
        %6610 = vmatpush1.bf16.msra.mxu0 %v6587
        %6611 = vmatprep.subr.bf16.mxu0 0
        %6612 = vmatpush1.bf16.msra.mxu0 %v6588
        %6613 = vmatprep.subr.bf16.mxu0 0
        %6614 = vmatpush1.bf16.msra.mxu0 0
        %6615 = vmatprep.subr.bf16.mxu0 0
        %6616 = vmatpush1.bf16.msra.mxu0 0
        %6617 = vmatprep.subr.bf16.mxu0 0
        %6618 = vmatpush1.bf16.msra.mxu0 0
        %6619 = vmatprep.subr.bf16.mxu0 0
        %6620 = vmatpush1.bf16.msra.mxu0 0
        %6621 = vmatprep.subr.bf16.mxu0 0
        %6622 = vmatpush1.bf16.msra.mxu0 0
        %6623 = vmatprep.subr.bf16.mxu0 0
        %6624 = vmatpush1.bf16.msra.mxu0 0
        %6625 = vmatprep.subr.bf16.mxu0 0
        %6626 = vmatpush1.bf16.msra.mxu0 0
        %6627 = vmatprep.subr.bf16.mxu0 0
        %6628 = vmatpush1.bf16.msra.mxu0 0
        %6629 = vmatprep.mubr.bf16.mxu0 0
        %6630 = vmatmul.mubr.bf16.gmra.mrb[0].mxu0 %v6530
        %v6631 = vpop.f32.mrb[0].mxu0
        %v6632 = vadd.f32 %v6548, %v6631
        %v6633 = vpop.f32.mrb[0].mxu0
        %v6634 = vpop.f32.mrb[0].mxu0
        %v6635 = vpop.f32.mrb[0].mxu0
        %6636 = vdwg.mxu0
        %6637 = vst [vmem:[%s438] sm:$0x1] %v6632
        %s6638 = sand.u32 %s230, 1
        %s6639 = scalar_lea.sflag [#allocation4], %s6638
        %s6640 = sand.u32 %s230, 1
        %s6641 = scalar_lea.vmem [#allocation16], %s6640
        // Predicated region
        $region89: #{swin_forward.1} parent=55 // pred_check
          %p6642 = pneg %p240
        $region90: #{swin_forward.1} parent=55 // pred_check_branch
          %6644 = sbr.rel (%p6642) target = $region92
        $region91: #{swin_forward.1} parent=55 // pred_region
          %s6646 = ssub.s32 16, 16
          %6647 = vsyncadd %s6639, %s6646
          %s6648 = smul.addr %s28, 16
          %s6649 = scalar_lea.hbm %s9, %s6648
          %s6651 = sshll.u32 %s6641, 4
          %s6652 = int_to_ptr.vmem [resolvable:$true] %s6651
          %6654 = dma.vmem_to_hbm [thread:$0]  %s6652, 16, %s6649, %s6639
        $region92: #{swin_forward.1} parent=55 // pred_fallthru
          _
      $region56: #{swin_forward.1} parent=5 // pred_fallthru
        _
      %p6655 = scmp.le.s32.totalorder 2, %s23
      // Predicated region
      $region93: #{swin_forward.1} parent=5 // pred_check
        %p6656 = pneg %p6655
      $region94: #{swin_forward.1} parent=5 // pred_check_branch
        %6658 = sbr.rel (%p6656) target = $region96
      $region95: #{swin_forward.1} parent=5 // pred_region
        %s6659 = ssub.s32 %s23, 2
        // Predicated region
        $region97: #{swin_forward.1} parent=95 // pred_check
          %p6660 = pneg %p246
        $region98: #{swin_forward.1} parent=95 // pred_check_branch
          %6662 = sbr.rel (%p6660) target = $region100
        $region99: #{swin_forward.1} parent=95 // pred_region
          %s6663 = sand.u32 %s231, 1
          %s6664 = scalar_lea.sflag [#allocation4], %s6663
          %s6665 = sand.u32 %s231, 1
          %s6666 = scalar_lea.vmem [#allocation16], %s6665
          %6667 = dma.done %s6664, 16
        $region100: #{swin_forward.1} parent=95 // pred_fallthru
          _
      $region96: #{swin_forward.1} parent=5 // pred_fallthru
        _
    $region6: #{swin_forward.1} parent=1 // loop_footer
      %s27 = sadd.s32 1, %s23
    $region7: #{swin_forward.1} parent=1 // loop_footer_branch
      %22 = sbr.rel target = $region3
    $region8: #{swin_forward.1} parent=1 // loop_exit
      _
    %6668 = vsyncpa [#allocation3], 1
    %s6669 = scalar_lea.sflag [#allocation3], 1
    %6670 = vsyncpa %s6669, 1
    %6671 = vsyncpa [#allocation8], 1
    %6672 = vsyncpa [#allocation11], 1
    %6673 = vsyncpa [#allocation14], 1
    %6674 = vsyncpa [#allocation4], 1
    %s6675 = scalar_lea.sflag [#allocation4], 1
    %6676 = vsyncpa %s6675, 1
    %6677 = vsyncpa [#allocation5], 1
    %s6678 = scalar_lea.sflag [#allocation5], 1
    %6679 = vsyncpa %s6678, 1

</llo_original>
